<compile_context>
chip_gen: v6e
topology: v6e:2x2x1
jax: 0.10.0
libtpu: 0.0.40
codegen_flags: <defaults>
</compile_context>

<pallas_src>
import functools

import jax
import jax.numpy as jnp
from jax.experimental import pallas as pl
from jax.experimental.pallas import tpu as pltpu

COEFF = 12.0
EPS = 1e-5  # nn.InstanceNorm2d default eps


def _split_bf16(v):
    """Split an f32 array into (hi, lo) bf16 parts with hi + lo ~= v (~16-bit mantissa).

    hi is exactly representable in bf16; lo = v - hi is exact in f32 and loses only
    ~2^-16 (relative to v) when rounded to bf16, so a 3-pass bf16 matmul built from
    these parts reproduces the f32 matmul to ~2^-15 relative error on any backend.
    """
    hi = v.astype(jnp.bfloat16)
    lo = (v - hi.astype(jnp.float32)).astype(jnp.bfloat16)
    return hi, lo


def _pool3x3_s2(mref, tmp_ref, B, H, W, C):
    """3x3 / stride-2 / pad-1 window sums of a zero-padded map ref (B, H+2, W+2, C).

    Only the even output columns/rows are ever materialized: the column stage uses
    three sublane-strided loads (stride 2 along W), the row stage three strided
    loads along the outer H axis of the column-sum scratch.  The lane (channel)
    axis is never touched, so nothing here needs a lane relayout.
    """
    Ho, Wo = H // 2, W // 2
    # column stage: pad columns {2j, 2j+1, 2j+2} for every output column j
    tmp_ref[...] = (mref[:, :, pl.ds(0, Wo, stride=2), :]
                    + mref[:, :, pl.ds(1, Wo, stride=2), :]
                    + mref[:, :, pl.ds(2, Wo, stride=2), :])
    # row stage: pad rows {2i, 2i+1, 2i+2} for every output row i
    return (tmp_ref[:, pl.ds(0, Ho, stride=2), :, :]
            + tmp_ref[:, pl.ds(1, Ho, stride=2), :, :]
            + tmp_ref[:, pl.ds(2, Ho, stride=2), :, :])


def _lip_kernel(x_ref, w_ref, g_ref, b_ref, o_ref, xpad_ref, wpad_ref, tmp_ref,
                *, B, H, W, C):
    # x_ref        : (B, H, W, C)        unpadded NHWC input block
    # w_ref        : (9, C, C)           conv taps, [ky*3+kx, cin, cout], f32
    # g_ref, b_ref : (1, C)              InstanceNorm affine params
    # o_ref        : (B, Ho, Wo, C)
    # xpad_ref, wpad_ref : (B, H+2, W+2, C) zero-halo VMEM scratch maps
    # tmp_ref      : (B, H+2, Wo, C)     column-sum scratch for the pooling stages

    # ---- zero only the 1-pixel halo (interior is fully overwritten below).
    # Done every step: scratch is per-TensorCore, so gating on program_id==0 would
    # leave the second core's halo uninitialized under megacore parallel sharding.
    zrow = jnp.zeros((B, 1, W + 2, C), jnp.float32)
    zcol = jnp.zeros((B, H + 2, 1, C), jnp.float32)
    for ref in (xpad_ref, wpad_ref):
        ref[:, 0:1, :, :] = zrow
        ref[:, H + 1:H + 2, :, :] = zrow
        ref[:, :, 0:1, :] = zcol
        ref[:, :, W + 1:W + 2, :] = zcol
    xpad_ref[:, 1:H + 1, 1:W + 1, :] = x_ref[...].astype(jnp.float32)

    # ---- 3x3 bias-free conv: 9 accumulating taps, each as a bf16 3-pass matmul ----
    # (deterministic ~f32 accuracy; native-rate bf16 MXU operands; no im2col concat)
    xp_hi, xp_lo = _split_bf16(xpad_ref[...])
    w_hi_all, w_lo_all = _split_bf16(w_ref[...])
    y = jnp.zeros((B * H * W, C), jnp.float32)
    for t in range(9):
        dy, dx = divmod(t, 3)
        t_hi = xp_hi[:, dy:dy + H, dx:dx + W, :].reshape(B * H * W, C)
        t_lo = xp_lo[:, dy:dy + H, dx:dx + W, :].reshape(B * H * W, C)
        w_hi = w_hi_all[t]
        w_lo = w_lo_all[t]
        y = y + jnp.dot(t_hi, w_hi, preferred_element_type=jnp.float32)
        y = y + jnp.dot(t_hi, w_lo, preferred_element_type=jnp.float32)
        y = y + jnp.dot(t_lo, w_hi, preferred_element_type=jnp.float32)

    # ---- InstanceNorm2d(affine=True): per-(batch, channel) spatial statistics ------
    y = y.reshape(B, H * W, C)
    mean = jnp.mean(y, axis=1, keepdims=True)
    var = jnp.mean(jnp.square(y - mean), axis=1, keepdims=True)   # biased, as in PyTorch
    yn = (y - mean) * jax.lax.rsqrt(var + EPS)
    yn = yn * g_ref[...] + b_ref[...]

    # ---- SoftGate (sigmoid * COEFF) then exp -> LIP weights (all exact f32) ---------
    logit = COEFF * pl.reciprocal(1.0 + jnp.exp(-yn), approx=False)
    wgt = jnp.exp(logit).reshape(B, H, W, C)

    # padded weight map; padded value*weight map from the dense input block (no RMW)
    wpad_ref[:, 1:H + 1, 1:W + 1, :] = wgt
    xpad_ref[:, 1:H + 1, 1:W + 1, :] = x_ref[...].astype(jnp.float32) * wgt

    # ---- lip2d: ratio of 3x3 / stride-2 / pad-1 window sums --------------------------
    num = _pool3x3_s2(xpad_ref, tmp_ref, B, H, W, C)
    den = _pool3x3_s2(wpad_ref, tmp_ref, B, H, W, C)
    # exact reciprocal: den >= 9*min(weight) >= 9, but keep full precision so the
    # whole error budget stays in the (tiny) conv-split term.
    o_ref[...] = (num * pl.reciprocal(den, approx=False)).astype(o_ref.dtype)


def _vmem_capacity_bytes():
    try:
        return int(pltpu.get_tpu_info().vmem_capacity_bytes)
    except Exception:
        return 64 * 1024 * 1024          # conservative: assume a v7x-class part


def _pick_batch_block(N, H, W, C, vmem_cap):
    """Batch elements per grid step under a chip-gated VMEM budget."""
    # live set per batch element (f32): two padded maps (~2.5 HWC), double-buffered
    # in/out blocks (~2.5 HWC), bf16 hi/lo maps + taps (~2.3 HWC), conv accumulator,
    # norm/sigmoid/exp temporaries and the column-sum scratch (~5 HWC) + slack.
    per_elem = 4 * H * W * C * 20
    small_vmem = vmem_cap < 100 * 1024 * 1024     # v7x-class: 64 MiB VMEM, 2 TCs
    budget = (20 if small_vmem else 40) * 1024 * 1024
    cap = max(1, min(N, budget // max(per_elem, 1)))
    divisors = [d for d in range(1, N + 1) if N % d == 0 and d <= cap]
    if small_vmem:
        # two TensorCores share the ("parallel",) grid: prefer an even grid length
        even = [d for d in divisors if (N // d) % 2 == 0]
        if even:
            return max(even)
    return max(divisors)


def projection_lip_nhwc(x_nhwc, conv_w, gamma, beta, *, batch_block=None):
    """Pallas TPU implementation of ProjectionLIP.forward, NHWC in / NHWC out."""
    N, H, W, C = x_nhwc.shape
    if H % 2 or W % 2:
        # TODO(synk): odd spatial dims need a tail row/col in the stride-2 downsample.
        raise ValueError("projection_lip kernel assumes even H and W")
    Ho, Wo = H // 2, W // 2

    # per-tap conv weights [ky*3+kx, cin, cout]; affine params as (1, C) rows
    wk = jnp.transpose(conv_w, (2, 3, 1, 0)).reshape(9, C, C).astype(jnp.float32)
    g = gamma.reshape(1, C).astype(jnp.float32)
    b = beta.reshape(1, C).astype(jnp.float32)

    vmem_cap = _vmem_capacity_bytes()
    small_vmem = vmem_cap < 100 * 1024 * 1024
    bb = batch_block or _pick_batch_block(N, H, W, C, vmem_cap)
    while N % bb:
        bb -= 1

    kernel = functools.partial(_lip_kernel, B=bb, H=H, W=W, C=C)
    return pl.pallas_call(
        kernel,
        out_shape=jax.ShapeDtypeStruct((N, Ho, Wo, C), jnp.float32),
        grid_spec=pltpu.PrefetchScalarGridSpec(
            num_scalar_prefetch=0,
            grid=(N // bb,),
            in_specs=[
                pl.BlockSpec((bb, H, W, C), lambda n: (n, 0, 0, 0)),
                pl.BlockSpec((9, C, C), lambda n: (0, 0, 0)),
                pl.BlockSpec((1, C), lambda n: (0, 0)),
                pl.BlockSpec((1, C), lambda n: (0, 0)),
            ],
            out_specs=pl.BlockSpec((bb, Ho, Wo, C), lambda n: (n, 0, 0, 0)),
            scratch_shapes=[
                pltpu.VMEM((bb, H + 2, W + 2, C), jnp.float32),   # padded x / x*w map
                pltpu.VMEM((bb, H + 2, W + 2, C), jnp.float32),   # padded weight map
                pltpu.VMEM((bb, H + 2, Wo, C), jnp.float32),      # pooling column sums
            ],
        ),
        compiler_params=pltpu.CompilerParams(
            dimension_semantics=("parallel",),
            vmem_limit_bytes=(48 if small_vmem else 100) * 1024 * 1024,
        ),
    )(x_nhwc, wk, g, b)


def projection_lip(x_nchw, conv_w, gamma, beta, **kwargs):
    """NCHW adapter matching the PyTorch interface.

    The transposes here are layout glue for the NCHW test only; in an NHWC model
    call projection_lip_nhwc directly and no extra HBM pass is made.
    """
    x_nhwc = jnp.transpose(x_nchw, (0, 2, 3, 1))
    out = projection_lip_nhwc(x_nhwc, conv_w, gamma, beta, **kwargs)
    return jnp.transpose(out, (0, 3, 1, 2))


def projection_lip_ref(x, conv_w, gamma, beta):
    """Pure-JAX reference (mirrors the PyTorch module) for the correctness check."""
    y = jax.lax.conv_general_dilated(
        x, conv_w, window_strides=(1, 1), padding=((1, 1), (1, 1)),
        dimension_numbers=("NCHW", "OIHW", "NCHW"),
        precision=jax.lax.Precision.HIGHEST)
    mean = jnp.mean(y, axis=(2, 3), keepdims=True)
    var = jnp.mean((y - mean) ** 2, axis=(2, 3), keepdims=True)
    yn = (y - mean) / jnp.sqrt(var + EPS)
    yn = yn * gamma.reshape(1, -1, 1, 1) + beta.reshape(1, -1, 1, 1)
    w = jnp.exp(jax.nn.sigmoid(yn) * COEFF)

    def winsum(a):
        return jax.lax.reduce_window(
            a, 0.0, jax.lax.add,
            window_dimensions=(1, 1, 3, 3), window_strides=(1, 1, 2, 2),
            padding=((0, 0), (0, 0), (1, 1), (1, 1)))

    return winsum(x * w) / winsum(w)


if __name__ == "__main__":
    key = jax.random.PRNGKey(0)
    k1, k2, k3, k4 = jax.random.split(key, 4)

    # C=128 keeps the channel (lane) axis fully utilized (review item #1) while the
    # overall problem stays tiny: 2*128*16*16 = 64K elements.
    N, C, H, W = 2, 128, 16, 16
    x = jax.random.normal(k1, (N, C, H, W), jnp.float32)
    # deterministic synthetic params (Conv2d(C,C,3,bias=False) + InstanceNorm2d affine)
    conv_w = jax.random.normal(k2, (C, C, 3, 3), jnp.float32) / jnp.sqrt(9.0 * C)
    gamma = 1.0 + 0.1 * jax.random.normal(k3, (C,), jnp.float32)
    beta = 0.05 * jax.random.normal(k4, (C,), jnp.float32)

    out = jax.block_until_ready(projection_lip(x, conv_w, gamma, beta))
    assert out.shape == (N, C, H // 2, W // 2), out.shape

    ref = jax.block_until_ready(projection_lip_ref(x, conv_w, gamma, beta))
    if not jnp.allclose(out, ref, rtol=1e-3, atol=1e-3):
        raise AssertionError(
            f"mismatch vs reference, max abs err = {jnp.max(jnp.abs(out - ref))}")

    print("KERNEL_OK")
</pallas_src>

<mosaic_0001>
module attributes {stable_mosaic.version = 11 : i64} {
  func.func @_lip_kernel(%arg0: i32, %arg1: memref<1x16x16x128xf32, #tpu.memory_space<vmem>>, %arg2: memref<9x128x128xf32, #tpu.memory_space<vmem>>, %arg3: memref<1x128xf32, #tpu.memory_space<vmem>>, %arg4: memref<1x128xf32, #tpu.memory_space<vmem>>, %arg5: memref<1x8x8x128xf32, #tpu.memory_space<vmem>>, %arg6: memref<1x18x18x128xf32, #tpu.memory_space<vmem>>, %arg7: memref<1x18x18x128xf32, #tpu.memory_space<vmem>>, %arg8: memref<1x18x8x128xf32, #tpu.memory_space<vmem>>) attributes {dimension_semantics = [#tpu.dimension_semantics<parallel>], iteration_bounds = array<i64: 2>, scalar_prefetch = 0 : i64, scratch_operands = 3 : i64, tpu.core_type = #tpu.core_type<tc>, window_params = [{transform_indices = @transform_0, window_bounds = array<i64: 1, 16, 16, 128>}, {pipeline_mode = #tpu.pipeline_mode<synchronous>, transform_indices = @transform_1, window_bounds = array<i64: 9, 128, 128>}, {pipeline_mode = #tpu.pipeline_mode<synchronous>, transform_indices = @transform_2, window_bounds = array<i64: 1, 128>}, {pipeline_mode = #tpu.pipeline_mode<synchronous>, transform_indices = @transform_3, window_bounds = array<i64: 1, 128>}, {transform_indices = @transform_4, window_bounds = array<i64: 1, 8, 8, 128>}]} {
    %cst = arith.constant 0.000000e+00 : f32
    %0 = vector.broadcast %cst : f32 to vector<1x1x18x128xf32>
    %cst_0 = arith.constant 0.000000e+00 : f32
    %1 = vector.broadcast %cst_0 : f32 to vector<1x18x1x128xf32>
    %c0 = arith.constant 0 : index
    %c0_1 = arith.constant 0 : index
    %c0_2 = arith.constant 0 : index
    %c0_3 = arith.constant 0 : index
    %2 = vector.load %arg6[%c0, %c0_1, %c0_2, %c0_3] : memref<1x18x18x128xf32, #tpu.memory_space<vmem>>, vector<1x1x18x128xf32>
    tpu.vector_store %arg6[%c0, %c0_1, %c0_2, %c0_3], %0 {strides = array<i32>} : memref<1x18x18x128xf32, #tpu.memory_space<vmem>>, vector<1x1x18x128xf32>,
    %c0_4 = arith.constant 0 : index
    %c17 = arith.constant 17 : index
    %c0_5 = arith.constant 0 : index
    %c0_6 = arith.constant 0 : index
    %3 = vector.load %arg6[%c0_4, %c17, %c0_5, %c0_6] : memref<1x18x18x128xf32, #tpu.memory_space<vmem>>, vector<1x1x18x128xf32>
    tpu.vector_store %arg6[%c0_4, %c17, %c0_5, %c0_6], %0 {strides = array<i32>} : memref<1x18x18x128xf32, #tpu.memory_space<vmem>>, vector<1x1x18x128xf32>,
    %c0_7 = arith.constant 0 : index
    %c0_8 = arith.constant 0 : index
    %c0_9 = arith.constant 0 : index
    %c0_10 = arith.constant 0 : index
    %4 = vector.load %arg6[%c0_7, %c0_8, %c0_9, %c0_10] : memref<1x18x18x128xf32, #tpu.memory_space<vmem>>, vector<1x18x1x128xf32>
    tpu.vector_store %arg6[%c0_7, %c0_8, %c0_9, %c0_10], %1 {strides = array<i32>} : memref<1x18x18x128xf32, #tpu.memory_space<vmem>>, vector<1x18x1x128xf32>,
    %c0_11 = arith.constant 0 : index
    %c0_12 = arith.constant 0 : index
    %c17_13 = arith.constant 17 : index
    %c0_14 = arith.constant 0 : index
    %5 = vector.load %arg6[%c0_11, %c0_12, %c17_13, %c0_14] : memref<1x18x18x128xf32, #tpu.memory_space<vmem>>, vector<1x18x1x128xf32>
    tpu.vector_store %arg6[%c0_11, %c0_12, %c17_13, %c0_14], %1 {strides = array<i32>} : memref<1x18x18x128xf32, #tpu.memory_space<vmem>>, vector<1x18x1x128xf32>,
    %c0_15 = arith.constant 0 : index
    %c0_16 = arith.constant 0 : index
    %c0_17 = arith.constant 0 : index
    %c0_18 = arith.constant 0 : index
    %6 = vector.load %arg7[%c0_15, %c0_16, %c0_17, %c0_18] : memref<1x18x18x128xf32, #tpu.memory_space<vmem>>, vector<1x1x18x128xf32>
    tpu.vector_store %arg7[%c0_15, %c0_16, %c0_17, %c0_18], %0 {strides = array<i32>} : memref<1x18x18x128xf32, #tpu.memory_space<vmem>>, vector<1x1x18x128xf32>,
    %c0_19 = arith.constant 0 : index
    %c17_20 = arith.constant 17 : index
    %c0_21 = arith.constant 0 : index
    %c0_22 = arith.constant 0 : index
    %7 = vector.load %arg7[%c0_19, %c17_20, %c0_21, %c0_22] : memref<1x18x18x128xf32, #tpu.memory_space<vmem>>, vector<1x1x18x128xf32>
    tpu.vector_store %arg7[%c0_19, %c17_20, %c0_21, %c0_22], %0 {strides = array<i32>} : memref<1x18x18x128xf32, #tpu.memory_space<vmem>>, vector<1x1x18x128xf32>,
    %c0_23 = arith.constant 0 : index
    %c0_24 = arith.constant 0 : index
    %c0_25 = arith.constant 0 : index
    %c0_26 = arith.constant 0 : index
    %8 = vector.load %arg7[%c0_23, %c0_24, %c0_25, %c0_26] : memref<1x18x18x128xf32, #tpu.memory_space<vmem>>, vector<1x18x1x128xf32>
    tpu.vector_store %arg7[%c0_23, %c0_24, %c0_25, %c0_26], %1 {strides = array<i32>} : memref<1x18x18x128xf32, #tpu.memory_space<vmem>>, vector<1x18x1x128xf32>,
    %c0_27 = arith.constant 0 : index
    %c0_28 = arith.constant 0 : index
    %c17_29 = arith.constant 17 : index
    %c0_30 = arith.constant 0 : index
    %9 = vector.load %arg7[%c0_27, %c0_28, %c17_29, %c0_30] : memref<1x18x18x128xf32, #tpu.memory_space<vmem>>, vector<1x18x1x128xf32>
    tpu.vector_store %arg7[%c0_27, %c0_28, %c17_29, %c0_30], %1 {strides = array<i32>} : memref<1x18x18x128xf32, #tpu.memory_space<vmem>>, vector<1x18x1x128xf32>,
    %c0_31 = arith.constant 0 : index
    %c0_32 = arith.constant 0 : index
    %c0_33 = arith.constant 0 : index
    %c0_34 = arith.constant 0 : index
    %10 = vector.load %arg1[%c0_31, %c0_32, %c0_33, %c0_34] : memref<1x16x16x128xf32, #tpu.memory_space<vmem>>, vector<1x16x16x128xf32>
    %c0_35 = arith.constant 0 : index
    %c1 = arith.constant 1 : index
    %c1_36 = arith.constant 1 : index
    %c0_37 = arith.constant 0 : index
    %11 = vector.load %arg6[%c0_35, %c1, %c1_36, %c0_37] : memref<1x18x18x128xf32, #tpu.memory_space<vmem>>, vector<1x16x16x128xf32>
    tpu.vector_store %arg6[%c0_35, %c1, %c1_36, %c0_37], %10 {strides = array<i32>} : memref<1x18x18x128xf32, #tpu.memory_space<vmem>>, vector<1x16x16x128xf32>,
    %c0_38 = arith.constant 0 : index
    %c0_39 = arith.constant 0 : index
    %c0_40 = arith.constant 0 : index
    %c0_41 = arith.constant 0 : index
    %12 = vector.load %arg6[%c0_38, %c0_39, %c0_40, %c0_41] : memref<1x18x18x128xf32, #tpu.memory_space<vmem>>, vector<1x18x18x128xf32>
    %13 = arith.truncf %12 : vector<1x18x18x128xf32> to vector<1x18x18x128xbf16>
    %14 = arith.extf %13 : vector<1x18x18x128xbf16> to vector<1x18x18x128xf32>
    %15 = arith.subf %12, %14 : vector<1x18x18x128xf32>
    %16 = arith.truncf %15 : vector<1x18x18x128xf32> to vector<1x18x18x128xbf16>
    %c0_42 = arith.constant 0 : index
    %c0_43 = arith.constant 0 : index
    %c0_44 = arith.constant 0 : index
    %17 = vector.load %arg2[%c0_42, %c0_43, %c0_44] : memref<9x128x128xf32, #tpu.memory_space<vmem>>, vector<9x128x128xf32>
    %18 = arith.truncf %17 : vector<9x128x128xf32> to vector<9x128x128xbf16>
    %19 = arith.extf %18 : vector<9x128x128xbf16> to vector<9x128x128xf32>
    %20 = arith.subf %17, %19 : vector<9x128x128xf32>
    %21 = arith.truncf %20 : vector<9x128x128xf32> to vector<9x128x128xbf16>
    %cst_45 = arith.constant 0.000000e+00 : f32
    %22 = vector.broadcast %cst_45 : f32 to vector<256x128xf32>
    %23 = vector.extract_strided_slice %13 {offsets = [0, 0, 0, 0], sizes = [1, 16, 16, 128], strides = [1, 1, 1, 1]} : vector<1x18x18x128xbf16> to vector<1x16x16x128xbf16>
    %24 = vector.shape_cast %23 : vector<1x16x16x128xbf16> to vector<256x128xbf16>
    %25 = vector.extract_strided_slice %16 {offsets = [0, 0, 0, 0], sizes = [1, 16, 16, 128], strides = [1, 1, 1, 1]} : vector<1x18x18x128xbf16> to vector<1x16x16x128xbf16>
    %26 = vector.shape_cast %25 : vector<1x16x16x128xbf16> to vector<256x128xbf16>
    %27 = vector.extract_strided_slice %18 {offsets = [0, 0, 0], sizes = [1, 128, 128], strides = [1, 1, 1]} : vector<9x128x128xbf16> to vector<1x128x128xbf16>
    %28 = vector.shape_cast %27 : vector<1x128x128xbf16> to vector<128x128xbf16>
    %29 = vector.extract_strided_slice %21 {offsets = [0, 0, 0], sizes = [1, 128, 128], strides = [1, 1, 1]} : vector<9x128x128xbf16> to vector<1x128x128xbf16>
    %30 = vector.shape_cast %29 : vector<1x128x128xbf16> to vector<128x128xbf16>
    %cst_46 = arith.constant dense<0.000000e+00> : vector<256x128xf32>
    %31 = tpu.matmul %24, %28, %cst_46 {dimension_numbers = #tpu.dot_dimension_numbers<[1], [0], [0], [1], [0, 0, 1, 1], [], []>} : vector<256x128xbf16>, vector<128x128xbf16>, vector<256x128xf32> -> vector<256x128xf32>
    %32 = arith.addf %22, %31 : vector<256x128xf32>
    %cst_47 = arith.constant dense<0.000000e+00> : vector<256x128xf32>
    %33 = tpu.matmul %24, %30, %cst_47 {dimension_numbers = #tpu.dot_dimension_numbers<[1], [0], [0], [1], [0, 0, 1, 1], [], []>} : vector<256x128xbf16>, vector<128x128xbf16>, vector<256x128xf32> -> vector<256x128xf32>
    %34 = arith.addf %32, %33 : vector<256x128xf32>
    %cst_48 = arith.constant dense<0.000000e+00> : vector<256x128xf32>
    %35 = tpu.matmul %26, %28, %cst_48 {dimension_numbers = #tpu.dot_dimension_numbers<[1], [0], [0], [1], [0, 0, 1, 1], [], []>} : vector<256x128xbf16>, vector<128x128xbf16>, vector<256x128xf32> -> vector<256x128xf32>
    %36 = arith.addf %34, %35 : vector<256x128xf32>
    %37 = vector.extract_strided_slice %13 {offsets = [0, 0, 1, 0], sizes = [1, 16, 16, 128], strides = [1, 1, 1, 1]} : vector<1x18x18x128xbf16> to vector<1x16x16x128xbf16>
    %38 = vector.shape_cast %37 : vector<1x16x16x128xbf16> to vector<256x128xbf16>
    %39 = vector.extract_strided_slice %16 {offsets = [0, 0, 1, 0], sizes = [1, 16, 16, 128], strides = [1, 1, 1, 1]} : vector<1x18x18x128xbf16> to vector<1x16x16x128xbf16>
    %40 = vector.shape_cast %39 : vector<1x16x16x128xbf16> to vector<256x128xbf16>
    %41 = vector.extract_strided_slice %18 {offsets = [1, 0, 0], sizes = [1, 128, 128], strides = [1, 1, 1]} : vector<9x128x128xbf16> to vector<1x128x128xbf16>
    %42 = vector.shape_cast %41 : vector<1x128x128xbf16> to vector<128x128xbf16>
    %43 = vector.extract_strided_slice %21 {offsets = [1, 0, 0], sizes = [1, 128, 128], strides = [1, 1, 1]} : vector<9x128x128xbf16> to vector<1x128x128xbf16>
    %44 = vector.shape_cast %43 : vector<1x128x128xbf16> to vector<128x128xbf16>
    %cst_49 = arith.constant dense<0.000000e+00> : vector<256x128xf32>
    %45 = tpu.matmul %38, %42, %cst_49 {dimension_numbers = #tpu.dot_dimension_numbers<[1], [0], [0], [1], [0, 0, 1, 1], [], []>} : vector<256x128xbf16>, vector<128x128xbf16>, vector<256x128xf32> -> vector<256x128xf32>
    %46 = arith.addf %36, %45 : vector<256x128xf32>
    %cst_50 = arith.constant dense<0.000000e+00> : vector<256x128xf32>
    %47 = tpu.matmul %38, %44, %cst_50 {dimension_numbers = #tpu.dot_dimension_numbers<[1], [0], [0], [1], [0, 0, 1, 1], [], []>} : vector<256x128xbf16>, vector<128x128xbf16>, vector<256x128xf32> -> vector<256x128xf32>
    %48 = arith.addf %46, %47 : vector<256x128xf32>
    %cst_51 = arith.constant dense<0.000000e+00> : vector<256x128xf32>
    %49 = tpu.matmul %40, %42, %cst_51 {dimension_numbers = #tpu.dot_dimension_numbers<[1], [0], [0], [1], [0, 0, 1, 1], [], []>} : vector<256x128xbf16>, vector<128x128xbf16>, vector<256x128xf32> -> vector<256x128xf32>
    %50 = arith.addf %48, %49 : vector<256x128xf32>
    %51 = vector.extract_strided_slice %13 {offsets = [0, 0, 2, 0], sizes = [1, 16, 16, 128], strides = [1, 1, 1, 1]} : vector<1x18x18x128xbf16> to vector<1x16x16x128xbf16>
    %52 = vector.shape_cast %51 : vector<1x16x16x128xbf16> to vector<256x128xbf16>
    %53 = vector.extract_strided_slice %16 {offsets = [0, 0, 2, 0], sizes = [1, 16, 16, 128], strides = [1, 1, 1, 1]} : vector<1x18x18x128xbf16> to vector<1x16x16x128xbf16>
    %54 = vector.shape_cast %53 : vector<1x16x16x128xbf16> to vector<256x128xbf16>
    %55 = vector.extract_strided_slice %18 {offsets = [2, 0, 0], sizes = [1, 128, 128], strides = [1, 1, 1]} : vector<9x128x128xbf16> to vector<1x128x128xbf16>
    %56 = vector.shape_cast %55 : vector<1x128x128xbf16> to vector<128x128xbf16>
    %57 = vector.extract_strided_slice %21 {offsets = [2, 0, 0], sizes = [1, 128, 128], strides = [1, 1, 1]} : vector<9x128x128xbf16> to vector<1x128x128xbf16>
    %58 = vector.shape_cast %57 : vector<1x128x128xbf16> to vector<128x128xbf16>
    %cst_52 = arith.constant dense<0.000000e+00> : vector<256x128xf32>
    %59 = tpu.matmul %52, %56, %cst_52 {dimension_numbers = #tpu.dot_dimension_numbers<[1], [0], [0], [1], [0, 0, 1, 1], [], []>} : vector<256x128xbf16>, vector<128x128xbf16>, vector<256x128xf32> -> vector<256x128xf32>
    %60 = arith.addf %50, %59 : vector<256x128xf32>
    %cst_53 = arith.constant dense<0.000000e+00> : vector<256x128xf32>
    %61 = tpu.matmul %52, %58, %cst_53 {dimension_numbers = #tpu.dot_dimension_numbers<[1], [0], [0], [1], [0, 0, 1, 1], [], []>} : vector<256x128xbf16>, vector<128x128xbf16>, vector<256x128xf32> -> vector<256x128xf32>
    %62 = arith.addf %60, %61 : vector<256x128xf32>
    %cst_54 = arith.constant dense<0.000000e+00> : vector<256x128xf32>
    %63 = tpu.matmul %54, %56, %cst_54 {dimension_numbers = #tpu.dot_dimension_numbers<[1], [0], [0], [1], [0, 0, 1, 1], [], []>} : vector<256x128xbf16>, vector<128x128xbf16>, vector<256x128xf32> -> vector<256x128xf32>
    %64 = arith.addf %62, %63 : vector<256x128xf32>
    %65 = vector.extract_strided_slice %13 {offsets = [0, 1, 0, 0], sizes = [1, 16, 16, 128], strides = [1, 1, 1, 1]} : vector<1x18x18x128xbf16> to vector<1x16x16x128xbf16>
    %66 = vector.shape_cast %65 : vector<1x16x16x128xbf16> to vector<256x128xbf16>
    %67 = vector.extract_strided_slice %16 {offsets = [0, 1, 0, 0], sizes = [1, 16, 16, 128], strides = [1, 1, 1, 1]} : vector<1x18x18x128xbf16> to vector<1x16x16x128xbf16>
    %68 = vector.shape_cast %67 : vector<1x16x16x128xbf16> to vector<256x128xbf16>
    %69 = vector.extract_strided_slice %18 {offsets = [3, 0, 0], sizes = [1, 128, 128], strides = [1, 1, 1]} : vector<9x128x128xbf16> to vector<1x128x128xbf16>
    %70 = vector.shape_cast %69 : vector<1x128x128xbf16> to vector<128x128xbf16>
    %71 = vector.extract_strided_slice %21 {offsets = [3, 0, 0], sizes = [1, 128, 128], strides = [1, 1, 1]} : vector<9x128x128xbf16> to vector<1x128x128xbf16>
    %72 = vector.shape_cast %71 : vector<1x128x128xbf16> to vector<128x128xbf16>
    %cst_55 = arith.constant dense<0.000000e+00> : vector<256x128xf32>
    %73 = tpu.matmul %66, %70, %cst_55 {dimension_numbers = #tpu.dot_dimension_numbers<[1], [0], [0], [1], [0, 0, 1, 1], [], []>} : vector<256x128xbf16>, vector<128x128xbf16>, vector<256x128xf32> -> vector<256x128xf32>
    %74 = arith.addf %64, %73 : vector<256x128xf32>
    %cst_56 = arith.constant dense<0.000000e+00> : vector<256x128xf32>
    %75 = tpu.matmul %66, %72, %cst_56 {dimension_numbers = #tpu.dot_dimension_numbers<[1], [0], [0], [1], [0, 0, 1, 1], [], []>} : vector<256x128xbf16>, vector<128x128xbf16>, vector<256x128xf32> -> vector<256x128xf32>
    %76 = arith.addf %74, %75 : vector<256x128xf32>
    %cst_57 = arith.constant dense<0.000000e+00> : vector<256x128xf32>
    %77 = tpu.matmul %68, %70, %cst_57 {dimension_numbers = #tpu.dot_dimension_numbers<[1], [0], [0], [1], [0, 0, 1, 1], [], []>} : vector<256x128xbf16>, vector<128x128xbf16>, vector<256x128xf32> -> vector<256x128xf32>
    %78 = arith.addf %76, %77 : vector<256x128xf32>
    %79 = vector.extract_strided_slice %13 {offsets = [0, 1, 1, 0], sizes = [1, 16, 16, 128], strides = [1, 1, 1, 1]} : vector<1x18x18x128xbf16> to vector<1x16x16x128xbf16>
    %80 = vector.shape_cast %79 : vector<1x16x16x128xbf16> to vector<256x128xbf16>
    %81 = vector.extract_strided_slice %16 {offsets = [0, 1, 1, 0], sizes = [1, 16, 16, 128], strides = [1, 1, 1, 1]} : vector<1x18x18x128xbf16> to vector<1x16x16x128xbf16>
    %82 = vector.shape_cast %81 : vector<1x16x16x128xbf16> to vector<256x128xbf16>
    %83 = vector.extract_strided_slice %18 {offsets = [4, 0, 0], sizes = [1, 128, 128], strides = [1, 1, 1]} : vector<9x128x128xbf16> to vector<1x128x128xbf16>
    %84 = vector.shape_cast %83 : vector<1x128x128xbf16> to vector<128x128xbf16>
    %85 = vector.extract_strided_slice %21 {offsets = [4, 0, 0], sizes = [1, 128, 128], strides = [1, 1, 1]} : vector<9x128x128xbf16> to vector<1x128x128xbf16>
    %86 = vector.shape_cast %85 : vector<1x128x128xbf16> to vector<128x128xbf16>
    %cst_58 = arith.constant dense<0.000000e+00> : vector<256x128xf32>
    %87 = tpu.matmul %80, %84, %cst_58 {dimension_numbers = #tpu.dot_dimension_numbers<[1], [0], [0], [1], [0, 0, 1, 1], [], []>} : vector<256x128xbf16>, vector<128x128xbf16>, vector<256x128xf32> -> vector<256x128xf32>
    %88 = arith.addf %78, %87 : vector<256x128xf32>
    %cst_59 = arith.constant dense<0.000000e+00> : vector<256x128xf32>
    %89 = tpu.matmul %80, %86, %cst_59 {dimension_numbers = #tpu.dot_dimension_numbers<[1], [0], [0], [1], [0, 0, 1, 1], [], []>} : vector<256x128xbf16>, vector<128x128xbf16>, vector<256x128xf32> -> vector<256x128xf32>
    %90 = arith.addf %88, %89 : vector<256x128xf32>
    %cst_60 = arith.constant dense<0.000000e+00> : vector<256x128xf32>
    %91 = tpu.matmul %82, %84, %cst_60 {dimension_numbers = #tpu.dot_dimension_numbers<[1], [0], [0], [1], [0, 0, 1, 1], [], []>} : vector<256x128xbf16>, vector<128x128xbf16>, vector<256x128xf32> -> vector<256x128xf32>
    %92 = arith.addf %90, %91 : vector<256x128xf32>
    %93 = vector.extract_strided_slice %13 {offsets = [0, 1, 2, 0], sizes = [1, 16, 16, 128], strides = [1, 1, 1, 1]} : vector<1x18x18x128xbf16> to vector<1x16x16x128xbf16>
    %94 = vector.shape_cast %93 : vector<1x16x16x128xbf16> to vector<256x128xbf16>
    %95 = vector.extract_strided_slice %16 {offsets = [0, 1, 2, 0], sizes = [1, 16, 16, 128], strides = [1, 1, 1, 1]} : vector<1x18x18x128xbf16> to vector<1x16x16x128xbf16>
    %96 = vector.shape_cast %95 : vector<1x16x16x128xbf16> to vector<256x128xbf16>
    %97 = vector.extract_strided_slice %18 {offsets = [5, 0, 0], sizes = [1, 128, 128], strides = [1, 1, 1]} : vector<9x128x128xbf16> to vector<1x128x128xbf16>
    %98 = vector.shape_cast %97 : vector<1x128x128xbf16> to vector<128x128xbf16>
    %99 = vector.extract_strided_slice %21 {offsets = [5, 0, 0], sizes = [1, 128, 128], strides = [1, 1, 1]} : vector<9x128x128xbf16> to vector<1x128x128xbf16>
    %100 = vector.shape_cast %99 : vector<1x128x128xbf16> to vector<128x128xbf16>
    %cst_61 = arith.constant dense<0.000000e+00> : vector<256x128xf32>
    %101 = tpu.matmul %94, %98, %cst_61 {dimension_numbers = #tpu.dot_dimension_numbers<[1], [0], [0], [1], [0, 0, 1, 1], [], []>} : vector<256x128xbf16>, vector<128x128xbf16>, vector<256x128xf32> -> vector<256x128xf32>
    %102 = arith.addf %92, %101 : vector<256x128xf32>
    %cst_62 = arith.constant dense<0.000000e+00> : vector<256x128xf32>
    %103 = tpu.matmul %94, %100, %cst_62 {dimension_numbers = #tpu.dot_dimension_numbers<[1], [0], [0], [1], [0, 0, 1, 1], [], []>} : vector<256x128xbf16>, vector<128x128xbf16>, vector<256x128xf32> -> vector<256x128xf32>
    %104 = arith.addf %102, %103 : vector<256x128xf32>
    %cst_63 = arith.constant dense<0.000000e+00> : vector<256x128xf32>
    %105 = tpu.matmul %96, %98, %cst_63 {dimension_numbers = #tpu.dot_dimension_numbers<[1], [0], [0], [1], [0, 0, 1, 1], [], []>} : vector<256x128xbf16>, vector<128x128xbf16>, vector<256x128xf32> -> vector<256x128xf32>
    %106 = arith.addf %104, %105 : vector<256x128xf32>
    %107 = vector.extract_strided_slice %13 {offsets = [0, 2, 0, 0], sizes = [1, 16, 16, 128], strides = [1, 1, 1, 1]} : vector<1x18x18x128xbf16> to vector<1x16x16x128xbf16>
    %108 = vector.shape_cast %107 : vector<1x16x16x128xbf16> to vector<256x128xbf16>
    %109 = vector.extract_strided_slice %16 {offsets = [0, 2, 0, 0], sizes = [1, 16, 16, 128], strides = [1, 1, 1, 1]} : vector<1x18x18x128xbf16> to vector<1x16x16x128xbf16>
    %110 = vector.shape_cast %109 : vector<1x16x16x128xbf16> to vector<256x128xbf16>
    %111 = vector.extract_strided_slice %18 {offsets = [6, 0, 0], sizes = [1, 128, 128], strides = [1, 1, 1]} : vector<9x128x128xbf16> to vector<1x128x128xbf16>
    %112 = vector.shape_cast %111 : vector<1x128x128xbf16> to vector<128x128xbf16>
    %113 = vector.extract_strided_slice %21 {offsets = [6, 0, 0], sizes = [1, 128, 128], strides = [1, 1, 1]} : vector<9x128x128xbf16> to vector<1x128x128xbf16>
    %114 = vector.shape_cast %113 : vector<1x128x128xbf16> to vector<128x128xbf16>
    %cst_64 = arith.constant dense<0.000000e+00> : vector<256x128xf32>
    %115 = tpu.matmul %108, %112, %cst_64 {dimension_numbers = #tpu.dot_dimension_numbers<[1], [0], [0], [1], [0, 0, 1, 1], [], []>} : vector<256x128xbf16>, vector<128x128xbf16>, vector<256x128xf32> -> vector<256x128xf32>
    %116 = arith.addf %106, %115 : vector<256x128xf32>
    %cst_65 = arith.constant dense<0.000000e+00> : vector<256x128xf32>
    %117 = tpu.matmul %108, %114, %cst_65 {dimension_numbers = #tpu.dot_dimension_numbers<[1], [0], [0], [1], [0, 0, 1, 1], [], []>} : vector<256x128xbf16>, vector<128x128xbf16>, vector<256x128xf32> -> vector<256x128xf32>
    %118 = arith.addf %116, %117 : vector<256x128xf32>
    %cst_66 = arith.constant dense<0.000000e+00> : vector<256x128xf32>
    %119 = tpu.matmul %110, %112, %cst_66 {dimension_numbers = #tpu.dot_dimension_numbers<[1], [0], [0], [1], [0, 0, 1, 1], [], []>} : vector<256x128xbf16>, vector<128x128xbf16>, vector<256x128xf32> -> vector<256x128xf32>
    %120 = arith.addf %118, %119 : vector<256x128xf32>
    %121 = vector.extract_strided_slice %13 {offsets = [0, 2, 1, 0], sizes = [1, 16, 16, 128], strides = [1, 1, 1, 1]} : vector<1x18x18x128xbf16> to vector<1x16x16x128xbf16>
    %122 = vector.shape_cast %121 : vector<1x16x16x128xbf16> to vector<256x128xbf16>
    %123 = vector.extract_strided_slice %16 {offsets = [0, 2, 1, 0], sizes = [1, 16, 16, 128], strides = [1, 1, 1, 1]} : vector<1x18x18x128xbf16> to vector<1x16x16x128xbf16>
    %124 = vector.shape_cast %123 : vector<1x16x16x128xbf16> to vector<256x128xbf16>
    %125 = vector.extract_strided_slice %18 {offsets = [7, 0, 0], sizes = [1, 128, 128], strides = [1, 1, 1]} : vector<9x128x128xbf16> to vector<1x128x128xbf16>
    %126 = vector.shape_cast %125 : vector<1x128x128xbf16> to vector<128x128xbf16>
    %127 = vector.extract_strided_slice %21 {offsets = [7, 0, 0], sizes = [1, 128, 128], strides = [1, 1, 1]} : vector<9x128x128xbf16> to vector<1x128x128xbf16>
    %128 = vector.shape_cast %127 : vector<1x128x128xbf16> to vector<128x128xbf16>
    %cst_67 = arith.constant dense<0.000000e+00> : vector<256x128xf32>
    %129 = tpu.matmul %122, %126, %cst_67 {dimension_numbers = #tpu.dot_dimension_numbers<[1], [0], [0], [1], [0, 0, 1, 1], [], []>} : vector<256x128xbf16>, vector<128x128xbf16>, vector<256x128xf32> -> vector<256x128xf32>
    %130 = arith.addf %120, %129 : vector<256x128xf32>
    %cst_68 = arith.constant dense<0.000000e+00> : vector<256x128xf32>
    %131 = tpu.matmul %122, %128, %cst_68 {dimension_numbers = #tpu.dot_dimension_numbers<[1], [0], [0], [1], [0, 0, 1, 1], [], []>} : vector<256x128xbf16>, vector<128x128xbf16>, vector<256x128xf32> -> vector<256x128xf32>
    %132 = arith.addf %130, %131 : vector<256x128xf32>
    %cst_69 = arith.constant dense<0.000000e+00> : vector<256x128xf32>
    %133 = tpu.matmul %124, %126, %cst_69 {dimension_numbers = #tpu.dot_dimension_numbers<[1], [0], [0], [1], [0, 0, 1, 1], [], []>} : vector<256x128xbf16>, vector<128x128xbf16>, vector<256x128xf32> -> vector<256x128xf32>
    %134 = arith.addf %132, %133 : vector<256x128xf32>
    %135 = vector.extract_strided_slice %13 {offsets = [0, 2, 2, 0], sizes = [1, 16, 16, 128], strides = [1, 1, 1, 1]} : vector<1x18x18x128xbf16> to vector<1x16x16x128xbf16>
    %136 = vector.shape_cast %135 : vector<1x16x16x128xbf16> to vector<256x128xbf16>
    %137 = vector.extract_strided_slice %16 {offsets = [0, 2, 2, 0], sizes = [1, 16, 16, 128], strides = [1, 1, 1, 1]} : vector<1x18x18x128xbf16> to vector<1x16x16x128xbf16>
    %138 = vector.shape_cast %137 : vector<1x16x16x128xbf16> to vector<256x128xbf16>
    %139 = vector.extract_strided_slice %18 {offsets = [8, 0, 0], sizes = [1, 128, 128], strides = [1, 1, 1]} : vector<9x128x128xbf16> to vector<1x128x128xbf16>
    %140 = vector.shape_cast %139 : vector<1x128x128xbf16> to vector<128x128xbf16>
    %141 = vector.extract_strided_slice %21 {offsets = [8, 0, 0], sizes = [1, 128, 128], strides = [1, 1, 1]} : vector<9x128x128xbf16> to vector<1x128x128xbf16>
    %142 = vector.shape_cast %141 : vector<1x128x128xbf16> to vector<128x128xbf16>
    %cst_70 = arith.constant dense<0.000000e+00> : vector<256x128xf32>
    %143 = tpu.matmul %136, %140, %cst_70 {dimension_numbers = #tpu.dot_dimension_numbers<[1], [0], [0], [1], [0, 0, 1, 1], [], []>} : vector<256x128xbf16>, vector<128x128xbf16>, vector<256x128xf32> -> vector<256x128xf32>
    %144 = arith.addf %134, %143 : vector<256x128xf32>
    %cst_71 = arith.constant dense<0.000000e+00> : vector<256x128xf32>
    %145 = tpu.matmul %136, %142, %cst_71 {dimension_numbers = #tpu.dot_dimension_numbers<[1], [0], [0], [1], [0, 0, 1, 1], [], []>} : vector<256x128xbf16>, vector<128x128xbf16>, vector<256x128xf32> -> vector<256x128xf32>
    %146 = arith.addf %144, %145 : vector<256x128xf32>
    %cst_72 = arith.constant dense<0.000000e+00> : vector<256x128xf32>
    %147 = tpu.matmul %138, %140, %cst_72 {dimension_numbers = #tpu.dot_dimension_numbers<[1], [0], [0], [1], [0, 0, 1, 1], [], []>} : vector<256x128xbf16>, vector<128x128xbf16>, vector<256x128xf32> -> vector<256x128xf32>
    %148 = arith.addf %146, %147 : vector<256x128xf32>
    %149 = vector.shape_cast %148 : vector<256x128xf32> to vector<1x256x128xf32>
    %cst_73 = arith.constant dense<0.000000e+00> : vector<1x128xf32>
    %150 = vector.multi_reduction <add>, %149, %cst_73 [1] : vector<1x256x128xf32> to vector<1x128xf32>
    %151 = vector.shape_cast %150 : vector<1x128xf32> to vector<1x1x128xf32>
    %cst_74 = arith.constant 2.560000e+02 : f32
    %152 = vector.broadcast %cst_74 : f32 to vector<1x1x128xf32>
    %153 = arith.divf %151, %152 : vector<1x1x128xf32>
    %154 = vector.broadcast %153 : vector<1x1x128xf32> to vector<1x256x128xf32>
    %155 = arith.subf %149, %154 : vector<1x256x128xf32>
    %156 = arith.mulf %155, %155 : vector<1x256x128xf32>
    %cst_75 = arith.constant dense<0.000000e+00> : vector<1x128xf32>
    %157 = vector.multi_reduction <add>, %156, %cst_75 [1] : vector<1x256x128xf32> to vector<1x128xf32>
    %158 = vector.shape_cast %157 : vector<1x128xf32> to vector<1x1x128xf32>
    %cst_76 = arith.constant 2.560000e+02 : f32
    %159 = vector.broadcast %cst_76 : f32 to vector<1x1x128xf32>
    %160 = arith.divf %158, %159 : vector<1x1x128xf32>
    %161 = vector.broadcast %153 : vector<1x1x128xf32> to vector<1x256x128xf32>
    %162 = arith.subf %149, %161 : vector<1x256x128xf32>
    %cst_77 = arith.constant 9.99999974E-6 : f32
    %163 = vector.broadcast %cst_77 : f32 to vector<1x1x128xf32>
    %164 = arith.addf %160, %163 : vector<1x1x128xf32>
    %165 = math.rsqrt %164 : vector<1x1x128xf32>
    %166 = vector.broadcast %165 : vector<1x1x128xf32> to vector<1x256x128xf32>
    %167 = arith.mulf %162, %166 : vector<1x256x128xf32>
    %c0_78 = arith.constant 0 : index
    %c0_79 = arith.constant 0 : index
    %168 = vector.load %arg3[%c0_78, %c0_79] : memref<1x128xf32, #tpu.memory_space<vmem>>, vector<1x128xf32>
    %169 = vector.shape_cast %168 : vector<1x128xf32> to vector<1x1x128xf32>
    %170 = vector.broadcast %169 : vector<1x1x128xf32> to vector<1x256x128xf32>
    %171 = arith.mulf %167, %170 : vector<1x256x128xf32>
    %c0_80 = arith.constant 0 : index
    %c0_81 = arith.constant 0 : index
    %172 = vector.load %arg4[%c0_80, %c0_81] : memref<1x128xf32, #tpu.memory_space<vmem>>, vector<1x128xf32>
    %173 = vector.shape_cast %172 : vector<1x128xf32> to vector<1x1x128xf32>
    %174 = vector.broadcast %173 : vector<1x1x128xf32> to vector<1x256x128xf32>
    %175 = arith.addf %171, %174 : vector<1x256x128xf32>
    %cst_82 = arith.constant 0.000000e+00 : f32
    %176 = vector.broadcast %cst_82 : f32 to vector<1x256x128xf32>
    %177 = arith.subf %176, %175 : vector<1x256x128xf32>
    %178 = math.exp %177 : vector<1x256x128xf32>
    %cst_83 = arith.constant 1.000000e+00 : f32
    %179 = vector.broadcast %cst_83 : f32 to vector<1x256x128xf32>
    %180 = arith.addf %179, %178 : vector<1x256x128xf32>
    %181 = tpu.reciprocal %180 : vector<1x256x128xf32> -> vector<1x256x128xf32>
    %cst_84 = arith.constant 1.200000e+01 : f32
    %182 = vector.broadcast %cst_84 : f32 to vector<1x256x128xf32>
    %183 = arith.mulf %182, %181 : vector<1x256x128xf32>
    %184 = math.exp %183 : vector<1x256x128xf32>
    %185 = vector.shape_cast %184 : vector<1x256x128xf32> to vector<1x16x16x128xf32>
    %c0_85 = arith.constant 0 : index
    %c1_86 = arith.constant 1 : index
    %c1_87 = arith.constant 1 : index
    %c0_88 = arith.constant 0 : index
    %186 = vector.load %arg7[%c0_85, %c1_86, %c1_87, %c0_88] : memref<1x18x18x128xf32, #tpu.memory_space<vmem>>, vector<1x16x16x128xf32>
    tpu.vector_store %arg7[%c0_85, %c1_86, %c1_87, %c0_88], %185 {strides = array<i32>} : memref<1x18x18x128xf32, #tpu.memory_space<vmem>>, vector<1x16x16x128xf32>,
    %c0_89 = arith.constant 0 : index
    %c0_90 = arith.constant 0 : index
    %c0_91 = arith.constant 0 : index
    %c0_92 = arith.constant 0 : index
    %187 = vector.load %arg1[%c0_89, %c0_90, %c0_91, %c0_92] : memref<1x16x16x128xf32, #tpu.memory_space<vmem>>, vector<1x16x16x128xf32>
    %188 = arith.mulf %187, %185 : vector<1x16x16x128xf32>
    %c0_93 = arith.constant 0 : index
    %c1_94 = arith.constant 1 : index
    %c1_95 = arith.constant 1 : index
    %c0_96 = arith.constant 0 : index
    %189 = vector.load %arg6[%c0_93, %c1_94, %c1_95, %c0_96] : memref<1x18x18x128xf32, #tpu.memory_space<vmem>>, vector<1x16x16x128xf32>
    tpu.vector_store %arg6[%c0_93, %c1_94, %c1_95, %c0_96], %188 {strides = array<i32>} : memref<1x18x18x128xf32, #tpu.memory_space<vmem>>, vector<1x16x16x128xf32>,
    %c0_97 = arith.constant 0 : index
    %c0_98 = arith.constant 0 : index
    %c0_99 = arith.constant 0 : index
    %c0_100 = arith.constant 0 : index
    %190 = tpu.strided_load %arg6[%c0_97, %c0_98, %c0_99, %c0_100] {strides = array<i32: 1, 1, 2, 1>} : memref<1x18x18x128xf32, #tpu.memory_space<vmem>>, vector<1x18x8x128xf32>
    %c0_101 = arith.constant 0 : index
    %c0_102 = arith.constant 0 : index
    %c1_103 = arith.constant 1 : index
    %c0_104 = arith.constant 0 : index
    %191 = tpu.strided_load %arg6[%c0_101, %c0_102, %c1_103, %c0_104] {strides = array<i32: 1, 1, 2, 1>} : memref<1x18x18x128xf32, #tpu.memory_space<vmem>>, vector<1x18x8x128xf32>
    %192 = arith.addf %190, %191 : vector<1x18x8x128xf32>
    %c0_105 = arith.constant 0 : index
    %c0_106 = arith.constant 0 : index
    %c2 = arith.constant 2 : index
    %c0_107 = arith.constant 0 : index
    %193 = tpu.strided_load %arg6[%c0_105, %c0_106, %c2, %c0_107] {strides = array<i32: 1, 1, 2, 1>} : memref<1x18x18x128xf32, #tpu.memory_space<vmem>>, vector<1x18x8x128xf32>
    %194 = arith.addf %192, %193 : vector<1x18x8x128xf32>
    %c0_108 = arith.constant 0 : index
    %c0_109 = arith.constant 0 : index
    %c0_110 = arith.constant 0 : index
    %c0_111 = arith.constant 0 : index
    %195 = vector.load %arg8[%c0_108, %c0_109, %c0_110, %c0_111] : memref<1x18x8x128xf32, #tpu.memory_space<vmem>>, vector<1x18x8x128xf32>
    tpu.vector_store %arg8[%c0_108, %c0_109, %c0_110, %c0_111], %194 {strides = array<i32>} : memref<1x18x8x128xf32, #tpu.memory_space<vmem>>, vector<1x18x8x128xf32>,
    %c0_112 = arith.constant 0 : index
    %c0_113 = arith.constant 0 : index
    %c0_114 = arith.constant 0 : index
    %c0_115 = arith.constant 0 : index
    %196 = tpu.strided_load %arg8[%c0_112, %c0_113, %c0_114, %c0_115] {strides = array<i32: 1, 2, 1, 1>} : memref<1x18x8x128xf32, #tpu.memory_space<vmem>>, vector<1x8x8x128xf32>
    %c0_116 = arith.constant 0 : index
    %c1_117 = arith.constant 1 : index
    %c0_118 = arith.constant 0 : index
    %c0_119 = arith.constant 0 : index
    %197 = tpu.strided_load %arg8[%c0_116, %c1_117, %c0_118, %c0_119] {strides = array<i32: 1, 2, 1, 1>} : memref<1x18x8x128xf32, #tpu.memory_space<vmem>>, vector<1x8x8x128xf32>
    %198 = arith.addf %196, %197 : vector<1x8x8x128xf32>
    %c0_120 = arith.constant 0 : index
    %c2_121 = arith.constant 2 : index
    %c0_122 = arith.constant 0 : index
    %c0_123 = arith.constant 0 : index
    %199 = tpu.strided_load %arg8[%c0_120, %c2_121, %c0_122, %c0_123] {strides = array<i32: 1, 2, 1, 1>} : memref<1x18x8x128xf32, #tpu.memory_space<vmem>>, vector<1x8x8x128xf32>
    %200 = arith.addf %198, %199 : vector<1x8x8x128xf32>
    %c0_124 = arith.constant 0 : index
    %c0_125 = arith.constant 0 : index
    %c0_126 = arith.constant 0 : index
    %c0_127 = arith.constant 0 : index
    %201 = tpu.strided_load %arg7[%c0_124, %c0_125, %c0_126, %c0_127] {strides = array<i32: 1, 1, 2, 1>} : memref<1x18x18x128xf32, #tpu.memory_space<vmem>>, vector<1x18x8x128xf32>
    %c0_128 = arith.constant 0 : index
    %c0_129 = arith.constant 0 : index
    %c1_130 = arith.constant 1 : index
    %c0_131 = arith.constant 0 : index
    %202 = tpu.strided_load %arg7[%c0_128, %c0_129, %c1_130, %c0_131] {strides = array<i32: 1, 1, 2, 1>} : memref<1x18x18x128xf32, #tpu.memory_space<vmem>>, vector<1x18x8x128xf32>
    %203 = arith.addf %201, %202 : vector<1x18x8x128xf32>
    %c0_132 = arith.constant 0 : index
    %c0_133 = arith.constant 0 : index
    %c2_134 = arith.constant 2 : index
    %c0_135 = arith.constant 0 : index
    %204 = tpu.strided_load %arg7[%c0_132, %c0_133, %c2_134, %c0_135] {strides = array<i32: 1, 1, 2, 1>} : memref<1x18x18x128xf32, #tpu.memory_space<vmem>>, vector<1x18x8x128xf32>
    %205 = arith.addf %203, %204 : vector<1x18x8x128xf32>
    %c0_136 = arith.constant 0 : index
    %c0_137 = arith.constant 0 : index
    %c0_138 = arith.constant 0 : index
    %c0_139 = arith.constant 0 : index
    %206 = vector.load %arg8[%c0_136, %c0_137, %c0_138, %c0_139] : memref<1x18x8x128xf32, #tpu.memory_space<vmem>>, vector<1x18x8x128xf32>
    tpu.vector_store %arg8[%c0_136, %c0_137, %c0_138, %c0_139], %205 {strides = array<i32>} : memref<1x18x8x128xf32, #tpu.memory_space<vmem>>, vector<1x18x8x128xf32>,
    %c0_140 = arith.constant 0 : index
    %c0_141 = arith.constant 0 : index
    %c0_142 = arith.constant 0 : index
    %c0_143 = arith.constant 0 : index
    %207 = tpu.strided_load %arg8[%c0_140, %c0_141, %c0_142, %c0_143] {strides = array<i32: 1, 2, 1, 1>} : memref<1x18x8x128xf32, #tpu.memory_space<vmem>>, vector<1x8x8x128xf32>
    %c0_144 = arith.constant 0 : index
    %c1_145 = arith.constant 1 : index
    %c0_146 = arith.constant 0 : index
    %c0_147 = arith.constant 0 : index
    %208 = tpu.strided_load %arg8[%c0_144, %c1_145, %c0_146, %c0_147] {strides = array<i32: 1, 2, 1, 1>} : memref<1x18x8x128xf32, #tpu.memory_space<vmem>>, vector<1x8x8x128xf32>
    %209 = arith.addf %207, %208 : vector<1x8x8x128xf32>
    %c0_148 = arith.constant 0 : index
    %c2_149 = arith.constant 2 : index
    %c0_150 = arith.constant 0 : index
    %c0_151 = arith.constant 0 : index
    %210 = tpu.strided_load %arg8[%c0_148, %c2_149, %c0_150, %c0_151] {strides = array<i32: 1, 2, 1, 1>} : memref<1x18x8x128xf32, #tpu.memory_space<vmem>>, vector<1x8x8x128xf32>
    %211 = arith.addf %209, %210 : vector<1x8x8x128xf32>
    %212 = tpu.reciprocal %211 : vector<1x8x8x128xf32> -> vector<1x8x8x128xf32>
    %213 = arith.mulf %200, %212 : vector<1x8x8x128xf32>
    %c0_152 = arith.constant 0 : index
    %c0_153 = arith.constant 0 : index
    %c0_154 = arith.constant 0 : index
    %c0_155 = arith.constant 0 : index
    %214 = vector.load %arg5[%c0_152, %c0_153, %c0_154, %c0_155] : memref<1x8x8x128xf32, #tpu.memory_space<vmem>>, vector<1x8x8x128xf32>
    tpu.vector_store %arg5[%c0_152, %c0_153, %c0_154, %c0_155], %213 {strides = array<i32>} : memref<1x8x8x128xf32, #tpu.memory_space<vmem>>, vector<1x8x8x128xf32>,
    return
  }
  func.func @transform_0(%arg0: i32) -> (i32, i32, i32, i32) {
    %c0_i32 = arith.constant 0 : i32
    %c0_i32_0 = arith.constant 0 : i32
    %c0_i32_1 = arith.constant 0 : i32
    %c0_i32_2 = arith.constant 0 : i32
    return %arg0, %c0_i32, %c0_i32_0, %c0_i32_1 : i32, i32, i32, i32
  }
  func.func @transform_1(%arg0: i32) -> (i32, i32, i32) {
    %c0_i32 = arith.constant 0 : i32
    %c0_i32_0 = arith.constant 0 : i32
    %c0_i32_1 = arith.constant 0 : i32
    %c0_i32_2 = arith.constant 0 : i32
    return %c0_i32, %c0_i32_0, %c0_i32_1 : i32, i32, i32
  }
  func.func @transform_2(%arg0: i32) -> (i32, i32) {
    %c0_i32 = arith.constant 0 : i32
    %c0_i32_0 = arith.constant 0 : i32
    %c0_i32_1 = arith.constant 0 : i32
    return %c0_i32, %c0_i32_0 : i32, i32
  }
  func.func @transform_3(%arg0: i32) -> (i32, i32) {
    %c0_i32 = arith.constant 0 : i32
    %c0_i32_0 = arith.constant 0 : i32
    %c0_i32_1 = arith.constant 0 : i32
    return %c0_i32, %c0_i32_0 : i32, i32
  }
  func.func @transform_4(%arg0: i32) -> (i32, i32, i32, i32) {
    %c0_i32 = arith.constant 0 : i32
    %c0_i32_0 = arith.constant 0 : i32
    %c0_i32_1 = arith.constant 0 : i32
    %c0_i32_2 = arith.constant 0 : i32
    return %arg0, %c0_i32, %c0_i32_0, %c0_i32_1 : i32, i32, i32, i32
  }
}

</mosaic_0001>

<llo_original>
// kernel: tpu_custom_call.1
$region0: #{tpu_custom_call.1}
  #allocation0 [shape = 'u32[]', space=smem, size = 0x4, offset = 0x4, fixed_abs, tag = 'smem constant byte address 0x4 - core index']
  #allocation1 [shape = 'u32[144,128]{1,0:T(1,128)}', space=vmem, size = 0x12000, scoped, tag = 'internal scratch']
  #allocation2 [shape = 'f32[1,18,18,128]{3,2,1,0:T(8,128)}', space=vmem, size = 0x36000, scoped, tag = 'scratch operand']
  #allocation3 [shape = 'f32[1,18,18,128]{3,2,1,0:T(8,128)}', space=vmem, size = 0x36000, scoped, tag = 'scratch operand']
  #allocation4 [shape = 'f32[1,18,8,128]{3,2,1,0:T(8,128)}', space=vmem, size = 0x12000, scoped, tag = 'scratch operand']
  %s0 = inlined_call_operand.hbm [shape: f32[2,16,16,128], index: 0, kind: input, shape index: {}]
  %s1 = inlined_call_operand.hbm [shape: f32[9,128,128], index: 1, kind: input, shape index: {}]
  %s2 = inlined_call_operand.vmem [shape: f32[1,128], index: 2, kind: input, shape index: {}]
  %s3 = inlined_call_operand.vmem [shape: f32[1,128], index: 3, kind: input, shape index: {}]
  %s4 = inlined_call_operand.hbm [shape: f32[2,8,8,128], index: 4, kind: output, shape index: {}]
  %s5 = sld [smem:[#allocation0]]
  $region57: #{tpu_custom_call.1} parent=0
    _
  %s7 = ssub.s32 1, %s5
  %s8 = scalar_select 0, %s7, %s5
  $region1: #{tpu_custom_call.1} parent=0
    #allocation5 [shape = 'u8[262144]{0}', space=vmem, size = 0x40000, scoped, tag = 'input window, operand 0']
    #allocation6 [shape = 's32[2]{0}', space=sflag, size = 0x8, scoped, tag = 'scoped memory for tpu_custom_call.1']
    #allocation7 [shape = 's32[2]{0}', space=sflag, size = 0x8, scoped, tag = 'scoped memory for tpu_custom_call.1']
    #allocation8 [shape = 'u8[589824]{0}', space=vmem, size = 0x90000, scoped, tag = 'input window, operand 1, single buffered']
    #allocation9 [shape = 's32[1]{0}', space=sflag, size = 0x4, scoped, tag = 'scoped memory for tpu_custom_call.1']
    #allocation10 [shape = 'u8[65536]{0}', space=vmem, size = 0x10000, scoped, tag = 'output window, operand 0']
    %9 = vsyncpa [#allocation6], 0
    %s10 = scalar_lea.sflag [#allocation6], 1
    %11 = vsyncpa %s10, 0
    %12 = vsyncpa [#allocation9], 0
    %13 = vsyncpa [#allocation7], 0
    %s14 = scalar_lea.sflag [#allocation7], 1
    %15 = vsyncpa %s14, 0
    loop: start=0, step=1, limit=4
    $region2: #{tpu_custom_call.1} parent=1 // loop_pre_header
      _
    $region3: #{tpu_custom_call.1} parent=1 // loop_header
      %s17 = sphi 0, %s21
      %p18 = scmp.ge.s32.totalorder %s17, 4
      %s27 = sphi 0, %s29
      %s30 = sphi 0, %s27
      %s31 = sphi 0, %s30
      %s47 = sphi 0, %s31
      %s51 = sphi 0, %s51
      %s53 = sphi 0, %s51
      %s54 = sphi 0, %s53
      %s68 = sphi 0, %s54
      %s72 = sphi 0, %s72
      %s74 = sphi 0, %s72
      %s75 = sphi 0, %s74
      %s89 = sphi 0, %s75
      %s93 = sphi 0, %s93
      %s95 = sphi 0, %s93
      %s96 = sphi 0, %s95
      %s110 = sphi 0, %s96
      %s116 = sphi 0, %s118
      %s119 = sphi 0, %s116
      %s120 = sphi 0, %s119
      %s136 = sphi 0, %s120
    $region4: #{tpu_custom_call.1} parent=1 // loop_header_branch
      %20 = sbr.rel (%p18) target = $region8
    $region5: #{tpu_custom_call.1} parent=1 // loop_body
      %s22 = ssub.s32 %s17, 1
      %s23 = ssub.s32 %s17, 2
      %s24 = sadd.s32 %s17, 1
      %s25 = ssub.s32 %s17, %s24
      %p26 = scmp.eq.s32.totalorder %s25, 0
      %s28 = sadd.s32 %s27, 1
      %s29 = scalar_select %p26, %s27, %s28
      %p32 = pneg %p26
      %p33 = scmp.eq.s32.totalorder %s17, 1
      %p34 = por %p32, %p33
      %p35 = scmp.ne.s32.totalorder %s27, %s30
      %p36 = scmp.eq.s32.totalorder %s17, 0
      %p37 = por %p35, %p36
      %p38 = scmp.ne.s32.totalorder %s27, %s30
      %p39 = scmp.eq.s32.totalorder %s22, 1
      %p40 = por %p38, %p39
      %p41 = scmp.ne.s32.totalorder %s30, %s31
      %p42 = scmp.eq.s32.totalorder %s22, 0
      %p43 = por %p41, %p42
      %p44 = scmp.ne.s32.totalorder %s30, %s31
      %p45 = scmp.eq.s32.totalorder %s23, 1
      %p46 = por %p44, %p45
      %p48 = scmp.ne.s32.totalorder %s31, %s47
      %p49 = scmp.eq.s32.totalorder %s23, 0
      %p50 = por %p48, %p49
      %s52 = sadd.s32 %s51, 1
      %p55 = scmp.eq.s32.totalorder %s17, 1
      %p56 = scmp.ne.s32.totalorder %s51, %s53
      %p57 = scmp.eq.s32.totalorder %s17, 0
      %p58 = por %p56, %p57
      %p59 = scmp.ne.s32.totalorder %s51, %s53
      %p60 = scmp.eq.s32.totalorder %s22, 1
      %p61 = por %p59, %p60
      %p62 = scmp.ne.s32.totalorder %s53, %s54
      %p63 = scmp.eq.s32.totalorder %s22, 0
      %p64 = por %p62, %p63
      %p65 = scmp.ne.s32.totalorder %s53, %s54
      %p66 = scmp.eq.s32.totalorder %s23, 1
      %p67 = por %p65, %p66
      %p69 = scmp.ne.s32.totalorder %s54, %s68
      %p70 = scmp.eq.s32.totalorder %s23, 0
      %p71 = por %p69, %p70
      %s73 = sadd.s32 %s72, 1
      %p76 = scmp.eq.s32.totalorder %s17, 1
      %p77 = scmp.ne.s32.totalorder %s72, %s74
      %p78 = scmp.eq.s32.totalorder %s17, 0
      %p79 = por %p77, %p78
      %p80 = scmp.ne.s32.totalorder %s72, %s74
      %p81 = scmp.eq.s32.totalorder %s22, 1
      %p82 = por %p80, %p81
      %p83 = scmp.ne.s32.totalorder %s74, %s75
      %p84 = scmp.eq.s32.totalorder %s22, 0
      %p85 = por %p83, %p84
      %p86 = scmp.ne.s32.totalorder %s74, %s75
      %p87 = scmp.eq.s32.totalorder %s23, 1
      %p88 = por %p86, %p87
      %p90 = scmp.ne.s32.totalorder %s75, %s89
      %p91 = scmp.eq.s32.totalorder %s23, 0
      %p92 = por %p90, %p91
      %s94 = sadd.s32 %s93, 1
      %p97 = scmp.eq.s32.totalorder %s17, 1
      %p98 = scmp.ne.s32.totalorder %s93, %s95
      %p99 = scmp.eq.s32.totalorder %s17, 0
      %p100 = por %p98, %p99
      %p101 = scmp.ne.s32.totalorder %s93, %s95
      %p102 = scmp.eq.s32.totalorder %s22, 1
      %p103 = por %p101, %p102
      %p104 = scmp.ne.s32.totalorder %s95, %s96
      %p105 = scmp.eq.s32.totalorder %s22, 0
      %p106 = por %p104, %p105
      %p107 = scmp.ne.s32.totalorder %s95, %s96
      %p108 = scmp.eq.s32.totalorder %s23, 1
      %p109 = por %p107, %p108
      %p111 = scmp.ne.s32.totalorder %s96, %s110
      %p112 = scmp.eq.s32.totalorder %s23, 0
      %p113 = por %p111, %p112
      %s114 = ssub.s32 %s17, %s24
      %p115 = scmp.eq.s32.totalorder %s114, 0
      %s117 = sadd.s32 %s116, 1
      %s118 = scalar_select %p115, %s116, %s117
      %p121 = pneg %p115
      %p122 = scmp.eq.s32.totalorder %s17, 1
      %p123 = por %p121, %p122
      %p124 = scmp.ne.s32.totalorder %s116, %s119
      %p125 = scmp.eq.s32.totalorder %s17, 0
      %p126 = por %p124, %p125
      %p127 = scmp.ne.s32.totalorder %s116, %s119
      %p128 = scmp.eq.s32.totalorder %s22, 1
      %p129 = por %p127, %p128
      %p130 = scmp.ne.s32.totalorder %s119, %s120
      %p131 = scmp.eq.s32.totalorder %s22, 0
      %p132 = por %p130, %p131
      %p133 = scmp.ne.s32.totalorder %s119, %s120
      %p134 = scmp.eq.s32.totalorder %s23, 1
      %p135 = por %p133, %p134
      %p137 = scmp.ne.s32.totalorder %s120, %s136
      %p138 = scmp.eq.s32.totalorder %s23, 0
      %p139 = por %p137, %p138
      %p140 = scmp.le.s32.totalorder 1, %s17
      %p141 = scmp.lt.s32.totalorder %s17, 3
      %p142 = pnand %p140, %p141
      %p143 = pneg %p142
      // Predicated region
      $region9: #{tpu_custom_call.1} parent=5 // pred_check
        _
      $region10: #{tpu_custom_call.1} parent=5 // pred_check_branch
        %145 = sbr.rel (%p142) target = $region12
      $region11: #{tpu_custom_call.1} parent=5 // pred_region
        %s146 = ssub.s32 %s17, 1
        // Predicated region
        $region13: #{tpu_custom_call.1} parent=11 // pred_check
          %p147 = pneg %p64
        $region14: #{tpu_custom_call.1} parent=11 // pred_check_branch
          %149 = sbr.rel (%p147) target = $region16
        $region15: #{tpu_custom_call.1} parent=11 // pred_region
          %s151 = ssub.s32 18432, 18432
          %152 = vsyncadd [#allocation9], %s151
          %s153 = sshll.u32 [#allocation8], 4
          %s154 = int_to_ptr.vmem [resolvable:$true] %s153
          %159 = dma.hbm_to_vmem [thread:$0]  %s1, 18432, %s154, [#allocation9], 128, 128, 8
        $region16: #{tpu_custom_call.1} parent=11 // pred_fallthru
          _
        // Predicated region
        $region17: #{tpu_custom_call.1} parent=11 // pred_check
          %p160 = pneg %p85
        $region18: #{tpu_custom_call.1} parent=11 // pred_check_branch
          %162 = sbr.rel (%p160) target = $region20
        $region19: #{tpu_custom_call.1} parent=11 // pred_region
          _
        $region20: #{tpu_custom_call.1} parent=11 // pred_fallthru
          _
        // Predicated region
        $region21: #{tpu_custom_call.1} parent=11 // pred_check
          %p163 = pneg %p106
        $region22: #{tpu_custom_call.1} parent=11 // pred_check_branch
          %165 = sbr.rel (%p163) target = $region24
        $region23: #{tpu_custom_call.1} parent=11 // pred_region
          _
        $region24: #{tpu_custom_call.1} parent=11 // pred_fallthru
          _
      $region12: #{tpu_custom_call.1} parent=5 // pred_fallthru
        _
      %p166 = scmp.lt.s32.totalorder %s17, 2
      // Predicated region
      $region25: #{tpu_custom_call.1} parent=5 // pred_check
        %p167 = pneg %p166
      $region26: #{tpu_custom_call.1} parent=5 // pred_check_branch
        %169 = sbr.rel (%p167) target = $region28
      $region27: #{tpu_custom_call.1} parent=5 // pred_region
        // Predicated region
        $region29: #{tpu_custom_call.1} parent=27 // pred_check
          %p170 = pneg %p37
        $region30: #{tpu_custom_call.1} parent=27 // pred_check_branch
          %172 = sbr.rel (%p170) target = $region32
        $region31: #{tpu_custom_call.1} parent=27 // pred_region
          %s173 = sand.u32 %s27, 1
          %s174 = scalar_lea.sflag [#allocation6], %s173
          %s175 = sand.u32 %s27, 1
          %s176 = smul.addr %s175, 256
          %s177 = scalar_lea.vmem [#allocation5], %s176
          %s179 = ssub.s32 4096, 4096
          %180 = vsyncadd %s174, %s179
          %s181 = smul.addr %s17, 32
          %s182 = smul.addr %s181, 128
          %s183 = scalar_lea.hbm %s0, %s182
          %s184 = sshll.u32 %s177, 4
          %s185 = int_to_ptr.vmem [resolvable:$true] %s184
          %190 = dma.hbm_to_vmem [thread:$0]  %s183, 4096, %s185, %s174, 128, 128, 8
        $region32: #{tpu_custom_call.1} parent=27 // pred_fallthru
          _
      $region28: #{tpu_custom_call.1} parent=5 // pred_fallthru
        _
      %p191 = scmp.le.s32.totalorder 1, %s17
      %p192 = scmp.lt.s32.totalorder %s17, 3
      %p193 = pnand %p191, %p192
      %p194 = pneg %p193
      // Predicated region
      $region33: #{tpu_custom_call.1} parent=5 // pred_check
        _
      $region34: #{tpu_custom_call.1} parent=5 // pred_check_branch
        %196 = sbr.rel (%p193) target = $region36
      $region35: #{tpu_custom_call.1} parent=5 // pred_region
        %s197 = ssub.s32 %s17, 1
        %s198 = sand.u32 %s30, 1
        %s199 = scalar_lea.sflag [#allocation6], %s198
        %s200 = sand.u32 %s30, 1
        %s201 = smul.addr %s200, 256
        %s202 = scalar_lea.vmem [#allocation5], %s201
        // Predicated region
        $region37: #{tpu_custom_call.1} parent=35 // pred_check
          %p203 = pneg %p43
        $region38: #{tpu_custom_call.1} parent=35 // pred_check_branch
          %205 = sbr.rel (%p203) target = $region40
        $region39: #{tpu_custom_call.1} parent=35 // pred_region
          %206 = dma.done %s199, 4096
        $region40: #{tpu_custom_call.1} parent=35 // pred_fallthru
          _
        // Predicated region
        $region41: #{tpu_custom_call.1} parent=35 // pred_check
          %p207 = pneg %p64
        $region42: #{tpu_custom_call.1} parent=35 // pred_check_branch
          %209 = sbr.rel (%p207) target = $region44
        $region43: #{tpu_custom_call.1} parent=35 // pred_region
          %210 = dma.done [#allocation9], 18432
        $region44: #{tpu_custom_call.1} parent=35 // pred_fallthru
          _
        %s211 = sand.u32 %s30, 1
        %s212 = scalar_lea.sflag [#allocation6], %s211
        %s213 = sand.u32 %s30, 1
        %s214 = smul.addr %s213, 256
        %s215 = scalar_lea.vmem [#allocation5], %s214
        %p216 = pneg %p43
        %p217 = pneg %p40
        %p218 = pneg %p64
        %p219 = pneg %p61
        %p220 = pneg %p85
        %p221 = pneg %p82
        %p222 = pneg %p106
        %p223 = pneg %p103
        %p224 = pneg %p132
        %p225 = pneg %p129
        %s226 = sand.u32 %s119, 1
        %s227 = scalar_lea.sflag [#allocation7], %s226
        %s228 = sand.u32 %s119, 1
        %s229 = smul.addr %s228, 64
        %s230 = scalar_lea.vmem [#allocation10], %s229
        %232 = vst [vmem:[#allocation2] sm:$0xff] 0.0
        %233 = vst [vmem:[#allocation2 + $0x8] sm:$0xff] 0.0
        %234 = vst [vmem:[#allocation2 + $0x10] sm:$0x3] 0.0
        %s235 = scalar_lea.vmem [#allocation2], 408
        %236 = vst [vmem:[%s235] sm:$0xff] 0.0
        %237 = vst [vmem:[%s235 + $0x8] sm:$0xff] 0.0
        %238 = vst [vmem:[%s235 + $0x10] sm:$0x3] 0.0
        %239 = vst [vmem:[#allocation2] sm:$0x1] 0.0
        %240 = vst [vmem:[#allocation2 + $0x18] sm:$0x1] 0.0
        %241 = vst [vmem:[#allocation2 + $0x30] sm:$0x1] 0.0
        %242 = vst [vmem:[#allocation2 + $0x48] sm:$0x1] 0.0
        %243 = vst [vmem:[#allocation2 + $0x60] sm:$0x1] 0.0
        %244 = vst [vmem:[#allocation2 + $0x78] sm:$0x1] 0.0
        %245 = vst [vmem:[#allocation2 + $0x90] sm:$0x1] 0.0
        %246 = vst [vmem:[#allocation2 + $0xa8] sm:$0x1] 0.0
        %247 = vst [vmem:[#allocation2 + $0xc0] sm:$0x1] 0.0
        %248 = vst [vmem:[#allocation2 + $0xd8] sm:$0x1] 0.0
        %249 = vst [vmem:[#allocation2 + $0xf0] sm:$0x1] 0.0
        %250 = vst [vmem:[#allocation2 + $0x108] sm:$0x1] 0.0
        %251 = vst [vmem:[#allocation2 + $0x120] sm:$0x1] 0.0
        %252 = vst [vmem:[#allocation2 + $0x138] sm:$0x1] 0.0
        %253 = vst [vmem:[#allocation2 + $0x150] sm:$0x1] 0.0
        %254 = vst [vmem:[#allocation2 + $0x168] sm:$0x1] 0.0
        %255 = vst [vmem:[#allocation2 + $0x180] sm:$0x1] 0.0
        %256 = vst [vmem:[#allocation2 + $0x198] sm:$0x1] 0.0
        %257 = vst [vmem:[#allocation2 + $0x11] sm:$0x1] 0.0
        %258 = vst [vmem:[#allocation2 + $0x29] sm:$0x1] 0.0
        %259 = vst [vmem:[#allocation2 + $0x41] sm:$0x1] 0.0
        %260 = vst [vmem:[#allocation2 + $0x59] sm:$0x1] 0.0
        %261 = vst [vmem:[#allocation2 + $0x71] sm:$0x1] 0.0
        %262 = vst [vmem:[#allocation2 + $0x89] sm:$0x1] 0.0
        %263 = vst [vmem:[#allocation2 + $0xa1] sm:$0x1] 0.0
        %264 = vst [vmem:[#allocation2 + $0xb9] sm:$0x1] 0.0
        %265 = vst [vmem:[#allocation2 + $0xd1] sm:$0x1] 0.0
        %266 = vst [vmem:[#allocation2 + $0xe9] sm:$0x1] 0.0
        %267 = vst [vmem:[#allocation2 + $0x101] sm:$0x1] 0.0
        %268 = vst [vmem:[#allocation2 + $0x119] sm:$0x1] 0.0
        %269 = vst [vmem:[#allocation2 + $0x131] sm:$0x1] 0.0
        %270 = vst [vmem:[#allocation2 + $0x149] sm:$0x1] 0.0
        %271 = vst [vmem:[#allocation2 + $0x161] sm:$0x1] 0.0
        %272 = vst [vmem:[#allocation2 + $0x179] sm:$0x1] 0.0
        %273 = vst [vmem:[#allocation2 + $0x191] sm:$0x1] 0.0
        %274 = vst [vmem:[#allocation2 + $0x1a9] sm:$0x1] 0.0
        %275 = vst [vmem:[#allocation3] sm:$0xff] 0.0
        %276 = vst [vmem:[#allocation3 + $0x8] sm:$0xff] 0.0
        %277 = vst [vmem:[#allocation3 + $0x10] sm:$0x3] 0.0
        %s278 = scalar_lea.vmem [#allocation3], 408
        %279 = vst [vmem:[%s278] sm:$0xff] 0.0
        %280 = vst [vmem:[%s278 + $0x8] sm:$0xff] 0.0
        %281 = vst [vmem:[%s278 + $0x10] sm:$0x3] 0.0
        %282 = vst [vmem:[#allocation3] sm:$0x1] 0.0
        %283 = vst [vmem:[#allocation3 + $0x18] sm:$0x1] 0.0
        %284 = vst [vmem:[#allocation3 + $0x30] sm:$0x1] 0.0
        %285 = vst [vmem:[#allocation3 + $0x48] sm:$0x1] 0.0
        %286 = vst [vmem:[#allocation3 + $0x60] sm:$0x1] 0.0
        %287 = vst [vmem:[#allocation3 + $0x78] sm:$0x1] 0.0
        %288 = vst [vmem:[#allocation3 + $0x90] sm:$0x1] 0.0
        %289 = vst [vmem:[#allocation3 + $0xa8] sm:$0x1] 0.0
        %290 = vst [vmem:[#allocation3 + $0xc0] sm:$0x1] 0.0
        %291 = vst [vmem:[#allocation3 + $0xd8] sm:$0x1] 0.0
        %292 = vst [vmem:[#allocation3 + $0xf0] sm:$0x1] 0.0
        %293 = vst [vmem:[#allocation3 + $0x108] sm:$0x1] 0.0
        %294 = vst [vmem:[#allocation3 + $0x120] sm:$0x1] 0.0
        %295 = vst [vmem:[#allocation3 + $0x138] sm:$0x1] 0.0
        %296 = vst [vmem:[#allocation3 + $0x150] sm:$0x1] 0.0
        %297 = vst [vmem:[#allocation3 + $0x168] sm:$0x1] 0.0
        %298 = vst [vmem:[#allocation3 + $0x180] sm:$0x1] 0.0
        %299 = vst [vmem:[#allocation3 + $0x198] sm:$0x1] 0.0
        %300 = vst [vmem:[#allocation3 + $0x11] sm:$0x1] 0.0
        %301 = vst [vmem:[#allocation3 + $0x29] sm:$0x1] 0.0
        %302 = vst [vmem:[#allocation3 + $0x41] sm:$0x1] 0.0
        %303 = vst [vmem:[#allocation3 + $0x59] sm:$0x1] 0.0
        %304 = vst [vmem:[#allocation3 + $0x71] sm:$0x1] 0.0
        %305 = vst [vmem:[#allocation3 + $0x89] sm:$0x1] 0.0
        %306 = vst [vmem:[#allocation3 + $0xa1] sm:$0x1] 0.0
        %307 = vst [vmem:[#allocation3 + $0xb9] sm:$0x1] 0.0
        %308 = vst [vmem:[#allocation3 + $0xd1] sm:$0x1] 0.0
        %309 = vst [vmem:[#allocation3 + $0xe9] sm:$0x1] 0.0
        %310 = vst [vmem:[#allocation3 + $0x101] sm:$0x1] 0.0
        %311 = vst [vmem:[#allocation3 + $0x119] sm:$0x1] 0.0
        %312 = vst [vmem:[#allocation3 + $0x131] sm:$0x1] 0.0
        %313 = vst [vmem:[#allocation3 + $0x149] sm:$0x1] 0.0
        %314 = vst [vmem:[#allocation3 + $0x161] sm:$0x1] 0.0
        %315 = vst [vmem:[#allocation3 + $0x179] sm:$0x1] 0.0
        %316 = vst [vmem:[#allocation3 + $0x191] sm:$0x1] 0.0
        %317 = vst [vmem:[#allocation3 + $0x1a9] sm:$0x1] 0.0
        %v318 = vld [vmem:[%s202] sm:$0xff]
        %v319 = vld [vmem:[%s202 + $0x8] sm:$0xff]
        %v320 = vld [vmem:[%s202 + $0x10] sm:$0xff]
        %v321 = vld [vmem:[%s202 + $0x18] sm:$0xff]
        %v322 = vld [vmem:[%s202 + $0x20] sm:$0xff]
        %v323 = vld [vmem:[%s202 + $0x28] sm:$0xff]
        %v324 = vld [vmem:[%s202 + $0x30] sm:$0xff]
        %v325 = vld [vmem:[%s202 + $0x38] sm:$0xff]
        %v326 = vld [vmem:[%s202 + $0x40] sm:$0xff]
        %v327 = vld [vmem:[%s202 + $0x48] sm:$0xff]
        %v328 = vld [vmem:[%s202 + $0x50] sm:$0xff]
        %v329 = vld [vmem:[%s202 + $0x58] sm:$0xff]
        %v330 = vld [vmem:[%s202 + $0x60] sm:$0xff]
        %v331 = vld [vmem:[%s202 + $0x68] sm:$0xff]
        %v332 = vld [vmem:[%s202 + $0x70] sm:$0xff]
        %v333 = vld [vmem:[%s202 + $0x78] sm:$0xff]
        %v334 = vld [vmem:[%s202 + $0x80] sm:$0xff]
        %v335 = vld [vmem:[%s202 + $0x88] sm:$0xff]
        %v336 = vld [vmem:[%s202 + $0x90] sm:$0xff]
        %v337 = vld [vmem:[%s202 + $0x98] sm:$0xff]
        %v338 = vld [vmem:[%s202 + $0xa0] sm:$0xff]
        %v339 = vld [vmem:[%s202 + $0xa8] sm:$0xff]
        %v340 = vld [vmem:[%s202 + $0xb0] sm:$0xff]
        %v341 = vld [vmem:[%s202 + $0xb8] sm:$0xff]
        %v342 = vld [vmem:[%s202 + $0xc0] sm:$0xff]
        %v343 = vld [vmem:[%s202 + $0xc8] sm:$0xff]
        %v344 = vld [vmem:[%s202 + $0xd0] sm:$0xff]
        %v345 = vld [vmem:[%s202 + $0xd8] sm:$0xff]
        %v346 = vld [vmem:[%s202 + $0xe0] sm:$0xff]
        %v347 = vld [vmem:[%s202 + $0xe8] sm:$0xff]
        %v348 = vld [vmem:[%s202 + $0xf0] sm:$0xff]
        %v349 = vld [vmem:[%s202 + $0xf8] sm:$0xff]
        %s350 = scalar_lea.vmem [#allocation2], 24
        %351 = vst [vmem:[%s350 + $0x1] sm:$0xff] %v318
        %352 = vst [vmem:[%s350 + $0x9] sm:$0xff] %v319
        %353 = vst [vmem:[%s350 + $0x19] sm:$0xff] %v320
        %354 = vst [vmem:[%s350 + $0x21] sm:$0xff] %v321
        %355 = vst [vmem:[%s350 + $0x31] sm:$0xff] %v322
        %356 = vst [vmem:[%s350 + $0x39] sm:$0xff] %v323
        %357 = vst [vmem:[%s350 + $0x49] sm:$0xff] %v324
        %358 = vst [vmem:[%s350 + $0x51] sm:$0xff] %v325
        %359 = vst [vmem:[%s350 + $0x61] sm:$0xff] %v326
        %360 = vst [vmem:[%s350 + $0x69] sm:$0xff] %v327
        %361 = vst [vmem:[%s350 + $0x79] sm:$0xff] %v328
        %362 = vst [vmem:[%s350 + $0x81] sm:$0xff] %v329
        %363 = vst [vmem:[%s350 + $0x91] sm:$0xff] %v330
        %364 = vst [vmem:[%s350 + $0x99] sm:$0xff] %v331
        %365 = vst [vmem:[%s350 + $0xa9] sm:$0xff] %v332
        %366 = vst [vmem:[%s350 + $0xb1] sm:$0xff] %v333
        %367 = vst [vmem:[%s350 + $0xc1] sm:$0xff] %v334
        %368 = vst [vmem:[%s350 + $0xc9] sm:$0xff] %v335
        %369 = vst [vmem:[%s350 + $0xd9] sm:$0xff] %v336
        %370 = vst [vmem:[%s350 + $0xe1] sm:$0xff] %v337
        %371 = vst [vmem:[%s350 + $0xf1] sm:$0xff] %v338
        %372 = vst [vmem:[%s350 + $0xf9] sm:$0xff] %v339
        %373 = vst [vmem:[%s350 + $0x109] sm:$0xff] %v340
        %374 = vst [vmem:[%s350 + $0x111] sm:$0xff] %v341
        %375 = vst [vmem:[%s350 + $0x121] sm:$0xff] %v342
        %376 = vst [vmem:[%s350 + $0x129] sm:$0xff] %v343
        %377 = vst [vmem:[%s350 + $0x139] sm:$0xff] %v344
        %378 = vst [vmem:[%s350 + $0x141] sm:$0xff] %v345
        %379 = vst [vmem:[%s350 + $0x151] sm:$0xff] %v346
        %380 = vst [vmem:[%s350 + $0x159] sm:$0xff] %v347
        %381 = vst [vmem:[%s350 + $0x169] sm:$0xff] %v348
        %382 = vst [vmem:[%s350 + $0x171] sm:$0xff] %v349
        %v383 = vld [vmem:[#allocation2] sm:$0xff]
        %v384 = vld [vmem:[#allocation2 + $0x8] sm:$0xff]
        %v385 = vld [vmem:[#allocation2 + $0x10] sm:$0x3]
        %v386 = vld [vmem:[#allocation2 + $0x18] sm:$0xff]
        %v387 = vld [vmem:[#allocation2 + $0x20] sm:$0xff]
        %v388 = vld [vmem:[#allocation2 + $0x28] sm:$0x3]
        %v389 = vld [vmem:[#allocation2 + $0x30] sm:$0xff]
        %v390 = vld [vmem:[#allocation2 + $0x38] sm:$0xff]
        %v391 = vld [vmem:[#allocation2 + $0x40] sm:$0x3]
        %v392 = vld [vmem:[#allocation2 + $0x48] sm:$0xff]
        %v393 = vld [vmem:[#allocation2 + $0x50] sm:$0xff]
        %v394 = vld [vmem:[#allocation2 + $0x58] sm:$0x3]
        %v395 = vld [vmem:[#allocation2 + $0x60] sm:$0xff]
        %v396 = vld [vmem:[#allocation2 + $0x68] sm:$0xff]
        %v397 = vld [vmem:[#allocation2 + $0x70] sm:$0x3]
        %v398 = vld [vmem:[#allocation2 + $0x78] sm:$0xff]
        %v399 = vld [vmem:[#allocation2 + $0x80] sm:$0xff]
        %v400 = vld [vmem:[#allocation2 + $0x88] sm:$0x3]
        %v401 = vld [vmem:[#allocation2 + $0x90] sm:$0xff]
        %v402 = vld [vmem:[#allocation2 + $0x98] sm:$0xff]
        %v403 = vld [vmem:[#allocation2 + $0xa0] sm:$0x3]
        %v404 = vld [vmem:[#allocation2 + $0xa8] sm:$0xff]
        %v405 = vld [vmem:[#allocation2 + $0xb0] sm:$0xff]
        %v406 = vld [vmem:[#allocation2 + $0xb8] sm:$0x3]
        %v407 = vld [vmem:[#allocation2 + $0xc0] sm:$0xff]
        %v408 = vld [vmem:[#allocation2 + $0xc8] sm:$0xff]
        %v409 = vld [vmem:[#allocation2 + $0xd0] sm:$0x3]
        %v410 = vld [vmem:[#allocation2 + $0xd8] sm:$0xff]
        %v411 = vld [vmem:[#allocation2 + $0xe0] sm:$0xff]
        %v412 = vld [vmem:[#allocation2 + $0xe8] sm:$0x3]
        %v413 = vld [vmem:[#allocation2 + $0xf0] sm:$0xff]
        %v414 = vld [vmem:[#allocation2 + $0xf8] sm:$0xff]
        %v415 = vld [vmem:[#allocation2 + $0x100] sm:$0x3]
        %v416 = vld [vmem:[#allocation2 + $0x108] sm:$0xff]
        %v417 = vld [vmem:[#allocation2 + $0x110] sm:$0xff]
        %v418 = vld [vmem:[#allocation2 + $0x118] sm:$0x3]
        %v419 = vld [vmem:[#allocation2 + $0x120] sm:$0xff]
        %v420 = vld [vmem:[#allocation2 + $0x128] sm:$0xff]
        %v421 = vld [vmem:[#allocation2 + $0x130] sm:$0x3]
        %v422 = vld [vmem:[#allocation2 + $0x138] sm:$0xff]
        %v423 = vld [vmem:[#allocation2 + $0x140] sm:$0xff]
        %v424 = vld [vmem:[#allocation2 + $0x148] sm:$0x3]
        %v425 = vld [vmem:[#allocation2 + $0x150] sm:$0xff]
        %v426 = vld [vmem:[#allocation2 + $0x158] sm:$0xff]
        %v427 = vld [vmem:[#allocation2 + $0x160] sm:$0x3]
        %v428 = vld [vmem:[#allocation2 + $0x168] sm:$0xff]
        %v429 = vld [vmem:[#allocation2 + $0x170] sm:$0xff]
        %v430 = vld [vmem:[#allocation2 + $0x178] sm:$0x3]
        %v431 = vld [vmem:[#allocation2 + $0x180] sm:$0xff]
        %v432 = vld [vmem:[#allocation2 + $0x188] sm:$0xff]
        %v433 = vld [vmem:[#allocation2 + $0x190] sm:$0x3]
        %v434 = vld [vmem:[#allocation2 + $0x198] sm:$0xff]
        %v435 = vld [vmem:[#allocation2 + $0x1a0] sm:$0xff]
        %v436 = vld [vmem:[#allocation2 + $0x1a8] sm:$0x3]
        %v437 = vpack.c.bf16 %v384, %v383
        %v438 = vpack.c.bf16 %v385, %v385
        %v439 = vpack.c.bf16 %v387, %v386
        %v440 = vpack.c.bf16 %v388, %v388
        %v441 = vpack.c.bf16 %v390, %v389
        %v442 = vpack.c.bf16 %v391, %v391
        %v443 = vpack.c.bf16 %v393, %v392
        %v444 = vpack.c.bf16 %v394, %v394
        %v445 = vpack.c.bf16 %v396, %v395
        %v446 = vpack.c.bf16 %v397, %v397
        %v447 = vpack.c.bf16 %v399, %v398
        %v448 = vpack.c.bf16 %v400, %v400
        %v449 = vpack.c.bf16 %v402, %v401
        %v450 = vpack.c.bf16 %v403, %v403
        %v451 = vpack.c.bf16 %v405, %v404
        %v452 = vpack.c.bf16 %v406, %v406
        %v453 = vpack.c.bf16 %v408, %v407
        %v454 = vpack.c.bf16 %v409, %v409
        %v455 = vpack.c.bf16 %v411, %v410
        %v456 = vpack.c.bf16 %v412, %v412
        %v457 = vpack.c.bf16 %v414, %v413
        %v458 = vpack.c.bf16 %v415, %v415
        %v459 = vpack.c.bf16 %v417, %v416
        %v460 = vpack.c.bf16 %v418, %v418
        %v461 = vpack.c.bf16 %v420, %v419
        %v462 = vpack.c.bf16 %v421, %v421
        %v463 = vpack.c.bf16 %v423, %v422
        %v464 = vpack.c.bf16 %v424, %v424
        %v465 = vpack.c.bf16 %v426, %v425
        %v466 = vpack.c.bf16 %v427, %v427
        %v467 = vpack.c.bf16 %v429, %v428
        %v468 = vpack.c.bf16 %v430, %v430
        %v469 = vpack.c.bf16 %v432, %v431
        %v470 = vpack.c.bf16 %v433, %v433
        %v471 = vpack.c.bf16 %v435, %v434
        %v472 = vpack.c.bf16 %v436, %v436
        %v473 = vunpack.c.l.bf16 %v437
        %v474 = vunpack.c.h.bf16 %v437
        %v475 = vunpack.c.l.bf16 %v438
        %v476 = vunpack.c.l.bf16 %v439
        %v477 = vunpack.c.h.bf16 %v439
        %v478 = vunpack.c.l.bf16 %v440
        %v479 = vunpack.c.l.bf16 %v441
        %v480 = vunpack.c.h.bf16 %v441
        %v481 = vunpack.c.l.bf16 %v442
        %v482 = vunpack.c.l.bf16 %v443
        %v483 = vunpack.c.h.bf16 %v443
        %v484 = vunpack.c.l.bf16 %v444
        %v485 = vunpack.c.l.bf16 %v445
        %v486 = vunpack.c.h.bf16 %v445
        %v487 = vunpack.c.l.bf16 %v446
        %v488 = vunpack.c.l.bf16 %v447
        %v489 = vunpack.c.h.bf16 %v447
        %v490 = vunpack.c.l.bf16 %v448
        %v491 = vunpack.c.l.bf16 %v449
        %v492 = vunpack.c.h.bf16 %v449
        %v493 = vunpack.c.l.bf16 %v450
        %v494 = vunpack.c.l.bf16 %v451
        %v495 = vunpack.c.h.bf16 %v451
        %v496 = vunpack.c.l.bf16 %v452
        %v497 = vunpack.c.l.bf16 %v453
        %v498 = vunpack.c.h.bf16 %v453
        %v499 = vunpack.c.l.bf16 %v454
        %v500 = vunpack.c.l.bf16 %v455
        %v501 = vunpack.c.h.bf16 %v455
        %v502 = vunpack.c.l.bf16 %v456
        %v503 = vunpack.c.l.bf16 %v457
        %v504 = vunpack.c.h.bf16 %v457
        %v505 = vunpack.c.l.bf16 %v458
        %v506 = vunpack.c.l.bf16 %v459
        %v507 = vunpack.c.h.bf16 %v459
        %v508 = vunpack.c.l.bf16 %v460
        %v509 = vunpack.c.l.bf16 %v461
        %v510 = vunpack.c.h.bf16 %v461
        %v511 = vunpack.c.l.bf16 %v462
        %v512 = vunpack.c.l.bf16 %v463
        %v513 = vunpack.c.h.bf16 %v463
        %v514 = vunpack.c.l.bf16 %v464
        %v515 = vunpack.c.l.bf16 %v465
        %v516 = vunpack.c.h.bf16 %v465
        %v517 = vunpack.c.l.bf16 %v466
        %v518 = vunpack.c.l.bf16 %v467
        %v519 = vunpack.c.h.bf16 %v467
        %v520 = vunpack.c.l.bf16 %v468
        %v521 = vunpack.c.l.bf16 %v469
        %v522 = vunpack.c.h.bf16 %v469
        %v523 = vunpack.c.l.bf16 %v470
        %v524 = vunpack.c.l.bf16 %v471
        %v525 = vunpack.c.h.bf16 %v471
        %v526 = vunpack.c.l.bf16 %v472
        %v527 = vsub.f32 %v383, %v473
        %v528 = vsub.f32 %v384, %v474
        %v529 = vsub.f32 %v385, %v475
        %v530 = vsub.f32 %v386, %v476
        %v531 = vsub.f32 %v387, %v477
        %v532 = vsub.f32 %v388, %v478
        %v533 = vsub.f32 %v389, %v479
        %v534 = vsub.f32 %v390, %v480
        %v535 = vsub.f32 %v391, %v481
        %v536 = vsub.f32 %v392, %v482
        %v537 = vsub.f32 %v393, %v483
        %v538 = vsub.f32 %v394, %v484
        %v539 = vsub.f32 %v395, %v485
        %v540 = vsub.f32 %v396, %v486
        %v541 = vsub.f32 %v397, %v487
        %v542 = vsub.f32 %v398, %v488
        %v543 = vsub.f32 %v399, %v489
        %v544 = vsub.f32 %v400, %v490
        %v545 = vsub.f32 %v401, %v491
        %v546 = vsub.f32 %v402, %v492
        %v547 = vsub.f32 %v403, %v493
        %v548 = vsub.f32 %v404, %v494
        %v549 = vsub.f32 %v405, %v495
        %v550 = vsub.f32 %v406, %v496
        %v551 = vsub.f32 %v407, %v497
        %v552 = vsub.f32 %v408, %v498
        %v553 = vsub.f32 %v409, %v499
        %v554 = vsub.f32 %v410, %v500
        %v555 = vsub.f32 %v411, %v501
        %v556 = vsub.f32 %v412, %v502
        %v557 = vsub.f32 %v413, %v503
        %v558 = vsub.f32 %v414, %v504
        %v559 = vsub.f32 %v415, %v505
        %v560 = vsub.f32 %v416, %v506
        %v561 = vsub.f32 %v417, %v507
        %v562 = vsub.f32 %v418, %v508
        %v563 = vsub.f32 %v419, %v509
        %v564 = vsub.f32 %v420, %v510
        %v565 = vsub.f32 %v421, %v511
        %v566 = vsub.f32 %v422, %v512
        %v567 = vsub.f32 %v423, %v513
        %v568 = vsub.f32 %v424, %v514
        %v569 = vsub.f32 %v425, %v515
        %v570 = vsub.f32 %v426, %v516
        %v571 = vsub.f32 %v427, %v517
        %v572 = vsub.f32 %v428, %v518
        %v573 = vsub.f32 %v429, %v519
        %v574 = vsub.f32 %v430, %v520
        %v575 = vsub.f32 %v431, %v521
        %v576 = vsub.f32 %v432, %v522
        %v577 = vsub.f32 %v433, %v523
        %v578 = vsub.f32 %v434, %v524
        %v579 = vsub.f32 %v435, %v525
        %v580 = vsub.f32 %v436, %v526
        %v581 = vpack.c.bf16 %v528, %v527
        %v582 = vpack.c.bf16 %v529, %v529
        %v583 = vpack.c.bf16 %v531, %v530
        %v584 = vpack.c.bf16 %v532, %v532
        %v585 = vpack.c.bf16 %v534, %v533
        %v586 = vpack.c.bf16 %v535, %v535
        %v587 = vpack.c.bf16 %v537, %v536
        %v588 = vpack.c.bf16 %v538, %v538
        %v589 = vpack.c.bf16 %v540, %v539
        %v590 = vpack.c.bf16 %v541, %v541
        %v591 = vpack.c.bf16 %v543, %v542
        %v592 = vpack.c.bf16 %v544, %v544
        %v593 = vpack.c.bf16 %v546, %v545
        %v594 = vpack.c.bf16 %v547, %v547
        %v595 = vpack.c.bf16 %v549, %v548
        %v596 = vpack.c.bf16 %v550, %v550
        %v597 = vpack.c.bf16 %v552, %v551
        %v598 = vpack.c.bf16 %v553, %v553
        %v599 = vpack.c.bf16 %v555, %v554
        %v600 = vpack.c.bf16 %v556, %v556
        %v601 = vpack.c.bf16 %v558, %v557
        %v602 = vpack.c.bf16 %v559, %v559
        %v603 = vpack.c.bf16 %v561, %v560
        %v604 = vpack.c.bf16 %v562, %v562
        %v605 = vpack.c.bf16 %v564, %v563
        %v606 = vpack.c.bf16 %v565, %v565
        %v607 = vpack.c.bf16 %v567, %v566
        %v608 = vpack.c.bf16 %v568, %v568
        %v609 = vpack.c.bf16 %v570, %v569
        %v610 = vpack.c.bf16 %v571, %v571
        %v611 = vpack.c.bf16 %v573, %v572
        %v612 = vpack.c.bf16 %v574, %v574
        %v613 = vpack.c.bf16 %v576, %v575
        %v614 = vpack.c.bf16 %v577, %v577
        %v615 = vpack.c.bf16 %v579, %v578
        %v616 = vpack.c.bf16 %v580, %v580
        %v617 = vld [vmem:[#allocation8] sm:$0xff]
        %v618 = vld [vmem:[#allocation8 + $0x8] sm:$0xff]
        %v619 = vld [vmem:[#allocation8 + $0x10] sm:$0xff]
        %v620 = vld [vmem:[#allocation8 + $0x18] sm:$0xff]
        %v621 = vld [vmem:[#allocation8 + $0x20] sm:$0xff]
        %v622 = vld [vmem:[#allocation8 + $0x28] sm:$0xff]
        %v623 = vld [vmem:[#allocation8 + $0x30] sm:$0xff]
        %v624 = vld [vmem:[#allocation8 + $0x38] sm:$0xff]
        %v625 = vld [vmem:[#allocation8 + $0x40] sm:$0xff]
        %v626 = vld [vmem:[#allocation8 + $0x48] sm:$0xff]
        %v627 = vld [vmem:[#allocation8 + $0x50] sm:$0xff]
        %v628 = vld [vmem:[#allocation8 + $0x58] sm:$0xff]
        %v629 = vld [vmem:[#allocation8 + $0x60] sm:$0xff]
        %v630 = vld [vmem:[#allocation8 + $0x68] sm:$0xff]
        %v631 = vld [vmem:[#allocation8 + $0x70] sm:$0xff]
        %v632 = vld [vmem:[#allocation8 + $0x78] sm:$0xff]
        %v633 = vld [vmem:[#allocation8 + $0x80] sm:$0xff]
        %v634 = vld [vmem:[#allocation8 + $0x88] sm:$0xff]
        %v635 = vld [vmem:[#allocation8 + $0x90] sm:$0xff]
        %v636 = vld [vmem:[#allocation8 + $0x98] sm:$0xff]
        %v637 = vld [vmem:[#allocation8 + $0xa0] sm:$0xff]
        %v638 = vld [vmem:[#allocation8 + $0xa8] sm:$0xff]
        %v639 = vld [vmem:[#allocation8 + $0xb0] sm:$0xff]
        %v640 = vld [vmem:[#allocation8 + $0xb8] sm:$0xff]
        %v641 = vld [vmem:[#allocation8 + $0xc0] sm:$0xff]
        %v642 = vld [vmem:[#allocation8 + $0xc8] sm:$0xff]
        %v643 = vld [vmem:[#allocation8 + $0xd0] sm:$0xff]
        %v644 = vld [vmem:[#allocation8 + $0xd8] sm:$0xff]
        %v645 = vld [vmem:[#allocation8 + $0xe0] sm:$0xff]
        %v646 = vld [vmem:[#allocation8 + $0xe8] sm:$0xff]
        %v647 = vld [vmem:[#allocation8 + $0xf0] sm:$0xff]
        %v648 = vld [vmem:[#allocation8 + $0xf8] sm:$0xff]
        %v649 = vld [vmem:[#allocation8 + $0x100] sm:$0xff]
        %v650 = vld [vmem:[#allocation8 + $0x108] sm:$0xff]
        %v651 = vld [vmem:[#allocation8 + $0x110] sm:$0xff]
        %v652 = vld [vmem:[#allocation8 + $0x118] sm:$0xff]
        %v653 = vld [vmem:[#allocation8 + $0x120] sm:$0xff]
        %v654 = vld [vmem:[#allocation8 + $0x128] sm:$0xff]
        %v655 = vld [vmem:[#allocation8 + $0x130] sm:$0xff]
        %v656 = vld [vmem:[#allocation8 + $0x138] sm:$0xff]
        %v657 = vld [vmem:[#allocation8 + $0x140] sm:$0xff]
        %v658 = vld [vmem:[#allocation8 + $0x148] sm:$0xff]
        %v659 = vld [vmem:[#allocation8 + $0x150] sm:$0xff]
        %v660 = vld [vmem:[#allocation8 + $0x158] sm:$0xff]
        %v661 = vld [vmem:[#allocation8 + $0x160] sm:$0xff]
        %v662 = vld [vmem:[#allocation8 + $0x168] sm:$0xff]
        %v663 = vld [vmem:[#allocation8 + $0x170] sm:$0xff]
        %v664 = vld [vmem:[#allocation8 + $0x178] sm:$0xff]
        %v665 = vld [vmem:[#allocation8 + $0x180] sm:$0xff]
        %v666 = vld [vmem:[#allocation8 + $0x188] sm:$0xff]
        %v667 = vld [vmem:[#allocation8 + $0x190] sm:$0xff]
        %v668 = vld [vmem:[#allocation8 + $0x198] sm:$0xff]
        %v669 = vld [vmem:[#allocation8 + $0x1a0] sm:$0xff]
        %v670 = vld [vmem:[#allocation8 + $0x1a8] sm:$0xff]
        %v671 = vld [vmem:[#allocation8 + $0x1b0] sm:$0xff]
        %v672 = vld [vmem:[#allocation8 + $0x1b8] sm:$0xff]
        %v673 = vld [vmem:[#allocation8 + $0x1c0] sm:$0xff]
        %v674 = vld [vmem:[#allocation8 + $0x1c8] sm:$0xff]
        %v675 = vld [vmem:[#allocation8 + $0x1d0] sm:$0xff]
        %v676 = vld [vmem:[#allocation8 + $0x1d8] sm:$0xff]
        %v677 = vld [vmem:[#allocation8 + $0x1e0] sm:$0xff]
        %v678 = vld [vmem:[#allocation8 + $0x1e8] sm:$0xff]
        %v679 = vld [vmem:[#allocation8 + $0x1f0] sm:$0xff]
        %v680 = vld [vmem:[#allocation8 + $0x1f8] sm:$0xff]
        %v681 = vld [vmem:[#allocation8 + $0x200] sm:$0xff]
        %v682 = vld [vmem:[#allocation8 + $0x208] sm:$0xff]
        %v683 = vld [vmem:[#allocation8 + $0x210] sm:$0xff]
        %v684 = vld [vmem:[#allocation8 + $0x218] sm:$0xff]
        %v685 = vld [vmem:[#allocation8 + $0x220] sm:$0xff]
        %v686 = vld [vmem:[#allocation8 + $0x228] sm:$0xff]
        %v687 = vld [vmem:[#allocation8 + $0x230] sm:$0xff]
        %v688 = vld [vmem:[#allocation8 + $0x238] sm:$0xff]
        %v689 = vld [vmem:[#allocation8 + $0x240] sm:$0xff]
        %v690 = vld [vmem:[#allocation8 + $0x248] sm:$0xff]
        %v691 = vld [vmem:[#allocation8 + $0x250] sm:$0xff]
        %v692 = vld [vmem:[#allocation8 + $0x258] sm:$0xff]
        %v693 = vld [vmem:[#allocation8 + $0x260] sm:$0xff]
        %v694 = vld [vmem:[#allocation8 + $0x268] sm:$0xff]
        %v695 = vld [vmem:[#allocation8 + $0x270] sm:$0xff]
        %v696 = vld [vmem:[#allocation8 + $0x278] sm:$0xff]
        %v697 = vld [vmem:[#allocation8 + $0x280] sm:$0xff]
        %v698 = vld [vmem:[#allocation8 + $0x288] sm:$0xff]
        %v699 = vld [vmem:[#allocation8 + $0x290] sm:$0xff]
        %v700 = vld [vmem:[#allocation8 + $0x298] sm:$0xff]
        %v701 = vld [vmem:[#allocation8 + $0x2a0] sm:$0xff]
        %v702 = vld [vmem:[#allocation8 + $0x2a8] sm:$0xff]
        %v703 = vld [vmem:[#allocation8 + $0x2b0] sm:$0xff]
        %v704 = vld [vmem:[#allocation8 + $0x2b8] sm:$0xff]
        %v705 = vld [vmem:[#allocation8 + $0x2c0] sm:$0xff]
        %v706 = vld [vmem:[#allocation8 + $0x2c8] sm:$0xff]
        %v707 = vld [vmem:[#allocation8 + $0x2d0] sm:$0xff]
        %v708 = vld [vmem:[#allocation8 + $0x2d8] sm:$0xff]
        %v709 = vld [vmem:[#allocation8 + $0x2e0] sm:$0xff]
        %v710 = vld [vmem:[#allocation8 + $0x2e8] sm:$0xff]
        %v711 = vld [vmem:[#allocation8 + $0x2f0] sm:$0xff]
        %v712 = vld [vmem:[#allocation8 + $0x2f8] sm:$0xff]
        %v713 = vld [vmem:[#allocation8 + $0x300] sm:$0xff]
        %v714 = vld [vmem:[#allocation8 + $0x308] sm:$0xff]
        %v715 = vld [vmem:[#allocation8 + $0x310] sm:$0xff]
        %v716 = vld [vmem:[#allocation8 + $0x318] sm:$0xff]
        %v717 = vld [vmem:[#allocation8 + $0x320] sm:$0xff]
        %v718 = vld [vmem:[#allocation8 + $0x328] sm:$0xff]
        %v719 = vld [vmem:[#allocation8 + $0x330] sm:$0xff]
        %v720 = vld [vmem:[#allocation8 + $0x338] sm:$0xff]
        %v721 = vld [vmem:[#allocation8 + $0x340] sm:$0xff]
        %v722 = vld [vmem:[#allocation8 + $0x348] sm:$0xff]
        %v723 = vld [vmem:[#allocation8 + $0x350] sm:$0xff]
        %v724 = vld [vmem:[#allocation8 + $0x358] sm:$0xff]
        %v725 = vld [vmem:[#allocation8 + $0x360] sm:$0xff]
        %v726 = vld [vmem:[#allocation8 + $0x368] sm:$0xff]
        %v727 = vld [vmem:[#allocation8 + $0x370] sm:$0xff]
        %v728 = vld [vmem:[#allocation8 + $0x378] sm:$0xff]
        %v729 = vld [vmem:[#allocation8 + $0x380] sm:$0xff]
        %v730 = vld [vmem:[#allocation8 + $0x388] sm:$0xff]
        %v731 = vld [vmem:[#allocation8 + $0x390] sm:$0xff]
        %v732 = vld [vmem:[#allocation8 + $0x398] sm:$0xff]
        %v733 = vld [vmem:[#allocation8 + $0x3a0] sm:$0xff]
        %v734 = vld [vmem:[#allocation8 + $0x3a8] sm:$0xff]
        %v735 = vld [vmem:[#allocation8 + $0x3b0] sm:$0xff]
        %v736 = vld [vmem:[#allocation8 + $0x3b8] sm:$0xff]
        %v737 = vld [vmem:[#allocation8 + $0x3c0] sm:$0xff]
        %v738 = vld [vmem:[#allocation8 + $0x3c8] sm:$0xff]
        %v739 = vld [vmem:[#allocation8 + $0x3d0] sm:$0xff]
        %v740 = vld [vmem:[#allocation8 + $0x3d8] sm:$0xff]
        %v741 = vld [vmem:[#allocation8 + $0x3e0] sm:$0xff]
        %v742 = vld [vmem:[#allocation8 + $0x3e8] sm:$0xff]
        %v743 = vld [vmem:[#allocation8 + $0x3f0] sm:$0xff]
        %v744 = vld [vmem:[#allocation8 + $0x3f8] sm:$0xff]
        %v745 = vld [vmem:[#allocation8 + $0x400] sm:$0xff]
        %v746 = vld [vmem:[#allocation8 + $0x408] sm:$0xff]
        %v747 = vld [vmem:[#allocation8 + $0x410] sm:$0xff]
        %v748 = vld [vmem:[#allocation8 + $0x418] sm:$0xff]
        %v749 = vld [vmem:[#allocation8 + $0x420] sm:$0xff]
        %v750 = vld [vmem:[#allocation8 + $0x428] sm:$0xff]
        %v751 = vld [vmem:[#allocation8 + $0x430] sm:$0xff]
        %v752 = vld [vmem:[#allocation8 + $0x438] sm:$0xff]
        %v753 = vld [vmem:[#allocation8 + $0x440] sm:$0xff]
        %v754 = vld [vmem:[#allocation8 + $0x448] sm:$0xff]
        %v755 = vld [vmem:[#allocation8 + $0x450] sm:$0xff]
        %v756 = vld [vmem:[#allocation8 + $0x458] sm:$0xff]
        %v757 = vld [vmem:[#allocation8 + $0x460] sm:$0xff]
        %v758 = vld [vmem:[#allocation8 + $0x468] sm:$0xff]
        %v759 = vld [vmem:[#allocation8 + $0x470] sm:$0xff]
        %v760 = vld [vmem:[#allocation8 + $0x478] sm:$0xff]
        %v761 = vpack.c.bf16 %v618, %v617
        %v762 = vpack.c.bf16 %v620, %v619
        %v763 = vpack.c.bf16 %v622, %v621
        %v764 = vpack.c.bf16 %v624, %v623
        %v765 = vpack.c.bf16 %v626, %v625
        %v766 = vpack.c.bf16 %v628, %v627
        %v767 = vpack.c.bf16 %v630, %v629
        %v768 = vpack.c.bf16 %v632, %v631
        %v769 = vpack.c.bf16 %v634, %v633
        %v770 = vpack.c.bf16 %v636, %v635
        %v771 = vpack.c.bf16 %v638, %v637
        %v772 = vpack.c.bf16 %v640, %v639
        %v773 = vpack.c.bf16 %v642, %v641
        %v774 = vpack.c.bf16 %v644, %v643
        %v775 = vpack.c.bf16 %v646, %v645
        %v776 = vpack.c.bf16 %v648, %v647
        %v777 = vpack.c.bf16 %v650, %v649
        %v778 = vpack.c.bf16 %v652, %v651
        %v779 = vpack.c.bf16 %v654, %v653
        %v780 = vpack.c.bf16 %v656, %v655
        %v781 = vpack.c.bf16 %v658, %v657
        %v782 = vpack.c.bf16 %v660, %v659
        %v783 = vpack.c.bf16 %v662, %v661
        %v784 = vpack.c.bf16 %v664, %v663
        %v785 = vpack.c.bf16 %v666, %v665
        %v786 = vpack.c.bf16 %v668, %v667
        %v787 = vpack.c.bf16 %v670, %v669
        %v788 = vpack.c.bf16 %v672, %v671
        %v789 = vpack.c.bf16 %v674, %v673
        %v790 = vpack.c.bf16 %v676, %v675
        %v791 = vpack.c.bf16 %v678, %v677
        %v792 = vpack.c.bf16 %v680, %v679
        %v793 = vpack.c.bf16 %v682, %v681
        %v794 = vpack.c.bf16 %v684, %v683
        %v795 = vpack.c.bf16 %v686, %v685
        %v796 = vpack.c.bf16 %v688, %v687
        %v797 = vpack.c.bf16 %v690, %v689
        %v798 = vpack.c.bf16 %v692, %v691
        %v799 = vpack.c.bf16 %v694, %v693
        %v800 = vpack.c.bf16 %v696, %v695
        %v801 = vpack.c.bf16 %v698, %v697
        %v802 = vpack.c.bf16 %v700, %v699
        %v803 = vpack.c.bf16 %v702, %v701
        %v804 = vpack.c.bf16 %v704, %v703
        %v805 = vpack.c.bf16 %v706, %v705
        %v806 = vpack.c.bf16 %v708, %v707
        %v807 = vpack.c.bf16 %v710, %v709
        %v808 = vpack.c.bf16 %v712, %v711
        %v809 = vpack.c.bf16 %v714, %v713
        %v810 = vpack.c.bf16 %v716, %v715
        %v811 = vpack.c.bf16 %v718, %v717
        %v812 = vpack.c.bf16 %v720, %v719
        %v813 = vpack.c.bf16 %v722, %v721
        %v814 = vpack.c.bf16 %v724, %v723
        %v815 = vpack.c.bf16 %v726, %v725
        %v816 = vpack.c.bf16 %v728, %v727
        %v817 = vpack.c.bf16 %v730, %v729
        %v818 = vpack.c.bf16 %v732, %v731
        %v819 = vpack.c.bf16 %v734, %v733
        %v820 = vpack.c.bf16 %v736, %v735
        %v821 = vpack.c.bf16 %v738, %v737
        %v822 = vpack.c.bf16 %v740, %v739
        %v823 = vpack.c.bf16 %v742, %v741
        %v824 = vpack.c.bf16 %v744, %v743
        %v825 = vpack.c.bf16 %v746, %v745
        %v826 = vpack.c.bf16 %v748, %v747
        %v827 = vpack.c.bf16 %v750, %v749
        %v828 = vpack.c.bf16 %v752, %v751
        %v829 = vpack.c.bf16 %v754, %v753
        %v830 = vpack.c.bf16 %v756, %v755
        %v831 = vpack.c.bf16 %v758, %v757
        %v832 = vpack.c.bf16 %v760, %v759
        %v833 = vunpack.c.l.bf16 %v761
        %v834 = vunpack.c.h.bf16 %v761
        %v835 = vunpack.c.l.bf16 %v762
        %v836 = vunpack.c.h.bf16 %v762
        %v837 = vunpack.c.l.bf16 %v763
        %v838 = vunpack.c.h.bf16 %v763
        %v839 = vunpack.c.l.bf16 %v764
        %v840 = vunpack.c.h.bf16 %v764
        %v841 = vunpack.c.l.bf16 %v765
        %v842 = vunpack.c.h.bf16 %v765
        %v843 = vunpack.c.l.bf16 %v766
        %v844 = vunpack.c.h.bf16 %v766
        %v845 = vunpack.c.l.bf16 %v767
        %v846 = vunpack.c.h.bf16 %v767
        %v847 = vunpack.c.l.bf16 %v768
        %v848 = vunpack.c.h.bf16 %v768
        %v849 = vunpack.c.l.bf16 %v769
        %v850 = vunpack.c.h.bf16 %v769
        %v851 = vunpack.c.l.bf16 %v770
        %v852 = vunpack.c.h.bf16 %v770
        %v853 = vunpack.c.l.bf16 %v771
        %v854 = vunpack.c.h.bf16 %v771
        %v855 = vunpack.c.l.bf16 %v772
        %v856 = vunpack.c.h.bf16 %v772
        %v857 = vunpack.c.l.bf16 %v773
        %v858 = vunpack.c.h.bf16 %v773
        %v859 = vunpack.c.l.bf16 %v774
        %v860 = vunpack.c.h.bf16 %v774
        %v861 = vunpack.c.l.bf16 %v775
        %v862 = vunpack.c.h.bf16 %v775
        %v863 = vunpack.c.l.bf16 %v776
        %v864 = vunpack.c.h.bf16 %v776
        %v865 = vunpack.c.l.bf16 %v777
        %v866 = vunpack.c.h.bf16 %v777
        %v867 = vunpack.c.l.bf16 %v778
        %v868 = vunpack.c.h.bf16 %v778
        %v869 = vunpack.c.l.bf16 %v779
        %v870 = vunpack.c.h.bf16 %v779
        %v871 = vunpack.c.l.bf16 %v780
        %v872 = vunpack.c.h.bf16 %v780
        %v873 = vunpack.c.l.bf16 %v781
        %v874 = vunpack.c.h.bf16 %v781
        %v875 = vunpack.c.l.bf16 %v782
        %v876 = vunpack.c.h.bf16 %v782
        %v877 = vunpack.c.l.bf16 %v783
        %v878 = vunpack.c.h.bf16 %v783
        %v879 = vunpack.c.l.bf16 %v784
        %v880 = vunpack.c.h.bf16 %v784
        %v881 = vunpack.c.l.bf16 %v785
        %v882 = vunpack.c.h.bf16 %v785
        %v883 = vunpack.c.l.bf16 %v786
        %v884 = vunpack.c.h.bf16 %v786
        %v885 = vunpack.c.l.bf16 %v787
        %v886 = vunpack.c.h.bf16 %v787
        %v887 = vunpack.c.l.bf16 %v788
        %v888 = vunpack.c.h.bf16 %v788
        %v889 = vunpack.c.l.bf16 %v789
        %v890 = vunpack.c.h.bf16 %v789
        %v891 = vunpack.c.l.bf16 %v790
        %v892 = vunpack.c.h.bf16 %v790
        %v893 = vunpack.c.l.bf16 %v791
        %v894 = vunpack.c.h.bf16 %v791
        %v895 = vunpack.c.l.bf16 %v792
        %v896 = vunpack.c.h.bf16 %v792
        %v897 = vunpack.c.l.bf16 %v793
        %v898 = vunpack.c.h.bf16 %v793
        %v899 = vunpack.c.l.bf16 %v794
        %v900 = vunpack.c.h.bf16 %v794
        %v901 = vunpack.c.l.bf16 %v795
        %v902 = vunpack.c.h.bf16 %v795
        %v903 = vunpack.c.l.bf16 %v796
        %v904 = vunpack.c.h.bf16 %v796
        %v905 = vunpack.c.l.bf16 %v797
        %v906 = vunpack.c.h.bf16 %v797
        %v907 = vunpack.c.l.bf16 %v798
        %v908 = vunpack.c.h.bf16 %v798
        %v909 = vunpack.c.l.bf16 %v799
        %v910 = vunpack.c.h.bf16 %v799
        %v911 = vunpack.c.l.bf16 %v800
        %v912 = vunpack.c.h.bf16 %v800
        %v913 = vunpack.c.l.bf16 %v801
        %v914 = vunpack.c.h.bf16 %v801
        %v915 = vunpack.c.l.bf16 %v802
        %v916 = vunpack.c.h.bf16 %v802
        %v917 = vunpack.c.l.bf16 %v803
        %v918 = vunpack.c.h.bf16 %v803
        %v919 = vunpack.c.l.bf16 %v804
        %v920 = vunpack.c.h.bf16 %v804
        %v921 = vunpack.c.l.bf16 %v805
        %v922 = vunpack.c.h.bf16 %v805
        %v923 = vunpack.c.l.bf16 %v806
        %v924 = vunpack.c.h.bf16 %v806
        %v925 = vunpack.c.l.bf16 %v807
        %v926 = vunpack.c.h.bf16 %v807
        %v927 = vunpack.c.l.bf16 %v808
        %v928 = vunpack.c.h.bf16 %v808
        %v929 = vunpack.c.l.bf16 %v809
        %v930 = vunpack.c.h.bf16 %v809
        %v931 = vunpack.c.l.bf16 %v810
        %v932 = vunpack.c.h.bf16 %v810
        %v933 = vunpack.c.l.bf16 %v811
        %v934 = vunpack.c.h.bf16 %v811
        %v935 = vunpack.c.l.bf16 %v812
        %v936 = vunpack.c.h.bf16 %v812
        %v937 = vunpack.c.l.bf16 %v813
        %v938 = vunpack.c.h.bf16 %v813
        %v939 = vunpack.c.l.bf16 %v814
        %v940 = vunpack.c.h.bf16 %v814
        %v941 = vunpack.c.l.bf16 %v815
        %v942 = vunpack.c.h.bf16 %v815
        %v943 = vunpack.c.l.bf16 %v816
        %v944 = vunpack.c.h.bf16 %v816
        %v945 = vunpack.c.l.bf16 %v817
        %v946 = vunpack.c.h.bf16 %v817
        %v947 = vunpack.c.l.bf16 %v818
        %v948 = vunpack.c.h.bf16 %v818
        %v949 = vunpack.c.l.bf16 %v819
        %v950 = vunpack.c.h.bf16 %v819
        %v951 = vunpack.c.l.bf16 %v820
        %v952 = vunpack.c.h.bf16 %v820
        %v953 = vunpack.c.l.bf16 %v821
        %v954 = vunpack.c.h.bf16 %v821
        %v955 = vunpack.c.l.bf16 %v822
        %v956 = vunpack.c.h.bf16 %v822
        %v957 = vunpack.c.l.bf16 %v823
        %v958 = vunpack.c.h.bf16 %v823
        %v959 = vunpack.c.l.bf16 %v824
        %v960 = vunpack.c.h.bf16 %v824
        %v961 = vunpack.c.l.bf16 %v825
        %v962 = vunpack.c.h.bf16 %v825
        %v963 = vunpack.c.l.bf16 %v826
        %v964 = vunpack.c.h.bf16 %v826
        %v965 = vunpack.c.l.bf16 %v827
        %v966 = vunpack.c.h.bf16 %v827
        %v967 = vunpack.c.l.bf16 %v828
        %v968 = vunpack.c.h.bf16 %v828
        %v969 = vunpack.c.l.bf16 %v829
        %v970 = vunpack.c.h.bf16 %v829
        %v971 = vunpack.c.l.bf16 %v830
        %v972 = vunpack.c.h.bf16 %v830
        %v973 = vunpack.c.l.bf16 %v831
        %v974 = vunpack.c.h.bf16 %v831
        %v975 = vunpack.c.l.bf16 %v832
        %v976 = vunpack.c.h.bf16 %v832
        %v977 = vsub.f32 %v617, %v833
        %v978 = vsub.f32 %v618, %v834
        %v979 = vsub.f32 %v619, %v835
        %v980 = vsub.f32 %v620, %v836
        %v981 = vsub.f32 %v621, %v837
        %v982 = vsub.f32 %v622, %v838
        %v983 = vsub.f32 %v623, %v839
        %v984 = vsub.f32 %v624, %v840
        %v985 = vsub.f32 %v625, %v841
        %v986 = vsub.f32 %v626, %v842
        %v987 = vsub.f32 %v627, %v843
        %v988 = vsub.f32 %v628, %v844
        %v989 = vsub.f32 %v629, %v845
        %v990 = vsub.f32 %v630, %v846
        %v991 = vsub.f32 %v631, %v847
        %v992 = vsub.f32 %v632, %v848
        %v993 = vsub.f32 %v633, %v849
        %v994 = vsub.f32 %v634, %v850
        %v995 = vsub.f32 %v635, %v851
        %v996 = vsub.f32 %v636, %v852
        %v997 = vsub.f32 %v637, %v853
        %v998 = vsub.f32 %v638, %v854
        %v999 = vsub.f32 %v639, %v855
        %v1000 = vsub.f32 %v640, %v856
        %v1001 = vsub.f32 %v641, %v857
        %v1002 = vsub.f32 %v642, %v858
        %v1003 = vsub.f32 %v643, %v859
        %v1004 = vsub.f32 %v644, %v860
        %v1005 = vsub.f32 %v645, %v861
        %v1006 = vsub.f32 %v646, %v862
        %v1007 = vsub.f32 %v647, %v863
        %v1008 = vsub.f32 %v648, %v864
        %v1009 = vsub.f32 %v649, %v865
        %v1010 = vsub.f32 %v650, %v866
        %v1011 = vsub.f32 %v651, %v867
        %v1012 = vsub.f32 %v652, %v868
        %v1013 = vsub.f32 %v653, %v869
        %v1014 = vsub.f32 %v654, %v870
        %v1015 = vsub.f32 %v655, %v871
        %v1016 = vsub.f32 %v656, %v872
        %v1017 = vsub.f32 %v657, %v873
        %v1018 = vsub.f32 %v658, %v874
        %v1019 = vsub.f32 %v659, %v875
        %v1020 = vsub.f32 %v660, %v876
        %v1021 = vsub.f32 %v661, %v877
        %v1022 = vsub.f32 %v662, %v878
        %v1023 = vsub.f32 %v663, %v879
        %v1024 = vsub.f32 %v664, %v880
        %v1025 = vsub.f32 %v665, %v881
        %v1026 = vsub.f32 %v666, %v882
        %v1027 = vsub.f32 %v667, %v883
        %v1028 = vsub.f32 %v668, %v884
        %v1029 = vsub.f32 %v669, %v885
        %v1030 = vsub.f32 %v670, %v886
        %v1031 = vsub.f32 %v671, %v887
        %v1032 = vsub.f32 %v672, %v888
        %v1033 = vsub.f32 %v673, %v889
        %v1034 = vsub.f32 %v674, %v890
        %v1035 = vsub.f32 %v675, %v891
        %v1036 = vsub.f32 %v676, %v892
        %v1037 = vsub.f32 %v677, %v893
        %v1038 = vsub.f32 %v678, %v894
        %v1039 = vsub.f32 %v679, %v895
        %v1040 = vsub.f32 %v680, %v896
        %v1041 = vsub.f32 %v681, %v897
        %v1042 = vsub.f32 %v682, %v898
        %v1043 = vsub.f32 %v683, %v899
        %v1044 = vsub.f32 %v684, %v900
        %v1045 = vsub.f32 %v685, %v901
        %v1046 = vsub.f32 %v686, %v902
        %v1047 = vsub.f32 %v687, %v903
        %v1048 = vsub.f32 %v688, %v904
        %v1049 = vsub.f32 %v689, %v905
        %v1050 = vsub.f32 %v690, %v906
        %v1051 = vsub.f32 %v691, %v907
        %v1052 = vsub.f32 %v692, %v908
        %v1053 = vsub.f32 %v693, %v909
        %v1054 = vsub.f32 %v694, %v910
        %v1055 = vsub.f32 %v695, %v911
        %v1056 = vsub.f32 %v696, %v912
        %v1057 = vsub.f32 %v697, %v913
        %v1058 = vsub.f32 %v698, %v914
        %v1059 = vsub.f32 %v699, %v915
        %v1060 = vsub.f32 %v700, %v916
        %v1061 = vsub.f32 %v701, %v917
        %v1062 = vsub.f32 %v702, %v918
        %v1063 = vsub.f32 %v703, %v919
        %v1064 = vsub.f32 %v704, %v920
        %v1065 = vsub.f32 %v705, %v921
        %v1066 = vsub.f32 %v706, %v922
        %v1067 = vsub.f32 %v707, %v923
        %v1068 = vsub.f32 %v708, %v924
        %v1069 = vsub.f32 %v709, %v925
        %v1070 = vsub.f32 %v710, %v926
        %v1071 = vsub.f32 %v711, %v927
        %v1072 = vsub.f32 %v712, %v928
        %v1073 = vsub.f32 %v713, %v929
        %v1074 = vsub.f32 %v714, %v930
        %v1075 = vsub.f32 %v715, %v931
        %v1076 = vsub.f32 %v716, %v932
        %v1077 = vsub.f32 %v717, %v933
        %v1078 = vsub.f32 %v718, %v934
        %v1079 = vsub.f32 %v719, %v935
        %v1080 = vsub.f32 %v720, %v936
        %v1081 = vsub.f32 %v721, %v937
        %v1082 = vsub.f32 %v722, %v938
        %v1083 = vsub.f32 %v723, %v939
        %v1084 = vsub.f32 %v724, %v940
        %v1085 = vsub.f32 %v725, %v941
        %v1086 = vsub.f32 %v726, %v942
        %v1087 = vsub.f32 %v727, %v943
        %v1088 = vsub.f32 %v728, %v944
        %v1089 = vsub.f32 %v729, %v945
        %v1090 = vsub.f32 %v730, %v946
        %v1091 = vsub.f32 %v731, %v947
        %v1092 = vsub.f32 %v732, %v948
        %v1093 = vsub.f32 %v733, %v949
        %v1094 = vsub.f32 %v734, %v950
        %v1095 = vsub.f32 %v735, %v951
        %v1096 = vsub.f32 %v736, %v952
        %v1097 = vsub.f32 %v737, %v953
        %v1098 = vsub.f32 %v738, %v954
        %v1099 = vsub.f32 %v739, %v955
        %v1100 = vsub.f32 %v740, %v956
        %v1101 = vsub.f32 %v741, %v957
        %v1102 = vsub.f32 %v742, %v958
        %v1103 = vsub.f32 %v743, %v959
        %v1104 = vsub.f32 %v744, %v960
        %v1105 = vsub.f32 %v745, %v961
        %v1106 = vsub.f32 %v746, %v962
        %v1107 = vsub.f32 %v747, %v963
        %v1108 = vsub.f32 %v748, %v964
        %v1109 = vsub.f32 %v749, %v965
        %v1110 = vsub.f32 %v750, %v966
        %v1111 = vsub.f32 %v751, %v967
        %v1112 = vsub.f32 %v752, %v968
        %v1113 = vsub.f32 %v753, %v969
        %v1114 = vsub.f32 %v754, %v970
        %v1115 = vsub.f32 %v755, %v971
        %v1116 = vsub.f32 %v756, %v972
        %v1117 = vsub.f32 %v757, %v973
        %v1118 = vsub.f32 %v758, %v974
        %v1119 = vsub.f32 %v759, %v975
        %v1120 = vsub.f32 %v760, %v976
        %v1121 = vpack.c.bf16 %v978, %v977
        %v1122 = vpack.c.bf16 %v980, %v979
        %v1123 = vpack.c.bf16 %v982, %v981
        %v1124 = vpack.c.bf16 %v984, %v983
        %v1125 = vpack.c.bf16 %v986, %v985
        %v1126 = vpack.c.bf16 %v988, %v987
        %v1127 = vpack.c.bf16 %v990, %v989
        %v1128 = vpack.c.bf16 %v992, %v991
        %v1129 = vpack.c.bf16 %v994, %v993
        %v1130 = vpack.c.bf16 %v996, %v995
        %v1131 = vpack.c.bf16 %v998, %v997
        %v1132 = vpack.c.bf16 %v1000, %v999
        %v1133 = vpack.c.bf16 %v1002, %v1001
        %v1134 = vpack.c.bf16 %v1004, %v1003
        %v1135 = vpack.c.bf16 %v1006, %v1005
        %v1136 = vpack.c.bf16 %v1008, %v1007
        %v1137 = vpack.c.bf16 %v1010, %v1009
        %v1138 = vpack.c.bf16 %v1012, %v1011
        %v1139 = vpack.c.bf16 %v1014, %v1013
        %v1140 = vpack.c.bf16 %v1016, %v1015
        %v1141 = vpack.c.bf16 %v1018, %v1017
        %v1142 = vpack.c.bf16 %v1020, %v1019
        %v1143 = vpack.c.bf16 %v1022, %v1021
        %v1144 = vpack.c.bf16 %v1024, %v1023
        %v1145 = vpack.c.bf16 %v1026, %v1025
        %v1146 = vpack.c.bf16 %v1028, %v1027
        %v1147 = vpack.c.bf16 %v1030, %v1029
        %v1148 = vpack.c.bf16 %v1032, %v1031
        %v1149 = vpack.c.bf16 %v1034, %v1033
        %v1150 = vpack.c.bf16 %v1036, %v1035
        %v1151 = vpack.c.bf16 %v1038, %v1037
        %v1152 = vpack.c.bf16 %v1040, %v1039
        %v1153 = vpack.c.bf16 %v1042, %v1041
        %v1154 = vpack.c.bf16 %v1044, %v1043
        %v1155 = vpack.c.bf16 %v1046, %v1045
        %v1156 = vpack.c.bf16 %v1048, %v1047
        %v1157 = vpack.c.bf16 %v1050, %v1049
        %v1158 = vpack.c.bf16 %v1052, %v1051
        %v1159 = vpack.c.bf16 %v1054, %v1053
        %v1160 = vpack.c.bf16 %v1056, %v1055
        %v1161 = vpack.c.bf16 %v1058, %v1057
        %v1162 = vpack.c.bf16 %v1060, %v1059
        %v1163 = vpack.c.bf16 %v1062, %v1061
        %v1164 = vpack.c.bf16 %v1064, %v1063
        %v1165 = vpack.c.bf16 %v1066, %v1065
        %v1166 = vpack.c.bf16 %v1068, %v1067
        %v1167 = vpack.c.bf16 %v1070, %v1069
        %v1168 = vpack.c.bf16 %v1072, %v1071
        %v1169 = vpack.c.bf16 %v1074, %v1073
        %v1170 = vpack.c.bf16 %v1076, %v1075
        %v1171 = vpack.c.bf16 %v1078, %v1077
        %v1172 = vpack.c.bf16 %v1080, %v1079
        %v1173 = vpack.c.bf16 %v1082, %v1081
        %v1174 = vpack.c.bf16 %v1084, %v1083
        %v1175 = vpack.c.bf16 %v1086, %v1085
        %v1176 = vpack.c.bf16 %v1088, %v1087
        %v1177 = vpack.c.bf16 %v1090, %v1089
        %v1178 = vpack.c.bf16 %v1092, %v1091
        %v1179 = vpack.c.bf16 %v1094, %v1093
        %v1180 = vpack.c.bf16 %v1096, %v1095
        %v1181 = vpack.c.bf16 %v1098, %v1097
        %v1182 = vpack.c.bf16 %v1100, %v1099
        %v1183 = vpack.c.bf16 %v1102, %v1101
        %v1184 = vpack.c.bf16 %v1104, %v1103
        %v1185 = vpack.c.bf16 %v1106, %v1105
        %v1186 = vpack.c.bf16 %v1108, %v1107
        %v1187 = vpack.c.bf16 %v1110, %v1109
        %v1188 = vpack.c.bf16 %v1112, %v1111
        %v1189 = vpack.c.bf16 %v1114, %v1113
        %v1190 = vpack.c.bf16 %v1116, %v1115
        %v1191 = vpack.c.bf16 %v1118, %v1117
        %v1192 = vpack.c.bf16 %v1120, %v1119
        %1193 = vmatprep.subr.bf16.mxu0 0
        %1194 = vmatpush1.bf16.msra.mxu0 %v1128
        %1195 = vmatprep.subr.bf16.mxu0 0
        %1196 = vmatpush1.bf16.msra.mxu0 %v1127
        %1197 = vmatprep.subr.bf16.mxu0 0
        %1198 = vmatpush1.bf16.msra.mxu0 %v1126
        %1199 = vmatprep.subr.bf16.mxu0 0
        %1200 = vmatpush1.bf16.msra.mxu0 %v1125
        %1201 = vmatprep.subr.bf16.mxu0 0
        %1202 = vmatpush1.bf16.msra.mxu0 %v1124
        %1203 = vmatprep.subr.bf16.mxu0 0
        %1204 = vmatpush1.bf16.msra.mxu0 %v1123
        %1205 = vmatprep.subr.bf16.mxu0 0
        %1206 = vmatpush1.bf16.msra.mxu0 %v1122
        %1207 = vmatprep.subr.bf16.mxu0 0
        %1208 = vmatpush1.bf16.msra.mxu0 %v1121
        %1209 = vmatprep.subr.bf16.mxu0 0
        %1210 = vmatpush2.bf16.msra.mxu0 0
        %1211 = vmatprep.subr.bf16.mxu0 0
        %1212 = vmatpush2.bf16.msra.mxu0 0
        %1213 = vmatprep.subr.bf16.mxu0 0
        %1214 = vmatpush2.bf16.msra.mxu0 0
        %1215 = vmatprep.subr.bf16.mxu0 0
        %1216 = vmatpush2.bf16.msra.mxu0 0
        %1217 = vmatprep.subr.bf16.mxu0 0
        %1218 = vmatpush2.bf16.msra.mxu0 0
        %1219 = vmatprep.subr.bf16.mxu0 0
        %1220 = vmatpush2.bf16.msra.mxu0 0
        %1221 = vmatprep.subr.bf16.mxu0 0
        %1222 = vmatpush2.bf16.msra.mxu0 0
        %1223 = vmatprep.subr.bf16.mxu0 0
        %1224 = vmatpush2.bf16.msra.mxu0 0
        %1225 = vmatprep.mubr.bf16.mxu0 0
        %1226 = vmatmul.mubr.bf16.gmra.mxu0 %v437
        %v1227 = vpop.f32.mrf.mxu0
        %v1228 = vadd.f32 0.0, %v1227
        %v1229 = vpop.f32.mrf.mxu0
        %v1230 = vpop.f32.mrf.mxu0
        %v1231 = vadd.f32 0.0, %v1230
        %v1232 = vpop.f32.mrf.mxu0
        %1233 = vmatprep.mubr.bf16.mxu0 0
        %1234 = vmatmul.mubr.bf16.gmra.mxu0 %v439
        %v1235 = vpop.f32.mrf.mxu0
        %v1236 = vadd.f32 0.0, %v1235
        %v1237 = vpop.f32.mrf.mxu0
        %v1238 = vpop.f32.mrf.mxu0
        %v1239 = vadd.f32 0.0, %v1238
        %v1240 = vpop.f32.mrf.mxu0
        %1241 = vmatprep.mubr.bf16.mxu0 0
        %1242 = vmatmul.mubr.bf16.gmra.mxu0 %v441
        %v1243 = vpop.f32.mrf.mxu0
        %v1244 = vadd.f32 0.0, %v1243
        %v1245 = vpop.f32.mrf.mxu0
        %v1246 = vpop.f32.mrf.mxu0
        %v1247 = vadd.f32 0.0, %v1246
        %v1248 = vpop.f32.mrf.mxu0
        %1249 = vmatprep.mubr.bf16.mxu0 0
        %1250 = vmatmul.mubr.bf16.gmra.mxu0 %v443
        %v1251 = vpop.f32.mrf.mxu0
        %v1252 = vadd.f32 0.0, %v1251
        %v1253 = vpop.f32.mrf.mxu0
        %v1254 = vpop.f32.mrf.mxu0
        %v1255 = vadd.f32 0.0, %v1254
        %v1256 = vpop.f32.mrf.mxu0
        %1257 = vmatprep.mubr.bf16.mxu0 0
        %1258 = vmatmul.mubr.bf16.gmra.mxu0 %v445
        %v1259 = vpop.f32.mrf.mxu0
        %v1260 = vadd.f32 0.0, %v1259
        %v1261 = vpop.f32.mrf.mxu0
        %v1262 = vpop.f32.mrf.mxu0
        %v1263 = vadd.f32 0.0, %v1262
        %v1264 = vpop.f32.mrf.mxu0
        %1265 = vmatprep.mubr.bf16.mxu0 0
        %1266 = vmatmul.mubr.bf16.gmra.mxu0 %v447
        %v1267 = vpop.f32.mrf.mxu0
        %v1268 = vadd.f32 0.0, %v1267
        %v1269 = vpop.f32.mrf.mxu0
        %v1270 = vpop.f32.mrf.mxu0
        %v1271 = vadd.f32 0.0, %v1270
        %v1272 = vpop.f32.mrf.mxu0
        %1273 = vmatprep.mubr.bf16.mxu0 0
        %1274 = vmatmul.mubr.bf16.gmra.mxu0 %v449
        %v1275 = vpop.f32.mrf.mxu0
        %v1276 = vadd.f32 0.0, %v1275
        %v1277 = vpop.f32.mrf.mxu0
        %v1278 = vpop.f32.mrf.mxu0
        %v1279 = vadd.f32 0.0, %v1278
        %v1280 = vpop.f32.mrf.mxu0
        %1281 = vmatprep.mubr.bf16.mxu0 0
        %1282 = vmatmul.mubr.bf16.gmra.mxu0 %v451
        %v1283 = vpop.f32.mrf.mxu0
        %v1284 = vadd.f32 0.0, %v1283
        %v1285 = vpop.f32.mrf.mxu0
        %v1286 = vpop.f32.mrf.mxu0
        %v1287 = vadd.f32 0.0, %v1286
        %v1288 = vpop.f32.mrf.mxu0
        %1289 = vmatprep.mubr.bf16.mxu0 0
        %1290 = vmatmul.mubr.bf16.gmra.mxu0 %v453
        %v1291 = vpop.f32.mrf.mxu0
        %v1292 = vadd.f32 0.0, %v1291
        %v1293 = vpop.f32.mrf.mxu0
        %v1294 = vpop.f32.mrf.mxu0
        %v1295 = vadd.f32 0.0, %v1294
        %v1296 = vpop.f32.mrf.mxu0
        %1297 = vmatprep.mubr.bf16.mxu0 0
        %1298 = vmatmul.mubr.bf16.gmra.mxu0 %v455
        %v1299 = vpop.f32.mrf.mxu0
        %v1300 = vadd.f32 0.0, %v1299
        %v1301 = vpop.f32.mrf.mxu0
        %v1302 = vpop.f32.mrf.mxu0
        %v1303 = vadd.f32 0.0, %v1302
        %v1304 = vpop.f32.mrf.mxu0
        %1305 = vmatprep.mubr.bf16.mxu0 0
        %1306 = vmatmul.mubr.bf16.gmra.mxu0 %v457
        %v1307 = vpop.f32.mrf.mxu0
        %v1308 = vadd.f32 0.0, %v1307
        %v1309 = vpop.f32.mrf.mxu0
        %v1310 = vpop.f32.mrf.mxu0
        %v1311 = vadd.f32 0.0, %v1310
        %v1312 = vpop.f32.mrf.mxu0
        %1313 = vmatprep.mubr.bf16.mxu0 0
        %1314 = vmatmul.mubr.bf16.gmra.mxu0 %v459
        %v1315 = vpop.f32.mrf.mxu0
        %v1316 = vadd.f32 0.0, %v1315
        %v1317 = vpop.f32.mrf.mxu0
        %v1318 = vpop.f32.mrf.mxu0
        %v1319 = vadd.f32 0.0, %v1318
        %v1320 = vpop.f32.mrf.mxu0
        %1321 = vmatprep.mubr.bf16.mxu0 0
        %1322 = vmatmul.mubr.bf16.gmra.mxu0 %v461
        %v1323 = vpop.f32.mrf.mxu0
        %v1324 = vadd.f32 0.0, %v1323
        %v1325 = vpop.f32.mrf.mxu0
        %v1326 = vpop.f32.mrf.mxu0
        %v1327 = vadd.f32 0.0, %v1326
        %v1328 = vpop.f32.mrf.mxu0
        %1329 = vmatprep.mubr.bf16.mxu0 0
        %1330 = vmatmul.mubr.bf16.gmra.mxu0 %v463
        %v1331 = vpop.f32.mrf.mxu0
        %v1332 = vadd.f32 0.0, %v1331
        %v1333 = vpop.f32.mrf.mxu0
        %v1334 = vpop.f32.mrf.mxu0
        %v1335 = vadd.f32 0.0, %v1334
        %v1336 = vpop.f32.mrf.mxu0
        %1337 = vmatprep.mubr.bf16.mxu0 0
        %1338 = vmatmul.mubr.bf16.gmra.mxu0 %v465
        %v1339 = vpop.f32.mrf.mxu0
        %v1340 = vadd.f32 0.0, %v1339
        %v1341 = vpop.f32.mrf.mxu0
        %v1342 = vpop.f32.mrf.mxu0
        %v1343 = vadd.f32 0.0, %v1342
        %v1344 = vpop.f32.mrf.mxu0
        %1345 = vmatprep.mubr.bf16.mxu0 0
        %1346 = vmatmul.mubr.bf16.gmra.mxu0 %v467
        %v1347 = vpop.f32.mrf.mxu0
        %v1348 = vadd.f32 0.0, %v1347
        %v1349 = vpop.f32.mrf.mxu0
        %v1350 = vpop.f32.mrf.mxu0
        %v1351 = vadd.f32 0.0, %v1350
        %v1352 = vpop.f32.mrf.mxu0
        %1353 = vdwg.mxu0
        %1354 = vmatprep.subr.bf16.mxu0 0
        %1355 = vmatpush1.bf16.msra.mxu0 %v768
        %1356 = vmatprep.subr.bf16.mxu0 0
        %1357 = vmatpush1.bf16.msra.mxu0 %v767
        %1358 = vmatprep.subr.bf16.mxu0 0
        %1359 = vmatpush1.bf16.msra.mxu0 %v766
        %1360 = vmatprep.subr.bf16.mxu0 0
        %1361 = vmatpush1.bf16.msra.mxu0 %v765
        %1362 = vmatprep.subr.bf16.mxu0 0
        %1363 = vmatpush1.bf16.msra.mxu0 %v764
        %1364 = vmatprep.subr.bf16.mxu0 0
        %1365 = vmatpush1.bf16.msra.mxu0 %v763
        %1366 = vmatprep.subr.bf16.mxu0 0
        %1367 = vmatpush1.bf16.msra.mxu0 %v762
        %1368 = vmatprep.subr.bf16.mxu0 0
        %1369 = vmatpush1.bf16.msra.mxu0 %v761
        %1370 = vmatprep.subr.bf16.mxu0 0
        %1371 = vmatpush2.bf16.msra.mxu0 0
        %1372 = vmatprep.subr.bf16.mxu0 0
        %1373 = vmatpush2.bf16.msra.mxu0 0
        %1374 = vmatprep.subr.bf16.mxu0 0
        %1375 = vmatpush2.bf16.msra.mxu0 0
        %1376 = vmatprep.subr.bf16.mxu0 0
        %1377 = vmatpush2.bf16.msra.mxu0 0
        %1378 = vmatprep.subr.bf16.mxu0 0
        %1379 = vmatpush2.bf16.msra.mxu0 0
        %1380 = vmatprep.subr.bf16.mxu0 0
        %1381 = vmatpush2.bf16.msra.mxu0 0
        %1382 = vmatprep.subr.bf16.mxu0 0
        %1383 = vmatpush2.bf16.msra.mxu0 0
        %1384 = vmatprep.subr.bf16.mxu0 0
        %1385 = vmatpush2.bf16.msra.mxu0 0
        %1386 = vmatprep.mubr.bf16.mxu0 0
        %1387 = vmatmul.mubr.bf16.gmra.mxu0 %v437
        %v1388 = vpop.f32.mrf.mxu0
        %v1389 = vadd.f32 %v1228, %v1388
        %v1390 = vpop.f32.mrf.mxu0
        %v1391 = vpop.f32.mrf.mxu0
        %v1392 = vadd.f32 %v1231, %v1391
        %v1393 = vpop.f32.mrf.mxu0
        %1394 = vmatprep.mubr.bf16.mxu0 0
        %1395 = vmatmul.mubr.bf16.gmra.mxu0 %v439
        %v1396 = vpop.f32.mrf.mxu0
        %v1397 = vadd.f32 %v1236, %v1396
        %v1398 = vpop.f32.mrf.mxu0
        %v1399 = vpop.f32.mrf.mxu0
        %v1400 = vadd.f32 %v1239, %v1399
        %v1401 = vpop.f32.mrf.mxu0
        %1402 = vmatprep.mubr.bf16.mxu0 0
        %1403 = vmatmul.mubr.bf16.gmra.mxu0 %v441
        %v1404 = vpop.f32.mrf.mxu0
        %v1405 = vadd.f32 %v1244, %v1404
        %v1406 = vpop.f32.mrf.mxu0
        %v1407 = vpop.f32.mrf.mxu0
        %v1408 = vadd.f32 %v1247, %v1407
        %v1409 = vpop.f32.mrf.mxu0
        %1410 = vmatprep.mubr.bf16.mxu0 0
        %1411 = vmatmul.mubr.bf16.gmra.mxu0 %v443
        %v1412 = vpop.f32.mrf.mxu0
        %v1413 = vadd.f32 %v1252, %v1412
        %v1414 = vpop.f32.mrf.mxu0
        %v1415 = vpop.f32.mrf.mxu0
        %v1416 = vadd.f32 %v1255, %v1415
        %v1417 = vpop.f32.mrf.mxu0
        %1418 = vmatprep.mubr.bf16.mxu0 0
        %1419 = vmatmul.mubr.bf16.gmra.mxu0 %v445
        %v1420 = vpop.f32.mrf.mxu0
        %v1421 = vadd.f32 %v1260, %v1420
        %v1422 = vpop.f32.mrf.mxu0
        %v1423 = vpop.f32.mrf.mxu0
        %v1424 = vadd.f32 %v1263, %v1423
        %v1425 = vpop.f32.mrf.mxu0
        %1426 = vmatprep.mubr.bf16.mxu0 0
        %1427 = vmatmul.mubr.bf16.gmra.mxu0 %v447
        %v1428 = vpop.f32.mrf.mxu0
        %v1429 = vadd.f32 %v1268, %v1428
        %v1430 = vpop.f32.mrf.mxu0
        %v1431 = vpop.f32.mrf.mxu0
        %v1432 = vadd.f32 %v1271, %v1431
        %v1433 = vpop.f32.mrf.mxu0
        %1434 = vmatprep.mubr.bf16.mxu0 0
        %1435 = vmatmul.mubr.bf16.gmra.mxu0 %v449
        %v1436 = vpop.f32.mrf.mxu0
        %v1437 = vadd.f32 %v1276, %v1436
        %v1438 = vpop.f32.mrf.mxu0
        %v1439 = vpop.f32.mrf.mxu0
        %v1440 = vadd.f32 %v1279, %v1439
        %v1441 = vpop.f32.mrf.mxu0
        %1442 = vmatprep.mubr.bf16.mxu0 0
        %1443 = vmatmul.mubr.bf16.gmra.mxu0 %v451
        %v1444 = vpop.f32.mrf.mxu0
        %v1445 = vadd.f32 %v1284, %v1444
        %v1446 = vpop.f32.mrf.mxu0
        %v1447 = vpop.f32.mrf.mxu0
        %v1448 = vadd.f32 %v1287, %v1447
        %v1449 = vpop.f32.mrf.mxu0
        %1450 = vmatprep.mubr.bf16.mxu0 0
        %1451 = vmatmul.mubr.bf16.gmra.mxu0 %v453
        %v1452 = vpop.f32.mrf.mxu0
        %v1453 = vadd.f32 %v1292, %v1452
        %v1454 = vpop.f32.mrf.mxu0
        %v1455 = vpop.f32.mrf.mxu0
        %v1456 = vadd.f32 %v1295, %v1455
        %v1457 = vpop.f32.mrf.mxu0
        %1458 = vmatprep.mubr.bf16.mxu0 0
        %1459 = vmatmul.mubr.bf16.gmra.mxu0 %v455
        %v1460 = vpop.f32.mrf.mxu0
        %v1461 = vadd.f32 %v1300, %v1460
        %v1462 = vpop.f32.mrf.mxu0
        %v1463 = vpop.f32.mrf.mxu0
        %v1464 = vadd.f32 %v1303, %v1463
        %v1465 = vpop.f32.mrf.mxu0
        %1466 = vmatprep.mubr.bf16.mxu0 0
        %1467 = vmatmul.mubr.bf16.gmra.mxu0 %v457
        %v1468 = vpop.f32.mrf.mxu0
        %v1469 = vadd.f32 %v1308, %v1468
        %v1470 = vpop.f32.mrf.mxu0
        %v1471 = vpop.f32.mrf.mxu0
        %v1472 = vadd.f32 %v1311, %v1471
        %v1473 = vpop.f32.mrf.mxu0
        %1474 = vmatprep.mubr.bf16.mxu0 0
        %1475 = vmatmul.mubr.bf16.gmra.mxu0 %v459
        %v1476 = vpop.f32.mrf.mxu0
        %v1477 = vadd.f32 %v1316, %v1476
        %v1478 = vpop.f32.mrf.mxu0
        %v1479 = vpop.f32.mrf.mxu0
        %v1480 = vadd.f32 %v1319, %v1479
        %v1481 = vpop.f32.mrf.mxu0
        %1482 = vmatprep.mubr.bf16.mxu0 0
        %1483 = vmatmul.mubr.bf16.gmra.mxu0 %v461
        %v1484 = vpop.f32.mrf.mxu0
        %v1485 = vadd.f32 %v1324, %v1484
        %v1486 = vpop.f32.mrf.mxu0
        %v1487 = vpop.f32.mrf.mxu0
        %v1488 = vadd.f32 %v1327, %v1487
        %v1489 = vpop.f32.mrf.mxu0
        %1490 = vmatprep.mubr.bf16.mxu0 0
        %1491 = vmatmul.mubr.bf16.gmra.mxu0 %v463
        %v1492 = vpop.f32.mrf.mxu0
        %v1493 = vadd.f32 %v1332, %v1492
        %v1494 = vpop.f32.mrf.mxu0
        %v1495 = vpop.f32.mrf.mxu0
        %v1496 = vadd.f32 %v1335, %v1495
        %v1497 = vpop.f32.mrf.mxu0
        %1498 = vmatprep.mubr.bf16.mxu0 0
        %1499 = vmatmul.mubr.bf16.gmra.mxu0 %v465
        %v1500 = vpop.f32.mrf.mxu0
        %v1501 = vadd.f32 %v1340, %v1500
        %v1502 = vpop.f32.mrf.mxu0
        %v1503 = vpop.f32.mrf.mxu0
        %v1504 = vadd.f32 %v1343, %v1503
        %v1505 = vpop.f32.mrf.mxu0
        %1506 = vmatprep.mubr.bf16.mxu0 0
        %1507 = vmatmul.mubr.bf16.gmra.mxu0 %v467
        %v1508 = vpop.f32.mrf.mxu0
        %v1509 = vadd.f32 %v1348, %v1508
        %v1510 = vpop.f32.mrf.mxu0
        %v1511 = vpop.f32.mrf.mxu0
        %v1512 = vadd.f32 %v1351, %v1511
        %v1513 = vpop.f32.mrf.mxu0
        %1514 = vdwg.mxu0
        %1515 = vmatprep.subr.bf16.mxu0 0
        %1516 = vmatpush1.bf16.msra.mxu0 %v768
        %1517 = vmatprep.subr.bf16.mxu0 0
        %1518 = vmatpush1.bf16.msra.mxu0 %v767
        %1519 = vmatprep.subr.bf16.mxu0 0
        %1520 = vmatpush1.bf16.msra.mxu0 %v766
        %1521 = vmatprep.subr.bf16.mxu0 0
        %1522 = vmatpush1.bf16.msra.mxu0 %v765
        %1523 = vmatprep.subr.bf16.mxu0 0
        %1524 = vmatpush1.bf16.msra.mxu0 %v764
        %1525 = vmatprep.subr.bf16.mxu0 0
        %1526 = vmatpush1.bf16.msra.mxu0 %v763
        %1527 = vmatprep.subr.bf16.mxu0 0
        %1528 = vmatpush1.bf16.msra.mxu0 %v762
        %1529 = vmatprep.subr.bf16.mxu0 0
        %1530 = vmatpush1.bf16.msra.mxu0 %v761
        %1531 = vmatprep.subr.bf16.mxu0 0
        %1532 = vmatpush2.bf16.msra.mxu0 0
        %1533 = vmatprep.subr.bf16.mxu0 0
        %1534 = vmatpush2.bf16.msra.mxu0 0
        %1535 = vmatprep.subr.bf16.mxu0 0
        %1536 = vmatpush2.bf16.msra.mxu0 0
        %1537 = vmatprep.subr.bf16.mxu0 0
        %1538 = vmatpush2.bf16.msra.mxu0 0
        %1539 = vmatprep.subr.bf16.mxu0 0
        %1540 = vmatpush2.bf16.msra.mxu0 0
        %1541 = vmatprep.subr.bf16.mxu0 0
        %1542 = vmatpush2.bf16.msra.mxu0 0
        %1543 = vmatprep.subr.bf16.mxu0 0
        %1544 = vmatpush2.bf16.msra.mxu0 0
        %1545 = vmatprep.subr.bf16.mxu0 0
        %1546 = vmatpush2.bf16.msra.mxu0 0
        %1547 = vmatprep.mubr.bf16.mxu0 0
        %1548 = vmatmul.mubr.bf16.gmra.mxu0 %v581
        %v1549 = vpop.f32.mrf.mxu0
        %v1550 = vadd.f32 0.0, %v1549
        %v1551 = vpop.f32.mrf.mxu0
        %v1552 = vpop.f32.mrf.mxu0
        %v1553 = vadd.f32 0.0, %v1552
        %v1554 = vpop.f32.mrf.mxu0
        %1555 = vmatprep.mubr.bf16.mxu0 0
        %1556 = vmatmul.mubr.bf16.gmra.mxu0 %v583
        %v1557 = vpop.f32.mrf.mxu0
        %v1558 = vadd.f32 0.0, %v1557
        %v1559 = vpop.f32.mrf.mxu0
        %v1560 = vpop.f32.mrf.mxu0
        %v1561 = vadd.f32 0.0, %v1560
        %v1562 = vpop.f32.mrf.mxu0
        %1563 = vmatprep.mubr.bf16.mxu0 0
        %1564 = vmatmul.mubr.bf16.gmra.mxu0 %v585
        %v1565 = vpop.f32.mrf.mxu0
        %v1566 = vadd.f32 0.0, %v1565
        %v1567 = vpop.f32.mrf.mxu0
        %v1568 = vpop.f32.mrf.mxu0
        %v1569 = vadd.f32 0.0, %v1568
        %v1570 = vpop.f32.mrf.mxu0
        %1571 = vmatprep.mubr.bf16.mxu0 0
        %1572 = vmatmul.mubr.bf16.gmra.mxu0 %v587
        %v1573 = vpop.f32.mrf.mxu0
        %v1574 = vadd.f32 0.0, %v1573
        %v1575 = vpop.f32.mrf.mxu0
        %v1576 = vpop.f32.mrf.mxu0
        %v1577 = vadd.f32 0.0, %v1576
        %v1578 = vpop.f32.mrf.mxu0
        %1579 = vmatprep.mubr.bf16.mxu0 0
        %1580 = vmatmul.mubr.bf16.gmra.mxu0 %v589
        %v1581 = vpop.f32.mrf.mxu0
        %v1582 = vadd.f32 0.0, %v1581
        %v1583 = vpop.f32.mrf.mxu0
        %v1584 = vpop.f32.mrf.mxu0
        %v1585 = vadd.f32 0.0, %v1584
        %v1586 = vpop.f32.mrf.mxu0
        %1587 = vmatprep.mubr.bf16.mxu0 0
        %1588 = vmatmul.mubr.bf16.gmra.mxu0 %v591
        %v1589 = vpop.f32.mrf.mxu0
        %v1590 = vadd.f32 0.0, %v1589
        %v1591 = vpop.f32.mrf.mxu0
        %v1592 = vpop.f32.mrf.mxu0
        %v1593 = vadd.f32 0.0, %v1592
        %v1594 = vpop.f32.mrf.mxu0
        %1595 = vmatprep.mubr.bf16.mxu0 0
        %1596 = vmatmul.mubr.bf16.gmra.mxu0 %v593
        %v1597 = vpop.f32.mrf.mxu0
        %v1598 = vadd.f32 0.0, %v1597
        %v1599 = vpop.f32.mrf.mxu0
        %v1600 = vpop.f32.mrf.mxu0
        %v1601 = vadd.f32 0.0, %v1600
        %v1602 = vpop.f32.mrf.mxu0
        %1603 = vmatprep.mubr.bf16.mxu0 0
        %1604 = vmatmul.mubr.bf16.gmra.mxu0 %v595
        %v1605 = vpop.f32.mrf.mxu0
        %v1606 = vadd.f32 0.0, %v1605
        %v1607 = vpop.f32.mrf.mxu0
        %v1608 = vpop.f32.mrf.mxu0
        %v1609 = vadd.f32 0.0, %v1608
        %v1610 = vpop.f32.mrf.mxu0
        %1611 = vmatprep.mubr.bf16.mxu0 0
        %1612 = vmatmul.mubr.bf16.gmra.mxu0 %v597
        %v1613 = vpop.f32.mrf.mxu0
        %v1614 = vadd.f32 0.0, %v1613
        %v1615 = vpop.f32.mrf.mxu0
        %v1616 = vpop.f32.mrf.mxu0
        %v1617 = vadd.f32 0.0, %v1616
        %v1618 = vpop.f32.mrf.mxu0
        %1619 = vmatprep.mubr.bf16.mxu0 0
        %1620 = vmatmul.mubr.bf16.gmra.mxu0 %v599
        %v1621 = vpop.f32.mrf.mxu0
        %v1622 = vadd.f32 0.0, %v1621
        %v1623 = vpop.f32.mrf.mxu0
        %v1624 = vpop.f32.mrf.mxu0
        %v1625 = vadd.f32 0.0, %v1624
        %v1626 = vpop.f32.mrf.mxu0
        %1627 = vmatprep.mubr.bf16.mxu0 0
        %1628 = vmatmul.mubr.bf16.gmra.mxu0 %v601
        %v1629 = vpop.f32.mrf.mxu0
        %v1630 = vadd.f32 0.0, %v1629
        %v1631 = vpop.f32.mrf.mxu0
        %v1632 = vpop.f32.mrf.mxu0
        %v1633 = vadd.f32 0.0, %v1632
        %v1634 = vpop.f32.mrf.mxu0
        %1635 = vmatprep.mubr.bf16.mxu0 0
        %1636 = vmatmul.mubr.bf16.gmra.mxu0 %v603
        %v1637 = vpop.f32.mrf.mxu0
        %v1638 = vadd.f32 0.0, %v1637
        %v1639 = vpop.f32.mrf.mxu0
        %v1640 = vpop.f32.mrf.mxu0
        %v1641 = vadd.f32 0.0, %v1640
        %v1642 = vpop.f32.mrf.mxu0
        %1643 = vmatprep.mubr.bf16.mxu0 0
        %1644 = vmatmul.mubr.bf16.gmra.mxu0 %v605
        %v1645 = vpop.f32.mrf.mxu0
        %v1646 = vadd.f32 0.0, %v1645
        %v1647 = vpop.f32.mrf.mxu0
        %v1648 = vpop.f32.mrf.mxu0
        %v1649 = vadd.f32 0.0, %v1648
        %v1650 = vpop.f32.mrf.mxu0
        %1651 = vmatprep.mubr.bf16.mxu0 0
        %1652 = vmatmul.mubr.bf16.gmra.mxu0 %v607
        %v1653 = vpop.f32.mrf.mxu0
        %v1654 = vadd.f32 0.0, %v1653
        %v1655 = vpop.f32.mrf.mxu0
        %v1656 = vpop.f32.mrf.mxu0
        %v1657 = vadd.f32 0.0, %v1656
        %v1658 = vpop.f32.mrf.mxu0
        %1659 = vmatprep.mubr.bf16.mxu0 0
        %1660 = vmatmul.mubr.bf16.gmra.mxu0 %v609
        %v1661 = vpop.f32.mrf.mxu0
        %v1662 = vadd.f32 0.0, %v1661
        %v1663 = vpop.f32.mrf.mxu0
        %v1664 = vpop.f32.mrf.mxu0
        %v1665 = vadd.f32 0.0, %v1664
        %v1666 = vpop.f32.mrf.mxu0
        %1667 = vmatprep.mubr.bf16.mxu0 0
        %1668 = vmatmul.mubr.bf16.gmra.mxu0 %v611
        %v1669 = vpop.f32.mrf.mxu0
        %v1670 = vadd.f32 0.0, %v1669
        %v1671 = vpop.f32.mrf.mxu0
        %v1672 = vpop.f32.mrf.mxu0
        %v1673 = vadd.f32 0.0, %v1672
        %v1674 = vpop.f32.mrf.mxu0
        %1675 = vdwg.mxu0
        %v1676 = vadd.f32 %v1389, %v1550
        %v1677 = vadd.f32 %v1392, %v1553
        %v1678 = vadd.f32 %v1397, %v1558
        %v1679 = vadd.f32 %v1400, %v1561
        %v1680 = vadd.f32 %v1405, %v1566
        %v1681 = vadd.f32 %v1408, %v1569
        %v1682 = vadd.f32 %v1413, %v1574
        %v1683 = vadd.f32 %v1416, %v1577
        %v1684 = vadd.f32 %v1421, %v1582
        %v1685 = vadd.f32 %v1424, %v1585
        %v1686 = vadd.f32 %v1429, %v1590
        %v1687 = vadd.f32 %v1432, %v1593
        %v1688 = vadd.f32 %v1437, %v1598
        %v1689 = vadd.f32 %v1440, %v1601
        %v1690 = vadd.f32 %v1445, %v1606
        %v1691 = vadd.f32 %v1448, %v1609
        %v1692 = vadd.f32 %v1453, %v1614
        %v1693 = vadd.f32 %v1456, %v1617
        %v1694 = vadd.f32 %v1461, %v1622
        %v1695 = vadd.f32 %v1464, %v1625
        %v1696 = vadd.f32 %v1469, %v1630
        %v1697 = vadd.f32 %v1472, %v1633
        %v1698 = vadd.f32 %v1477, %v1638
        %v1699 = vadd.f32 %v1480, %v1641
        %v1700 = vadd.f32 %v1485, %v1646
        %v1701 = vadd.f32 %v1488, %v1649
        %v1702 = vadd.f32 %v1493, %v1654
        %v1703 = vadd.f32 %v1496, %v1657
        %v1704 = vadd.f32 %v1501, %v1662
        %v1705 = vadd.f32 %v1504, %v1665
        %v1706 = vadd.f32 %v1509, %v1670
        %v1707 = vadd.f32 %v1512, %v1673
        %vm1708 = vsmask.f32 7424
        %v1710 = vshrl.u32 %v437, 16
        %v1712 = vshll.u32 %v437, 16
        %v1714 = vrot.slane %v1712, 1
        %v1715 = vor.u32 %v1710, %v1714
        %v1717 = vshll.u32 %v438, 16
        %v1719 = vrot.slane %v1717, 1
        %v1720 = vsel %vm1708, %v1715, %v1719
        %v1722 = vshrl.u32 %v439, 16
        %v1724 = vshll.u32 %v439, 16
        %v1726 = vrot.slane %v1724, 1
        %v1727 = vor.u32 %v1722, %v1726
        %v1729 = vshll.u32 %v440, 16
        %v1731 = vrot.slane %v1729, 1
        %v1732 = vsel %vm1708, %v1727, %v1731
        %v1734 = vshrl.u32 %v441, 16
        %v1736 = vshll.u32 %v441, 16
        %v1738 = vrot.slane %v1736, 1
        %v1739 = vor.u32 %v1734, %v1738
        %v1741 = vshll.u32 %v442, 16
        %v1743 = vrot.slane %v1741, 1
        %v1744 = vsel %vm1708, %v1739, %v1743
        %v1746 = vshrl.u32 %v443, 16
        %v1748 = vshll.u32 %v443, 16
        %v1750 = vrot.slane %v1748, 1
        %v1751 = vor.u32 %v1746, %v1750
        %v1753 = vshll.u32 %v444, 16
        %v1755 = vrot.slane %v1753, 1
        %v1756 = vsel %vm1708, %v1751, %v1755
        %v1758 = vshrl.u32 %v445, 16
        %v1760 = vshll.u32 %v445, 16
        %v1762 = vrot.slane %v1760, 1
        %v1763 = vor.u32 %v1758, %v1762
        %v1765 = vshll.u32 %v446, 16
        %v1767 = vrot.slane %v1765, 1
        %v1768 = vsel %vm1708, %v1763, %v1767
        %v1770 = vshrl.u32 %v447, 16
        %v1772 = vshll.u32 %v447, 16
        %v1774 = vrot.slane %v1772, 1
        %v1775 = vor.u32 %v1770, %v1774
        %v1777 = vshll.u32 %v448, 16
        %v1779 = vrot.slane %v1777, 1
        %v1780 = vsel %vm1708, %v1775, %v1779
        %v1782 = vshrl.u32 %v449, 16
        %v1784 = vshll.u32 %v449, 16
        %v1786 = vrot.slane %v1784, 1
        %v1787 = vor.u32 %v1782, %v1786
        %v1789 = vshll.u32 %v450, 16
        %v1791 = vrot.slane %v1789, 1
        %v1792 = vsel %vm1708, %v1787, %v1791
        %v1794 = vshrl.u32 %v451, 16
        %v1796 = vshll.u32 %v451, 16
        %v1798 = vrot.slane %v1796, 1
        %v1799 = vor.u32 %v1794, %v1798
        %v1801 = vshll.u32 %v452, 16
        %v1803 = vrot.slane %v1801, 1
        %v1804 = vsel %vm1708, %v1799, %v1803
        %v1806 = vshrl.u32 %v453, 16
        %v1808 = vshll.u32 %v453, 16
        %v1810 = vrot.slane %v1808, 1
        %v1811 = vor.u32 %v1806, %v1810
        %v1813 = vshll.u32 %v454, 16
        %v1815 = vrot.slane %v1813, 1
        %v1816 = vsel %vm1708, %v1811, %v1815
        %v1818 = vshrl.u32 %v455, 16
        %v1820 = vshll.u32 %v455, 16
        %v1822 = vrot.slane %v1820, 1
        %v1823 = vor.u32 %v1818, %v1822
        %v1825 = vshll.u32 %v456, 16
        %v1827 = vrot.slane %v1825, 1
        %v1828 = vsel %vm1708, %v1823, %v1827
        %v1830 = vshrl.u32 %v457, 16
        %v1832 = vshll.u32 %v457, 16
        %v1834 = vrot.slane %v1832, 1
        %v1835 = vor.u32 %v1830, %v1834
        %v1837 = vshll.u32 %v458, 16
        %v1839 = vrot.slane %v1837, 1
        %v1840 = vsel %vm1708, %v1835, %v1839
        %v1842 = vshrl.u32 %v459, 16
        %v1844 = vshll.u32 %v459, 16
        %v1846 = vrot.slane %v1844, 1
        %v1847 = vor.u32 %v1842, %v1846
        %v1849 = vshll.u32 %v460, 16
        %v1851 = vrot.slane %v1849, 1
        %v1852 = vsel %vm1708, %v1847, %v1851
        %v1854 = vshrl.u32 %v461, 16
        %v1856 = vshll.u32 %v461, 16
        %v1858 = vrot.slane %v1856, 1
        %v1859 = vor.u32 %v1854, %v1858
        %v1861 = vshll.u32 %v462, 16
        %v1863 = vrot.slane %v1861, 1
        %v1864 = vsel %vm1708, %v1859, %v1863
        %v1866 = vshrl.u32 %v463, 16
        %v1868 = vshll.u32 %v463, 16
        %v1870 = vrot.slane %v1868, 1
        %v1871 = vor.u32 %v1866, %v1870
        %v1873 = vshll.u32 %v464, 16
        %v1875 = vrot.slane %v1873, 1
        %v1876 = vsel %vm1708, %v1871, %v1875
        %v1878 = vshrl.u32 %v465, 16
        %v1880 = vshll.u32 %v465, 16
        %v1882 = vrot.slane %v1880, 1
        %v1883 = vor.u32 %v1878, %v1882
        %v1885 = vshll.u32 %v466, 16
        %v1887 = vrot.slane %v1885, 1
        %v1888 = vsel %vm1708, %v1883, %v1887
        %v1890 = vshrl.u32 %v467, 16
        %v1892 = vshll.u32 %v467, 16
        %v1894 = vrot.slane %v1892, 1
        %v1895 = vor.u32 %v1890, %v1894
        %v1897 = vshll.u32 %v468, 16
        %v1899 = vrot.slane %v1897, 1
        %v1900 = vsel %vm1708, %v1895, %v1899
        %v1918 = vshrl.u32 %v581, 16
        %v1920 = vshll.u32 %v581, 16
        %v1922 = vrot.slane %v1920, 1
        %v1923 = vor.u32 %v1918, %v1922
        %v1925 = vshll.u32 %v582, 16
        %v1927 = vrot.slane %v1925, 1
        %v1928 = vsel %vm1708, %v1923, %v1927
        %v1930 = vshrl.u32 %v583, 16
        %v1932 = vshll.u32 %v583, 16
        %v1934 = vrot.slane %v1932, 1
        %v1935 = vor.u32 %v1930, %v1934
        %v1937 = vshll.u32 %v584, 16
        %v1939 = vrot.slane %v1937, 1
        %v1940 = vsel %vm1708, %v1935, %v1939
        %v1942 = vshrl.u32 %v585, 16
        %v1944 = vshll.u32 %v585, 16
        %v1946 = vrot.slane %v1944, 1
        %v1947 = vor.u32 %v1942, %v1946
        %v1949 = vshll.u32 %v586, 16
        %v1951 = vrot.slane %v1949, 1
        %v1952 = vsel %vm1708, %v1947, %v1951
        %v1954 = vshrl.u32 %v587, 16
        %v1956 = vshll.u32 %v587, 16
        %v1958 = vrot.slane %v1956, 1
        %v1959 = vor.u32 %v1954, %v1958
        %v1961 = vshll.u32 %v588, 16
        %v1963 = vrot.slane %v1961, 1
        %v1964 = vsel %vm1708, %v1959, %v1963
        %v1966 = vshrl.u32 %v589, 16
        %v1968 = vshll.u32 %v589, 16
        %v1970 = vrot.slane %v1968, 1
        %v1971 = vor.u32 %v1966, %v1970
        %v1973 = vshll.u32 %v590, 16
        %v1975 = vrot.slane %v1973, 1
        %v1976 = vsel %vm1708, %v1971, %v1975
        %v1978 = vshrl.u32 %v591, 16
        %v1980 = vshll.u32 %v591, 16
        %v1982 = vrot.slane %v1980, 1
        %v1983 = vor.u32 %v1978, %v1982
        %v1985 = vshll.u32 %v592, 16
        %v1987 = vrot.slane %v1985, 1
        %v1988 = vsel %vm1708, %v1983, %v1987
        %v1990 = vshrl.u32 %v593, 16
        %v1992 = vshll.u32 %v593, 16
        %v1994 = vrot.slane %v1992, 1
        %v1995 = vor.u32 %v1990, %v1994
        %v1997 = vshll.u32 %v594, 16
        %v1999 = vrot.slane %v1997, 1
        %v2000 = vsel %vm1708, %v1995, %v1999
        %v2002 = vshrl.u32 %v595, 16
        %v2004 = vshll.u32 %v595, 16
        %v2006 = vrot.slane %v2004, 1
        %v2007 = vor.u32 %v2002, %v2006
        %v2009 = vshll.u32 %v596, 16
        %v2011 = vrot.slane %v2009, 1
        %v2012 = vsel %vm1708, %v2007, %v2011
        %v2014 = vshrl.u32 %v597, 16
        %v2016 = vshll.u32 %v597, 16
        %v2018 = vrot.slane %v2016, 1
        %v2019 = vor.u32 %v2014, %v2018
        %v2021 = vshll.u32 %v598, 16
        %v2023 = vrot.slane %v2021, 1
        %v2024 = vsel %vm1708, %v2019, %v2023
        %v2026 = vshrl.u32 %v599, 16
        %v2028 = vshll.u32 %v599, 16
        %v2030 = vrot.slane %v2028, 1
        %v2031 = vor.u32 %v2026, %v2030
        %v2033 = vshll.u32 %v600, 16
        %v2035 = vrot.slane %v2033, 1
        %v2036 = vsel %vm1708, %v2031, %v2035
        %v2038 = vshrl.u32 %v601, 16
        %v2040 = vshll.u32 %v601, 16
        %v2042 = vrot.slane %v2040, 1
        %v2043 = vor.u32 %v2038, %v2042
        %v2045 = vshll.u32 %v602, 16
        %v2047 = vrot.slane %v2045, 1
        %v2048 = vsel %vm1708, %v2043, %v2047
        %v2050 = vshrl.u32 %v603, 16
        %v2052 = vshll.u32 %v603, 16
        %v2054 = vrot.slane %v2052, 1
        %v2055 = vor.u32 %v2050, %v2054
        %v2057 = vshll.u32 %v604, 16
        %v2059 = vrot.slane %v2057, 1
        %v2060 = vsel %vm1708, %v2055, %v2059
        %v2062 = vshrl.u32 %v605, 16
        %v2064 = vshll.u32 %v605, 16
        %v2066 = vrot.slane %v2064, 1
        %v2067 = vor.u32 %v2062, %v2066
        %v2069 = vshll.u32 %v606, 16
        %v2071 = vrot.slane %v2069, 1
        %v2072 = vsel %vm1708, %v2067, %v2071
        %v2074 = vshrl.u32 %v607, 16
        %v2076 = vshll.u32 %v607, 16
        %v2078 = vrot.slane %v2076, 1
        %v2079 = vor.u32 %v2074, %v2078
        %v2081 = vshll.u32 %v608, 16
        %v2083 = vrot.slane %v2081, 1
        %v2084 = vsel %vm1708, %v2079, %v2083
        %v2086 = vshrl.u32 %v609, 16
        %v2088 = vshll.u32 %v609, 16
        %v2090 = vrot.slane %v2088, 1
        %v2091 = vor.u32 %v2086, %v2090
        %v2093 = vshll.u32 %v610, 16
        %v2095 = vrot.slane %v2093, 1
        %v2096 = vsel %vm1708, %v2091, %v2095
        %v2098 = vshrl.u32 %v611, 16
        %v2100 = vshll.u32 %v611, 16
        %v2102 = vrot.slane %v2100, 1
        %v2103 = vor.u32 %v2098, %v2102
        %v2105 = vshll.u32 %v612, 16
        %v2107 = vrot.slane %v2105, 1
        %v2108 = vsel %vm1708, %v2103, %v2107
        %2125 = vmatprep.subr.bf16.mxu0 0
        %2126 = vmatpush1.bf16.msra.mxu0 %v776
        %2127 = vmatprep.subr.bf16.mxu0 0
        %2128 = vmatpush1.bf16.msra.mxu0 %v775
        %2129 = vmatprep.subr.bf16.mxu0 0
        %2130 = vmatpush1.bf16.msra.mxu0 %v774
        %2131 = vmatprep.subr.bf16.mxu0 0
        %2132 = vmatpush1.bf16.msra.mxu0 %v773
        %2133 = vmatprep.subr.bf16.mxu0 0
        %2134 = vmatpush1.bf16.msra.mxu0 %v772
        %2135 = vmatprep.subr.bf16.mxu0 0
        %2136 = vmatpush1.bf16.msra.mxu0 %v771
        %2137 = vmatprep.subr.bf16.mxu0 0
        %2138 = vmatpush1.bf16.msra.mxu0 %v770
        %2139 = vmatprep.subr.bf16.mxu0 0
        %2140 = vmatpush1.bf16.msra.mxu0 %v769
        %2141 = vmatprep.subr.bf16.mxu0 0
        %2142 = vmatpush2.bf16.msra.mxu0 0
        %2143 = vmatprep.subr.bf16.mxu0 0
        %2144 = vmatpush2.bf16.msra.mxu0 0
        %2145 = vmatprep.subr.bf16.mxu0 0
        %2146 = vmatpush2.bf16.msra.mxu0 0
        %2147 = vmatprep.subr.bf16.mxu0 0
        %2148 = vmatpush2.bf16.msra.mxu0 0
        %2149 = vmatprep.subr.bf16.mxu0 0
        %2150 = vmatpush2.bf16.msra.mxu0 0
        %2151 = vmatprep.subr.bf16.mxu0 0
        %2152 = vmatpush2.bf16.msra.mxu0 0
        %2153 = vmatprep.subr.bf16.mxu0 0
        %2154 = vmatpush2.bf16.msra.mxu0 0
        %2155 = vmatprep.subr.bf16.mxu0 0
        %2156 = vmatpush2.bf16.msra.mxu0 0
        %2157 = vmatprep.mubr.bf16.mxu0 0
        %2158 = vmatmul.mubr.bf16.gmra.mxu0 %v1720
        %v2159 = vpop.f32.mrf.mxu0
        %v2160 = vadd.f32 0.0, %v2159
        %v2161 = vpop.f32.mrf.mxu0
        %v2162 = vpop.f32.mrf.mxu0
        %v2163 = vadd.f32 0.0, %v2162
        %v2164 = vpop.f32.mrf.mxu0
        %2165 = vmatprep.mubr.bf16.mxu0 0
        %2166 = vmatmul.mubr.bf16.gmra.mxu0 %v1732
        %v2167 = vpop.f32.mrf.mxu0
        %v2168 = vadd.f32 0.0, %v2167
        %v2169 = vpop.f32.mrf.mxu0
        %v2170 = vpop.f32.mrf.mxu0
        %v2171 = vadd.f32 0.0, %v2170
        %v2172 = vpop.f32.mrf.mxu0
        %2173 = vmatprep.mubr.bf16.mxu0 0
        %2174 = vmatmul.mubr.bf16.gmra.mxu0 %v1744
        %v2175 = vpop.f32.mrf.mxu0
        %v2176 = vadd.f32 0.0, %v2175
        %v2177 = vpop.f32.mrf.mxu0
        %v2178 = vpop.f32.mrf.mxu0
        %v2179 = vadd.f32 0.0, %v2178
        %v2180 = vpop.f32.mrf.mxu0
        %2181 = vmatprep.mubr.bf16.mxu0 0
        %2182 = vmatmul.mubr.bf16.gmra.mxu0 %v1756
        %v2183 = vpop.f32.mrf.mxu0
        %v2184 = vadd.f32 0.0, %v2183
        %v2185 = vpop.f32.mrf.mxu0
        %v2186 = vpop.f32.mrf.mxu0
        %v2187 = vadd.f32 0.0, %v2186
        %v2188 = vpop.f32.mrf.mxu0
        %2189 = vmatprep.mubr.bf16.mxu0 0
        %2190 = vmatmul.mubr.bf16.gmra.mxu0 %v1768
        %v2191 = vpop.f32.mrf.mxu0
        %v2192 = vadd.f32 0.0, %v2191
        %v2193 = vpop.f32.mrf.mxu0
        %v2194 = vpop.f32.mrf.mxu0
        %v2195 = vadd.f32 0.0, %v2194
        %v2196 = vpop.f32.mrf.mxu0
        %2197 = vmatprep.mubr.bf16.mxu0 0
        %2198 = vmatmul.mubr.bf16.gmra.mxu0 %v1780
        %v2199 = vpop.f32.mrf.mxu0
        %v2200 = vadd.f32 0.0, %v2199
        %v2201 = vpop.f32.mrf.mxu0
        %v2202 = vpop.f32.mrf.mxu0
        %v2203 = vadd.f32 0.0, %v2202
        %v2204 = vpop.f32.mrf.mxu0
        %2205 = vmatprep.mubr.bf16.mxu0 0
        %2206 = vmatmul.mubr.bf16.gmra.mxu0 %v1792
        %v2207 = vpop.f32.mrf.mxu0
        %v2208 = vadd.f32 0.0, %v2207
        %v2209 = vpop.f32.mrf.mxu0
        %v2210 = vpop.f32.mrf.mxu0
        %v2211 = vadd.f32 0.0, %v2210
        %v2212 = vpop.f32.mrf.mxu0
        %2213 = vmatprep.mubr.bf16.mxu0 0
        %2214 = vmatmul.mubr.bf16.gmra.mxu0 %v1804
        %v2215 = vpop.f32.mrf.mxu0
        %v2216 = vadd.f32 0.0, %v2215
        %v2217 = vpop.f32.mrf.mxu0
        %v2218 = vpop.f32.mrf.mxu0
        %v2219 = vadd.f32 0.0, %v2218
        %v2220 = vpop.f32.mrf.mxu0
        %2221 = vmatprep.mubr.bf16.mxu0 0
        %2222 = vmatmul.mubr.bf16.gmra.mxu0 %v1816
        %v2223 = vpop.f32.mrf.mxu0
        %v2224 = vadd.f32 0.0, %v2223
        %v2225 = vpop.f32.mrf.mxu0
        %v2226 = vpop.f32.mrf.mxu0
        %v2227 = vadd.f32 0.0, %v2226
        %v2228 = vpop.f32.mrf.mxu0
        %2229 = vmatprep.mubr.bf16.mxu0 0
        %2230 = vmatmul.mubr.bf16.gmra.mxu0 %v1828
        %v2231 = vpop.f32.mrf.mxu0
        %v2232 = vadd.f32 0.0, %v2231
        %v2233 = vpop.f32.mrf.mxu0
        %v2234 = vpop.f32.mrf.mxu0
        %v2235 = vadd.f32 0.0, %v2234
        %v2236 = vpop.f32.mrf.mxu0
        %2237 = vmatprep.mubr.bf16.mxu0 0
        %2238 = vmatmul.mubr.bf16.gmra.mxu0 %v1840
        %v2239 = vpop.f32.mrf.mxu0
        %v2240 = vadd.f32 0.0, %v2239
        %v2241 = vpop.f32.mrf.mxu0
        %v2242 = vpop.f32.mrf.mxu0
        %v2243 = vadd.f32 0.0, %v2242
        %v2244 = vpop.f32.mrf.mxu0
        %2245 = vmatprep.mubr.bf16.mxu0 0
        %2246 = vmatmul.mubr.bf16.gmra.mxu0 %v1852
        %v2247 = vpop.f32.mrf.mxu0
        %v2248 = vadd.f32 0.0, %v2247
        %v2249 = vpop.f32.mrf.mxu0
        %v2250 = vpop.f32.mrf.mxu0
        %v2251 = vadd.f32 0.0, %v2250
        %v2252 = vpop.f32.mrf.mxu0
        %2253 = vmatprep.mubr.bf16.mxu0 0
        %2254 = vmatmul.mubr.bf16.gmra.mxu0 %v1864
        %v2255 = vpop.f32.mrf.mxu0
        %v2256 = vadd.f32 0.0, %v2255
        %v2257 = vpop.f32.mrf.mxu0
        %v2258 = vpop.f32.mrf.mxu0
        %v2259 = vadd.f32 0.0, %v2258
        %v2260 = vpop.f32.mrf.mxu0
        %2261 = vmatprep.mubr.bf16.mxu0 0
        %2262 = vmatmul.mubr.bf16.gmra.mxu0 %v1876
        %v2263 = vpop.f32.mrf.mxu0
        %v2264 = vadd.f32 0.0, %v2263
        %v2265 = vpop.f32.mrf.mxu0
        %v2266 = vpop.f32.mrf.mxu0
        %v2267 = vadd.f32 0.0, %v2266
        %v2268 = vpop.f32.mrf.mxu0
        %2269 = vmatprep.mubr.bf16.mxu0 0
        %2270 = vmatmul.mubr.bf16.gmra.mxu0 %v1888
        %v2271 = vpop.f32.mrf.mxu0
        %v2272 = vadd.f32 0.0, %v2271
        %v2273 = vpop.f32.mrf.mxu0
        %v2274 = vpop.f32.mrf.mxu0
        %v2275 = vadd.f32 0.0, %v2274
        %v2276 = vpop.f32.mrf.mxu0
        %2277 = vmatprep.mubr.bf16.mxu0 0
        %2278 = vmatmul.mubr.bf16.gmra.mxu0 %v1900
        %v2279 = vpop.f32.mrf.mxu0
        %v2280 = vadd.f32 0.0, %v2279
        %v2281 = vpop.f32.mrf.mxu0
        %v2282 = vpop.f32.mrf.mxu0
        %v2283 = vadd.f32 0.0, %v2282
        %v2284 = vpop.f32.mrf.mxu0
        %2285 = vdwg.mxu0
        %v2286 = vadd.f32 %v1676, %v2160
        %v2287 = vadd.f32 %v1677, %v2163
        %v2288 = vadd.f32 %v1678, %v2168
        %v2289 = vadd.f32 %v1679, %v2171
        %v2290 = vadd.f32 %v1680, %v2176
        %v2291 = vadd.f32 %v1681, %v2179
        %v2292 = vadd.f32 %v1682, %v2184
        %v2293 = vadd.f32 %v1683, %v2187
        %v2294 = vadd.f32 %v1684, %v2192
        %v2295 = vadd.f32 %v1685, %v2195
        %v2296 = vadd.f32 %v1686, %v2200
        %v2297 = vadd.f32 %v1687, %v2203
        %v2298 = vadd.f32 %v1688, %v2208
        %v2299 = vadd.f32 %v1689, %v2211
        %v2300 = vadd.f32 %v1690, %v2216
        %v2301 = vadd.f32 %v1691, %v2219
        %v2302 = vadd.f32 %v1692, %v2224
        %v2303 = vadd.f32 %v1693, %v2227
        %v2304 = vadd.f32 %v1694, %v2232
        %v2305 = vadd.f32 %v1695, %v2235
        %v2306 = vadd.f32 %v1696, %v2240
        %v2307 = vadd.f32 %v1697, %v2243
        %v2308 = vadd.f32 %v1698, %v2248
        %v2309 = vadd.f32 %v1699, %v2251
        %v2310 = vadd.f32 %v1700, %v2256
        %v2311 = vadd.f32 %v1701, %v2259
        %v2312 = vadd.f32 %v1702, %v2264
        %v2313 = vadd.f32 %v1703, %v2267
        %v2314 = vadd.f32 %v1704, %v2272
        %v2315 = vadd.f32 %v1705, %v2275
        %v2316 = vadd.f32 %v1706, %v2280
        %v2317 = vadd.f32 %v1707, %v2283
        %2318 = vmatprep.subr.bf16.mxu0 0
        %2319 = vmatpush1.bf16.msra.mxu0 %v1136
        %2320 = vmatprep.subr.bf16.mxu0 0
        %2321 = vmatpush1.bf16.msra.mxu0 %v1135
        %2322 = vmatprep.subr.bf16.mxu0 0
        %2323 = vmatpush1.bf16.msra.mxu0 %v1134
        %2324 = vmatprep.subr.bf16.mxu0 0
        %2325 = vmatpush1.bf16.msra.mxu0 %v1133
        %2326 = vmatprep.subr.bf16.mxu0 0
        %2327 = vmatpush1.bf16.msra.mxu0 %v1132
        %2328 = vmatprep.subr.bf16.mxu0 0
        %2329 = vmatpush1.bf16.msra.mxu0 %v1131
        %2330 = vmatprep.subr.bf16.mxu0 0
        %2331 = vmatpush1.bf16.msra.mxu0 %v1130
        %2332 = vmatprep.subr.bf16.mxu0 0
        %2333 = vmatpush1.bf16.msra.mxu0 %v1129
        %2334 = vmatprep.subr.bf16.mxu0 0
        %2335 = vmatpush2.bf16.msra.mxu0 0
        %2336 = vmatprep.subr.bf16.mxu0 0
        %2337 = vmatpush2.bf16.msra.mxu0 0
        %2338 = vmatprep.subr.bf16.mxu0 0
        %2339 = vmatpush2.bf16.msra.mxu0 0
        %2340 = vmatprep.subr.bf16.mxu0 0
        %2341 = vmatpush2.bf16.msra.mxu0 0
        %2342 = vmatprep.subr.bf16.mxu0 0
        %2343 = vmatpush2.bf16.msra.mxu0 0
        %2344 = vmatprep.subr.bf16.mxu0 0
        %2345 = vmatpush2.bf16.msra.mxu0 0
        %2346 = vmatprep.subr.bf16.mxu0 0
        %2347 = vmatpush2.bf16.msra.mxu0 0
        %2348 = vmatprep.subr.bf16.mxu0 0
        %2349 = vmatpush2.bf16.msra.mxu0 0
        %2350 = vmatprep.mubr.bf16.mxu0 0
        %2351 = vmatmul.mubr.bf16.gmra.mxu0 %v1720
        %v2352 = vpop.f32.mrf.mxu0
        %v2353 = vadd.f32 0.0, %v2352
        %v2354 = vpop.f32.mrf.mxu0
        %v2355 = vpop.f32.mrf.mxu0
        %v2356 = vadd.f32 0.0, %v2355
        %v2357 = vpop.f32.mrf.mxu0
        %2358 = vmatprep.mubr.bf16.mxu0 0
        %2359 = vmatmul.mubr.bf16.gmra.mxu0 %v1732
        %v2360 = vpop.f32.mrf.mxu0
        %v2361 = vadd.f32 0.0, %v2360
        %v2362 = vpop.f32.mrf.mxu0
        %v2363 = vpop.f32.mrf.mxu0
        %v2364 = vadd.f32 0.0, %v2363
        %v2365 = vpop.f32.mrf.mxu0
        %2366 = vmatprep.mubr.bf16.mxu0 0
        %2367 = vmatmul.mubr.bf16.gmra.mxu0 %v1744
        %v2368 = vpop.f32.mrf.mxu0
        %v2369 = vadd.f32 0.0, %v2368
        %v2370 = vpop.f32.mrf.mxu0
        %v2371 = vpop.f32.mrf.mxu0
        %v2372 = vadd.f32 0.0, %v2371
        %v2373 = vpop.f32.mrf.mxu0
        %2374 = vmatprep.mubr.bf16.mxu0 0
        %2375 = vmatmul.mubr.bf16.gmra.mxu0 %v1756
        %v2376 = vpop.f32.mrf.mxu0
        %v2377 = vadd.f32 0.0, %v2376
        %v2378 = vpop.f32.mrf.mxu0
        %v2379 = vpop.f32.mrf.mxu0
        %v2380 = vadd.f32 0.0, %v2379
        %v2381 = vpop.f32.mrf.mxu0
        %2382 = vmatprep.mubr.bf16.mxu0 0
        %2383 = vmatmul.mubr.bf16.gmra.mxu0 %v1768
        %v2384 = vpop.f32.mrf.mxu0
        %v2385 = vadd.f32 0.0, %v2384
        %v2386 = vpop.f32.mrf.mxu0
        %v2387 = vpop.f32.mrf.mxu0
        %v2388 = vadd.f32 0.0, %v2387
        %v2389 = vpop.f32.mrf.mxu0
        %2390 = vmatprep.mubr.bf16.mxu0 0
        %2391 = vmatmul.mubr.bf16.gmra.mxu0 %v1780
        %v2392 = vpop.f32.mrf.mxu0
        %v2393 = vadd.f32 0.0, %v2392
        %v2394 = vpop.f32.mrf.mxu0
        %v2395 = vpop.f32.mrf.mxu0
        %v2396 = vadd.f32 0.0, %v2395
        %v2397 = vpop.f32.mrf.mxu0
        %2398 = vmatprep.mubr.bf16.mxu0 0
        %2399 = vmatmul.mubr.bf16.gmra.mxu0 %v1792
        %v2400 = vpop.f32.mrf.mxu0
        %v2401 = vadd.f32 0.0, %v2400
        %v2402 = vpop.f32.mrf.mxu0
        %v2403 = vpop.f32.mrf.mxu0
        %v2404 = vadd.f32 0.0, %v2403
        %v2405 = vpop.f32.mrf.mxu0
        %2406 = vmatprep.mubr.bf16.mxu0 0
        %2407 = vmatmul.mubr.bf16.gmra.mxu0 %v1804
        %v2408 = vpop.f32.mrf.mxu0
        %v2409 = vadd.f32 0.0, %v2408
        %v2410 = vpop.f32.mrf.mxu0
        %v2411 = vpop.f32.mrf.mxu0
        %v2412 = vadd.f32 0.0, %v2411
        %v2413 = vpop.f32.mrf.mxu0
        %2414 = vmatprep.mubr.bf16.mxu0 0
        %2415 = vmatmul.mubr.bf16.gmra.mxu0 %v1816
        %v2416 = vpop.f32.mrf.mxu0
        %v2417 = vadd.f32 0.0, %v2416
        %v2418 = vpop.f32.mrf.mxu0
        %v2419 = vpop.f32.mrf.mxu0
        %v2420 = vadd.f32 0.0, %v2419
        %v2421 = vpop.f32.mrf.mxu0
        %2422 = vmatprep.mubr.bf16.mxu0 0
        %2423 = vmatmul.mubr.bf16.gmra.mxu0 %v1828
        %v2424 = vpop.f32.mrf.mxu0
        %v2425 = vadd.f32 0.0, %v2424
        %v2426 = vpop.f32.mrf.mxu0
        %v2427 = vpop.f32.mrf.mxu0
        %v2428 = vadd.f32 0.0, %v2427
        %v2429 = vpop.f32.mrf.mxu0
        %2430 = vmatprep.mubr.bf16.mxu0 0
        %2431 = vmatmul.mubr.bf16.gmra.mxu0 %v1840
        %v2432 = vpop.f32.mrf.mxu0
        %v2433 = vadd.f32 0.0, %v2432
        %v2434 = vpop.f32.mrf.mxu0
        %v2435 = vpop.f32.mrf.mxu0
        %v2436 = vadd.f32 0.0, %v2435
        %v2437 = vpop.f32.mrf.mxu0
        %2438 = vmatprep.mubr.bf16.mxu0 0
        %2439 = vmatmul.mubr.bf16.gmra.mxu0 %v1852
        %v2440 = vpop.f32.mrf.mxu0
        %v2441 = vadd.f32 0.0, %v2440
        %v2442 = vpop.f32.mrf.mxu0
        %v2443 = vpop.f32.mrf.mxu0
        %v2444 = vadd.f32 0.0, %v2443
        %v2445 = vpop.f32.mrf.mxu0
        %2446 = vmatprep.mubr.bf16.mxu0 0
        %2447 = vmatmul.mubr.bf16.gmra.mxu0 %v1864
        %v2448 = vpop.f32.mrf.mxu0
        %v2449 = vadd.f32 0.0, %v2448
        %v2450 = vpop.f32.mrf.mxu0
        %v2451 = vpop.f32.mrf.mxu0
        %v2452 = vadd.f32 0.0, %v2451
        %v2453 = vpop.f32.mrf.mxu0
        %2454 = vmatprep.mubr.bf16.mxu0 0
        %2455 = vmatmul.mubr.bf16.gmra.mxu0 %v1876
        %v2456 = vpop.f32.mrf.mxu0
        %v2457 = vadd.f32 0.0, %v2456
        %v2458 = vpop.f32.mrf.mxu0
        %v2459 = vpop.f32.mrf.mxu0
        %v2460 = vadd.f32 0.0, %v2459
        %v2461 = vpop.f32.mrf.mxu0
        %2462 = vmatprep.mubr.bf16.mxu0 0
        %2463 = vmatmul.mubr.bf16.gmra.mxu0 %v1888
        %v2464 = vpop.f32.mrf.mxu0
        %v2465 = vadd.f32 0.0, %v2464
        %v2466 = vpop.f32.mrf.mxu0
        %v2467 = vpop.f32.mrf.mxu0
        %v2468 = vadd.f32 0.0, %v2467
        %v2469 = vpop.f32.mrf.mxu0
        %2470 = vmatprep.mubr.bf16.mxu0 0
        %2471 = vmatmul.mubr.bf16.gmra.mxu0 %v1900
        %v2472 = vpop.f32.mrf.mxu0
        %v2473 = vadd.f32 0.0, %v2472
        %v2474 = vpop.f32.mrf.mxu0
        %v2475 = vpop.f32.mrf.mxu0
        %v2476 = vadd.f32 0.0, %v2475
        %v2477 = vpop.f32.mrf.mxu0
        %2478 = vdwg.mxu0
        %v2479 = vadd.f32 %v2286, %v2353
        %v2480 = vadd.f32 %v2287, %v2356
        %v2481 = vadd.f32 %v2288, %v2361
        %v2482 = vadd.f32 %v2289, %v2364
        %v2483 = vadd.f32 %v2290, %v2369
        %v2484 = vadd.f32 %v2291, %v2372
        %v2485 = vadd.f32 %v2292, %v2377
        %v2486 = vadd.f32 %v2293, %v2380
        %v2487 = vadd.f32 %v2294, %v2385
        %v2488 = vadd.f32 %v2295, %v2388
        %v2489 = vadd.f32 %v2296, %v2393
        %v2490 = vadd.f32 %v2297, %v2396
        %v2491 = vadd.f32 %v2298, %v2401
        %v2492 = vadd.f32 %v2299, %v2404
        %v2493 = vadd.f32 %v2300, %v2409
        %v2494 = vadd.f32 %v2301, %v2412
        %v2495 = vadd.f32 %v2302, %v2417
        %v2496 = vadd.f32 %v2303, %v2420
        %v2497 = vadd.f32 %v2304, %v2425
        %v2498 = vadd.f32 %v2305, %v2428
        %v2499 = vadd.f32 %v2306, %v2433
        %v2500 = vadd.f32 %v2307, %v2436
        %v2501 = vadd.f32 %v2308, %v2441
        %v2502 = vadd.f32 %v2309, %v2444
        %v2503 = vadd.f32 %v2310, %v2449
        %v2504 = vadd.f32 %v2311, %v2452
        %v2505 = vadd.f32 %v2312, %v2457
        %v2506 = vadd.f32 %v2313, %v2460
        %v2507 = vadd.f32 %v2314, %v2465
        %v2508 = vadd.f32 %v2315, %v2468
        %v2509 = vadd.f32 %v2316, %v2473
        %v2510 = vadd.f32 %v2317, %v2476
        %2511 = vmatprep.subr.bf16.mxu0 0
        %2512 = vmatpush1.bf16.msra.mxu0 %v776
        %2513 = vmatprep.subr.bf16.mxu0 0
        %2514 = vmatpush1.bf16.msra.mxu0 %v775
        %2515 = vmatprep.subr.bf16.mxu0 0
        %2516 = vmatpush1.bf16.msra.mxu0 %v774
        %2517 = vmatprep.subr.bf16.mxu0 0
        %2518 = vmatpush1.bf16.msra.mxu0 %v773
        %2519 = vmatprep.subr.bf16.mxu0 0
        %2520 = vmatpush1.bf16.msra.mxu0 %v772
        %2521 = vmatprep.subr.bf16.mxu0 0
        %2522 = vmatpush1.bf16.msra.mxu0 %v771
        %2523 = vmatprep.subr.bf16.mxu0 0
        %2524 = vmatpush1.bf16.msra.mxu0 %v770
        %2525 = vmatprep.subr.bf16.mxu0 0
        %2526 = vmatpush1.bf16.msra.mxu0 %v769
        %2527 = vmatprep.subr.bf16.mxu0 0
        %2528 = vmatpush2.bf16.msra.mxu0 0
        %2529 = vmatprep.subr.bf16.mxu0 0
        %2530 = vmatpush2.bf16.msra.mxu0 0
        %2531 = vmatprep.subr.bf16.mxu0 0
        %2532 = vmatpush2.bf16.msra.mxu0 0
        %2533 = vmatprep.subr.bf16.mxu0 0
        %2534 = vmatpush2.bf16.msra.mxu0 0
        %2535 = vmatprep.subr.bf16.mxu0 0
        %2536 = vmatpush2.bf16.msra.mxu0 0
        %2537 = vmatprep.subr.bf16.mxu0 0
        %2538 = vmatpush2.bf16.msra.mxu0 0
        %2539 = vmatprep.subr.bf16.mxu0 0
        %2540 = vmatpush2.bf16.msra.mxu0 0
        %2541 = vmatprep.subr.bf16.mxu0 0
        %2542 = vmatpush2.bf16.msra.mxu0 0
        %2543 = vmatprep.mubr.bf16.mxu0 0
        %2544 = vmatmul.mubr.bf16.gmra.mxu0 %v1928
        %v2545 = vpop.f32.mrf.mxu0
        %v2546 = vadd.f32 0.0, %v2545
        %v2547 = vpop.f32.mrf.mxu0
        %v2548 = vpop.f32.mrf.mxu0
        %v2549 = vadd.f32 0.0, %v2548
        %v2550 = vpop.f32.mrf.mxu0
        %2551 = vmatprep.mubr.bf16.mxu0 0
        %2552 = vmatmul.mubr.bf16.gmra.mxu0 %v1940
        %v2553 = vpop.f32.mrf.mxu0
        %v2554 = vadd.f32 0.0, %v2553
        %v2555 = vpop.f32.mrf.mxu0
        %v2556 = vpop.f32.mrf.mxu0
        %v2557 = vadd.f32 0.0, %v2556
        %v2558 = vpop.f32.mrf.mxu0
        %2559 = vmatprep.mubr.bf16.mxu0 0
        %2560 = vmatmul.mubr.bf16.gmra.mxu0 %v1952
        %v2561 = vpop.f32.mrf.mxu0
        %v2562 = vadd.f32 0.0, %v2561
        %v2563 = vpop.f32.mrf.mxu0
        %v2564 = vpop.f32.mrf.mxu0
        %v2565 = vadd.f32 0.0, %v2564
        %v2566 = vpop.f32.mrf.mxu0
        %2567 = vmatprep.mubr.bf16.mxu0 0
        %2568 = vmatmul.mubr.bf16.gmra.mxu0 %v1964
        %v2569 = vpop.f32.mrf.mxu0
        %v2570 = vadd.f32 0.0, %v2569
        %v2571 = vpop.f32.mrf.mxu0
        %v2572 = vpop.f32.mrf.mxu0
        %v2573 = vadd.f32 0.0, %v2572
        %v2574 = vpop.f32.mrf.mxu0
        %2575 = vmatprep.mubr.bf16.mxu0 0
        %2576 = vmatmul.mubr.bf16.gmra.mxu0 %v1976
        %v2577 = vpop.f32.mrf.mxu0
        %v2578 = vadd.f32 0.0, %v2577
        %v2579 = vpop.f32.mrf.mxu0
        %v2580 = vpop.f32.mrf.mxu0
        %v2581 = vadd.f32 0.0, %v2580
        %v2582 = vpop.f32.mrf.mxu0
        %2583 = vmatprep.mubr.bf16.mxu0 0
        %2584 = vmatmul.mubr.bf16.gmra.mxu0 %v1988
        %v2585 = vpop.f32.mrf.mxu0
        %v2586 = vadd.f32 0.0, %v2585
        %v2587 = vpop.f32.mrf.mxu0
        %v2588 = vpop.f32.mrf.mxu0
        %v2589 = vadd.f32 0.0, %v2588
        %v2590 = vpop.f32.mrf.mxu0
        %2591 = vmatprep.mubr.bf16.mxu0 0
        %2592 = vmatmul.mubr.bf16.gmra.mxu0 %v2000
        %v2593 = vpop.f32.mrf.mxu0
        %v2594 = vadd.f32 0.0, %v2593
        %v2595 = vpop.f32.mrf.mxu0
        %v2596 = vpop.f32.mrf.mxu0
        %v2597 = vadd.f32 0.0, %v2596
        %v2598 = vpop.f32.mrf.mxu0
        %2599 = vmatprep.mubr.bf16.mxu0 0
        %2600 = vmatmul.mubr.bf16.gmra.mxu0 %v2012
        %v2601 = vpop.f32.mrf.mxu0
        %v2602 = vadd.f32 0.0, %v2601
        %v2603 = vpop.f32.mrf.mxu0
        %v2604 = vpop.f32.mrf.mxu0
        %v2605 = vadd.f32 0.0, %v2604
        %v2606 = vpop.f32.mrf.mxu0
        %2607 = vmatprep.mubr.bf16.mxu0 0
        %2608 = vmatmul.mubr.bf16.gmra.mxu0 %v2024
        %v2609 = vpop.f32.mrf.mxu0
        %v2610 = vadd.f32 0.0, %v2609
        %v2611 = vpop.f32.mrf.mxu0
        %v2612 = vpop.f32.mrf.mxu0
        %v2613 = vadd.f32 0.0, %v2612
        %v2614 = vpop.f32.mrf.mxu0
        %2615 = vmatprep.mubr.bf16.mxu0 0
        %2616 = vmatmul.mubr.bf16.gmra.mxu0 %v2036
        %v2617 = vpop.f32.mrf.mxu0
        %v2618 = vadd.f32 0.0, %v2617
        %v2619 = vpop.f32.mrf.mxu0
        %v2620 = vpop.f32.mrf.mxu0
        %v2621 = vadd.f32 0.0, %v2620
        %v2622 = vpop.f32.mrf.mxu0
        %2623 = vmatprep.mubr.bf16.mxu0 0
        %2624 = vmatmul.mubr.bf16.gmra.mxu0 %v2048
        %v2625 = vpop.f32.mrf.mxu0
        %v2626 = vadd.f32 0.0, %v2625
        %v2627 = vpop.f32.mrf.mxu0
        %v2628 = vpop.f32.mrf.mxu0
        %v2629 = vadd.f32 0.0, %v2628
        %v2630 = vpop.f32.mrf.mxu0
        %2631 = vmatprep.mubr.bf16.mxu0 0
        %2632 = vmatmul.mubr.bf16.gmra.mxu0 %v2060
        %v2633 = vpop.f32.mrf.mxu0
        %v2634 = vadd.f32 0.0, %v2633
        %v2635 = vpop.f32.mrf.mxu0
        %v2636 = vpop.f32.mrf.mxu0
        %v2637 = vadd.f32 0.0, %v2636
        %v2638 = vpop.f32.mrf.mxu0
        %2639 = vmatprep.mubr.bf16.mxu0 0
        %2640 = vmatmul.mubr.bf16.gmra.mxu0 %v2072
        %v2641 = vpop.f32.mrf.mxu0
        %v2642 = vadd.f32 0.0, %v2641
        %v2643 = vpop.f32.mrf.mxu0
        %v2644 = vpop.f32.mrf.mxu0
        %v2645 = vadd.f32 0.0, %v2644
        %v2646 = vpop.f32.mrf.mxu0
        %2647 = vmatprep.mubr.bf16.mxu0 0
        %2648 = vmatmul.mubr.bf16.gmra.mxu0 %v2084
        %v2649 = vpop.f32.mrf.mxu0
        %v2650 = vadd.f32 0.0, %v2649
        %v2651 = vpop.f32.mrf.mxu0
        %v2652 = vpop.f32.mrf.mxu0
        %v2653 = vadd.f32 0.0, %v2652
        %v2654 = vpop.f32.mrf.mxu0
        %2655 = vmatprep.mubr.bf16.mxu0 0
        %2656 = vmatmul.mubr.bf16.gmra.mxu0 %v2096
        %v2657 = vpop.f32.mrf.mxu0
        %v2658 = vadd.f32 0.0, %v2657
        %v2659 = vpop.f32.mrf.mxu0
        %v2660 = vpop.f32.mrf.mxu0
        %v2661 = vadd.f32 0.0, %v2660
        %v2662 = vpop.f32.mrf.mxu0
        %2663 = vmatprep.mubr.bf16.mxu0 0
        %2664 = vmatmul.mubr.bf16.gmra.mxu0 %v2108
        %v2665 = vpop.f32.mrf.mxu0
        %v2666 = vadd.f32 0.0, %v2665
        %v2667 = vpop.f32.mrf.mxu0
        %v2668 = vpop.f32.mrf.mxu0
        %v2669 = vadd.f32 0.0, %v2668
        %v2670 = vpop.f32.mrf.mxu0
        %2671 = vdwg.mxu0
        %v2672 = vadd.f32 %v2479, %v2546
        %v2673 = vadd.f32 %v2480, %v2549
        %v2674 = vadd.f32 %v2481, %v2554
        %v2675 = vadd.f32 %v2482, %v2557
        %v2676 = vadd.f32 %v2483, %v2562
        %v2677 = vadd.f32 %v2484, %v2565
        %v2678 = vadd.f32 %v2485, %v2570
        %v2679 = vadd.f32 %v2486, %v2573
        %v2680 = vadd.f32 %v2487, %v2578
        %v2681 = vadd.f32 %v2488, %v2581
        %v2682 = vadd.f32 %v2489, %v2586
        %v2683 = vadd.f32 %v2490, %v2589
        %v2684 = vadd.f32 %v2491, %v2594
        %v2685 = vadd.f32 %v2492, %v2597
        %v2686 = vadd.f32 %v2493, %v2602
        %v2687 = vadd.f32 %v2494, %v2605
        %v2688 = vadd.f32 %v2495, %v2610
        %v2689 = vadd.f32 %v2496, %v2613
        %v2690 = vadd.f32 %v2497, %v2618
        %v2691 = vadd.f32 %v2498, %v2621
        %v2692 = vadd.f32 %v2499, %v2626
        %v2693 = vadd.f32 %v2500, %v2629
        %v2694 = vadd.f32 %v2501, %v2634
        %v2695 = vadd.f32 %v2502, %v2637
        %v2696 = vadd.f32 %v2503, %v2642
        %v2697 = vadd.f32 %v2504, %v2645
        %v2698 = vadd.f32 %v2505, %v2650
        %v2699 = vadd.f32 %v2506, %v2653
        %v2700 = vadd.f32 %v2507, %v2658
        %v2701 = vadd.f32 %v2508, %v2661
        %v2702 = vadd.f32 %v2509, %v2666
        %v2703 = vadd.f32 %v2510, %v2669
        %vm2736 = vcmask 1046528
        %v2737 = vrot.slane %v437, 1
        %v2738 = vrot.slane %v438, 1
        %v2739 = vsel %vm2736, %v2737, %v2738
        %v2740 = vrot.slane %v439, 1
        %v2741 = vrot.slane %v440, 1
        %v2742 = vsel %vm2736, %v2740, %v2741
        %v2743 = vrot.slane %v441, 1
        %v2744 = vrot.slane %v442, 1
        %v2745 = vsel %vm2736, %v2743, %v2744
        %v2746 = vrot.slane %v443, 1
        %v2747 = vrot.slane %v444, 1
        %v2748 = vsel %vm2736, %v2746, %v2747
        %v2749 = vrot.slane %v445, 1
        %v2750 = vrot.slane %v446, 1
        %v2751 = vsel %vm2736, %v2749, %v2750
        %v2752 = vrot.slane %v447, 1
        %v2753 = vrot.slane %v448, 1
        %v2754 = vsel %vm2736, %v2752, %v2753
        %v2755 = vrot.slane %v449, 1
        %v2756 = vrot.slane %v450, 1
        %v2757 = vsel %vm2736, %v2755, %v2756
        %v2758 = vrot.slane %v451, 1
        %v2759 = vrot.slane %v452, 1
        %v2760 = vsel %vm2736, %v2758, %v2759
        %v2761 = vrot.slane %v453, 1
        %v2762 = vrot.slane %v454, 1
        %v2763 = vsel %vm2736, %v2761, %v2762
        %v2764 = vrot.slane %v455, 1
        %v2765 = vrot.slane %v456, 1
        %v2766 = vsel %vm2736, %v2764, %v2765
        %v2767 = vrot.slane %v457, 1
        %v2768 = vrot.slane %v458, 1
        %v2769 = vsel %vm2736, %v2767, %v2768
        %v2770 = vrot.slane %v459, 1
        %v2771 = vrot.slane %v460, 1
        %v2772 = vsel %vm2736, %v2770, %v2771
        %v2773 = vrot.slane %v461, 1
        %v2774 = vrot.slane %v462, 1
        %v2775 = vsel %vm2736, %v2773, %v2774
        %v2776 = vrot.slane %v463, 1
        %v2777 = vrot.slane %v464, 1
        %v2778 = vsel %vm2736, %v2776, %v2777
        %v2779 = vrot.slane %v465, 1
        %v2780 = vrot.slane %v466, 1
        %v2781 = vsel %vm2736, %v2779, %v2780
        %v2782 = vrot.slane %v467, 1
        %v2783 = vrot.slane %v468, 1
        %v2784 = vsel %vm2736, %v2782, %v2783
        %v2833 = vrot.slane %v581, 1
        %v2834 = vrot.slane %v582, 1
        %v2835 = vsel %vm2736, %v2833, %v2834
        %v2836 = vrot.slane %v583, 1
        %v2837 = vrot.slane %v584, 1
        %v2838 = vsel %vm2736, %v2836, %v2837
        %v2839 = vrot.slane %v585, 1
        %v2840 = vrot.slane %v586, 1
        %v2841 = vsel %vm2736, %v2839, %v2840
        %v2842 = vrot.slane %v587, 1
        %v2843 = vrot.slane %v588, 1
        %v2844 = vsel %vm2736, %v2842, %v2843
        %v2845 = vrot.slane %v589, 1
        %v2846 = vrot.slane %v590, 1
        %v2847 = vsel %vm2736, %v2845, %v2846
        %v2848 = vrot.slane %v591, 1
        %v2849 = vrot.slane %v592, 1
        %v2850 = vsel %vm2736, %v2848, %v2849
        %v2851 = vrot.slane %v593, 1
        %v2852 = vrot.slane %v594, 1
        %v2853 = vsel %vm2736, %v2851, %v2852
        %v2854 = vrot.slane %v595, 1
        %v2855 = vrot.slane %v596, 1
        %v2856 = vsel %vm2736, %v2854, %v2855
        %v2857 = vrot.slane %v597, 1
        %v2858 = vrot.slane %v598, 1
        %v2859 = vsel %vm2736, %v2857, %v2858
        %v2860 = vrot.slane %v599, 1
        %v2861 = vrot.slane %v600, 1
        %v2862 = vsel %vm2736, %v2860, %v2861
        %v2863 = vrot.slane %v601, 1
        %v2864 = vrot.slane %v602, 1
        %v2865 = vsel %vm2736, %v2863, %v2864
        %v2866 = vrot.slane %v603, 1
        %v2867 = vrot.slane %v604, 1
        %v2868 = vsel %vm2736, %v2866, %v2867
        %v2869 = vrot.slane %v605, 1
        %v2870 = vrot.slane %v606, 1
        %v2871 = vsel %vm2736, %v2869, %v2870
        %v2872 = vrot.slane %v607, 1
        %v2873 = vrot.slane %v608, 1
        %v2874 = vsel %vm2736, %v2872, %v2873
        %v2875 = vrot.slane %v609, 1
        %v2876 = vrot.slane %v610, 1
        %v2877 = vsel %vm2736, %v2875, %v2876
        %v2878 = vrot.slane %v611, 1
        %v2879 = vrot.slane %v612, 1
        %v2880 = vsel %vm2736, %v2878, %v2879
        %2897 = vmatprep.subr.bf16.mxu0 0
        %2898 = vmatpush1.bf16.msra.mxu0 %v784
        %2899 = vmatprep.subr.bf16.mxu0 0
        %2900 = vmatpush1.bf16.msra.mxu0 %v783
        %2901 = vmatprep.subr.bf16.mxu0 0
        %2902 = vmatpush1.bf16.msra.mxu0 %v782
        %2903 = vmatprep.subr.bf16.mxu0 0
        %2904 = vmatpush1.bf16.msra.mxu0 %v781
        %2905 = vmatprep.subr.bf16.mxu0 0
        %2906 = vmatpush1.bf16.msra.mxu0 %v780
        %2907 = vmatprep.subr.bf16.mxu0 0
        %2908 = vmatpush1.bf16.msra.mxu0 %v779
        %2909 = vmatprep.subr.bf16.mxu0 0
        %2910 = vmatpush1.bf16.msra.mxu0 %v778
        %2911 = vmatprep.subr.bf16.mxu0 0
        %2912 = vmatpush1.bf16.msra.mxu0 %v777
        %2913 = vmatprep.subr.bf16.mxu0 0
        %2914 = vmatpush2.bf16.msra.mxu0 0
        %2915 = vmatprep.subr.bf16.mxu0 0
        %2916 = vmatpush2.bf16.msra.mxu0 0
        %2917 = vmatprep.subr.bf16.mxu0 0
        %2918 = vmatpush2.bf16.msra.mxu0 0
        %2919 = vmatprep.subr.bf16.mxu0 0
        %2920 = vmatpush2.bf16.msra.mxu0 0
        %2921 = vmatprep.subr.bf16.mxu0 0
        %2922 = vmatpush2.bf16.msra.mxu0 0
        %2923 = vmatprep.subr.bf16.mxu0 0
        %2924 = vmatpush2.bf16.msra.mxu0 0
        %2925 = vmatprep.subr.bf16.mxu0 0
        %2926 = vmatpush2.bf16.msra.mxu0 0
        %2927 = vmatprep.subr.bf16.mxu0 0
        %2928 = vmatpush2.bf16.msra.mxu0 0
        %2929 = vmatprep.mubr.bf16.mxu0 0
        %2930 = vmatmul.mubr.bf16.gmra.mxu0 %v2739
        %v2931 = vpop.f32.mrf.mxu0
        %v2932 = vadd.f32 0.0, %v2931
        %v2933 = vpop.f32.mrf.mxu0
        %v2934 = vpop.f32.mrf.mxu0
        %v2935 = vadd.f32 0.0, %v2934
        %v2936 = vpop.f32.mrf.mxu0
        %2937 = vmatprep.mubr.bf16.mxu0 0
        %2938 = vmatmul.mubr.bf16.gmra.mxu0 %v2742
        %v2939 = vpop.f32.mrf.mxu0
        %v2940 = vadd.f32 0.0, %v2939
        %v2941 = vpop.f32.mrf.mxu0
        %v2942 = vpop.f32.mrf.mxu0
        %v2943 = vadd.f32 0.0, %v2942
        %v2944 = vpop.f32.mrf.mxu0
        %2945 = vmatprep.mubr.bf16.mxu0 0
        %2946 = vmatmul.mubr.bf16.gmra.mxu0 %v2745
        %v2947 = vpop.f32.mrf.mxu0
        %v2948 = vadd.f32 0.0, %v2947
        %v2949 = vpop.f32.mrf.mxu0
        %v2950 = vpop.f32.mrf.mxu0
        %v2951 = vadd.f32 0.0, %v2950
        %v2952 = vpop.f32.mrf.mxu0
        %2953 = vmatprep.mubr.bf16.mxu0 0
        %2954 = vmatmul.mubr.bf16.gmra.mxu0 %v2748
        %v2955 = vpop.f32.mrf.mxu0
        %v2956 = vadd.f32 0.0, %v2955
        %v2957 = vpop.f32.mrf.mxu0
        %v2958 = vpop.f32.mrf.mxu0
        %v2959 = vadd.f32 0.0, %v2958
        %v2960 = vpop.f32.mrf.mxu0
        %2961 = vmatprep.mubr.bf16.mxu0 0
        %2962 = vmatmul.mubr.bf16.gmra.mxu0 %v2751
        %v2963 = vpop.f32.mrf.mxu0
        %v2964 = vadd.f32 0.0, %v2963
        %v2965 = vpop.f32.mrf.mxu0
        %v2966 = vpop.f32.mrf.mxu0
        %v2967 = vadd.f32 0.0, %v2966
        %v2968 = vpop.f32.mrf.mxu0
        %2969 = vmatprep.mubr.bf16.mxu0 0
        %2970 = vmatmul.mubr.bf16.gmra.mxu0 %v2754
        %v2971 = vpop.f32.mrf.mxu0
        %v2972 = vadd.f32 0.0, %v2971
        %v2973 = vpop.f32.mrf.mxu0
        %v2974 = vpop.f32.mrf.mxu0
        %v2975 = vadd.f32 0.0, %v2974
        %v2976 = vpop.f32.mrf.mxu0
        %2977 = vmatprep.mubr.bf16.mxu0 0
        %2978 = vmatmul.mubr.bf16.gmra.mxu0 %v2757
        %v2979 = vpop.f32.mrf.mxu0
        %v2980 = vadd.f32 0.0, %v2979
        %v2981 = vpop.f32.mrf.mxu0
        %v2982 = vpop.f32.mrf.mxu0
        %v2983 = vadd.f32 0.0, %v2982
        %v2984 = vpop.f32.mrf.mxu0
        %2985 = vmatprep.mubr.bf16.mxu0 0
        %2986 = vmatmul.mubr.bf16.gmra.mxu0 %v2760
        %v2987 = vpop.f32.mrf.mxu0
        %v2988 = vadd.f32 0.0, %v2987
        %v2989 = vpop.f32.mrf.mxu0
        %v2990 = vpop.f32.mrf.mxu0
        %v2991 = vadd.f32 0.0, %v2990
        %v2992 = vpop.f32.mrf.mxu0
        %2993 = vmatprep.mubr.bf16.mxu0 0
        %2994 = vmatmul.mubr.bf16.gmra.mxu0 %v2763
        %v2995 = vpop.f32.mrf.mxu0
        %v2996 = vadd.f32 0.0, %v2995
        %v2997 = vpop.f32.mrf.mxu0
        %v2998 = vpop.f32.mrf.mxu0
        %v2999 = vadd.f32 0.0, %v2998
        %v3000 = vpop.f32.mrf.mxu0
        %3001 = vmatprep.mubr.bf16.mxu0 0
        %3002 = vmatmul.mubr.bf16.gmra.mxu0 %v2766
        %v3003 = vpop.f32.mrf.mxu0
        %v3004 = vadd.f32 0.0, %v3003
        %v3005 = vpop.f32.mrf.mxu0
        %v3006 = vpop.f32.mrf.mxu0
        %v3007 = vadd.f32 0.0, %v3006
        %v3008 = vpop.f32.mrf.mxu0
        %3009 = vmatprep.mubr.bf16.mxu0 0
        %3010 = vmatmul.mubr.bf16.gmra.mxu0 %v2769
        %v3011 = vpop.f32.mrf.mxu0
        %v3012 = vadd.f32 0.0, %v3011
        %v3013 = vpop.f32.mrf.mxu0
        %v3014 = vpop.f32.mrf.mxu0
        %v3015 = vadd.f32 0.0, %v3014
        %v3016 = vpop.f32.mrf.mxu0
        %3017 = vmatprep.mubr.bf16.mxu0 0
        %3018 = vmatmul.mubr.bf16.gmra.mxu0 %v2772
        %v3019 = vpop.f32.mrf.mxu0
        %v3020 = vadd.f32 0.0, %v3019
        %v3021 = vpop.f32.mrf.mxu0
        %v3022 = vpop.f32.mrf.mxu0
        %v3023 = vadd.f32 0.0, %v3022
        %v3024 = vpop.f32.mrf.mxu0
        %3025 = vmatprep.mubr.bf16.mxu0 0
        %3026 = vmatmul.mubr.bf16.gmra.mxu0 %v2775
        %v3027 = vpop.f32.mrf.mxu0
        %v3028 = vadd.f32 0.0, %v3027
        %v3029 = vpop.f32.mrf.mxu0
        %v3030 = vpop.f32.mrf.mxu0
        %v3031 = vadd.f32 0.0, %v3030
        %v3032 = vpop.f32.mrf.mxu0
        %3033 = vmatprep.mubr.bf16.mxu0 0
        %3034 = vmatmul.mubr.bf16.gmra.mxu0 %v2778
        %v3035 = vpop.f32.mrf.mxu0
        %v3036 = vadd.f32 0.0, %v3035
        %v3037 = vpop.f32.mrf.mxu0
        %v3038 = vpop.f32.mrf.mxu0
        %v3039 = vadd.f32 0.0, %v3038
        %v3040 = vpop.f32.mrf.mxu0
        %3041 = vmatprep.mubr.bf16.mxu0 0
        %3042 = vmatmul.mubr.bf16.gmra.mxu0 %v2781
        %v3043 = vpop.f32.mrf.mxu0
        %v3044 = vadd.f32 0.0, %v3043
        %v3045 = vpop.f32.mrf.mxu0
        %v3046 = vpop.f32.mrf.mxu0
        %v3047 = vadd.f32 0.0, %v3046
        %v3048 = vpop.f32.mrf.mxu0
        %3049 = vmatprep.mubr.bf16.mxu0 0
        %3050 = vmatmul.mubr.bf16.gmra.mxu0 %v2784
        %v3051 = vpop.f32.mrf.mxu0
        %v3052 = vadd.f32 0.0, %v3051
        %v3053 = vpop.f32.mrf.mxu0
        %v3054 = vpop.f32.mrf.mxu0
        %v3055 = vadd.f32 0.0, %v3054
        %v3056 = vpop.f32.mrf.mxu0
        %3057 = vdwg.mxu0
        %v3058 = vadd.f32 %v2672, %v2932
        %v3059 = vadd.f32 %v2673, %v2935
        %v3060 = vadd.f32 %v2674, %v2940
        %v3061 = vadd.f32 %v2675, %v2943
        %v3062 = vadd.f32 %v2676, %v2948
        %v3063 = vadd.f32 %v2677, %v2951
        %v3064 = vadd.f32 %v2678, %v2956
        %v3065 = vadd.f32 %v2679, %v2959
        %v3066 = vadd.f32 %v2680, %v2964
        %v3067 = vadd.f32 %v2681, %v2967
        %v3068 = vadd.f32 %v2682, %v2972
        %v3069 = vadd.f32 %v2683, %v2975
        %v3070 = vadd.f32 %v2684, %v2980
        %v3071 = vadd.f32 %v2685, %v2983
        %v3072 = vadd.f32 %v2686, %v2988
        %v3073 = vadd.f32 %v2687, %v2991
        %v3074 = vadd.f32 %v2688, %v2996
        %v3075 = vadd.f32 %v2689, %v2999
        %v3076 = vadd.f32 %v2690, %v3004
        %v3077 = vadd.f32 %v2691, %v3007
        %v3078 = vadd.f32 %v2692, %v3012
        %v3079 = vadd.f32 %v2693, %v3015
        %v3080 = vadd.f32 %v2694, %v3020
        %v3081 = vadd.f32 %v2695, %v3023
        %v3082 = vadd.f32 %v2696, %v3028
        %v3083 = vadd.f32 %v2697, %v3031
        %v3084 = vadd.f32 %v2698, %v3036
        %v3085 = vadd.f32 %v2699, %v3039
        %v3086 = vadd.f32 %v2700, %v3044
        %v3087 = vadd.f32 %v2701, %v3047
        %v3088 = vadd.f32 %v2702, %v3052
        %v3089 = vadd.f32 %v2703, %v3055
        %3090 = vmatprep.subr.bf16.mxu0 0
        %3091 = vmatpush1.bf16.msra.mxu0 %v1144
        %3092 = vmatprep.subr.bf16.mxu0 0
        %3093 = vmatpush1.bf16.msra.mxu0 %v1143
        %3094 = vmatprep.subr.bf16.mxu0 0
        %3095 = vmatpush1.bf16.msra.mxu0 %v1142
        %3096 = vmatprep.subr.bf16.mxu0 0
        %3097 = vmatpush1.bf16.msra.mxu0 %v1141
        %3098 = vmatprep.subr.bf16.mxu0 0
        %3099 = vmatpush1.bf16.msra.mxu0 %v1140
        %3100 = vmatprep.subr.bf16.mxu0 0
        %3101 = vmatpush1.bf16.msra.mxu0 %v1139
        %3102 = vmatprep.subr.bf16.mxu0 0
        %3103 = vmatpush1.bf16.msra.mxu0 %v1138
        %3104 = vmatprep.subr.bf16.mxu0 0
        %3105 = vmatpush1.bf16.msra.mxu0 %v1137
        %3106 = vmatprep.subr.bf16.mxu0 0
        %3107 = vmatpush2.bf16.msra.mxu0 0
        %3108 = vmatprep.subr.bf16.mxu0 0
        %3109 = vmatpush2.bf16.msra.mxu0 0
        %3110 = vmatprep.subr.bf16.mxu0 0
        %3111 = vmatpush2.bf16.msra.mxu0 0
        %3112 = vmatprep.subr.bf16.mxu0 0
        %3113 = vmatpush2.bf16.msra.mxu0 0
        %3114 = vmatprep.subr.bf16.mxu0 0
        %3115 = vmatpush2.bf16.msra.mxu0 0
        %3116 = vmatprep.subr.bf16.mxu0 0
        %3117 = vmatpush2.bf16.msra.mxu0 0
        %3118 = vmatprep.subr.bf16.mxu0 0
        %3119 = vmatpush2.bf16.msra.mxu0 0
        %3120 = vmatprep.subr.bf16.mxu0 0
        %3121 = vmatpush2.bf16.msra.mxu0 0
        %3122 = vmatprep.mubr.bf16.mxu0 0
        %3123 = vmatmul.mubr.bf16.gmra.mxu0 %v2739
        %v3124 = vpop.f32.mrf.mxu0
        %v3125 = vadd.f32 0.0, %v3124
        %v3126 = vpop.f32.mrf.mxu0
        %v3127 = vpop.f32.mrf.mxu0
        %v3128 = vadd.f32 0.0, %v3127
        %v3129 = vpop.f32.mrf.mxu0
        %3130 = vmatprep.mubr.bf16.mxu0 0
        %3131 = vmatmul.mubr.bf16.gmra.mxu0 %v2742
        %v3132 = vpop.f32.mrf.mxu0
        %v3133 = vadd.f32 0.0, %v3132
        %v3134 = vpop.f32.mrf.mxu0
        %v3135 = vpop.f32.mrf.mxu0
        %v3136 = vadd.f32 0.0, %v3135
        %v3137 = vpop.f32.mrf.mxu0
        %3138 = vmatprep.mubr.bf16.mxu0 0
        %3139 = vmatmul.mubr.bf16.gmra.mxu0 %v2745
        %v3140 = vpop.f32.mrf.mxu0
        %v3141 = vadd.f32 0.0, %v3140
        %v3142 = vpop.f32.mrf.mxu0
        %v3143 = vpop.f32.mrf.mxu0
        %v3144 = vadd.f32 0.0, %v3143
        %v3145 = vpop.f32.mrf.mxu0
        %3146 = vmatprep.mubr.bf16.mxu0 0
        %3147 = vmatmul.mubr.bf16.gmra.mxu0 %v2748
        %v3148 = vpop.f32.mrf.mxu0
        %v3149 = vadd.f32 0.0, %v3148
        %v3150 = vpop.f32.mrf.mxu0
        %v3151 = vpop.f32.mrf.mxu0
        %v3152 = vadd.f32 0.0, %v3151
        %v3153 = vpop.f32.mrf.mxu0
        %3154 = vmatprep.mubr.bf16.mxu0 0
        %3155 = vmatmul.mubr.bf16.gmra.mxu0 %v2751
        %v3156 = vpop.f32.mrf.mxu0
        %v3157 = vadd.f32 0.0, %v3156
        %v3158 = vpop.f32.mrf.mxu0
        %v3159 = vpop.f32.mrf.mxu0
        %v3160 = vadd.f32 0.0, %v3159
        %v3161 = vpop.f32.mrf.mxu0
        %3162 = vmatprep.mubr.bf16.mxu0 0
        %3163 = vmatmul.mubr.bf16.gmra.mxu0 %v2754
        %v3164 = vpop.f32.mrf.mxu0
        %v3165 = vadd.f32 0.0, %v3164
        %v3166 = vpop.f32.mrf.mxu0
        %v3167 = vpop.f32.mrf.mxu0
        %v3168 = vadd.f32 0.0, %v3167
        %v3169 = vpop.f32.mrf.mxu0
        %3170 = vmatprep.mubr.bf16.mxu0 0
        %3171 = vmatmul.mubr.bf16.gmra.mxu0 %v2757
        %v3172 = vpop.f32.mrf.mxu0
        %v3173 = vadd.f32 0.0, %v3172
        %v3174 = vpop.f32.mrf.mxu0
        %v3175 = vpop.f32.mrf.mxu0
        %v3176 = vadd.f32 0.0, %v3175
        %v3177 = vpop.f32.mrf.mxu0
        %3178 = vmatprep.mubr.bf16.mxu0 0
        %3179 = vmatmul.mubr.bf16.gmra.mxu0 %v2760
        %v3180 = vpop.f32.mrf.mxu0
        %v3181 = vadd.f32 0.0, %v3180
        %v3182 = vpop.f32.mrf.mxu0
        %v3183 = vpop.f32.mrf.mxu0
        %v3184 = vadd.f32 0.0, %v3183
        %v3185 = vpop.f32.mrf.mxu0
        %3186 = vmatprep.mubr.bf16.mxu0 0
        %3187 = vmatmul.mubr.bf16.gmra.mxu0 %v2763
        %v3188 = vpop.f32.mrf.mxu0
        %v3189 = vadd.f32 0.0, %v3188
        %v3190 = vpop.f32.mrf.mxu0
        %v3191 = vpop.f32.mrf.mxu0
        %v3192 = vadd.f32 0.0, %v3191
        %v3193 = vpop.f32.mrf.mxu0
        %3194 = vmatprep.mubr.bf16.mxu0 0
        %3195 = vmatmul.mubr.bf16.gmra.mxu0 %v2766
        %v3196 = vpop.f32.mrf.mxu0
        %v3197 = vadd.f32 0.0, %v3196
        %v3198 = vpop.f32.mrf.mxu0
        %v3199 = vpop.f32.mrf.mxu0
        %v3200 = vadd.f32 0.0, %v3199
        %v3201 = vpop.f32.mrf.mxu0
        %3202 = vmatprep.mubr.bf16.mxu0 0
        %3203 = vmatmul.mubr.bf16.gmra.mxu0 %v2769
        %v3204 = vpop.f32.mrf.mxu0
        %v3205 = vadd.f32 0.0, %v3204
        %v3206 = vpop.f32.mrf.mxu0
        %v3207 = vpop.f32.mrf.mxu0
        %v3208 = vadd.f32 0.0, %v3207
        %v3209 = vpop.f32.mrf.mxu0
        %3210 = vmatprep.mubr.bf16.mxu0 0
        %3211 = vmatmul.mubr.bf16.gmra.mxu0 %v2772
        %v3212 = vpop.f32.mrf.mxu0
        %v3213 = vadd.f32 0.0, %v3212
        %v3214 = vpop.f32.mrf.mxu0
        %v3215 = vpop.f32.mrf.mxu0
        %v3216 = vadd.f32 0.0, %v3215
        %v3217 = vpop.f32.mrf.mxu0
        %3218 = vmatprep.mubr.bf16.mxu0 0
        %3219 = vmatmul.mubr.bf16.gmra.mxu0 %v2775
        %v3220 = vpop.f32.mrf.mxu0
        %v3221 = vadd.f32 0.0, %v3220
        %v3222 = vpop.f32.mrf.mxu0
        %v3223 = vpop.f32.mrf.mxu0
        %v3224 = vadd.f32 0.0, %v3223
        %v3225 = vpop.f32.mrf.mxu0
        %3226 = vmatprep.mubr.bf16.mxu0 0
        %3227 = vmatmul.mubr.bf16.gmra.mxu0 %v2778
        %v3228 = vpop.f32.mrf.mxu0
        %v3229 = vadd.f32 0.0, %v3228
        %v3230 = vpop.f32.mrf.mxu0
        %v3231 = vpop.f32.mrf.mxu0
        %v3232 = vadd.f32 0.0, %v3231
        %v3233 = vpop.f32.mrf.mxu0
        %3234 = vmatprep.mubr.bf16.mxu0 0
        %3235 = vmatmul.mubr.bf16.gmra.mxu0 %v2781
        %v3236 = vpop.f32.mrf.mxu0
        %v3237 = vadd.f32 0.0, %v3236
        %v3238 = vpop.f32.mrf.mxu0
        %v3239 = vpop.f32.mrf.mxu0
        %v3240 = vadd.f32 0.0, %v3239
        %v3241 = vpop.f32.mrf.mxu0
        %3242 = vmatprep.mubr.bf16.mxu0 0
        %3243 = vmatmul.mubr.bf16.gmra.mxu0 %v2784
        %v3244 = vpop.f32.mrf.mxu0
        %v3245 = vadd.f32 0.0, %v3244
        %v3246 = vpop.f32.mrf.mxu0
        %v3247 = vpop.f32.mrf.mxu0
        %v3248 = vadd.f32 0.0, %v3247
        %v3249 = vpop.f32.mrf.mxu0
        %3250 = vdwg.mxu0
        %v3251 = vadd.f32 %v3058, %v3125
        %v3252 = vadd.f32 %v3059, %v3128
        %v3253 = vadd.f32 %v3060, %v3133
        %v3254 = vadd.f32 %v3061, %v3136
        %v3255 = vadd.f32 %v3062, %v3141
        %v3256 = vadd.f32 %v3063, %v3144
        %v3257 = vadd.f32 %v3064, %v3149
        %v3258 = vadd.f32 %v3065, %v3152
        %v3259 = vadd.f32 %v3066, %v3157
        %v3260 = vadd.f32 %v3067, %v3160
        %v3261 = vadd.f32 %v3068, %v3165
        %v3262 = vadd.f32 %v3069, %v3168
        %v3263 = vadd.f32 %v3070, %v3173
        %v3264 = vadd.f32 %v3071, %v3176
        %v3265 = vadd.f32 %v3072, %v3181
        %v3266 = vadd.f32 %v3073, %v3184
        %v3267 = vadd.f32 %v3074, %v3189
        %v3268 = vadd.f32 %v3075, %v3192
        %v3269 = vadd.f32 %v3076, %v3197
        %v3270 = vadd.f32 %v3077, %v3200
        %v3271 = vadd.f32 %v3078, %v3205
        %v3272 = vadd.f32 %v3079, %v3208
        %v3273 = vadd.f32 %v3080, %v3213
        %v3274 = vadd.f32 %v3081, %v3216
        %v3275 = vadd.f32 %v3082, %v3221
        %v3276 = vadd.f32 %v3083, %v3224
        %v3277 = vadd.f32 %v3084, %v3229
        %v3278 = vadd.f32 %v3085, %v3232
        %v3279 = vadd.f32 %v3086, %v3237
        %v3280 = vadd.f32 %v3087, %v3240
        %v3281 = vadd.f32 %v3088, %v3245
        %v3282 = vadd.f32 %v3089, %v3248
        %3283 = vmatprep.subr.bf16.mxu0 0
        %3284 = vmatpush1.bf16.msra.mxu0 %v784
        %3285 = vmatprep.subr.bf16.mxu0 0
        %3286 = vmatpush1.bf16.msra.mxu0 %v783
        %3287 = vmatprep.subr.bf16.mxu0 0
        %3288 = vmatpush1.bf16.msra.mxu0 %v782
        %3289 = vmatprep.subr.bf16.mxu0 0
        %3290 = vmatpush1.bf16.msra.mxu0 %v781
        %3291 = vmatprep.subr.bf16.mxu0 0
        %3292 = vmatpush1.bf16.msra.mxu0 %v780
        %3293 = vmatprep.subr.bf16.mxu0 0
        %3294 = vmatpush1.bf16.msra.mxu0 %v779
        %3295 = vmatprep.subr.bf16.mxu0 0
        %3296 = vmatpush1.bf16.msra.mxu0 %v778
        %3297 = vmatprep.subr.bf16.mxu0 0
        %3298 = vmatpush1.bf16.msra.mxu0 %v777
        %3299 = vmatprep.subr.bf16.mxu0 0
        %3300 = vmatpush2.bf16.msra.mxu0 0
        %3301 = vmatprep.subr.bf16.mxu0 0
        %3302 = vmatpush2.bf16.msra.mxu0 0
        %3303 = vmatprep.subr.bf16.mxu0 0
        %3304 = vmatpush2.bf16.msra.mxu0 0
        %3305 = vmatprep.subr.bf16.mxu0 0
        %3306 = vmatpush2.bf16.msra.mxu0 0
        %3307 = vmatprep.subr.bf16.mxu0 0
        %3308 = vmatpush2.bf16.msra.mxu0 0
        %3309 = vmatprep.subr.bf16.mxu0 0
        %3310 = vmatpush2.bf16.msra.mxu0 0
        %3311 = vmatprep.subr.bf16.mxu0 0
        %3312 = vmatpush2.bf16.msra.mxu0 0
        %3313 = vmatprep.subr.bf16.mxu0 0
        %3314 = vmatpush2.bf16.msra.mxu0 0
        %3315 = vmatprep.mubr.bf16.mxu0 0
        %3316 = vmatmul.mubr.bf16.gmra.mxu0 %v2835
        %v3317 = vpop.f32.mrf.mxu0
        %v3318 = vadd.f32 0.0, %v3317
        %v3319 = vpop.f32.mrf.mxu0
        %v3320 = vpop.f32.mrf.mxu0
        %v3321 = vadd.f32 0.0, %v3320
        %v3322 = vpop.f32.mrf.mxu0
        %3323 = vmatprep.mubr.bf16.mxu0 0
        %3324 = vmatmul.mubr.bf16.gmra.mxu0 %v2838
        %v3325 = vpop.f32.mrf.mxu0
        %v3326 = vadd.f32 0.0, %v3325
        %v3327 = vpop.f32.mrf.mxu0
        %v3328 = vpop.f32.mrf.mxu0
        %v3329 = vadd.f32 0.0, %v3328
        %v3330 = vpop.f32.mrf.mxu0
        %3331 = vmatprep.mubr.bf16.mxu0 0
        %3332 = vmatmul.mubr.bf16.gmra.mxu0 %v2841
        %v3333 = vpop.f32.mrf.mxu0
        %v3334 = vadd.f32 0.0, %v3333
        %v3335 = vpop.f32.mrf.mxu0
        %v3336 = vpop.f32.mrf.mxu0
        %v3337 = vadd.f32 0.0, %v3336
        %v3338 = vpop.f32.mrf.mxu0
        %3339 = vmatprep.mubr.bf16.mxu0 0
        %3340 = vmatmul.mubr.bf16.gmra.mxu0 %v2844
        %v3341 = vpop.f32.mrf.mxu0
        %v3342 = vadd.f32 0.0, %v3341
        %v3343 = vpop.f32.mrf.mxu0
        %v3344 = vpop.f32.mrf.mxu0
        %v3345 = vadd.f32 0.0, %v3344
        %v3346 = vpop.f32.mrf.mxu0
        %3347 = vmatprep.mubr.bf16.mxu0 0
        %3348 = vmatmul.mubr.bf16.gmra.mxu0 %v2847
        %v3349 = vpop.f32.mrf.mxu0
        %v3350 = vadd.f32 0.0, %v3349
        %v3351 = vpop.f32.mrf.mxu0
        %v3352 = vpop.f32.mrf.mxu0
        %v3353 = vadd.f32 0.0, %v3352
        %v3354 = vpop.f32.mrf.mxu0
        %3355 = vmatprep.mubr.bf16.mxu0 0
        %3356 = vmatmul.mubr.bf16.gmra.mxu0 %v2850
        %v3357 = vpop.f32.mrf.mxu0
        %v3358 = vadd.f32 0.0, %v3357
        %v3359 = vpop.f32.mrf.mxu0
        %v3360 = vpop.f32.mrf.mxu0
        %v3361 = vadd.f32 0.0, %v3360
        %v3362 = vpop.f32.mrf.mxu0
        %3363 = vmatprep.mubr.bf16.mxu0 0
        %3364 = vmatmul.mubr.bf16.gmra.mxu0 %v2853
        %v3365 = vpop.f32.mrf.mxu0
        %v3366 = vadd.f32 0.0, %v3365
        %v3367 = vpop.f32.mrf.mxu0
        %v3368 = vpop.f32.mrf.mxu0
        %v3369 = vadd.f32 0.0, %v3368
        %v3370 = vpop.f32.mrf.mxu0
        %3371 = vmatprep.mubr.bf16.mxu0 0
        %3372 = vmatmul.mubr.bf16.gmra.mxu0 %v2856
        %v3373 = vpop.f32.mrf.mxu0
        %v3374 = vadd.f32 0.0, %v3373
        %v3375 = vpop.f32.mrf.mxu0
        %v3376 = vpop.f32.mrf.mxu0
        %v3377 = vadd.f32 0.0, %v3376
        %v3378 = vpop.f32.mrf.mxu0
        %3379 = vmatprep.mubr.bf16.mxu0 0
        %3380 = vmatmul.mubr.bf16.gmra.mxu0 %v2859
        %v3381 = vpop.f32.mrf.mxu0
        %v3382 = vadd.f32 0.0, %v3381
        %v3383 = vpop.f32.mrf.mxu0
        %v3384 = vpop.f32.mrf.mxu0
        %v3385 = vadd.f32 0.0, %v3384
        %v3386 = vpop.f32.mrf.mxu0
        %3387 = vmatprep.mubr.bf16.mxu0 0
        %3388 = vmatmul.mubr.bf16.gmra.mxu0 %v2862
        %v3389 = vpop.f32.mrf.mxu0
        %v3390 = vadd.f32 0.0, %v3389
        %v3391 = vpop.f32.mrf.mxu0
        %v3392 = vpop.f32.mrf.mxu0
        %v3393 = vadd.f32 0.0, %v3392
        %v3394 = vpop.f32.mrf.mxu0
        %3395 = vmatprep.mubr.bf16.mxu0 0
        %3396 = vmatmul.mubr.bf16.gmra.mxu0 %v2865
        %v3397 = vpop.f32.mrf.mxu0
        %v3398 = vadd.f32 0.0, %v3397
        %v3399 = vpop.f32.mrf.mxu0
        %v3400 = vpop.f32.mrf.mxu0
        %v3401 = vadd.f32 0.0, %v3400
        %v3402 = vpop.f32.mrf.mxu0
        %3403 = vmatprep.mubr.bf16.mxu0 0
        %3404 = vmatmul.mubr.bf16.gmra.mxu0 %v2868
        %v3405 = vpop.f32.mrf.mxu0
        %v3406 = vadd.f32 0.0, %v3405
        %v3407 = vpop.f32.mrf.mxu0
        %v3408 = vpop.f32.mrf.mxu0
        %v3409 = vadd.f32 0.0, %v3408
        %v3410 = vpop.f32.mrf.mxu0
        %3411 = vmatprep.mubr.bf16.mxu0 0
        %3412 = vmatmul.mubr.bf16.gmra.mxu0 %v2871
        %v3413 = vpop.f32.mrf.mxu0
        %v3414 = vadd.f32 0.0, %v3413
        %v3415 = vpop.f32.mrf.mxu0
        %v3416 = vpop.f32.mrf.mxu0
        %v3417 = vadd.f32 0.0, %v3416
        %v3418 = vpop.f32.mrf.mxu0
        %3419 = vmatprep.mubr.bf16.mxu0 0
        %3420 = vmatmul.mubr.bf16.gmra.mxu0 %v2874
        %v3421 = vpop.f32.mrf.mxu0
        %v3422 = vadd.f32 0.0, %v3421
        %v3423 = vpop.f32.mrf.mxu0
        %v3424 = vpop.f32.mrf.mxu0
        %v3425 = vadd.f32 0.0, %v3424
        %v3426 = vpop.f32.mrf.mxu0
        %3427 = vmatprep.mubr.bf16.mxu0 0
        %3428 = vmatmul.mubr.bf16.gmra.mxu0 %v2877
        %v3429 = vpop.f32.mrf.mxu0
        %v3430 = vadd.f32 0.0, %v3429
        %v3431 = vpop.f32.mrf.mxu0
        %v3432 = vpop.f32.mrf.mxu0
        %v3433 = vadd.f32 0.0, %v3432
        %v3434 = vpop.f32.mrf.mxu0
        %3435 = vmatprep.mubr.bf16.mxu0 0
        %3436 = vmatmul.mubr.bf16.gmra.mxu0 %v2880
        %v3437 = vpop.f32.mrf.mxu0
        %v3438 = vadd.f32 0.0, %v3437
        %v3439 = vpop.f32.mrf.mxu0
        %v3440 = vpop.f32.mrf.mxu0
        %v3441 = vadd.f32 0.0, %v3440
        %v3442 = vpop.f32.mrf.mxu0
        %3443 = vdwg.mxu0
        %v3444 = vadd.f32 %v3251, %v3318
        %v3445 = vadd.f32 %v3252, %v3321
        %v3446 = vadd.f32 %v3253, %v3326
        %v3447 = vadd.f32 %v3254, %v3329
        %v3448 = vadd.f32 %v3255, %v3334
        %v3449 = vadd.f32 %v3256, %v3337
        %v3450 = vadd.f32 %v3257, %v3342
        %v3451 = vadd.f32 %v3258, %v3345
        %v3452 = vadd.f32 %v3259, %v3350
        %v3453 = vadd.f32 %v3260, %v3353
        %v3454 = vadd.f32 %v3261, %v3358
        %v3455 = vadd.f32 %v3262, %v3361
        %v3456 = vadd.f32 %v3263, %v3366
        %v3457 = vadd.f32 %v3264, %v3369
        %v3458 = vadd.f32 %v3265, %v3374
        %v3459 = vadd.f32 %v3266, %v3377
        %v3460 = vadd.f32 %v3267, %v3382
        %v3461 = vadd.f32 %v3268, %v3385
        %v3462 = vadd.f32 %v3269, %v3390
        %v3463 = vadd.f32 %v3270, %v3393
        %v3464 = vadd.f32 %v3271, %v3398
        %v3465 = vadd.f32 %v3272, %v3401
        %v3466 = vadd.f32 %v3273, %v3406
        %v3467 = vadd.f32 %v3274, %v3409
        %v3468 = vadd.f32 %v3275, %v3414
        %v3469 = vadd.f32 %v3276, %v3417
        %v3470 = vadd.f32 %v3277, %v3422
        %v3471 = vadd.f32 %v3278, %v3425
        %v3472 = vadd.f32 %v3279, %v3430
        %v3473 = vadd.f32 %v3280, %v3433
        %v3474 = vadd.f32 %v3281, %v3438
        %v3475 = vadd.f32 %v3282, %v3441
        %3476 = vmatprep.subr.bf16.mxu0 0
        %3477 = vmatpush1.bf16.msra.mxu0 %v792
        %3478 = vmatprep.subr.bf16.mxu0 0
        %3479 = vmatpush1.bf16.msra.mxu0 %v791
        %3480 = vmatprep.subr.bf16.mxu0 0
        %3481 = vmatpush1.bf16.msra.mxu0 %v790
        %3482 = vmatprep.subr.bf16.mxu0 0
        %3483 = vmatpush1.bf16.msra.mxu0 %v789
        %3484 = vmatprep.subr.bf16.mxu0 0
        %3485 = vmatpush1.bf16.msra.mxu0 %v788
        %3486 = vmatprep.subr.bf16.mxu0 0
        %3487 = vmatpush1.bf16.msra.mxu0 %v787
        %3488 = vmatprep.subr.bf16.mxu0 0
        %3489 = vmatpush1.bf16.msra.mxu0 %v786
        %3490 = vmatprep.subr.bf16.mxu0 0
        %3491 = vmatpush1.bf16.msra.mxu0 %v785
        %3492 = vmatprep.subr.bf16.mxu0 0
        %3493 = vmatpush2.bf16.msra.mxu0 0
        %3494 = vmatprep.subr.bf16.mxu0 0
        %3495 = vmatpush2.bf16.msra.mxu0 0
        %3496 = vmatprep.subr.bf16.mxu0 0
        %3497 = vmatpush2.bf16.msra.mxu0 0
        %3498 = vmatprep.subr.bf16.mxu0 0
        %3499 = vmatpush2.bf16.msra.mxu0 0
        %3500 = vmatprep.subr.bf16.mxu0 0
        %3501 = vmatpush2.bf16.msra.mxu0 0
        %3502 = vmatprep.subr.bf16.mxu0 0
        %3503 = vmatpush2.bf16.msra.mxu0 0
        %3504 = vmatprep.subr.bf16.mxu0 0
        %3505 = vmatpush2.bf16.msra.mxu0 0
        %3506 = vmatprep.subr.bf16.mxu0 0
        %3507 = vmatpush2.bf16.msra.mxu0 0
        %3508 = vmatprep.mubr.bf16.mxu0 0
        %3509 = vmatmul.mubr.bf16.gmra.mxu0 %v439
        %v3510 = vpop.f32.mrf.mxu0
        %v3511 = vadd.f32 0.0, %v3510
        %v3512 = vpop.f32.mrf.mxu0
        %v3513 = vpop.f32.mrf.mxu0
        %v3514 = vadd.f32 0.0, %v3513
        %v3515 = vpop.f32.mrf.mxu0
        %3516 = vmatprep.mubr.bf16.mxu0 0
        %3517 = vmatmul.mubr.bf16.gmra.mxu0 %v441
        %v3518 = vpop.f32.mrf.mxu0
        %v3519 = vadd.f32 0.0, %v3518
        %v3520 = vpop.f32.mrf.mxu0
        %v3521 = vpop.f32.mrf.mxu0
        %v3522 = vadd.f32 0.0, %v3521
        %v3523 = vpop.f32.mrf.mxu0
        %3524 = vmatprep.mubr.bf16.mxu0 0
        %3525 = vmatmul.mubr.bf16.gmra.mxu0 %v443
        %v3526 = vpop.f32.mrf.mxu0
        %v3527 = vadd.f32 0.0, %v3526
        %v3528 = vpop.f32.mrf.mxu0
        %v3529 = vpop.f32.mrf.mxu0
        %v3530 = vadd.f32 0.0, %v3529
        %v3531 = vpop.f32.mrf.mxu0
        %3532 = vmatprep.mubr.bf16.mxu0 0
        %3533 = vmatmul.mubr.bf16.gmra.mxu0 %v445
        %v3534 = vpop.f32.mrf.mxu0
        %v3535 = vadd.f32 0.0, %v3534
        %v3536 = vpop.f32.mrf.mxu0
        %v3537 = vpop.f32.mrf.mxu0
        %v3538 = vadd.f32 0.0, %v3537
        %v3539 = vpop.f32.mrf.mxu0
        %3540 = vmatprep.mubr.bf16.mxu0 0
        %3541 = vmatmul.mubr.bf16.gmra.mxu0 %v447
        %v3542 = vpop.f32.mrf.mxu0
        %v3543 = vadd.f32 0.0, %v3542
        %v3544 = vpop.f32.mrf.mxu0
        %v3545 = vpop.f32.mrf.mxu0
        %v3546 = vadd.f32 0.0, %v3545
        %v3547 = vpop.f32.mrf.mxu0
        %3548 = vmatprep.mubr.bf16.mxu0 0
        %3549 = vmatmul.mubr.bf16.gmra.mxu0 %v449
        %v3550 = vpop.f32.mrf.mxu0
        %v3551 = vadd.f32 0.0, %v3550
        %v3552 = vpop.f32.mrf.mxu0
        %v3553 = vpop.f32.mrf.mxu0
        %v3554 = vadd.f32 0.0, %v3553
        %v3555 = vpop.f32.mrf.mxu0
        %3556 = vmatprep.mubr.bf16.mxu0 0
        %3557 = vmatmul.mubr.bf16.gmra.mxu0 %v451
        %v3558 = vpop.f32.mrf.mxu0
        %v3559 = vadd.f32 0.0, %v3558
        %v3560 = vpop.f32.mrf.mxu0
        %v3561 = vpop.f32.mrf.mxu0
        %v3562 = vadd.f32 0.0, %v3561
        %v3563 = vpop.f32.mrf.mxu0
        %3564 = vmatprep.mubr.bf16.mxu0 0
        %3565 = vmatmul.mubr.bf16.gmra.mxu0 %v453
        %v3566 = vpop.f32.mrf.mxu0
        %v3567 = vadd.f32 0.0, %v3566
        %v3568 = vpop.f32.mrf.mxu0
        %v3569 = vpop.f32.mrf.mxu0
        %v3570 = vadd.f32 0.0, %v3569
        %v3571 = vpop.f32.mrf.mxu0
        %3572 = vmatprep.mubr.bf16.mxu0 0
        %3573 = vmatmul.mubr.bf16.gmra.mxu0 %v455
        %v3574 = vpop.f32.mrf.mxu0
        %v3575 = vadd.f32 0.0, %v3574
        %v3576 = vpop.f32.mrf.mxu0
        %v3577 = vpop.f32.mrf.mxu0
        %v3578 = vadd.f32 0.0, %v3577
        %v3579 = vpop.f32.mrf.mxu0
        %3580 = vmatprep.mubr.bf16.mxu0 0
        %3581 = vmatmul.mubr.bf16.gmra.mxu0 %v457
        %v3582 = vpop.f32.mrf.mxu0
        %v3583 = vadd.f32 0.0, %v3582
        %v3584 = vpop.f32.mrf.mxu0
        %v3585 = vpop.f32.mrf.mxu0
        %v3586 = vadd.f32 0.0, %v3585
        %v3587 = vpop.f32.mrf.mxu0
        %3588 = vmatprep.mubr.bf16.mxu0 0
        %3589 = vmatmul.mubr.bf16.gmra.mxu0 %v459
        %v3590 = vpop.f32.mrf.mxu0
        %v3591 = vadd.f32 0.0, %v3590
        %v3592 = vpop.f32.mrf.mxu0
        %v3593 = vpop.f32.mrf.mxu0
        %v3594 = vadd.f32 0.0, %v3593
        %v3595 = vpop.f32.mrf.mxu0
        %3596 = vmatprep.mubr.bf16.mxu0 0
        %3597 = vmatmul.mubr.bf16.gmra.mxu0 %v461
        %v3598 = vpop.f32.mrf.mxu0
        %v3599 = vadd.f32 0.0, %v3598
        %v3600 = vpop.f32.mrf.mxu0
        %v3601 = vpop.f32.mrf.mxu0
        %v3602 = vadd.f32 0.0, %v3601
        %v3603 = vpop.f32.mrf.mxu0
        %3604 = vmatprep.mubr.bf16.mxu0 0
        %3605 = vmatmul.mubr.bf16.gmra.mxu0 %v463
        %v3606 = vpop.f32.mrf.mxu0
        %v3607 = vadd.f32 0.0, %v3606
        %v3608 = vpop.f32.mrf.mxu0
        %v3609 = vpop.f32.mrf.mxu0
        %v3610 = vadd.f32 0.0, %v3609
        %v3611 = vpop.f32.mrf.mxu0
        %3612 = vmatprep.mubr.bf16.mxu0 0
        %3613 = vmatmul.mubr.bf16.gmra.mxu0 %v465
        %v3614 = vpop.f32.mrf.mxu0
        %v3615 = vadd.f32 0.0, %v3614
        %v3616 = vpop.f32.mrf.mxu0
        %v3617 = vpop.f32.mrf.mxu0
        %v3618 = vadd.f32 0.0, %v3617
        %v3619 = vpop.f32.mrf.mxu0
        %3620 = vmatprep.mubr.bf16.mxu0 0
        %3621 = vmatmul.mubr.bf16.gmra.mxu0 %v467
        %v3622 = vpop.f32.mrf.mxu0
        %v3623 = vadd.f32 0.0, %v3622
        %v3624 = vpop.f32.mrf.mxu0
        %v3625 = vpop.f32.mrf.mxu0
        %v3626 = vadd.f32 0.0, %v3625
        %v3627 = vpop.f32.mrf.mxu0
        %3628 = vmatprep.mubr.bf16.mxu0 0
        %3629 = vmatmul.mubr.bf16.gmra.mxu0 %v469
        %v3630 = vpop.f32.mrf.mxu0
        %v3631 = vadd.f32 0.0, %v3630
        %v3632 = vpop.f32.mrf.mxu0
        %v3633 = vpop.f32.mrf.mxu0
        %v3634 = vadd.f32 0.0, %v3633
        %v3635 = vpop.f32.mrf.mxu0
        %3636 = vdwg.mxu0
        %v3637 = vadd.f32 %v3444, %v3511
        %v3638 = vadd.f32 %v3445, %v3514
        %v3639 = vadd.f32 %v3446, %v3519
        %v3640 = vadd.f32 %v3447, %v3522
        %v3641 = vadd.f32 %v3448, %v3527
        %v3642 = vadd.f32 %v3449, %v3530
        %v3643 = vadd.f32 %v3450, %v3535
        %v3644 = vadd.f32 %v3451, %v3538
        %v3645 = vadd.f32 %v3452, %v3543
        %v3646 = vadd.f32 %v3453, %v3546
        %v3647 = vadd.f32 %v3454, %v3551
        %v3648 = vadd.f32 %v3455, %v3554
        %v3649 = vadd.f32 %v3456, %v3559
        %v3650 = vadd.f32 %v3457, %v3562
        %v3651 = vadd.f32 %v3458, %v3567
        %v3652 = vadd.f32 %v3459, %v3570
        %v3653 = vadd.f32 %v3460, %v3575
        %v3654 = vadd.f32 %v3461, %v3578
        %v3655 = vadd.f32 %v3462, %v3583
        %v3656 = vadd.f32 %v3463, %v3586
        %v3657 = vadd.f32 %v3464, %v3591
        %v3658 = vadd.f32 %v3465, %v3594
        %v3659 = vadd.f32 %v3466, %v3599
        %v3660 = vadd.f32 %v3467, %v3602
        %v3661 = vadd.f32 %v3468, %v3607
        %v3662 = vadd.f32 %v3469, %v3610
        %v3663 = vadd.f32 %v3470, %v3615
        %v3664 = vadd.f32 %v3471, %v3618
        %v3665 = vadd.f32 %v3472, %v3623
        %v3666 = vadd.f32 %v3473, %v3626
        %v3667 = vadd.f32 %v3474, %v3631
        %v3668 = vadd.f32 %v3475, %v3634
        %3669 = vmatprep.subr.bf16.mxu0 0
        %3670 = vmatpush1.bf16.msra.mxu0 %v1152
        %3671 = vmatprep.subr.bf16.mxu0 0
        %3672 = vmatpush1.bf16.msra.mxu0 %v1151
        %3673 = vmatprep.subr.bf16.mxu0 0
        %3674 = vmatpush1.bf16.msra.mxu0 %v1150
        %3675 = vmatprep.subr.bf16.mxu0 0
        %3676 = vmatpush1.bf16.msra.mxu0 %v1149
        %3677 = vmatprep.subr.bf16.mxu0 0
        %3678 = vmatpush1.bf16.msra.mxu0 %v1148
        %3679 = vmatprep.subr.bf16.mxu0 0
        %3680 = vmatpush1.bf16.msra.mxu0 %v1147
        %3681 = vmatprep.subr.bf16.mxu0 0
        %3682 = vmatpush1.bf16.msra.mxu0 %v1146
        %3683 = vmatprep.subr.bf16.mxu0 0
        %3684 = vmatpush1.bf16.msra.mxu0 %v1145
        %3685 = vmatprep.subr.bf16.mxu0 0
        %3686 = vmatpush2.bf16.msra.mxu0 0
        %3687 = vmatprep.subr.bf16.mxu0 0
        %3688 = vmatpush2.bf16.msra.mxu0 0
        %3689 = vmatprep.subr.bf16.mxu0 0
        %3690 = vmatpush2.bf16.msra.mxu0 0
        %3691 = vmatprep.subr.bf16.mxu0 0
        %3692 = vmatpush2.bf16.msra.mxu0 0
        %3693 = vmatprep.subr.bf16.mxu0 0
        %3694 = vmatpush2.bf16.msra.mxu0 0
        %3695 = vmatprep.subr.bf16.mxu0 0
        %3696 = vmatpush2.bf16.msra.mxu0 0
        %3697 = vmatprep.subr.bf16.mxu0 0
        %3698 = vmatpush2.bf16.msra.mxu0 0
        %3699 = vmatprep.subr.bf16.mxu0 0
        %3700 = vmatpush2.bf16.msra.mxu0 0
        %3701 = vmatprep.mubr.bf16.mxu0 0
        %3702 = vmatmul.mubr.bf16.gmra.mxu0 %v439
        %v3703 = vpop.f32.mrf.mxu0
        %v3704 = vadd.f32 0.0, %v3703
        %v3705 = vpop.f32.mrf.mxu0
        %v3706 = vpop.f32.mrf.mxu0
        %v3707 = vadd.f32 0.0, %v3706
        %v3708 = vpop.f32.mrf.mxu0
        %3709 = vmatprep.mubr.bf16.mxu0 0
        %3710 = vmatmul.mubr.bf16.gmra.mxu0 %v441
        %v3711 = vpop.f32.mrf.mxu0
        %v3712 = vadd.f32 0.0, %v3711
        %v3713 = vpop.f32.mrf.mxu0
        %v3714 = vpop.f32.mrf.mxu0
        %v3715 = vadd.f32 0.0, %v3714
        %v3716 = vpop.f32.mrf.mxu0
        %3717 = vmatprep.mubr.bf16.mxu0 0
        %3718 = vmatmul.mubr.bf16.gmra.mxu0 %v443
        %v3719 = vpop.f32.mrf.mxu0
        %v3720 = vadd.f32 0.0, %v3719
        %v3721 = vpop.f32.mrf.mxu0
        %v3722 = vpop.f32.mrf.mxu0
        %v3723 = vadd.f32 0.0, %v3722
        %v3724 = vpop.f32.mrf.mxu0
        %3725 = vmatprep.mubr.bf16.mxu0 0
        %3726 = vmatmul.mubr.bf16.gmra.mxu0 %v445
        %v3727 = vpop.f32.mrf.mxu0
        %v3728 = vadd.f32 0.0, %v3727
        %v3729 = vpop.f32.mrf.mxu0
        %v3730 = vpop.f32.mrf.mxu0
        %v3731 = vadd.f32 0.0, %v3730
        %v3732 = vpop.f32.mrf.mxu0
        %3733 = vmatprep.mubr.bf16.mxu0 0
        %3734 = vmatmul.mubr.bf16.gmra.mxu0 %v447
        %v3735 = vpop.f32.mrf.mxu0
        %v3736 = vadd.f32 0.0, %v3735
        %v3737 = vpop.f32.mrf.mxu0
        %v3738 = vpop.f32.mrf.mxu0
        %v3739 = vadd.f32 0.0, %v3738
        %v3740 = vpop.f32.mrf.mxu0
        %3741 = vmatprep.mubr.bf16.mxu0 0
        %3742 = vmatmul.mubr.bf16.gmra.mxu0 %v449
        %v3743 = vpop.f32.mrf.mxu0
        %v3744 = vadd.f32 0.0, %v3743
        %v3745 = vpop.f32.mrf.mxu0
        %v3746 = vpop.f32.mrf.mxu0
        %v3747 = vadd.f32 0.0, %v3746
        %v3748 = vpop.f32.mrf.mxu0
        %3749 = vmatprep.mubr.bf16.mxu0 0
        %3750 = vmatmul.mubr.bf16.gmra.mxu0 %v451
        %v3751 = vpop.f32.mrf.mxu0
        %v3752 = vadd.f32 0.0, %v3751
        %v3753 = vpop.f32.mrf.mxu0
        %v3754 = vpop.f32.mrf.mxu0
        %v3755 = vadd.f32 0.0, %v3754
        %v3756 = vpop.f32.mrf.mxu0
        %3757 = vmatprep.mubr.bf16.mxu0 0
        %3758 = vmatmul.mubr.bf16.gmra.mxu0 %v453
        %v3759 = vpop.f32.mrf.mxu0
        %v3760 = vadd.f32 0.0, %v3759
        %v3761 = vpop.f32.mrf.mxu0
        %v3762 = vpop.f32.mrf.mxu0
        %v3763 = vadd.f32 0.0, %v3762
        %v3764 = vpop.f32.mrf.mxu0
        %3765 = vmatprep.mubr.bf16.mxu0 0
        %3766 = vmatmul.mubr.bf16.gmra.mxu0 %v455
        %v3767 = vpop.f32.mrf.mxu0
        %v3768 = vadd.f32 0.0, %v3767
        %v3769 = vpop.f32.mrf.mxu0
        %v3770 = vpop.f32.mrf.mxu0
        %v3771 = vadd.f32 0.0, %v3770
        %v3772 = vpop.f32.mrf.mxu0
        %3773 = vmatprep.mubr.bf16.mxu0 0
        %3774 = vmatmul.mubr.bf16.gmra.mxu0 %v457
        %v3775 = vpop.f32.mrf.mxu0
        %v3776 = vadd.f32 0.0, %v3775
        %v3777 = vpop.f32.mrf.mxu0
        %v3778 = vpop.f32.mrf.mxu0
        %v3779 = vadd.f32 0.0, %v3778
        %v3780 = vpop.f32.mrf.mxu0
        %3781 = vmatprep.mubr.bf16.mxu0 0
        %3782 = vmatmul.mubr.bf16.gmra.mxu0 %v459
        %v3783 = vpop.f32.mrf.mxu0
        %v3784 = vadd.f32 0.0, %v3783
        %v3785 = vpop.f32.mrf.mxu0
        %v3786 = vpop.f32.mrf.mxu0
        %v3787 = vadd.f32 0.0, %v3786
        %v3788 = vpop.f32.mrf.mxu0
        %3789 = vmatprep.mubr.bf16.mxu0 0
        %3790 = vmatmul.mubr.bf16.gmra.mxu0 %v461
        %v3791 = vpop.f32.mrf.mxu0
        %v3792 = vadd.f32 0.0, %v3791
        %v3793 = vpop.f32.mrf.mxu0
        %v3794 = vpop.f32.mrf.mxu0
        %v3795 = vadd.f32 0.0, %v3794
        %v3796 = vpop.f32.mrf.mxu0
        %3797 = vmatprep.mubr.bf16.mxu0 0
        %3798 = vmatmul.mubr.bf16.gmra.mxu0 %v463
        %v3799 = vpop.f32.mrf.mxu0
        %v3800 = vadd.f32 0.0, %v3799
        %v3801 = vpop.f32.mrf.mxu0
        %v3802 = vpop.f32.mrf.mxu0
        %v3803 = vadd.f32 0.0, %v3802
        %v3804 = vpop.f32.mrf.mxu0
        %3805 = vmatprep.mubr.bf16.mxu0 0
        %3806 = vmatmul.mubr.bf16.gmra.mxu0 %v465
        %v3807 = vpop.f32.mrf.mxu0
        %v3808 = vadd.f32 0.0, %v3807
        %v3809 = vpop.f32.mrf.mxu0
        %v3810 = vpop.f32.mrf.mxu0
        %v3811 = vadd.f32 0.0, %v3810
        %v3812 = vpop.f32.mrf.mxu0
        %3813 = vmatprep.mubr.bf16.mxu0 0
        %3814 = vmatmul.mubr.bf16.gmra.mxu0 %v467
        %v3815 = vpop.f32.mrf.mxu0
        %v3816 = vadd.f32 0.0, %v3815
        %v3817 = vpop.f32.mrf.mxu0
        %v3818 = vpop.f32.mrf.mxu0
        %v3819 = vadd.f32 0.0, %v3818
        %v3820 = vpop.f32.mrf.mxu0
        %3821 = vmatprep.mubr.bf16.mxu0 0
        %3822 = vmatmul.mubr.bf16.gmra.mxu0 %v469
        %v3823 = vpop.f32.mrf.mxu0
        %v3824 = vadd.f32 0.0, %v3823
        %v3825 = vpop.f32.mrf.mxu0
        %v3826 = vpop.f32.mrf.mxu0
        %v3827 = vadd.f32 0.0, %v3826
        %v3828 = vpop.f32.mrf.mxu0
        %3829 = vdwg.mxu0
        %v3830 = vadd.f32 %v3637, %v3704
        %v3831 = vadd.f32 %v3638, %v3707
        %v3832 = vadd.f32 %v3639, %v3712
        %v3833 = vadd.f32 %v3640, %v3715
        %v3834 = vadd.f32 %v3641, %v3720
        %v3835 = vadd.f32 %v3642, %v3723
        %v3836 = vadd.f32 %v3643, %v3728
        %v3837 = vadd.f32 %v3644, %v3731
        %v3838 = vadd.f32 %v3645, %v3736
        %v3839 = vadd.f32 %v3646, %v3739
        %v3840 = vadd.f32 %v3647, %v3744
        %v3841 = vadd.f32 %v3648, %v3747
        %v3842 = vadd.f32 %v3649, %v3752
        %v3843 = vadd.f32 %v3650, %v3755
        %v3844 = vadd.f32 %v3651, %v3760
        %v3845 = vadd.f32 %v3652, %v3763
        %v3846 = vadd.f32 %v3653, %v3768
        %v3847 = vadd.f32 %v3654, %v3771
        %v3848 = vadd.f32 %v3655, %v3776
        %v3849 = vadd.f32 %v3656, %v3779
        %v3850 = vadd.f32 %v3657, %v3784
        %v3851 = vadd.f32 %v3658, %v3787
        %v3852 = vadd.f32 %v3659, %v3792
        %v3853 = vadd.f32 %v3660, %v3795
        %v3854 = vadd.f32 %v3661, %v3800
        %v3855 = vadd.f32 %v3662, %v3803
        %v3856 = vadd.f32 %v3663, %v3808
        %v3857 = vadd.f32 %v3664, %v3811
        %v3858 = vadd.f32 %v3665, %v3816
        %v3859 = vadd.f32 %v3666, %v3819
        %v3860 = vadd.f32 %v3667, %v3824
        %v3861 = vadd.f32 %v3668, %v3827
        %3862 = vmatprep.subr.bf16.mxu0 0
        %3863 = vmatpush1.bf16.msra.mxu0 %v792
        %3864 = vmatprep.subr.bf16.mxu0 0
        %3865 = vmatpush1.bf16.msra.mxu0 %v791
        %3866 = vmatprep.subr.bf16.mxu0 0
        %3867 = vmatpush1.bf16.msra.mxu0 %v790
        %3868 = vmatprep.subr.bf16.mxu0 0
        %3869 = vmatpush1.bf16.msra.mxu0 %v789
        %3870 = vmatprep.subr.bf16.mxu0 0
        %3871 = vmatpush1.bf16.msra.mxu0 %v788
        %3872 = vmatprep.subr.bf16.mxu0 0
        %3873 = vmatpush1.bf16.msra.mxu0 %v787
        %3874 = vmatprep.subr.bf16.mxu0 0
        %3875 = vmatpush1.bf16.msra.mxu0 %v786
        %3876 = vmatprep.subr.bf16.mxu0 0
        %3877 = vmatpush1.bf16.msra.mxu0 %v785
        %3878 = vmatprep.subr.bf16.mxu0 0
        %3879 = vmatpush2.bf16.msra.mxu0 0
        %3880 = vmatprep.subr.bf16.mxu0 0
        %3881 = vmatpush2.bf16.msra.mxu0 0
        %3882 = vmatprep.subr.bf16.mxu0 0
        %3883 = vmatpush2.bf16.msra.mxu0 0
        %3884 = vmatprep.subr.bf16.mxu0 0
        %3885 = vmatpush2.bf16.msra.mxu0 0
        %3886 = vmatprep.subr.bf16.mxu0 0
        %3887 = vmatpush2.bf16.msra.mxu0 0
        %3888 = vmatprep.subr.bf16.mxu0 0
        %3889 = vmatpush2.bf16.msra.mxu0 0
        %3890 = vmatprep.subr.bf16.mxu0 0
        %3891 = vmatpush2.bf16.msra.mxu0 0
        %3892 = vmatprep.subr.bf16.mxu0 0
        %3893 = vmatpush2.bf16.msra.mxu0 0
        %3894 = vmatprep.mubr.bf16.mxu0 0
        %3895 = vmatmul.mubr.bf16.gmra.mxu0 %v583
        %v3896 = vpop.f32.mrf.mxu0
        %v3897 = vadd.f32 0.0, %v3896
        %v3898 = vpop.f32.mrf.mxu0
        %v3899 = vpop.f32.mrf.mxu0
        %v3900 = vadd.f32 0.0, %v3899
        %v3901 = vpop.f32.mrf.mxu0
        %3902 = vmatprep.mubr.bf16.mxu0 0
        %3903 = vmatmul.mubr.bf16.gmra.mxu0 %v585
        %v3904 = vpop.f32.mrf.mxu0
        %v3905 = vadd.f32 0.0, %v3904
        %v3906 = vpop.f32.mrf.mxu0
        %v3907 = vpop.f32.mrf.mxu0
        %v3908 = vadd.f32 0.0, %v3907
        %v3909 = vpop.f32.mrf.mxu0
        %3910 = vmatprep.mubr.bf16.mxu0 0
        %3911 = vmatmul.mubr.bf16.gmra.mxu0 %v587
        %v3912 = vpop.f32.mrf.mxu0
        %v3913 = vadd.f32 0.0, %v3912
        %v3914 = vpop.f32.mrf.mxu0
        %v3915 = vpop.f32.mrf.mxu0
        %v3916 = vadd.f32 0.0, %v3915
        %v3917 = vpop.f32.mrf.mxu0
        %3918 = vmatprep.mubr.bf16.mxu0 0
        %3919 = vmatmul.mubr.bf16.gmra.mxu0 %v589
        %v3920 = vpop.f32.mrf.mxu0
        %v3921 = vadd.f32 0.0, %v3920
        %v3922 = vpop.f32.mrf.mxu0
        %v3923 = vpop.f32.mrf.mxu0
        %v3924 = vadd.f32 0.0, %v3923
        %v3925 = vpop.f32.mrf.mxu0
        %3926 = vmatprep.mubr.bf16.mxu0 0
        %3927 = vmatmul.mubr.bf16.gmra.mxu0 %v591
        %v3928 = vpop.f32.mrf.mxu0
        %v3929 = vadd.f32 0.0, %v3928
        %v3930 = vpop.f32.mrf.mxu0
        %v3931 = vpop.f32.mrf.mxu0
        %v3932 = vadd.f32 0.0, %v3931
        %v3933 = vpop.f32.mrf.mxu0
        %3934 = vmatprep.mubr.bf16.mxu0 0
        %3935 = vmatmul.mubr.bf16.gmra.mxu0 %v593
        %v3936 = vpop.f32.mrf.mxu0
        %v3937 = vadd.f32 0.0, %v3936
        %v3938 = vpop.f32.mrf.mxu0
        %v3939 = vpop.f32.mrf.mxu0
        %v3940 = vadd.f32 0.0, %v3939
        %v3941 = vpop.f32.mrf.mxu0
        %3942 = vmatprep.mubr.bf16.mxu0 0
        %3943 = vmatmul.mubr.bf16.gmra.mxu0 %v595
        %v3944 = vpop.f32.mrf.mxu0
        %v3945 = vadd.f32 0.0, %v3944
        %v3946 = vpop.f32.mrf.mxu0
        %v3947 = vpop.f32.mrf.mxu0
        %v3948 = vadd.f32 0.0, %v3947
        %v3949 = vpop.f32.mrf.mxu0
        %3950 = vmatprep.mubr.bf16.mxu0 0
        %3951 = vmatmul.mubr.bf16.gmra.mxu0 %v597
        %v3952 = vpop.f32.mrf.mxu0
        %v3953 = vadd.f32 0.0, %v3952
        %v3954 = vpop.f32.mrf.mxu0
        %v3955 = vpop.f32.mrf.mxu0
        %v3956 = vadd.f32 0.0, %v3955
        %v3957 = vpop.f32.mrf.mxu0
        %3958 = vmatprep.mubr.bf16.mxu0 0
        %3959 = vmatmul.mubr.bf16.gmra.mxu0 %v599
        %v3960 = vpop.f32.mrf.mxu0
        %v3961 = vadd.f32 0.0, %v3960
        %v3962 = vpop.f32.mrf.mxu0
        %v3963 = vpop.f32.mrf.mxu0
        %v3964 = vadd.f32 0.0, %v3963
        %v3965 = vpop.f32.mrf.mxu0
        %3966 = vmatprep.mubr.bf16.mxu0 0
        %3967 = vmatmul.mubr.bf16.gmra.mxu0 %v601
        %v3968 = vpop.f32.mrf.mxu0
        %v3969 = vadd.f32 0.0, %v3968
        %v3970 = vpop.f32.mrf.mxu0
        %v3971 = vpop.f32.mrf.mxu0
        %v3972 = vadd.f32 0.0, %v3971
        %v3973 = vpop.f32.mrf.mxu0
        %3974 = vmatprep.mubr.bf16.mxu0 0
        %3975 = vmatmul.mubr.bf16.gmra.mxu0 %v603
        %v3976 = vpop.f32.mrf.mxu0
        %v3977 = vadd.f32 0.0, %v3976
        %v3978 = vpop.f32.mrf.mxu0
        %v3979 = vpop.f32.mrf.mxu0
        %v3980 = vadd.f32 0.0, %v3979
        %v3981 = vpop.f32.mrf.mxu0
        %3982 = vmatprep.mubr.bf16.mxu0 0
        %3983 = vmatmul.mubr.bf16.gmra.mxu0 %v605
        %v3984 = vpop.f32.mrf.mxu0
        %v3985 = vadd.f32 0.0, %v3984
        %v3986 = vpop.f32.mrf.mxu0
        %v3987 = vpop.f32.mrf.mxu0
        %v3988 = vadd.f32 0.0, %v3987
        %v3989 = vpop.f32.mrf.mxu0
        %3990 = vmatprep.mubr.bf16.mxu0 0
        %3991 = vmatmul.mubr.bf16.gmra.mxu0 %v607
        %v3992 = vpop.f32.mrf.mxu0
        %v3993 = vadd.f32 0.0, %v3992
        %v3994 = vpop.f32.mrf.mxu0
        %v3995 = vpop.f32.mrf.mxu0
        %v3996 = vadd.f32 0.0, %v3995
        %v3997 = vpop.f32.mrf.mxu0
        %3998 = vmatprep.mubr.bf16.mxu0 0
        %3999 = vmatmul.mubr.bf16.gmra.mxu0 %v609
        %v4000 = vpop.f32.mrf.mxu0
        %v4001 = vadd.f32 0.0, %v4000
        %v4002 = vpop.f32.mrf.mxu0
        %v4003 = vpop.f32.mrf.mxu0
        %v4004 = vadd.f32 0.0, %v4003
        %v4005 = vpop.f32.mrf.mxu0
        %4006 = vmatprep.mubr.bf16.mxu0 0
        %4007 = vmatmul.mubr.bf16.gmra.mxu0 %v611
        %v4008 = vpop.f32.mrf.mxu0
        %v4009 = vadd.f32 0.0, %v4008
        %v4010 = vpop.f32.mrf.mxu0
        %v4011 = vpop.f32.mrf.mxu0
        %v4012 = vadd.f32 0.0, %v4011
        %v4013 = vpop.f32.mrf.mxu0
        %4014 = vmatprep.mubr.bf16.mxu0 0
        %4015 = vmatmul.mubr.bf16.gmra.mxu0 %v613
        %v4016 = vpop.f32.mrf.mxu0
        %v4017 = vadd.f32 0.0, %v4016
        %v4018 = vpop.f32.mrf.mxu0
        %v4019 = vpop.f32.mrf.mxu0
        %v4020 = vadd.f32 0.0, %v4019
        %v4021 = vpop.f32.mrf.mxu0
        %4022 = vdwg.mxu0
        %v4023 = vadd.f32 %v3830, %v3897
        %v4024 = vadd.f32 %v3831, %v3900
        %v4025 = vadd.f32 %v3832, %v3905
        %v4026 = vadd.f32 %v3833, %v3908
        %v4027 = vadd.f32 %v3834, %v3913
        %v4028 = vadd.f32 %v3835, %v3916
        %v4029 = vadd.f32 %v3836, %v3921
        %v4030 = vadd.f32 %v3837, %v3924
        %v4031 = vadd.f32 %v3838, %v3929
        %v4032 = vadd.f32 %v3839, %v3932
        %v4033 = vadd.f32 %v3840, %v3937
        %v4034 = vadd.f32 %v3841, %v3940
        %v4035 = vadd.f32 %v3842, %v3945
        %v4036 = vadd.f32 %v3843, %v3948
        %v4037 = vadd.f32 %v3844, %v3953
        %v4038 = vadd.f32 %v3845, %v3956
        %v4039 = vadd.f32 %v3846, %v3961
        %v4040 = vadd.f32 %v3847, %v3964
        %v4041 = vadd.f32 %v3848, %v3969
        %v4042 = vadd.f32 %v3849, %v3972
        %v4043 = vadd.f32 %v3850, %v3977
        %v4044 = vadd.f32 %v3851, %v3980
        %v4045 = vadd.f32 %v3852, %v3985
        %v4046 = vadd.f32 %v3853, %v3988
        %v4047 = vadd.f32 %v3854, %v3993
        %v4048 = vadd.f32 %v3855, %v3996
        %v4049 = vadd.f32 %v3856, %v4001
        %v4050 = vadd.f32 %v3857, %v4004
        %v4051 = vadd.f32 %v3858, %v4009
        %v4052 = vadd.f32 %v3859, %v4012
        %v4053 = vadd.f32 %v3860, %v4017
        %v4054 = vadd.f32 %v3861, %v4020
        %v4056 = vshrl.u32 %v469, 16
        %v4058 = vshll.u32 %v469, 16
        %v4060 = vrot.slane %v4058, 1
        %v4061 = vor.u32 %v4056, %v4060
        %v4063 = vshll.u32 %v470, 16
        %v4065 = vrot.slane %v4063, 1
        %v4066 = vsel %vm1708, %v4061, %v4065
        %v4069 = vshrl.u32 %v613, 16
        %v4071 = vshll.u32 %v613, 16
        %v4073 = vrot.slane %v4071, 1
        %v4074 = vor.u32 %v4069, %v4073
        %v4076 = vshll.u32 %v614, 16
        %v4078 = vrot.slane %v4076, 1
        %v4079 = vsel %vm1708, %v4074, %v4078
        %4081 = vmatprep.subr.bf16.mxu0 0
        %4082 = vmatpush1.bf16.msra.mxu0 %v800
        %4083 = vmatprep.subr.bf16.mxu0 0
        %4084 = vmatpush1.bf16.msra.mxu0 %v799
        %4085 = vmatprep.subr.bf16.mxu0 0
        %4086 = vmatpush1.bf16.msra.mxu0 %v798
        %4087 = vmatprep.subr.bf16.mxu0 0
        %4088 = vmatpush1.bf16.msra.mxu0 %v797
        %4089 = vmatprep.subr.bf16.mxu0 0
        %4090 = vmatpush1.bf16.msra.mxu0 %v796
        %4091 = vmatprep.subr.bf16.mxu0 0
        %4092 = vmatpush1.bf16.msra.mxu0 %v795
        %4093 = vmatprep.subr.bf16.mxu0 0
        %4094 = vmatpush1.bf16.msra.mxu0 %v794
        %4095 = vmatprep.subr.bf16.mxu0 0
        %4096 = vmatpush1.bf16.msra.mxu0 %v793
        %4097 = vmatprep.subr.bf16.mxu0 0
        %4098 = vmatpush2.bf16.msra.mxu0 0
        %4099 = vmatprep.subr.bf16.mxu0 0
        %4100 = vmatpush2.bf16.msra.mxu0 0
        %4101 = vmatprep.subr.bf16.mxu0 0
        %4102 = vmatpush2.bf16.msra.mxu0 0
        %4103 = vmatprep.subr.bf16.mxu0 0
        %4104 = vmatpush2.bf16.msra.mxu0 0
        %4105 = vmatprep.subr.bf16.mxu0 0
        %4106 = vmatpush2.bf16.msra.mxu0 0
        %4107 = vmatprep.subr.bf16.mxu0 0
        %4108 = vmatpush2.bf16.msra.mxu0 0
        %4109 = vmatprep.subr.bf16.mxu0 0
        %4110 = vmatpush2.bf16.msra.mxu0 0
        %4111 = vmatprep.subr.bf16.mxu0 0
        %4112 = vmatpush2.bf16.msra.mxu0 0
        %4113 = vmatprep.mubr.bf16.mxu0 0
        %4114 = vmatmul.mubr.bf16.gmra.mxu0 %v1732
        %v4115 = vpop.f32.mrf.mxu0
        %v4116 = vadd.f32 0.0, %v4115
        %v4117 = vpop.f32.mrf.mxu0
        %v4118 = vpop.f32.mrf.mxu0
        %v4119 = vadd.f32 0.0, %v4118
        %v4120 = vpop.f32.mrf.mxu0
        %4121 = vmatprep.mubr.bf16.mxu0 0
        %4122 = vmatmul.mubr.bf16.gmra.mxu0 %v1744
        %v4123 = vpop.f32.mrf.mxu0
        %v4124 = vadd.f32 0.0, %v4123
        %v4125 = vpop.f32.mrf.mxu0
        %v4126 = vpop.f32.mrf.mxu0
        %v4127 = vadd.f32 0.0, %v4126
        %v4128 = vpop.f32.mrf.mxu0
        %4129 = vmatprep.mubr.bf16.mxu0 0
        %4130 = vmatmul.mubr.bf16.gmra.mxu0 %v1756
        %v4131 = vpop.f32.mrf.mxu0
        %v4132 = vadd.f32 0.0, %v4131
        %v4133 = vpop.f32.mrf.mxu0
        %v4134 = vpop.f32.mrf.mxu0
        %v4135 = vadd.f32 0.0, %v4134
        %v4136 = vpop.f32.mrf.mxu0
        %4137 = vmatprep.mubr.bf16.mxu0 0
        %4138 = vmatmul.mubr.bf16.gmra.mxu0 %v1768
        %v4139 = vpop.f32.mrf.mxu0
        %v4140 = vadd.f32 0.0, %v4139
        %v4141 = vpop.f32.mrf.mxu0
        %v4142 = vpop.f32.mrf.mxu0
        %v4143 = vadd.f32 0.0, %v4142
        %v4144 = vpop.f32.mrf.mxu0
        %4145 = vmatprep.mubr.bf16.mxu0 0
        %4146 = vmatmul.mubr.bf16.gmra.mxu0 %v1780
        %v4147 = vpop.f32.mrf.mxu0
        %v4148 = vadd.f32 0.0, %v4147
        %v4149 = vpop.f32.mrf.mxu0
        %v4150 = vpop.f32.mrf.mxu0
        %v4151 = vadd.f32 0.0, %v4150
        %v4152 = vpop.f32.mrf.mxu0
        %4153 = vmatprep.mubr.bf16.mxu0 0
        %4154 = vmatmul.mubr.bf16.gmra.mxu0 %v1792
        %v4155 = vpop.f32.mrf.mxu0
        %v4156 = vadd.f32 0.0, %v4155
        %v4157 = vpop.f32.mrf.mxu0
        %v4158 = vpop.f32.mrf.mxu0
        %v4159 = vadd.f32 0.0, %v4158
        %v4160 = vpop.f32.mrf.mxu0
        %4161 = vmatprep.mubr.bf16.mxu0 0
        %4162 = vmatmul.mubr.bf16.gmra.mxu0 %v1804
        %v4163 = vpop.f32.mrf.mxu0
        %v4164 = vadd.f32 0.0, %v4163
        %v4165 = vpop.f32.mrf.mxu0
        %v4166 = vpop.f32.mrf.mxu0
        %v4167 = vadd.f32 0.0, %v4166
        %v4168 = vpop.f32.mrf.mxu0
        %4169 = vmatprep.mubr.bf16.mxu0 0
        %4170 = vmatmul.mubr.bf16.gmra.mxu0 %v1816
        %v4171 = vpop.f32.mrf.mxu0
        %v4172 = vadd.f32 0.0, %v4171
        %v4173 = vpop.f32.mrf.mxu0
        %v4174 = vpop.f32.mrf.mxu0
        %v4175 = vadd.f32 0.0, %v4174
        %v4176 = vpop.f32.mrf.mxu0
        %4177 = vmatprep.mubr.bf16.mxu0 0
        %4178 = vmatmul.mubr.bf16.gmra.mxu0 %v1828
        %v4179 = vpop.f32.mrf.mxu0
        %v4180 = vadd.f32 0.0, %v4179
        %v4181 = vpop.f32.mrf.mxu0
        %v4182 = vpop.f32.mrf.mxu0
        %v4183 = vadd.f32 0.0, %v4182
        %v4184 = vpop.f32.mrf.mxu0
        %4185 = vmatprep.mubr.bf16.mxu0 0
        %4186 = vmatmul.mubr.bf16.gmra.mxu0 %v1840
        %v4187 = vpop.f32.mrf.mxu0
        %v4188 = vadd.f32 0.0, %v4187
        %v4189 = vpop.f32.mrf.mxu0
        %v4190 = vpop.f32.mrf.mxu0
        %v4191 = vadd.f32 0.0, %v4190
        %v4192 = vpop.f32.mrf.mxu0
        %4193 = vmatprep.mubr.bf16.mxu0 0
        %4194 = vmatmul.mubr.bf16.gmra.mxu0 %v1852
        %v4195 = vpop.f32.mrf.mxu0
        %v4196 = vadd.f32 0.0, %v4195
        %v4197 = vpop.f32.mrf.mxu0
        %v4198 = vpop.f32.mrf.mxu0
        %v4199 = vadd.f32 0.0, %v4198
        %v4200 = vpop.f32.mrf.mxu0
        %4201 = vmatprep.mubr.bf16.mxu0 0
        %4202 = vmatmul.mubr.bf16.gmra.mxu0 %v1864
        %v4203 = vpop.f32.mrf.mxu0
        %v4204 = vadd.f32 0.0, %v4203
        %v4205 = vpop.f32.mrf.mxu0
        %v4206 = vpop.f32.mrf.mxu0
        %v4207 = vadd.f32 0.0, %v4206
        %v4208 = vpop.f32.mrf.mxu0
        %4209 = vmatprep.mubr.bf16.mxu0 0
        %4210 = vmatmul.mubr.bf16.gmra.mxu0 %v1876
        %v4211 = vpop.f32.mrf.mxu0
        %v4212 = vadd.f32 0.0, %v4211
        %v4213 = vpop.f32.mrf.mxu0
        %v4214 = vpop.f32.mrf.mxu0
        %v4215 = vadd.f32 0.0, %v4214
        %v4216 = vpop.f32.mrf.mxu0
        %4217 = vmatprep.mubr.bf16.mxu0 0
        %4218 = vmatmul.mubr.bf16.gmra.mxu0 %v1888
        %v4219 = vpop.f32.mrf.mxu0
        %v4220 = vadd.f32 0.0, %v4219
        %v4221 = vpop.f32.mrf.mxu0
        %v4222 = vpop.f32.mrf.mxu0
        %v4223 = vadd.f32 0.0, %v4222
        %v4224 = vpop.f32.mrf.mxu0
        %4225 = vmatprep.mubr.bf16.mxu0 0
        %4226 = vmatmul.mubr.bf16.gmra.mxu0 %v1900
        %v4227 = vpop.f32.mrf.mxu0
        %v4228 = vadd.f32 0.0, %v4227
        %v4229 = vpop.f32.mrf.mxu0
        %v4230 = vpop.f32.mrf.mxu0
        %v4231 = vadd.f32 0.0, %v4230
        %v4232 = vpop.f32.mrf.mxu0
        %4233 = vmatprep.mubr.bf16.mxu0 0
        %4234 = vmatmul.mubr.bf16.gmra.mxu0 %v4066
        %v4235 = vpop.f32.mrf.mxu0
        %v4236 = vadd.f32 0.0, %v4235
        %v4237 = vpop.f32.mrf.mxu0
        %v4238 = vpop.f32.mrf.mxu0
        %v4239 = vadd.f32 0.0, %v4238
        %v4240 = vpop.f32.mrf.mxu0
        %4241 = vdwg.mxu0
        %v4242 = vadd.f32 %v4023, %v4116
        %v4243 = vadd.f32 %v4024, %v4119
        %v4244 = vadd.f32 %v4025, %v4124
        %v4245 = vadd.f32 %v4026, %v4127
        %v4246 = vadd.f32 %v4027, %v4132
        %v4247 = vadd.f32 %v4028, %v4135
        %v4248 = vadd.f32 %v4029, %v4140
        %v4249 = vadd.f32 %v4030, %v4143
        %v4250 = vadd.f32 %v4031, %v4148
        %v4251 = vadd.f32 %v4032, %v4151
        %v4252 = vadd.f32 %v4033, %v4156
        %v4253 = vadd.f32 %v4034, %v4159
        %v4254 = vadd.f32 %v4035, %v4164
        %v4255 = vadd.f32 %v4036, %v4167
        %v4256 = vadd.f32 %v4037, %v4172
        %v4257 = vadd.f32 %v4038, %v4175
        %v4258 = vadd.f32 %v4039, %v4180
        %v4259 = vadd.f32 %v4040, %v4183
        %v4260 = vadd.f32 %v4041, %v4188
        %v4261 = vadd.f32 %v4042, %v4191
        %v4262 = vadd.f32 %v4043, %v4196
        %v4263 = vadd.f32 %v4044, %v4199
        %v4264 = vadd.f32 %v4045, %v4204
        %v4265 = vadd.f32 %v4046, %v4207
        %v4266 = vadd.f32 %v4047, %v4212
        %v4267 = vadd.f32 %v4048, %v4215
        %v4268 = vadd.f32 %v4049, %v4220
        %v4269 = vadd.f32 %v4050, %v4223
        %v4270 = vadd.f32 %v4051, %v4228
        %v4271 = vadd.f32 %v4052, %v4231
        %v4272 = vadd.f32 %v4053, %v4236
        %v4273 = vadd.f32 %v4054, %v4239
        %4274 = vmatprep.subr.bf16.mxu0 0
        %4275 = vmatpush1.bf16.msra.mxu0 %v1160
        %4276 = vmatprep.subr.bf16.mxu0 0
        %4277 = vmatpush1.bf16.msra.mxu0 %v1159
        %4278 = vmatprep.subr.bf16.mxu0 0
        %4279 = vmatpush1.bf16.msra.mxu0 %v1158
        %4280 = vmatprep.subr.bf16.mxu0 0
        %4281 = vmatpush1.bf16.msra.mxu0 %v1157
        %4282 = vmatprep.subr.bf16.mxu0 0
        %4283 = vmatpush1.bf16.msra.mxu0 %v1156
        %4284 = vmatprep.subr.bf16.mxu0 0
        %4285 = vmatpush1.bf16.msra.mxu0 %v1155
        %4286 = vmatprep.subr.bf16.mxu0 0
        %4287 = vmatpush1.bf16.msra.mxu0 %v1154
        %4288 = vmatprep.subr.bf16.mxu0 0
        %4289 = vmatpush1.bf16.msra.mxu0 %v1153
        %4290 = vmatprep.subr.bf16.mxu0 0
        %4291 = vmatpush2.bf16.msra.mxu0 0
        %4292 = vmatprep.subr.bf16.mxu0 0
        %4293 = vmatpush2.bf16.msra.mxu0 0
        %4294 = vmatprep.subr.bf16.mxu0 0
        %4295 = vmatpush2.bf16.msra.mxu0 0
        %4296 = vmatprep.subr.bf16.mxu0 0
        %4297 = vmatpush2.bf16.msra.mxu0 0
        %4298 = vmatprep.subr.bf16.mxu0 0
        %4299 = vmatpush2.bf16.msra.mxu0 0
        %4300 = vmatprep.subr.bf16.mxu0 0
        %4301 = vmatpush2.bf16.msra.mxu0 0
        %4302 = vmatprep.subr.bf16.mxu0 0
        %4303 = vmatpush2.bf16.msra.mxu0 0
        %4304 = vmatprep.subr.bf16.mxu0 0
        %4305 = vmatpush2.bf16.msra.mxu0 0
        %4306 = vmatprep.mubr.bf16.mxu0 0
        %4307 = vmatmul.mubr.bf16.gmra.mxu0 %v1732
        %v4308 = vpop.f32.mrf.mxu0
        %v4309 = vadd.f32 0.0, %v4308
        %v4310 = vpop.f32.mrf.mxu0
        %v4311 = vpop.f32.mrf.mxu0
        %v4312 = vadd.f32 0.0, %v4311
        %v4313 = vpop.f32.mrf.mxu0
        %4314 = vmatprep.mubr.bf16.mxu0 0
        %4315 = vmatmul.mubr.bf16.gmra.mxu0 %v1744
        %v4316 = vpop.f32.mrf.mxu0
        %v4317 = vadd.f32 0.0, %v4316
        %v4318 = vpop.f32.mrf.mxu0
        %v4319 = vpop.f32.mrf.mxu0
        %v4320 = vadd.f32 0.0, %v4319
        %v4321 = vpop.f32.mrf.mxu0
        %4322 = vmatprep.mubr.bf16.mxu0 0
        %4323 = vmatmul.mubr.bf16.gmra.mxu0 %v1756
        %v4324 = vpop.f32.mrf.mxu0
        %v4325 = vadd.f32 0.0, %v4324
        %v4326 = vpop.f32.mrf.mxu0
        %v4327 = vpop.f32.mrf.mxu0
        %v4328 = vadd.f32 0.0, %v4327
        %v4329 = vpop.f32.mrf.mxu0
        %4330 = vmatprep.mubr.bf16.mxu0 0
        %4331 = vmatmul.mubr.bf16.gmra.mxu0 %v1768
        %v4332 = vpop.f32.mrf.mxu0
        %v4333 = vadd.f32 0.0, %v4332
        %v4334 = vpop.f32.mrf.mxu0
        %v4335 = vpop.f32.mrf.mxu0
        %v4336 = vadd.f32 0.0, %v4335
        %v4337 = vpop.f32.mrf.mxu0
        %4338 = vmatprep.mubr.bf16.mxu0 0
        %4339 = vmatmul.mubr.bf16.gmra.mxu0 %v1780
        %v4340 = vpop.f32.mrf.mxu0
        %v4341 = vadd.f32 0.0, %v4340
        %v4342 = vpop.f32.mrf.mxu0
        %v4343 = vpop.f32.mrf.mxu0
        %v4344 = vadd.f32 0.0, %v4343
        %v4345 = vpop.f32.mrf.mxu0
        %4346 = vmatprep.mubr.bf16.mxu0 0
        %4347 = vmatmul.mubr.bf16.gmra.mxu0 %v1792
        %v4348 = vpop.f32.mrf.mxu0
        %v4349 = vadd.f32 0.0, %v4348
        %v4350 = vpop.f32.mrf.mxu0
        %v4351 = vpop.f32.mrf.mxu0
        %v4352 = vadd.f32 0.0, %v4351
        %v4353 = vpop.f32.mrf.mxu0
        %4354 = vmatprep.mubr.bf16.mxu0 0
        %4355 = vmatmul.mubr.bf16.gmra.mxu0 %v1804
        %v4356 = vpop.f32.mrf.mxu0
        %v4357 = vadd.f32 0.0, %v4356
        %v4358 = vpop.f32.mrf.mxu0
        %v4359 = vpop.f32.mrf.mxu0
        %v4360 = vadd.f32 0.0, %v4359
        %v4361 = vpop.f32.mrf.mxu0
        %4362 = vmatprep.mubr.bf16.mxu0 0
        %4363 = vmatmul.mubr.bf16.gmra.mxu0 %v1816
        %v4364 = vpop.f32.mrf.mxu0
        %v4365 = vadd.f32 0.0, %v4364
        %v4366 = vpop.f32.mrf.mxu0
        %v4367 = vpop.f32.mrf.mxu0
        %v4368 = vadd.f32 0.0, %v4367
        %v4369 = vpop.f32.mrf.mxu0
        %4370 = vmatprep.mubr.bf16.mxu0 0
        %4371 = vmatmul.mubr.bf16.gmra.mxu0 %v1828
        %v4372 = vpop.f32.mrf.mxu0
        %v4373 = vadd.f32 0.0, %v4372
        %v4374 = vpop.f32.mrf.mxu0
        %v4375 = vpop.f32.mrf.mxu0
        %v4376 = vadd.f32 0.0, %v4375
        %v4377 = vpop.f32.mrf.mxu0
        %4378 = vmatprep.mubr.bf16.mxu0 0
        %4379 = vmatmul.mubr.bf16.gmra.mxu0 %v1840
        %v4380 = vpop.f32.mrf.mxu0
        %v4381 = vadd.f32 0.0, %v4380
        %v4382 = vpop.f32.mrf.mxu0
        %v4383 = vpop.f32.mrf.mxu0
        %v4384 = vadd.f32 0.0, %v4383
        %v4385 = vpop.f32.mrf.mxu0
        %4386 = vmatprep.mubr.bf16.mxu0 0
        %4387 = vmatmul.mubr.bf16.gmra.mxu0 %v1852
        %v4388 = vpop.f32.mrf.mxu0
        %v4389 = vadd.f32 0.0, %v4388
        %v4390 = vpop.f32.mrf.mxu0
        %v4391 = vpop.f32.mrf.mxu0
        %v4392 = vadd.f32 0.0, %v4391
        %v4393 = vpop.f32.mrf.mxu0
        %4394 = vmatprep.mubr.bf16.mxu0 0
        %4395 = vmatmul.mubr.bf16.gmra.mxu0 %v1864
        %v4396 = vpop.f32.mrf.mxu0
        %v4397 = vadd.f32 0.0, %v4396
        %v4398 = vpop.f32.mrf.mxu0
        %v4399 = vpop.f32.mrf.mxu0
        %v4400 = vadd.f32 0.0, %v4399
        %v4401 = vpop.f32.mrf.mxu0
        %4402 = vmatprep.mubr.bf16.mxu0 0
        %4403 = vmatmul.mubr.bf16.gmra.mxu0 %v1876
        %v4404 = vpop.f32.mrf.mxu0
        %v4405 = vadd.f32 0.0, %v4404
        %v4406 = vpop.f32.mrf.mxu0
        %v4407 = vpop.f32.mrf.mxu0
        %v4408 = vadd.f32 0.0, %v4407
        %v4409 = vpop.f32.mrf.mxu0
        %4410 = vmatprep.mubr.bf16.mxu0 0
        %4411 = vmatmul.mubr.bf16.gmra.mxu0 %v1888
        %v4412 = vpop.f32.mrf.mxu0
        %v4413 = vadd.f32 0.0, %v4412
        %v4414 = vpop.f32.mrf.mxu0
        %v4415 = vpop.f32.mrf.mxu0
        %v4416 = vadd.f32 0.0, %v4415
        %v4417 = vpop.f32.mrf.mxu0
        %4418 = vmatprep.mubr.bf16.mxu0 0
        %4419 = vmatmul.mubr.bf16.gmra.mxu0 %v1900
        %v4420 = vpop.f32.mrf.mxu0
        %v4421 = vadd.f32 0.0, %v4420
        %v4422 = vpop.f32.mrf.mxu0
        %v4423 = vpop.f32.mrf.mxu0
        %v4424 = vadd.f32 0.0, %v4423
        %v4425 = vpop.f32.mrf.mxu0
        %4426 = vmatprep.mubr.bf16.mxu0 0
        %4427 = vmatmul.mubr.bf16.gmra.mxu0 %v4066
        %v4428 = vpop.f32.mrf.mxu0
        %v4429 = vadd.f32 0.0, %v4428
        %v4430 = vpop.f32.mrf.mxu0
        %v4431 = vpop.f32.mrf.mxu0
        %v4432 = vadd.f32 0.0, %v4431
        %v4433 = vpop.f32.mrf.mxu0
        %4434 = vdwg.mxu0
        %v4435 = vadd.f32 %v4242, %v4309
        %v4436 = vadd.f32 %v4243, %v4312
        %v4437 = vadd.f32 %v4244, %v4317
        %v4438 = vadd.f32 %v4245, %v4320
        %v4439 = vadd.f32 %v4246, %v4325
        %v4440 = vadd.f32 %v4247, %v4328
        %v4441 = vadd.f32 %v4248, %v4333
        %v4442 = vadd.f32 %v4249, %v4336
        %v4443 = vadd.f32 %v4250, %v4341
        %v4444 = vadd.f32 %v4251, %v4344
        %v4445 = vadd.f32 %v4252, %v4349
        %v4446 = vadd.f32 %v4253, %v4352
        %v4447 = vadd.f32 %v4254, %v4357
        %v4448 = vadd.f32 %v4255, %v4360
        %v4449 = vadd.f32 %v4256, %v4365
        %v4450 = vadd.f32 %v4257, %v4368
        %v4451 = vadd.f32 %v4258, %v4373
        %v4452 = vadd.f32 %v4259, %v4376
        %v4453 = vadd.f32 %v4260, %v4381
        %v4454 = vadd.f32 %v4261, %v4384
        %v4455 = vadd.f32 %v4262, %v4389
        %v4456 = vadd.f32 %v4263, %v4392
        %v4457 = vadd.f32 %v4264, %v4397
        %v4458 = vadd.f32 %v4265, %v4400
        %v4459 = vadd.f32 %v4266, %v4405
        %v4460 = vadd.f32 %v4267, %v4408
        %v4461 = vadd.f32 %v4268, %v4413
        %v4462 = vadd.f32 %v4269, %v4416
        %v4463 = vadd.f32 %v4270, %v4421
        %v4464 = vadd.f32 %v4271, %v4424
        %v4465 = vadd.f32 %v4272, %v4429
        %v4466 = vadd.f32 %v4273, %v4432
        %4467 = vmatprep.subr.bf16.mxu0 0
        %4468 = vmatpush1.bf16.msra.mxu0 %v800
        %4469 = vmatprep.subr.bf16.mxu0 0
        %4470 = vmatpush1.bf16.msra.mxu0 %v799
        %4471 = vmatprep.subr.bf16.mxu0 0
        %4472 = vmatpush1.bf16.msra.mxu0 %v798
        %4473 = vmatprep.subr.bf16.mxu0 0
        %4474 = vmatpush1.bf16.msra.mxu0 %v797
        %4475 = vmatprep.subr.bf16.mxu0 0
        %4476 = vmatpush1.bf16.msra.mxu0 %v796
        %4477 = vmatprep.subr.bf16.mxu0 0
        %4478 = vmatpush1.bf16.msra.mxu0 %v795
        %4479 = vmatprep.subr.bf16.mxu0 0
        %4480 = vmatpush1.bf16.msra.mxu0 %v794
        %4481 = vmatprep.subr.bf16.mxu0 0
        %4482 = vmatpush1.bf16.msra.mxu0 %v793
        %4483 = vmatprep.subr.bf16.mxu0 0
        %4484 = vmatpush2.bf16.msra.mxu0 0
        %4485 = vmatprep.subr.bf16.mxu0 0
        %4486 = vmatpush2.bf16.msra.mxu0 0
        %4487 = vmatprep.subr.bf16.mxu0 0
        %4488 = vmatpush2.bf16.msra.mxu0 0
        %4489 = vmatprep.subr.bf16.mxu0 0
        %4490 = vmatpush2.bf16.msra.mxu0 0
        %4491 = vmatprep.subr.bf16.mxu0 0
        %4492 = vmatpush2.bf16.msra.mxu0 0
        %4493 = vmatprep.subr.bf16.mxu0 0
        %4494 = vmatpush2.bf16.msra.mxu0 0
        %4495 = vmatprep.subr.bf16.mxu0 0
        %4496 = vmatpush2.bf16.msra.mxu0 0
        %4497 = vmatprep.subr.bf16.mxu0 0
        %4498 = vmatpush2.bf16.msra.mxu0 0
        %4499 = vmatprep.mubr.bf16.mxu0 0
        %4500 = vmatmul.mubr.bf16.gmra.mxu0 %v1940
        %v4501 = vpop.f32.mrf.mxu0
        %v4502 = vadd.f32 0.0, %v4501
        %v4503 = vpop.f32.mrf.mxu0
        %v4504 = vpop.f32.mrf.mxu0
        %v4505 = vadd.f32 0.0, %v4504
        %v4506 = vpop.f32.mrf.mxu0
        %4507 = vmatprep.mubr.bf16.mxu0 0
        %4508 = vmatmul.mubr.bf16.gmra.mxu0 %v1952
        %v4509 = vpop.f32.mrf.mxu0
        %v4510 = vadd.f32 0.0, %v4509
        %v4511 = vpop.f32.mrf.mxu0
        %v4512 = vpop.f32.mrf.mxu0
        %v4513 = vadd.f32 0.0, %v4512
        %v4514 = vpop.f32.mrf.mxu0
        %4515 = vmatprep.mubr.bf16.mxu0 0
        %4516 = vmatmul.mubr.bf16.gmra.mxu0 %v1964
        %v4517 = vpop.f32.mrf.mxu0
        %v4518 = vadd.f32 0.0, %v4517
        %v4519 = vpop.f32.mrf.mxu0
        %v4520 = vpop.f32.mrf.mxu0
        %v4521 = vadd.f32 0.0, %v4520
        %v4522 = vpop.f32.mrf.mxu0
        %4523 = vmatprep.mubr.bf16.mxu0 0
        %4524 = vmatmul.mubr.bf16.gmra.mxu0 %v1976
        %v4525 = vpop.f32.mrf.mxu0
        %v4526 = vadd.f32 0.0, %v4525
        %v4527 = vpop.f32.mrf.mxu0
        %v4528 = vpop.f32.mrf.mxu0
        %v4529 = vadd.f32 0.0, %v4528
        %v4530 = vpop.f32.mrf.mxu0
        %4531 = vmatprep.mubr.bf16.mxu0 0
        %4532 = vmatmul.mubr.bf16.gmra.mxu0 %v1988
        %v4533 = vpop.f32.mrf.mxu0
        %v4534 = vadd.f32 0.0, %v4533
        %v4535 = vpop.f32.mrf.mxu0
        %v4536 = vpop.f32.mrf.mxu0
        %v4537 = vadd.f32 0.0, %v4536
        %v4538 = vpop.f32.mrf.mxu0
        %4539 = vmatprep.mubr.bf16.mxu0 0
        %4540 = vmatmul.mubr.bf16.gmra.mxu0 %v2000
        %v4541 = vpop.f32.mrf.mxu0
        %v4542 = vadd.f32 0.0, %v4541
        %v4543 = vpop.f32.mrf.mxu0
        %v4544 = vpop.f32.mrf.mxu0
        %v4545 = vadd.f32 0.0, %v4544
        %v4546 = vpop.f32.mrf.mxu0
        %4547 = vmatprep.mubr.bf16.mxu0 0
        %4548 = vmatmul.mubr.bf16.gmra.mxu0 %v2012
        %v4549 = vpop.f32.mrf.mxu0
        %v4550 = vadd.f32 0.0, %v4549
        %v4551 = vpop.f32.mrf.mxu0
        %v4552 = vpop.f32.mrf.mxu0
        %v4553 = vadd.f32 0.0, %v4552
        %v4554 = vpop.f32.mrf.mxu0
        %4555 = vmatprep.mubr.bf16.mxu0 0
        %4556 = vmatmul.mubr.bf16.gmra.mxu0 %v2024
        %v4557 = vpop.f32.mrf.mxu0
        %v4558 = vadd.f32 0.0, %v4557
        %v4559 = vpop.f32.mrf.mxu0
        %v4560 = vpop.f32.mrf.mxu0
        %v4561 = vadd.f32 0.0, %v4560
        %v4562 = vpop.f32.mrf.mxu0
        %4563 = vmatprep.mubr.bf16.mxu0 0
        %4564 = vmatmul.mubr.bf16.gmra.mxu0 %v2036
        %v4565 = vpop.f32.mrf.mxu0
        %v4566 = vadd.f32 0.0, %v4565
        %v4567 = vpop.f32.mrf.mxu0
        %v4568 = vpop.f32.mrf.mxu0
        %v4569 = vadd.f32 0.0, %v4568
        %v4570 = vpop.f32.mrf.mxu0
        %4571 = vmatprep.mubr.bf16.mxu0 0
        %4572 = vmatmul.mubr.bf16.gmra.mxu0 %v2048
        %v4573 = vpop.f32.mrf.mxu0
        %v4574 = vadd.f32 0.0, %v4573
        %v4575 = vpop.f32.mrf.mxu0
        %v4576 = vpop.f32.mrf.mxu0
        %v4577 = vadd.f32 0.0, %v4576
        %v4578 = vpop.f32.mrf.mxu0
        %4579 = vmatprep.mubr.bf16.mxu0 0
        %4580 = vmatmul.mubr.bf16.gmra.mxu0 %v2060
        %v4581 = vpop.f32.mrf.mxu0
        %v4582 = vadd.f32 0.0, %v4581
        %v4583 = vpop.f32.mrf.mxu0
        %v4584 = vpop.f32.mrf.mxu0
        %v4585 = vadd.f32 0.0, %v4584
        %v4586 = vpop.f32.mrf.mxu0
        %4587 = vmatprep.mubr.bf16.mxu0 0
        %4588 = vmatmul.mubr.bf16.gmra.mxu0 %v2072
        %v4589 = vpop.f32.mrf.mxu0
        %v4590 = vadd.f32 0.0, %v4589
        %v4591 = vpop.f32.mrf.mxu0
        %v4592 = vpop.f32.mrf.mxu0
        %v4593 = vadd.f32 0.0, %v4592
        %v4594 = vpop.f32.mrf.mxu0
        %4595 = vmatprep.mubr.bf16.mxu0 0
        %4596 = vmatmul.mubr.bf16.gmra.mxu0 %v2084
        %v4597 = vpop.f32.mrf.mxu0
        %v4598 = vadd.f32 0.0, %v4597
        %v4599 = vpop.f32.mrf.mxu0
        %v4600 = vpop.f32.mrf.mxu0
        %v4601 = vadd.f32 0.0, %v4600
        %v4602 = vpop.f32.mrf.mxu0
        %4603 = vmatprep.mubr.bf16.mxu0 0
        %4604 = vmatmul.mubr.bf16.gmra.mxu0 %v2096
        %v4605 = vpop.f32.mrf.mxu0
        %v4606 = vadd.f32 0.0, %v4605
        %v4607 = vpop.f32.mrf.mxu0
        %v4608 = vpop.f32.mrf.mxu0
        %v4609 = vadd.f32 0.0, %v4608
        %v4610 = vpop.f32.mrf.mxu0
        %4611 = vmatprep.mubr.bf16.mxu0 0
        %4612 = vmatmul.mubr.bf16.gmra.mxu0 %v2108
        %v4613 = vpop.f32.mrf.mxu0
        %v4614 = vadd.f32 0.0, %v4613
        %v4615 = vpop.f32.mrf.mxu0
        %v4616 = vpop.f32.mrf.mxu0
        %v4617 = vadd.f32 0.0, %v4616
        %v4618 = vpop.f32.mrf.mxu0
        %4619 = vmatprep.mubr.bf16.mxu0 0
        %4620 = vmatmul.mubr.bf16.gmra.mxu0 %v4079
        %v4621 = vpop.f32.mrf.mxu0
        %v4622 = vadd.f32 0.0, %v4621
        %v4623 = vpop.f32.mrf.mxu0
        %v4624 = vpop.f32.mrf.mxu0
        %v4625 = vadd.f32 0.0, %v4624
        %v4626 = vpop.f32.mrf.mxu0
        %4627 = vdwg.mxu0
        %v4628 = vadd.f32 %v4435, %v4502
        %v4629 = vadd.f32 %v4436, %v4505
        %v4630 = vadd.f32 %v4437, %v4510
        %v4631 = vadd.f32 %v4438, %v4513
        %v4632 = vadd.f32 %v4439, %v4518
        %v4633 = vadd.f32 %v4440, %v4521
        %v4634 = vadd.f32 %v4441, %v4526
        %v4635 = vadd.f32 %v4442, %v4529
        %v4636 = vadd.f32 %v4443, %v4534
        %v4637 = vadd.f32 %v4444, %v4537
        %v4638 = vadd.f32 %v4445, %v4542
        %v4639 = vadd.f32 %v4446, %v4545
        %v4640 = vadd.f32 %v4447, %v4550
        %v4641 = vadd.f32 %v4448, %v4553
        %v4642 = vadd.f32 %v4449, %v4558
        %v4643 = vadd.f32 %v4450, %v4561
        %v4644 = vadd.f32 %v4451, %v4566
        %v4645 = vadd.f32 %v4452, %v4569
        %v4646 = vadd.f32 %v4453, %v4574
        %v4647 = vadd.f32 %v4454, %v4577
        %v4648 = vadd.f32 %v4455, %v4582
        %v4649 = vadd.f32 %v4456, %v4585
        %v4650 = vadd.f32 %v4457, %v4590
        %v4651 = vadd.f32 %v4458, %v4593
        %v4652 = vadd.f32 %v4459, %v4598
        %v4653 = vadd.f32 %v4460, %v4601
        %v4654 = vadd.f32 %v4461, %v4606
        %v4655 = vadd.f32 %v4462, %v4609
        %v4656 = vadd.f32 %v4463, %v4614
        %v4657 = vadd.f32 %v4464, %v4617
        %v4658 = vadd.f32 %v4465, %v4622
        %v4659 = vadd.f32 %v4466, %v4625
        %v4662 = vrot.slane %v469, 1
        %v4663 = vrot.slane %v470, 1
        %v4664 = vsel %vm2736, %v4662, %v4663
        %v4668 = vrot.slane %v613, 1
        %v4669 = vrot.slane %v614, 1
        %v4670 = vsel %vm2736, %v4668, %v4669
        %4672 = vmatprep.subr.bf16.mxu0 0
        %4673 = vmatpush1.bf16.msra.mxu0 %v808
        %4674 = vmatprep.subr.bf16.mxu0 0
        %4675 = vmatpush1.bf16.msra.mxu0 %v807
        %4676 = vmatprep.subr.bf16.mxu0 0
        %4677 = vmatpush1.bf16.msra.mxu0 %v806
        %4678 = vmatprep.subr.bf16.mxu0 0
        %4679 = vmatpush1.bf16.msra.mxu0 %v805
        %4680 = vmatprep.subr.bf16.mxu0 0
        %4681 = vmatpush1.bf16.msra.mxu0 %v804
        %4682 = vmatprep.subr.bf16.mxu0 0
        %4683 = vmatpush1.bf16.msra.mxu0 %v803
        %4684 = vmatprep.subr.bf16.mxu0 0
        %4685 = vmatpush1.bf16.msra.mxu0 %v802
        %4686 = vmatprep.subr.bf16.mxu0 0
        %4687 = vmatpush1.bf16.msra.mxu0 %v801
        %4688 = vmatprep.subr.bf16.mxu0 0
        %4689 = vmatpush2.bf16.msra.mxu0 0
        %4690 = vmatprep.subr.bf16.mxu0 0
        %4691 = vmatpush2.bf16.msra.mxu0 0
        %4692 = vmatprep.subr.bf16.mxu0 0
        %4693 = vmatpush2.bf16.msra.mxu0 0
        %4694 = vmatprep.subr.bf16.mxu0 0
        %4695 = vmatpush2.bf16.msra.mxu0 0
        %4696 = vmatprep.subr.bf16.mxu0 0
        %4697 = vmatpush2.bf16.msra.mxu0 0
        %4698 = vmatprep.subr.bf16.mxu0 0
        %4699 = vmatpush2.bf16.msra.mxu0 0
        %4700 = vmatprep.subr.bf16.mxu0 0
        %4701 = vmatpush2.bf16.msra.mxu0 0
        %4702 = vmatprep.subr.bf16.mxu0 0
        %4703 = vmatpush2.bf16.msra.mxu0 0
        %4704 = vmatprep.mubr.bf16.mxu0 0
        %4705 = vmatmul.mubr.bf16.gmra.mxu0 %v2742
        %v4706 = vpop.f32.mrf.mxu0
        %v4707 = vadd.f32 0.0, %v4706
        %v4708 = vpop.f32.mrf.mxu0
        %v4709 = vpop.f32.mrf.mxu0
        %v4710 = vadd.f32 0.0, %v4709
        %v4711 = vpop.f32.mrf.mxu0
        %4712 = vmatprep.mubr.bf16.mxu0 0
        %4713 = vmatmul.mubr.bf16.gmra.mxu0 %v2745
        %v4714 = vpop.f32.mrf.mxu0
        %v4715 = vadd.f32 0.0, %v4714
        %v4716 = vpop.f32.mrf.mxu0
        %v4717 = vpop.f32.mrf.mxu0
        %v4718 = vadd.f32 0.0, %v4717
        %v4719 = vpop.f32.mrf.mxu0
        %4720 = vmatprep.mubr.bf16.mxu0 0
        %4721 = vmatmul.mubr.bf16.gmra.mxu0 %v2748
        %v4722 = vpop.f32.mrf.mxu0
        %v4723 = vadd.f32 0.0, %v4722
        %v4724 = vpop.f32.mrf.mxu0
        %v4725 = vpop.f32.mrf.mxu0
        %v4726 = vadd.f32 0.0, %v4725
        %v4727 = vpop.f32.mrf.mxu0
        %4728 = vmatprep.mubr.bf16.mxu0 0
        %4729 = vmatmul.mubr.bf16.gmra.mxu0 %v2751
        %v4730 = vpop.f32.mrf.mxu0
        %v4731 = vadd.f32 0.0, %v4730
        %v4732 = vpop.f32.mrf.mxu0
        %v4733 = vpop.f32.mrf.mxu0
        %v4734 = vadd.f32 0.0, %v4733
        %v4735 = vpop.f32.mrf.mxu0
        %4736 = vmatprep.mubr.bf16.mxu0 0
        %4737 = vmatmul.mubr.bf16.gmra.mxu0 %v2754
        %v4738 = vpop.f32.mrf.mxu0
        %v4739 = vadd.f32 0.0, %v4738
        %v4740 = vpop.f32.mrf.mxu0
        %v4741 = vpop.f32.mrf.mxu0
        %v4742 = vadd.f32 0.0, %v4741
        %v4743 = vpop.f32.mrf.mxu0
        %4744 = vmatprep.mubr.bf16.mxu0 0
        %4745 = vmatmul.mubr.bf16.gmra.mxu0 %v2757
        %v4746 = vpop.f32.mrf.mxu0
        %v4747 = vadd.f32 0.0, %v4746
        %v4748 = vpop.f32.mrf.mxu0
        %v4749 = vpop.f32.mrf.mxu0
        %v4750 = vadd.f32 0.0, %v4749
        %v4751 = vpop.f32.mrf.mxu0
        %4752 = vmatprep.mubr.bf16.mxu0 0
        %4753 = vmatmul.mubr.bf16.gmra.mxu0 %v2760
        %v4754 = vpop.f32.mrf.mxu0
        %v4755 = vadd.f32 0.0, %v4754
        %v4756 = vpop.f32.mrf.mxu0
        %v4757 = vpop.f32.mrf.mxu0
        %v4758 = vadd.f32 0.0, %v4757
        %v4759 = vpop.f32.mrf.mxu0
        %4760 = vmatprep.mubr.bf16.mxu0 0
        %4761 = vmatmul.mubr.bf16.gmra.mxu0 %v2763
        %v4762 = vpop.f32.mrf.mxu0
        %v4763 = vadd.f32 0.0, %v4762
        %v4764 = vpop.f32.mrf.mxu0
        %v4765 = vpop.f32.mrf.mxu0
        %v4766 = vadd.f32 0.0, %v4765
        %v4767 = vpop.f32.mrf.mxu0
        %4768 = vmatprep.mubr.bf16.mxu0 0
        %4769 = vmatmul.mubr.bf16.gmra.mxu0 %v2766
        %v4770 = vpop.f32.mrf.mxu0
        %v4771 = vadd.f32 0.0, %v4770
        %v4772 = vpop.f32.mrf.mxu0
        %v4773 = vpop.f32.mrf.mxu0
        %v4774 = vadd.f32 0.0, %v4773
        %v4775 = vpop.f32.mrf.mxu0
        %4776 = vmatprep.mubr.bf16.mxu0 0
        %4777 = vmatmul.mubr.bf16.gmra.mxu0 %v2769
        %v4778 = vpop.f32.mrf.mxu0
        %v4779 = vadd.f32 0.0, %v4778
        %v4780 = vpop.f32.mrf.mxu0
        %v4781 = vpop.f32.mrf.mxu0
        %v4782 = vadd.f32 0.0, %v4781
        %v4783 = vpop.f32.mrf.mxu0
        %4784 = vmatprep.mubr.bf16.mxu0 0
        %4785 = vmatmul.mubr.bf16.gmra.mxu0 %v2772
        %v4786 = vpop.f32.mrf.mxu0
        %v4787 = vadd.f32 0.0, %v4786
        %v4788 = vpop.f32.mrf.mxu0
        %v4789 = vpop.f32.mrf.mxu0
        %v4790 = vadd.f32 0.0, %v4789
        %v4791 = vpop.f32.mrf.mxu0
        %4792 = vmatprep.mubr.bf16.mxu0 0
        %4793 = vmatmul.mubr.bf16.gmra.mxu0 %v2775
        %v4794 = vpop.f32.mrf.mxu0
        %v4795 = vadd.f32 0.0, %v4794
        %v4796 = vpop.f32.mrf.mxu0
        %v4797 = vpop.f32.mrf.mxu0
        %v4798 = vadd.f32 0.0, %v4797
        %v4799 = vpop.f32.mrf.mxu0
        %4800 = vmatprep.mubr.bf16.mxu0 0
        %4801 = vmatmul.mubr.bf16.gmra.mxu0 %v2778
        %v4802 = vpop.f32.mrf.mxu0
        %v4803 = vadd.f32 0.0, %v4802
        %v4804 = vpop.f32.mrf.mxu0
        %v4805 = vpop.f32.mrf.mxu0
        %v4806 = vadd.f32 0.0, %v4805
        %v4807 = vpop.f32.mrf.mxu0
        %4808 = vmatprep.mubr.bf16.mxu0 0
        %4809 = vmatmul.mubr.bf16.gmra.mxu0 %v2781
        %v4810 = vpop.f32.mrf.mxu0
        %v4811 = vadd.f32 0.0, %v4810
        %v4812 = vpop.f32.mrf.mxu0
        %v4813 = vpop.f32.mrf.mxu0
        %v4814 = vadd.f32 0.0, %v4813
        %v4815 = vpop.f32.mrf.mxu0
        %4816 = vmatprep.mubr.bf16.mxu0 0
        %4817 = vmatmul.mubr.bf16.gmra.mxu0 %v2784
        %v4818 = vpop.f32.mrf.mxu0
        %v4819 = vadd.f32 0.0, %v4818
        %v4820 = vpop.f32.mrf.mxu0
        %v4821 = vpop.f32.mrf.mxu0
        %v4822 = vadd.f32 0.0, %v4821
        %v4823 = vpop.f32.mrf.mxu0
        %4824 = vmatprep.mubr.bf16.mxu0 0
        %4825 = vmatmul.mubr.bf16.gmra.mxu0 %v4664
        %v4826 = vpop.f32.mrf.mxu0
        %v4827 = vadd.f32 0.0, %v4826
        %v4828 = vpop.f32.mrf.mxu0
        %v4829 = vpop.f32.mrf.mxu0
        %v4830 = vadd.f32 0.0, %v4829
        %v4831 = vpop.f32.mrf.mxu0
        %4832 = vdwg.mxu0
        %v4833 = vadd.f32 %v4628, %v4707
        %v4834 = vadd.f32 %v4629, %v4710
        %v4835 = vadd.f32 %v4630, %v4715
        %v4836 = vadd.f32 %v4631, %v4718
        %v4837 = vadd.f32 %v4632, %v4723
        %v4838 = vadd.f32 %v4633, %v4726
        %v4839 = vadd.f32 %v4634, %v4731
        %v4840 = vadd.f32 %v4635, %v4734
        %v4841 = vadd.f32 %v4636, %v4739
        %v4842 = vadd.f32 %v4637, %v4742
        %v4843 = vadd.f32 %v4638, %v4747
        %v4844 = vadd.f32 %v4639, %v4750
        %v4845 = vadd.f32 %v4640, %v4755
        %v4846 = vadd.f32 %v4641, %v4758
        %v4847 = vadd.f32 %v4642, %v4763
        %v4848 = vadd.f32 %v4643, %v4766
        %v4849 = vadd.f32 %v4644, %v4771
        %v4850 = vadd.f32 %v4645, %v4774
        %v4851 = vadd.f32 %v4646, %v4779
        %v4852 = vadd.f32 %v4647, %v4782
        %v4853 = vadd.f32 %v4648, %v4787
        %v4854 = vadd.f32 %v4649, %v4790
        %v4855 = vadd.f32 %v4650, %v4795
        %v4856 = vadd.f32 %v4651, %v4798
        %v4857 = vadd.f32 %v4652, %v4803
        %v4858 = vadd.f32 %v4653, %v4806
        %v4859 = vadd.f32 %v4654, %v4811
        %v4860 = vadd.f32 %v4655, %v4814
        %v4861 = vadd.f32 %v4656, %v4819
        %v4862 = vadd.f32 %v4657, %v4822
        %v4863 = vadd.f32 %v4658, %v4827
        %v4864 = vadd.f32 %v4659, %v4830
        %4865 = vmatprep.subr.bf16.mxu0 0
        %4866 = vmatpush1.bf16.msra.mxu0 %v1168
        %4867 = vmatprep.subr.bf16.mxu0 0
        %4868 = vmatpush1.bf16.msra.mxu0 %v1167
        %4869 = vmatprep.subr.bf16.mxu0 0
        %4870 = vmatpush1.bf16.msra.mxu0 %v1166
        %4871 = vmatprep.subr.bf16.mxu0 0
        %4872 = vmatpush1.bf16.msra.mxu0 %v1165
        %4873 = vmatprep.subr.bf16.mxu0 0
        %4874 = vmatpush1.bf16.msra.mxu0 %v1164
        %4875 = vmatprep.subr.bf16.mxu0 0
        %4876 = vmatpush1.bf16.msra.mxu0 %v1163
        %4877 = vmatprep.subr.bf16.mxu0 0
        %4878 = vmatpush1.bf16.msra.mxu0 %v1162
        %4879 = vmatprep.subr.bf16.mxu0 0
        %4880 = vmatpush1.bf16.msra.mxu0 %v1161
        %4881 = vmatprep.subr.bf16.mxu0 0
        %4882 = vmatpush2.bf16.msra.mxu0 0
        %4883 = vmatprep.subr.bf16.mxu0 0
        %4884 = vmatpush2.bf16.msra.mxu0 0
        %4885 = vmatprep.subr.bf16.mxu0 0
        %4886 = vmatpush2.bf16.msra.mxu0 0
        %4887 = vmatprep.subr.bf16.mxu0 0
        %4888 = vmatpush2.bf16.msra.mxu0 0
        %4889 = vmatprep.subr.bf16.mxu0 0
        %4890 = vmatpush2.bf16.msra.mxu0 0
        %4891 = vmatprep.subr.bf16.mxu0 0
        %4892 = vmatpush2.bf16.msra.mxu0 0
        %4893 = vmatprep.subr.bf16.mxu0 0
        %4894 = vmatpush2.bf16.msra.mxu0 0
        %4895 = vmatprep.subr.bf16.mxu0 0
        %4896 = vmatpush2.bf16.msra.mxu0 0
        %4897 = vmatprep.mubr.bf16.mxu0 0
        %4898 = vmatmul.mubr.bf16.gmra.mxu0 %v2742
        %v4899 = vpop.f32.mrf.mxu0
        %v4900 = vadd.f32 0.0, %v4899
        %v4901 = vpop.f32.mrf.mxu0
        %v4902 = vpop.f32.mrf.mxu0
        %v4903 = vadd.f32 0.0, %v4902
        %v4904 = vpop.f32.mrf.mxu0
        %4905 = vmatprep.mubr.bf16.mxu0 0
        %4906 = vmatmul.mubr.bf16.gmra.mxu0 %v2745
        %v4907 = vpop.f32.mrf.mxu0
        %v4908 = vadd.f32 0.0, %v4907
        %v4909 = vpop.f32.mrf.mxu0
        %v4910 = vpop.f32.mrf.mxu0
        %v4911 = vadd.f32 0.0, %v4910
        %v4912 = vpop.f32.mrf.mxu0
        %4913 = vmatprep.mubr.bf16.mxu0 0
        %4914 = vmatmul.mubr.bf16.gmra.mxu0 %v2748
        %v4915 = vpop.f32.mrf.mxu0
        %v4916 = vadd.f32 0.0, %v4915
        %v4917 = vpop.f32.mrf.mxu0
        %v4918 = vpop.f32.mrf.mxu0
        %v4919 = vadd.f32 0.0, %v4918
        %v4920 = vpop.f32.mrf.mxu0
        %4921 = vmatprep.mubr.bf16.mxu0 0
        %4922 = vmatmul.mubr.bf16.gmra.mxu0 %v2751
        %v4923 = vpop.f32.mrf.mxu0
        %v4924 = vadd.f32 0.0, %v4923
        %v4925 = vpop.f32.mrf.mxu0
        %v4926 = vpop.f32.mrf.mxu0
        %v4927 = vadd.f32 0.0, %v4926
        %v4928 = vpop.f32.mrf.mxu0
        %4929 = vmatprep.mubr.bf16.mxu0 0
        %4930 = vmatmul.mubr.bf16.gmra.mxu0 %v2754
        %v4931 = vpop.f32.mrf.mxu0
        %v4932 = vadd.f32 0.0, %v4931
        %v4933 = vpop.f32.mrf.mxu0
        %v4934 = vpop.f32.mrf.mxu0
        %v4935 = vadd.f32 0.0, %v4934
        %v4936 = vpop.f32.mrf.mxu0
        %4937 = vmatprep.mubr.bf16.mxu0 0
        %4938 = vmatmul.mubr.bf16.gmra.mxu0 %v2757
        %v4939 = vpop.f32.mrf.mxu0
        %v4940 = vadd.f32 0.0, %v4939
        %v4941 = vpop.f32.mrf.mxu0
        %v4942 = vpop.f32.mrf.mxu0
        %v4943 = vadd.f32 0.0, %v4942
        %v4944 = vpop.f32.mrf.mxu0
        %4945 = vmatprep.mubr.bf16.mxu0 0
        %4946 = vmatmul.mubr.bf16.gmra.mxu0 %v2760
        %v4947 = vpop.f32.mrf.mxu0
        %v4948 = vadd.f32 0.0, %v4947
        %v4949 = vpop.f32.mrf.mxu0
        %v4950 = vpop.f32.mrf.mxu0
        %v4951 = vadd.f32 0.0, %v4950
        %v4952 = vpop.f32.mrf.mxu0
        %4953 = vmatprep.mubr.bf16.mxu0 0
        %4954 = vmatmul.mubr.bf16.gmra.mxu0 %v2763
        %v4955 = vpop.f32.mrf.mxu0
        %v4956 = vadd.f32 0.0, %v4955
        %v4957 = vpop.f32.mrf.mxu0
        %v4958 = vpop.f32.mrf.mxu0
        %v4959 = vadd.f32 0.0, %v4958
        %v4960 = vpop.f32.mrf.mxu0
        %4961 = vmatprep.mubr.bf16.mxu0 0
        %4962 = vmatmul.mubr.bf16.gmra.mxu0 %v2766
        %v4963 = vpop.f32.mrf.mxu0
        %v4964 = vadd.f32 0.0, %v4963
        %v4965 = vpop.f32.mrf.mxu0
        %v4966 = vpop.f32.mrf.mxu0
        %v4967 = vadd.f32 0.0, %v4966
        %v4968 = vpop.f32.mrf.mxu0
        %4969 = vmatprep.mubr.bf16.mxu0 0
        %4970 = vmatmul.mubr.bf16.gmra.mxu0 %v2769
        %v4971 = vpop.f32.mrf.mxu0
        %v4972 = vadd.f32 0.0, %v4971
        %v4973 = vpop.f32.mrf.mxu0
        %v4974 = vpop.f32.mrf.mxu0
        %v4975 = vadd.f32 0.0, %v4974
        %v4976 = vpop.f32.mrf.mxu0
        %4977 = vmatprep.mubr.bf16.mxu0 0
        %4978 = vmatmul.mubr.bf16.gmra.mxu0 %v2772
        %v4979 = vpop.f32.mrf.mxu0
        %v4980 = vadd.f32 0.0, %v4979
        %v4981 = vpop.f32.mrf.mxu0
        %v4982 = vpop.f32.mrf.mxu0
        %v4983 = vadd.f32 0.0, %v4982
        %v4984 = vpop.f32.mrf.mxu0
        %4985 = vmatprep.mubr.bf16.mxu0 0
        %4986 = vmatmul.mubr.bf16.gmra.mxu0 %v2775
        %v4987 = vpop.f32.mrf.mxu0
        %v4988 = vadd.f32 0.0, %v4987
        %v4989 = vpop.f32.mrf.mxu0
        %v4990 = vpop.f32.mrf.mxu0
        %v4991 = vadd.f32 0.0, %v4990
        %v4992 = vpop.f32.mrf.mxu0
        %4993 = vmatprep.mubr.bf16.mxu0 0
        %4994 = vmatmul.mubr.bf16.gmra.mxu0 %v2778
        %v4995 = vpop.f32.mrf.mxu0
        %v4996 = vadd.f32 0.0, %v4995
        %v4997 = vpop.f32.mrf.mxu0
        %v4998 = vpop.f32.mrf.mxu0
        %v4999 = vadd.f32 0.0, %v4998
        %v5000 = vpop.f32.mrf.mxu0
        %5001 = vmatprep.mubr.bf16.mxu0 0
        %5002 = vmatmul.mubr.bf16.gmra.mxu0 %v2781
        %v5003 = vpop.f32.mrf.mxu0
        %v5004 = vadd.f32 0.0, %v5003
        %v5005 = vpop.f32.mrf.mxu0
        %v5006 = vpop.f32.mrf.mxu0
        %v5007 = vadd.f32 0.0, %v5006
        %v5008 = vpop.f32.mrf.mxu0
        %5009 = vmatprep.mubr.bf16.mxu0 0
        %5010 = vmatmul.mubr.bf16.gmra.mxu0 %v2784
        %v5011 = vpop.f32.mrf.mxu0
        %v5012 = vadd.f32 0.0, %v5011
        %v5013 = vpop.f32.mrf.mxu0
        %v5014 = vpop.f32.mrf.mxu0
        %v5015 = vadd.f32 0.0, %v5014
        %v5016 = vpop.f32.mrf.mxu0
        %5017 = vmatprep.mubr.bf16.mxu0 0
        %5018 = vmatmul.mubr.bf16.gmra.mxu0 %v4664
        %v5019 = vpop.f32.mrf.mxu0
        %v5020 = vadd.f32 0.0, %v5019
        %v5021 = vpop.f32.mrf.mxu0
        %v5022 = vpop.f32.mrf.mxu0
        %v5023 = vadd.f32 0.0, %v5022
        %v5024 = vpop.f32.mrf.mxu0
        %5025 = vdwg.mxu0
        %v5026 = vadd.f32 %v4833, %v4900
        %v5027 = vadd.f32 %v4834, %v4903
        %v5028 = vadd.f32 %v4835, %v4908
        %v5029 = vadd.f32 %v4836, %v4911
        %v5030 = vadd.f32 %v4837, %v4916
        %v5031 = vadd.f32 %v4838, %v4919
        %v5032 = vadd.f32 %v4839, %v4924
        %v5033 = vadd.f32 %v4840, %v4927
        %v5034 = vadd.f32 %v4841, %v4932
        %v5035 = vadd.f32 %v4842, %v4935
        %v5036 = vadd.f32 %v4843, %v4940
        %v5037 = vadd.f32 %v4844, %v4943
        %v5038 = vadd.f32 %v4845, %v4948
        %v5039 = vadd.f32 %v4846, %v4951
        %v5040 = vadd.f32 %v4847, %v4956
        %v5041 = vadd.f32 %v4848, %v4959
        %v5042 = vadd.f32 %v4849, %v4964
        %v5043 = vadd.f32 %v4850, %v4967
        %v5044 = vadd.f32 %v4851, %v4972
        %v5045 = vadd.f32 %v4852, %v4975
        %v5046 = vadd.f32 %v4853, %v4980
        %v5047 = vadd.f32 %v4854, %v4983
        %v5048 = vadd.f32 %v4855, %v4988
        %v5049 = vadd.f32 %v4856, %v4991
        %v5050 = vadd.f32 %v4857, %v4996
        %v5051 = vadd.f32 %v4858, %v4999
        %v5052 = vadd.f32 %v4859, %v5004
        %v5053 = vadd.f32 %v4860, %v5007
        %v5054 = vadd.f32 %v4861, %v5012
        %v5055 = vadd.f32 %v4862, %v5015
        %v5056 = vadd.f32 %v4863, %v5020
        %v5057 = vadd.f32 %v4864, %v5023
        %5058 = vmatprep.subr.bf16.mxu0 0
        %5059 = vmatpush1.bf16.msra.mxu0 %v808
        %5060 = vmatprep.subr.bf16.mxu0 0
        %5061 = vmatpush1.bf16.msra.mxu0 %v807
        %5062 = vmatprep.subr.bf16.mxu0 0
        %5063 = vmatpush1.bf16.msra.mxu0 %v806
        %5064 = vmatprep.subr.bf16.mxu0 0
        %5065 = vmatpush1.bf16.msra.mxu0 %v805
        %5066 = vmatprep.subr.bf16.mxu0 0
        %5067 = vmatpush1.bf16.msra.mxu0 %v804
        %5068 = vmatprep.subr.bf16.mxu0 0
        %5069 = vmatpush1.bf16.msra.mxu0 %v803
        %5070 = vmatprep.subr.bf16.mxu0 0
        %5071 = vmatpush1.bf16.msra.mxu0 %v802
        %5072 = vmatprep.subr.bf16.mxu0 0
        %5073 = vmatpush1.bf16.msra.mxu0 %v801
        %5074 = vmatprep.subr.bf16.mxu0 0
        %5075 = vmatpush2.bf16.msra.mxu0 0
        %5076 = vmatprep.subr.bf16.mxu0 0
        %5077 = vmatpush2.bf16.msra.mxu0 0
        %5078 = vmatprep.subr.bf16.mxu0 0
        %5079 = vmatpush2.bf16.msra.mxu0 0
        %5080 = vmatprep.subr.bf16.mxu0 0
        %5081 = vmatpush2.bf16.msra.mxu0 0
        %5082 = vmatprep.subr.bf16.mxu0 0
        %5083 = vmatpush2.bf16.msra.mxu0 0
        %5084 = vmatprep.subr.bf16.mxu0 0
        %5085 = vmatpush2.bf16.msra.mxu0 0
        %5086 = vmatprep.subr.bf16.mxu0 0
        %5087 = vmatpush2.bf16.msra.mxu0 0
        %5088 = vmatprep.subr.bf16.mxu0 0
        %5089 = vmatpush2.bf16.msra.mxu0 0
        %5090 = vmatprep.mubr.bf16.mxu0 0
        %5091 = vmatmul.mubr.bf16.gmra.mxu0 %v2838
        %v5092 = vpop.f32.mrf.mxu0
        %v5093 = vadd.f32 0.0, %v5092
        %v5094 = vpop.f32.mrf.mxu0
        %v5095 = vpop.f32.mrf.mxu0
        %v5096 = vadd.f32 0.0, %v5095
        %v5097 = vpop.f32.mrf.mxu0
        %5098 = vmatprep.mubr.bf16.mxu0 0
        %5099 = vmatmul.mubr.bf16.gmra.mxu0 %v2841
        %v5100 = vpop.f32.mrf.mxu0
        %v5101 = vadd.f32 0.0, %v5100
        %v5102 = vpop.f32.mrf.mxu0
        %v5103 = vpop.f32.mrf.mxu0
        %v5104 = vadd.f32 0.0, %v5103
        %v5105 = vpop.f32.mrf.mxu0
        %5106 = vmatprep.mubr.bf16.mxu0 0
        %5107 = vmatmul.mubr.bf16.gmra.mxu0 %v2844
        %v5108 = vpop.f32.mrf.mxu0
        %v5109 = vadd.f32 0.0, %v5108
        %v5110 = vpop.f32.mrf.mxu0
        %v5111 = vpop.f32.mrf.mxu0
        %v5112 = vadd.f32 0.0, %v5111
        %v5113 = vpop.f32.mrf.mxu0
        %5114 = vmatprep.mubr.bf16.mxu0 0
        %5115 = vmatmul.mubr.bf16.gmra.mxu0 %v2847
        %v5116 = vpop.f32.mrf.mxu0
        %v5117 = vadd.f32 0.0, %v5116
        %v5118 = vpop.f32.mrf.mxu0
        %v5119 = vpop.f32.mrf.mxu0
        %v5120 = vadd.f32 0.0, %v5119
        %v5121 = vpop.f32.mrf.mxu0
        %5122 = vmatprep.mubr.bf16.mxu0 0
        %5123 = vmatmul.mubr.bf16.gmra.mxu0 %v2850
        %v5124 = vpop.f32.mrf.mxu0
        %v5125 = vadd.f32 0.0, %v5124
        %v5126 = vpop.f32.mrf.mxu0
        %v5127 = vpop.f32.mrf.mxu0
        %v5128 = vadd.f32 0.0, %v5127
        %v5129 = vpop.f32.mrf.mxu0
        %5130 = vmatprep.mubr.bf16.mxu0 0
        %5131 = vmatmul.mubr.bf16.gmra.mxu0 %v2853
        %v5132 = vpop.f32.mrf.mxu0
        %v5133 = vadd.f32 0.0, %v5132
        %v5134 = vpop.f32.mrf.mxu0
        %v5135 = vpop.f32.mrf.mxu0
        %v5136 = vadd.f32 0.0, %v5135
        %v5137 = vpop.f32.mrf.mxu0
        %5138 = vmatprep.mubr.bf16.mxu0 0
        %5139 = vmatmul.mubr.bf16.gmra.mxu0 %v2856
        %v5140 = vpop.f32.mrf.mxu0
        %v5141 = vadd.f32 0.0, %v5140
        %v5142 = vpop.f32.mrf.mxu0
        %v5143 = vpop.f32.mrf.mxu0
        %v5144 = vadd.f32 0.0, %v5143
        %v5145 = vpop.f32.mrf.mxu0
        %5146 = vmatprep.mubr.bf16.mxu0 0
        %5147 = vmatmul.mubr.bf16.gmra.mxu0 %v2859
        %v5148 = vpop.f32.mrf.mxu0
        %v5149 = vadd.f32 0.0, %v5148
        %v5150 = vpop.f32.mrf.mxu0
        %v5151 = vpop.f32.mrf.mxu0
        %v5152 = vadd.f32 0.0, %v5151
        %v5153 = vpop.f32.mrf.mxu0
        %5154 = vmatprep.mubr.bf16.mxu0 0
        %5155 = vmatmul.mubr.bf16.gmra.mxu0 %v2862
        %v5156 = vpop.f32.mrf.mxu0
        %v5157 = vadd.f32 0.0, %v5156
        %v5158 = vpop.f32.mrf.mxu0
        %v5159 = vpop.f32.mrf.mxu0
        %v5160 = vadd.f32 0.0, %v5159
        %v5161 = vpop.f32.mrf.mxu0
        %5162 = vmatprep.mubr.bf16.mxu0 0
        %5163 = vmatmul.mubr.bf16.gmra.mxu0 %v2865
        %v5164 = vpop.f32.mrf.mxu0
        %v5165 = vadd.f32 0.0, %v5164
        %v5166 = vpop.f32.mrf.mxu0
        %v5167 = vpop.f32.mrf.mxu0
        %v5168 = vadd.f32 0.0, %v5167
        %v5169 = vpop.f32.mrf.mxu0
        %5170 = vmatprep.mubr.bf16.mxu0 0
        %5171 = vmatmul.mubr.bf16.gmra.mxu0 %v2868
        %v5172 = vpop.f32.mrf.mxu0
        %v5173 = vadd.f32 0.0, %v5172
        %v5174 = vpop.f32.mrf.mxu0
        %v5175 = vpop.f32.mrf.mxu0
        %v5176 = vadd.f32 0.0, %v5175
        %v5177 = vpop.f32.mrf.mxu0
        %5178 = vmatprep.mubr.bf16.mxu0 0
        %5179 = vmatmul.mubr.bf16.gmra.mxu0 %v2871
        %v5180 = vpop.f32.mrf.mxu0
        %v5181 = vadd.f32 0.0, %v5180
        %v5182 = vpop.f32.mrf.mxu0
        %v5183 = vpop.f32.mrf.mxu0
        %v5184 = vadd.f32 0.0, %v5183
        %v5185 = vpop.f32.mrf.mxu0
        %5186 = vmatprep.mubr.bf16.mxu0 0
        %5187 = vmatmul.mubr.bf16.gmra.mxu0 %v2874
        %v5188 = vpop.f32.mrf.mxu0
        %v5189 = vadd.f32 0.0, %v5188
        %v5190 = vpop.f32.mrf.mxu0
        %v5191 = vpop.f32.mrf.mxu0
        %v5192 = vadd.f32 0.0, %v5191
        %v5193 = vpop.f32.mrf.mxu0
        %5194 = vmatprep.mubr.bf16.mxu0 0
        %5195 = vmatmul.mubr.bf16.gmra.mxu0 %v2877
        %v5196 = vpop.f32.mrf.mxu0
        %v5197 = vadd.f32 0.0, %v5196
        %v5198 = vpop.f32.mrf.mxu0
        %v5199 = vpop.f32.mrf.mxu0
        %v5200 = vadd.f32 0.0, %v5199
        %v5201 = vpop.f32.mrf.mxu0
        %5202 = vmatprep.mubr.bf16.mxu0 0
        %5203 = vmatmul.mubr.bf16.gmra.mxu0 %v2880
        %v5204 = vpop.f32.mrf.mxu0
        %v5205 = vadd.f32 0.0, %v5204
        %v5206 = vpop.f32.mrf.mxu0
        %v5207 = vpop.f32.mrf.mxu0
        %v5208 = vadd.f32 0.0, %v5207
        %v5209 = vpop.f32.mrf.mxu0
        %5210 = vmatprep.mubr.bf16.mxu0 0
        %5211 = vmatmul.mubr.bf16.gmra.mxu0 %v4670
        %v5212 = vpop.f32.mrf.mxu0
        %v5213 = vadd.f32 0.0, %v5212
        %v5214 = vpop.f32.mrf.mxu0
        %v5215 = vpop.f32.mrf.mxu0
        %v5216 = vadd.f32 0.0, %v5215
        %v5217 = vpop.f32.mrf.mxu0
        %5218 = vdwg.mxu0
        %v5219 = vadd.f32 %v5026, %v5093
        %v5220 = vadd.f32 %v5027, %v5096
        %v5221 = vadd.f32 %v5028, %v5101
        %v5222 = vadd.f32 %v5029, %v5104
        %v5223 = vadd.f32 %v5030, %v5109
        %v5224 = vadd.f32 %v5031, %v5112
        %v5225 = vadd.f32 %v5032, %v5117
        %v5226 = vadd.f32 %v5033, %v5120
        %v5227 = vadd.f32 %v5034, %v5125
        %v5228 = vadd.f32 %v5035, %v5128
        %v5229 = vadd.f32 %v5036, %v5133
        %v5230 = vadd.f32 %v5037, %v5136
        %v5231 = vadd.f32 %v5038, %v5141
        %v5232 = vadd.f32 %v5039, %v5144
        %v5233 = vadd.f32 %v5040, %v5149
        %v5234 = vadd.f32 %v5041, %v5152
        %v5235 = vadd.f32 %v5042, %v5157
        %v5236 = vadd.f32 %v5043, %v5160
        %v5237 = vadd.f32 %v5044, %v5165
        %v5238 = vadd.f32 %v5045, %v5168
        %v5239 = vadd.f32 %v5046, %v5173
        %v5240 = vadd.f32 %v5047, %v5176
        %v5241 = vadd.f32 %v5048, %v5181
        %v5242 = vadd.f32 %v5049, %v5184
        %v5243 = vadd.f32 %v5050, %v5189
        %v5244 = vadd.f32 %v5051, %v5192
        %v5245 = vadd.f32 %v5052, %v5197
        %v5246 = vadd.f32 %v5053, %v5200
        %v5247 = vadd.f32 %v5054, %v5205
        %v5248 = vadd.f32 %v5055, %v5208
        %v5249 = vadd.f32 %v5056, %v5213
        %v5250 = vadd.f32 %v5057, %v5216
        %5251 = vmatprep.subr.bf16.mxu0 0
        %5252 = vmatpush1.bf16.msra.mxu0 %v816
        %5253 = vmatprep.subr.bf16.mxu0 0
        %5254 = vmatpush1.bf16.msra.mxu0 %v815
        %5255 = vmatprep.subr.bf16.mxu0 0
        %5256 = vmatpush1.bf16.msra.mxu0 %v814
        %5257 = vmatprep.subr.bf16.mxu0 0
        %5258 = vmatpush1.bf16.msra.mxu0 %v813
        %5259 = vmatprep.subr.bf16.mxu0 0
        %5260 = vmatpush1.bf16.msra.mxu0 %v812
        %5261 = vmatprep.subr.bf16.mxu0 0
        %5262 = vmatpush1.bf16.msra.mxu0 %v811
        %5263 = vmatprep.subr.bf16.mxu0 0
        %5264 = vmatpush1.bf16.msra.mxu0 %v810
        %5265 = vmatprep.subr.bf16.mxu0 0
        %5266 = vmatpush1.bf16.msra.mxu0 %v809
        %5267 = vmatprep.subr.bf16.mxu0 0
        %5268 = vmatpush2.bf16.msra.mxu0 0
        %5269 = vmatprep.subr.bf16.mxu0 0
        %5270 = vmatpush2.bf16.msra.mxu0 0
        %5271 = vmatprep.subr.bf16.mxu0 0
        %5272 = vmatpush2.bf16.msra.mxu0 0
        %5273 = vmatprep.subr.bf16.mxu0 0
        %5274 = vmatpush2.bf16.msra.mxu0 0
        %5275 = vmatprep.subr.bf16.mxu0 0
        %5276 = vmatpush2.bf16.msra.mxu0 0
        %5277 = vmatprep.subr.bf16.mxu0 0
        %5278 = vmatpush2.bf16.msra.mxu0 0
        %5279 = vmatprep.subr.bf16.mxu0 0
        %5280 = vmatpush2.bf16.msra.mxu0 0
        %5281 = vmatprep.subr.bf16.mxu0 0
        %5282 = vmatpush2.bf16.msra.mxu0 0
        %5283 = vmatprep.mubr.bf16.mxu0 0
        %5284 = vmatmul.mubr.bf16.gmra.mxu0 %v441
        %v5285 = vpop.f32.mrf.mxu0
        %v5286 = vadd.f32 0.0, %v5285
        %v5287 = vpop.f32.mrf.mxu0
        %v5288 = vpop.f32.mrf.mxu0
        %v5289 = vadd.f32 0.0, %v5288
        %v5290 = vpop.f32.mrf.mxu0
        %5291 = vmatprep.mubr.bf16.mxu0 0
        %5292 = vmatmul.mubr.bf16.gmra.mxu0 %v443
        %v5293 = vpop.f32.mrf.mxu0
        %v5294 = vadd.f32 0.0, %v5293
        %v5295 = vpop.f32.mrf.mxu0
        %v5296 = vpop.f32.mrf.mxu0
        %v5297 = vadd.f32 0.0, %v5296
        %v5298 = vpop.f32.mrf.mxu0
        %5299 = vmatprep.mubr.bf16.mxu0 0
        %5300 = vmatmul.mubr.bf16.gmra.mxu0 %v445
        %v5301 = vpop.f32.mrf.mxu0
        %v5302 = vadd.f32 0.0, %v5301
        %v5303 = vpop.f32.mrf.mxu0
        %v5304 = vpop.f32.mrf.mxu0
        %v5305 = vadd.f32 0.0, %v5304
        %v5306 = vpop.f32.mrf.mxu0
        %5307 = vmatprep.mubr.bf16.mxu0 0
        %5308 = vmatmul.mubr.bf16.gmra.mxu0 %v447
        %v5309 = vpop.f32.mrf.mxu0
        %v5310 = vadd.f32 0.0, %v5309
        %v5311 = vpop.f32.mrf.mxu0
        %v5312 = vpop.f32.mrf.mxu0
        %v5313 = vadd.f32 0.0, %v5312
        %v5314 = vpop.f32.mrf.mxu0
        %5315 = vmatprep.mubr.bf16.mxu0 0
        %5316 = vmatmul.mubr.bf16.gmra.mxu0 %v449
        %v5317 = vpop.f32.mrf.mxu0
        %v5318 = vadd.f32 0.0, %v5317
        %v5319 = vpop.f32.mrf.mxu0
        %v5320 = vpop.f32.mrf.mxu0
        %v5321 = vadd.f32 0.0, %v5320
        %v5322 = vpop.f32.mrf.mxu0
        %5323 = vmatprep.mubr.bf16.mxu0 0
        %5324 = vmatmul.mubr.bf16.gmra.mxu0 %v451
        %v5325 = vpop.f32.mrf.mxu0
        %v5326 = vadd.f32 0.0, %v5325
        %v5327 = vpop.f32.mrf.mxu0
        %v5328 = vpop.f32.mrf.mxu0
        %v5329 = vadd.f32 0.0, %v5328
        %v5330 = vpop.f32.mrf.mxu0
        %5331 = vmatprep.mubr.bf16.mxu0 0
        %5332 = vmatmul.mubr.bf16.gmra.mxu0 %v453
        %v5333 = vpop.f32.mrf.mxu0
        %v5334 = vadd.f32 0.0, %v5333
        %v5335 = vpop.f32.mrf.mxu0
        %v5336 = vpop.f32.mrf.mxu0
        %v5337 = vadd.f32 0.0, %v5336
        %v5338 = vpop.f32.mrf.mxu0
        %5339 = vmatprep.mubr.bf16.mxu0 0
        %5340 = vmatmul.mubr.bf16.gmra.mxu0 %v455
        %v5341 = vpop.f32.mrf.mxu0
        %v5342 = vadd.f32 0.0, %v5341
        %v5343 = vpop.f32.mrf.mxu0
        %v5344 = vpop.f32.mrf.mxu0
        %v5345 = vadd.f32 0.0, %v5344
        %v5346 = vpop.f32.mrf.mxu0
        %5347 = vmatprep.mubr.bf16.mxu0 0
        %5348 = vmatmul.mubr.bf16.gmra.mxu0 %v457
        %v5349 = vpop.f32.mrf.mxu0
        %v5350 = vadd.f32 0.0, %v5349
        %v5351 = vpop.f32.mrf.mxu0
        %v5352 = vpop.f32.mrf.mxu0
        %v5353 = vadd.f32 0.0, %v5352
        %v5354 = vpop.f32.mrf.mxu0
        %5355 = vmatprep.mubr.bf16.mxu0 0
        %5356 = vmatmul.mubr.bf16.gmra.mxu0 %v459
        %v5357 = vpop.f32.mrf.mxu0
        %v5358 = vadd.f32 0.0, %v5357
        %v5359 = vpop.f32.mrf.mxu0
        %v5360 = vpop.f32.mrf.mxu0
        %v5361 = vadd.f32 0.0, %v5360
        %v5362 = vpop.f32.mrf.mxu0
        %5363 = vmatprep.mubr.bf16.mxu0 0
        %5364 = vmatmul.mubr.bf16.gmra.mxu0 %v461
        %v5365 = vpop.f32.mrf.mxu0
        %v5366 = vadd.f32 0.0, %v5365
        %v5367 = vpop.f32.mrf.mxu0
        %v5368 = vpop.f32.mrf.mxu0
        %v5369 = vadd.f32 0.0, %v5368
        %v5370 = vpop.f32.mrf.mxu0
        %5371 = vmatprep.mubr.bf16.mxu0 0
        %5372 = vmatmul.mubr.bf16.gmra.mxu0 %v463
        %v5373 = vpop.f32.mrf.mxu0
        %v5374 = vadd.f32 0.0, %v5373
        %v5375 = vpop.f32.mrf.mxu0
        %v5376 = vpop.f32.mrf.mxu0
        %v5377 = vadd.f32 0.0, %v5376
        %v5378 = vpop.f32.mrf.mxu0
        %5379 = vmatprep.mubr.bf16.mxu0 0
        %5380 = vmatmul.mubr.bf16.gmra.mxu0 %v465
        %v5381 = vpop.f32.mrf.mxu0
        %v5382 = vadd.f32 0.0, %v5381
        %v5383 = vpop.f32.mrf.mxu0
        %v5384 = vpop.f32.mrf.mxu0
        %v5385 = vadd.f32 0.0, %v5384
        %v5386 = vpop.f32.mrf.mxu0
        %5387 = vmatprep.mubr.bf16.mxu0 0
        %5388 = vmatmul.mubr.bf16.gmra.mxu0 %v467
        %v5389 = vpop.f32.mrf.mxu0
        %v5390 = vadd.f32 0.0, %v5389
        %v5391 = vpop.f32.mrf.mxu0
        %v5392 = vpop.f32.mrf.mxu0
        %v5393 = vadd.f32 0.0, %v5392
        %v5394 = vpop.f32.mrf.mxu0
        %5395 = vmatprep.mubr.bf16.mxu0 0
        %5396 = vmatmul.mubr.bf16.gmra.mxu0 %v469
        %v5397 = vpop.f32.mrf.mxu0
        %v5398 = vadd.f32 0.0, %v5397
        %v5399 = vpop.f32.mrf.mxu0
        %v5400 = vpop.f32.mrf.mxu0
        %v5401 = vadd.f32 0.0, %v5400
        %v5402 = vpop.f32.mrf.mxu0
        %5403 = vmatprep.mubr.bf16.mxu0 0
        %5404 = vmatmul.mubr.bf16.gmra.mxu0 %v471
        %v5405 = vpop.f32.mrf.mxu0
        %v5406 = vadd.f32 0.0, %v5405
        %v5407 = vpop.f32.mrf.mxu0
        %v5408 = vpop.f32.mrf.mxu0
        %v5409 = vadd.f32 0.0, %v5408
        %v5410 = vpop.f32.mrf.mxu0
        %5411 = vdwg.mxu0
        %v5412 = vadd.f32 %v5219, %v5286
        %v5413 = vadd.f32 %v5220, %v5289
        %v5414 = vadd.f32 %v5221, %v5294
        %v5415 = vadd.f32 %v5222, %v5297
        %v5416 = vadd.f32 %v5223, %v5302
        %v5417 = vadd.f32 %v5224, %v5305
        %v5418 = vadd.f32 %v5225, %v5310
        %v5419 = vadd.f32 %v5226, %v5313
        %v5420 = vadd.f32 %v5227, %v5318
        %v5421 = vadd.f32 %v5228, %v5321
        %v5422 = vadd.f32 %v5229, %v5326
        %v5423 = vadd.f32 %v5230, %v5329
        %v5424 = vadd.f32 %v5231, %v5334
        %v5425 = vadd.f32 %v5232, %v5337
        %v5426 = vadd.f32 %v5233, %v5342
        %v5427 = vadd.f32 %v5234, %v5345
        %v5428 = vadd.f32 %v5235, %v5350
        %v5429 = vadd.f32 %v5236, %v5353
        %v5430 = vadd.f32 %v5237, %v5358
        %v5431 = vadd.f32 %v5238, %v5361
        %v5432 = vadd.f32 %v5239, %v5366
        %v5433 = vadd.f32 %v5240, %v5369
        %v5434 = vadd.f32 %v5241, %v5374
        %v5435 = vadd.f32 %v5242, %v5377
        %v5436 = vadd.f32 %v5243, %v5382
        %v5437 = vadd.f32 %v5244, %v5385
        %v5438 = vadd.f32 %v5245, %v5390
        %v5439 = vadd.f32 %v5246, %v5393
        %v5440 = vadd.f32 %v5247, %v5398
        %v5441 = vadd.f32 %v5248, %v5401
        %v5442 = vadd.f32 %v5249, %v5406
        %v5443 = vadd.f32 %v5250, %v5409
        %5444 = vmatprep.subr.bf16.mxu0 0
        %5445 = vmatpush1.bf16.msra.mxu0 %v1176
        %5446 = vmatprep.subr.bf16.mxu0 0
        %5447 = vmatpush1.bf16.msra.mxu0 %v1175
        %5448 = vmatprep.subr.bf16.mxu0 0
        %5449 = vmatpush1.bf16.msra.mxu0 %v1174
        %5450 = vmatprep.subr.bf16.mxu0 0
        %5451 = vmatpush1.bf16.msra.mxu0 %v1173
        %5452 = vmatprep.subr.bf16.mxu0 0
        %5453 = vmatpush1.bf16.msra.mxu0 %v1172
        %5454 = vmatprep.subr.bf16.mxu0 0
        %5455 = vmatpush1.bf16.msra.mxu0 %v1171
        %5456 = vmatprep.subr.bf16.mxu0 0
        %5457 = vmatpush1.bf16.msra.mxu0 %v1170
        %5458 = vmatprep.subr.bf16.mxu0 0
        %5459 = vmatpush1.bf16.msra.mxu0 %v1169
        %5460 = vmatprep.subr.bf16.mxu0 0
        %5461 = vmatpush2.bf16.msra.mxu0 0
        %5462 = vmatprep.subr.bf16.mxu0 0
        %5463 = vmatpush2.bf16.msra.mxu0 0
        %5464 = vmatprep.subr.bf16.mxu0 0
        %5465 = vmatpush2.bf16.msra.mxu0 0
        %5466 = vmatprep.subr.bf16.mxu0 0
        %5467 = vmatpush2.bf16.msra.mxu0 0
        %5468 = vmatprep.subr.bf16.mxu0 0
        %5469 = vmatpush2.bf16.msra.mxu0 0
        %5470 = vmatprep.subr.bf16.mxu0 0
        %5471 = vmatpush2.bf16.msra.mxu0 0
        %5472 = vmatprep.subr.bf16.mxu0 0
        %5473 = vmatpush2.bf16.msra.mxu0 0
        %5474 = vmatprep.subr.bf16.mxu0 0
        %5475 = vmatpush2.bf16.msra.mxu0 0
        %5476 = vmatprep.mubr.bf16.mxu0 0
        %5477 = vmatmul.mubr.bf16.gmra.mxu0 %v441
        %v5478 = vpop.f32.mrf.mxu0
        %v5479 = vadd.f32 0.0, %v5478
        %v5480 = vpop.f32.mrf.mxu0
        %v5481 = vpop.f32.mrf.mxu0
        %v5482 = vadd.f32 0.0, %v5481
        %v5483 = vpop.f32.mrf.mxu0
        %5484 = vmatprep.mubr.bf16.mxu0 0
        %5485 = vmatmul.mubr.bf16.gmra.mxu0 %v443
        %v5486 = vpop.f32.mrf.mxu0
        %v5487 = vadd.f32 0.0, %v5486
        %v5488 = vpop.f32.mrf.mxu0
        %v5489 = vpop.f32.mrf.mxu0
        %v5490 = vadd.f32 0.0, %v5489
        %v5491 = vpop.f32.mrf.mxu0
        %5492 = vmatprep.mubr.bf16.mxu0 0
        %5493 = vmatmul.mubr.bf16.gmra.mxu0 %v445
        %v5494 = vpop.f32.mrf.mxu0
        %v5495 = vadd.f32 0.0, %v5494
        %v5496 = vpop.f32.mrf.mxu0
        %v5497 = vpop.f32.mrf.mxu0
        %v5498 = vadd.f32 0.0, %v5497
        %v5499 = vpop.f32.mrf.mxu0
        %5500 = vmatprep.mubr.bf16.mxu0 0
        %5501 = vmatmul.mubr.bf16.gmra.mxu0 %v447
        %v5502 = vpop.f32.mrf.mxu0
        %v5503 = vadd.f32 0.0, %v5502
        %v5504 = vpop.f32.mrf.mxu0
        %v5505 = vpop.f32.mrf.mxu0
        %v5506 = vadd.f32 0.0, %v5505
        %v5507 = vpop.f32.mrf.mxu0
        %5508 = vmatprep.mubr.bf16.mxu0 0
        %5509 = vmatmul.mubr.bf16.gmra.mxu0 %v449
        %v5510 = vpop.f32.mrf.mxu0
        %v5511 = vadd.f32 0.0, %v5510
        %v5512 = vpop.f32.mrf.mxu0
        %v5513 = vpop.f32.mrf.mxu0
        %v5514 = vadd.f32 0.0, %v5513
        %v5515 = vpop.f32.mrf.mxu0
        %5516 = vmatprep.mubr.bf16.mxu0 0
        %5517 = vmatmul.mubr.bf16.gmra.mxu0 %v451
        %v5518 = vpop.f32.mrf.mxu0
        %v5519 = vadd.f32 0.0, %v5518
        %v5520 = vpop.f32.mrf.mxu0
        %v5521 = vpop.f32.mrf.mxu0
        %v5522 = vadd.f32 0.0, %v5521
        %v5523 = vpop.f32.mrf.mxu0
        %5524 = vmatprep.mubr.bf16.mxu0 0
        %5525 = vmatmul.mubr.bf16.gmra.mxu0 %v453
        %v5526 = vpop.f32.mrf.mxu0
        %v5527 = vadd.f32 0.0, %v5526
        %v5528 = vpop.f32.mrf.mxu0
        %v5529 = vpop.f32.mrf.mxu0
        %v5530 = vadd.f32 0.0, %v5529
        %v5531 = vpop.f32.mrf.mxu0
        %5532 = vmatprep.mubr.bf16.mxu0 0
        %5533 = vmatmul.mubr.bf16.gmra.mxu0 %v455
        %v5534 = vpop.f32.mrf.mxu0
        %v5535 = vadd.f32 0.0, %v5534
        %v5536 = vpop.f32.mrf.mxu0
        %v5537 = vpop.f32.mrf.mxu0
        %v5538 = vadd.f32 0.0, %v5537
        %v5539 = vpop.f32.mrf.mxu0
        %5540 = vmatprep.mubr.bf16.mxu0 0
        %5541 = vmatmul.mubr.bf16.gmra.mxu0 %v457
        %v5542 = vpop.f32.mrf.mxu0
        %v5543 = vadd.f32 0.0, %v5542
        %v5544 = vpop.f32.mrf.mxu0
        %v5545 = vpop.f32.mrf.mxu0
        %v5546 = vadd.f32 0.0, %v5545
        %v5547 = vpop.f32.mrf.mxu0
        %5548 = vmatprep.mubr.bf16.mxu0 0
        %5549 = vmatmul.mubr.bf16.gmra.mxu0 %v459
        %v5550 = vpop.f32.mrf.mxu0
        %v5551 = vadd.f32 0.0, %v5550
        %v5552 = vpop.f32.mrf.mxu0
        %v5553 = vpop.f32.mrf.mxu0
        %v5554 = vadd.f32 0.0, %v5553
        %v5555 = vpop.f32.mrf.mxu0
        %5556 = vmatprep.mubr.bf16.mxu0 0
        %5557 = vmatmul.mubr.bf16.gmra.mxu0 %v461
        %v5558 = vpop.f32.mrf.mxu0
        %v5559 = vadd.f32 0.0, %v5558
        %v5560 = vpop.f32.mrf.mxu0
        %v5561 = vpop.f32.mrf.mxu0
        %v5562 = vadd.f32 0.0, %v5561
        %v5563 = vpop.f32.mrf.mxu0
        %5564 = vmatprep.mubr.bf16.mxu0 0
        %5565 = vmatmul.mubr.bf16.gmra.mxu0 %v463
        %v5566 = vpop.f32.mrf.mxu0
        %v5567 = vadd.f32 0.0, %v5566
        %v5568 = vpop.f32.mrf.mxu0
        %v5569 = vpop.f32.mrf.mxu0
        %v5570 = vadd.f32 0.0, %v5569
        %v5571 = vpop.f32.mrf.mxu0
        %5572 = vmatprep.mubr.bf16.mxu0 0
        %5573 = vmatmul.mubr.bf16.gmra.mxu0 %v465
        %v5574 = vpop.f32.mrf.mxu0
        %v5575 = vadd.f32 0.0, %v5574
        %v5576 = vpop.f32.mrf.mxu0
        %v5577 = vpop.f32.mrf.mxu0
        %v5578 = vadd.f32 0.0, %v5577
        %v5579 = vpop.f32.mrf.mxu0
        %5580 = vmatprep.mubr.bf16.mxu0 0
        %5581 = vmatmul.mubr.bf16.gmra.mxu0 %v467
        %v5582 = vpop.f32.mrf.mxu0
        %v5583 = vadd.f32 0.0, %v5582
        %v5584 = vpop.f32.mrf.mxu0
        %v5585 = vpop.f32.mrf.mxu0
        %v5586 = vadd.f32 0.0, %v5585
        %v5587 = vpop.f32.mrf.mxu0
        %5588 = vmatprep.mubr.bf16.mxu0 0
        %5589 = vmatmul.mubr.bf16.gmra.mxu0 %v469
        %v5590 = vpop.f32.mrf.mxu0
        %v5591 = vadd.f32 0.0, %v5590
        %v5592 = vpop.f32.mrf.mxu0
        %v5593 = vpop.f32.mrf.mxu0
        %v5594 = vadd.f32 0.0, %v5593
        %v5595 = vpop.f32.mrf.mxu0
        %5596 = vmatprep.mubr.bf16.mxu0 0
        %5597 = vmatmul.mubr.bf16.gmra.mxu0 %v471
        %v5598 = vpop.f32.mrf.mxu0
        %v5599 = vadd.f32 0.0, %v5598
        %v5600 = vpop.f32.mrf.mxu0
        %v5601 = vpop.f32.mrf.mxu0
        %v5602 = vadd.f32 0.0, %v5601
        %v5603 = vpop.f32.mrf.mxu0
        %5604 = vdwg.mxu0
        %v5605 = vadd.f32 %v5412, %v5479
        %v5606 = vadd.f32 %v5413, %v5482
        %v5607 = vadd.f32 %v5414, %v5487
        %v5608 = vadd.f32 %v5415, %v5490
        %v5609 = vadd.f32 %v5416, %v5495
        %v5610 = vadd.f32 %v5417, %v5498
        %v5611 = vadd.f32 %v5418, %v5503
        %v5612 = vadd.f32 %v5419, %v5506
        %v5613 = vadd.f32 %v5420, %v5511
        %v5614 = vadd.f32 %v5421, %v5514
        %v5615 = vadd.f32 %v5422, %v5519
        %v5616 = vadd.f32 %v5423, %v5522
        %v5617 = vadd.f32 %v5424, %v5527
        %v5618 = vadd.f32 %v5425, %v5530
        %v5619 = vadd.f32 %v5426, %v5535
        %v5620 = vadd.f32 %v5427, %v5538
        %v5621 = vadd.f32 %v5428, %v5543
        %v5622 = vadd.f32 %v5429, %v5546
        %v5623 = vadd.f32 %v5430, %v5551
        %v5624 = vadd.f32 %v5431, %v5554
        %v5625 = vadd.f32 %v5432, %v5559
        %v5626 = vadd.f32 %v5433, %v5562
        %v5627 = vadd.f32 %v5434, %v5567
        %v5628 = vadd.f32 %v5435, %v5570
        %v5629 = vadd.f32 %v5436, %v5575
        %v5630 = vadd.f32 %v5437, %v5578
        %v5631 = vadd.f32 %v5438, %v5583
        %v5632 = vadd.f32 %v5439, %v5586
        %v5633 = vadd.f32 %v5440, %v5591
        %v5634 = vadd.f32 %v5441, %v5594
        %v5635 = vadd.f32 %v5442, %v5599
        %v5636 = vadd.f32 %v5443, %v5602
        %5637 = vmatprep.subr.bf16.mxu0 0
        %5638 = vmatpush1.bf16.msra.mxu0 %v816
        %5639 = vmatprep.subr.bf16.mxu0 0
        %5640 = vmatpush1.bf16.msra.mxu0 %v815
        %5641 = vmatprep.subr.bf16.mxu0 0
        %5642 = vmatpush1.bf16.msra.mxu0 %v814
        %5643 = vmatprep.subr.bf16.mxu0 0
        %5644 = vmatpush1.bf16.msra.mxu0 %v813
        %5645 = vmatprep.subr.bf16.mxu0 0
        %5646 = vmatpush1.bf16.msra.mxu0 %v812
        %5647 = vmatprep.subr.bf16.mxu0 0
        %5648 = vmatpush1.bf16.msra.mxu0 %v811
        %5649 = vmatprep.subr.bf16.mxu0 0
        %5650 = vmatpush1.bf16.msra.mxu0 %v810
        %5651 = vmatprep.subr.bf16.mxu0 0
        %5652 = vmatpush1.bf16.msra.mxu0 %v809
        %5653 = vmatprep.subr.bf16.mxu0 0
        %5654 = vmatpush2.bf16.msra.mxu0 0
        %5655 = vmatprep.subr.bf16.mxu0 0
        %5656 = vmatpush2.bf16.msra.mxu0 0
        %5657 = vmatprep.subr.bf16.mxu0 0
        %5658 = vmatpush2.bf16.msra.mxu0 0
        %5659 = vmatprep.subr.bf16.mxu0 0
        %5660 = vmatpush2.bf16.msra.mxu0 0
        %5661 = vmatprep.subr.bf16.mxu0 0
        %5662 = vmatpush2.bf16.msra.mxu0 0
        %5663 = vmatprep.subr.bf16.mxu0 0
        %5664 = vmatpush2.bf16.msra.mxu0 0
        %5665 = vmatprep.subr.bf16.mxu0 0
        %5666 = vmatpush2.bf16.msra.mxu0 0
        %5667 = vmatprep.subr.bf16.mxu0 0
        %5668 = vmatpush2.bf16.msra.mxu0 0
        %5669 = vmatprep.mubr.bf16.mxu0 0
        %5670 = vmatmul.mubr.bf16.gmra.mxu0 %v585
        %v5671 = vpop.f32.mrf.mxu0
        %v5672 = vadd.f32 0.0, %v5671
        %v5673 = vpop.f32.mrf.mxu0
        %v5674 = vpop.f32.mrf.mxu0
        %v5675 = vadd.f32 0.0, %v5674
        %v5676 = vpop.f32.mrf.mxu0
        %5677 = vmatprep.mubr.bf16.mxu0 0
        %5678 = vmatmul.mubr.bf16.gmra.mxu0 %v587
        %v5679 = vpop.f32.mrf.mxu0
        %v5680 = vadd.f32 0.0, %v5679
        %v5681 = vpop.f32.mrf.mxu0
        %v5682 = vpop.f32.mrf.mxu0
        %v5683 = vadd.f32 0.0, %v5682
        %v5684 = vpop.f32.mrf.mxu0
        %5685 = vmatprep.mubr.bf16.mxu0 0
        %5686 = vmatmul.mubr.bf16.gmra.mxu0 %v589
        %v5687 = vpop.f32.mrf.mxu0
        %v5688 = vadd.f32 0.0, %v5687
        %v5689 = vpop.f32.mrf.mxu0
        %v5690 = vpop.f32.mrf.mxu0
        %v5691 = vadd.f32 0.0, %v5690
        %v5692 = vpop.f32.mrf.mxu0
        %5693 = vmatprep.mubr.bf16.mxu0 0
        %5694 = vmatmul.mubr.bf16.gmra.mxu0 %v591
        %v5695 = vpop.f32.mrf.mxu0
        %v5696 = vadd.f32 0.0, %v5695
        %v5697 = vpop.f32.mrf.mxu0
        %v5698 = vpop.f32.mrf.mxu0
        %v5699 = vadd.f32 0.0, %v5698
        %v5700 = vpop.f32.mrf.mxu0
        %5701 = vmatprep.mubr.bf16.mxu0 0
        %5702 = vmatmul.mubr.bf16.gmra.mxu0 %v593
        %v5703 = vpop.f32.mrf.mxu0
        %v5704 = vadd.f32 0.0, %v5703
        %v5705 = vpop.f32.mrf.mxu0
        %v5706 = vpop.f32.mrf.mxu0
        %v5707 = vadd.f32 0.0, %v5706
        %v5708 = vpop.f32.mrf.mxu0
        %5709 = vmatprep.mubr.bf16.mxu0 0
        %5710 = vmatmul.mubr.bf16.gmra.mxu0 %v595
        %v5711 = vpop.f32.mrf.mxu0
        %v5712 = vadd.f32 0.0, %v5711
        %v5713 = vpop.f32.mrf.mxu0
        %v5714 = vpop.f32.mrf.mxu0
        %v5715 = vadd.f32 0.0, %v5714
        %v5716 = vpop.f32.mrf.mxu0
        %5717 = vmatprep.mubr.bf16.mxu0 0
        %5718 = vmatmul.mubr.bf16.gmra.mxu0 %v597
        %v5719 = vpop.f32.mrf.mxu0
        %v5720 = vadd.f32 0.0, %v5719
        %v5721 = vpop.f32.mrf.mxu0
        %v5722 = vpop.f32.mrf.mxu0
        %v5723 = vadd.f32 0.0, %v5722
        %v5724 = vpop.f32.mrf.mxu0
        %5725 = vmatprep.mubr.bf16.mxu0 0
        %5726 = vmatmul.mubr.bf16.gmra.mxu0 %v599
        %v5727 = vpop.f32.mrf.mxu0
        %v5728 = vadd.f32 0.0, %v5727
        %v5729 = vpop.f32.mrf.mxu0
        %v5730 = vpop.f32.mrf.mxu0
        %v5731 = vadd.f32 0.0, %v5730
        %v5732 = vpop.f32.mrf.mxu0
        %5733 = vmatprep.mubr.bf16.mxu0 0
        %5734 = vmatmul.mubr.bf16.gmra.mxu0 %v601
        %v5735 = vpop.f32.mrf.mxu0
        %v5736 = vadd.f32 0.0, %v5735
        %v5737 = vpop.f32.mrf.mxu0
        %v5738 = vpop.f32.mrf.mxu0
        %v5739 = vadd.f32 0.0, %v5738
        %v5740 = vpop.f32.mrf.mxu0
        %5741 = vmatprep.mubr.bf16.mxu0 0
        %5742 = vmatmul.mubr.bf16.gmra.mxu0 %v603
        %v5743 = vpop.f32.mrf.mxu0
        %v5744 = vadd.f32 0.0, %v5743
        %v5745 = vpop.f32.mrf.mxu0
        %v5746 = vpop.f32.mrf.mxu0
        %v5747 = vadd.f32 0.0, %v5746
        %v5748 = vpop.f32.mrf.mxu0
        %5749 = vmatprep.mubr.bf16.mxu0 0
        %5750 = vmatmul.mubr.bf16.gmra.mxu0 %v605
        %v5751 = vpop.f32.mrf.mxu0
        %v5752 = vadd.f32 0.0, %v5751
        %v5753 = vpop.f32.mrf.mxu0
        %v5754 = vpop.f32.mrf.mxu0
        %v5755 = vadd.f32 0.0, %v5754
        %v5756 = vpop.f32.mrf.mxu0
        %5757 = vmatprep.mubr.bf16.mxu0 0
        %5758 = vmatmul.mubr.bf16.gmra.mxu0 %v607
        %v5759 = vpop.f32.mrf.mxu0
        %v5760 = vadd.f32 0.0, %v5759
        %v5761 = vpop.f32.mrf.mxu0
        %v5762 = vpop.f32.mrf.mxu0
        %v5763 = vadd.f32 0.0, %v5762
        %v5764 = vpop.f32.mrf.mxu0
        %5765 = vmatprep.mubr.bf16.mxu0 0
        %5766 = vmatmul.mubr.bf16.gmra.mxu0 %v609
        %v5767 = vpop.f32.mrf.mxu0
        %v5768 = vadd.f32 0.0, %v5767
        %v5769 = vpop.f32.mrf.mxu0
        %v5770 = vpop.f32.mrf.mxu0
        %v5771 = vadd.f32 0.0, %v5770
        %v5772 = vpop.f32.mrf.mxu0
        %5773 = vmatprep.mubr.bf16.mxu0 0
        %5774 = vmatmul.mubr.bf16.gmra.mxu0 %v611
        %v5775 = vpop.f32.mrf.mxu0
        %v5776 = vadd.f32 0.0, %v5775
        %v5777 = vpop.f32.mrf.mxu0
        %v5778 = vpop.f32.mrf.mxu0
        %v5779 = vadd.f32 0.0, %v5778
        %v5780 = vpop.f32.mrf.mxu0
        %5781 = vmatprep.mubr.bf16.mxu0 0
        %5782 = vmatmul.mubr.bf16.gmra.mxu0 %v613
        %v5783 = vpop.f32.mrf.mxu0
        %v5784 = vadd.f32 0.0, %v5783
        %v5785 = vpop.f32.mrf.mxu0
        %v5786 = vpop.f32.mrf.mxu0
        %v5787 = vadd.f32 0.0, %v5786
        %v5788 = vpop.f32.mrf.mxu0
        %5789 = vmatprep.mubr.bf16.mxu0 0
        %5790 = vmatmul.mubr.bf16.gmra.mxu0 %v615
        %v5791 = vpop.f32.mrf.mxu0
        %v5792 = vadd.f32 0.0, %v5791
        %v5793 = vpop.f32.mrf.mxu0
        %v5794 = vpop.f32.mrf.mxu0
        %v5795 = vadd.f32 0.0, %v5794
        %v5796 = vpop.f32.mrf.mxu0
        %5797 = vdwg.mxu0
        %v5798 = vadd.f32 %v5605, %v5672
        %v5799 = vadd.f32 %v5606, %v5675
        %v5800 = vadd.f32 %v5607, %v5680
        %v5801 = vadd.f32 %v5608, %v5683
        %v5802 = vadd.f32 %v5609, %v5688
        %v5803 = vadd.f32 %v5610, %v5691
        %v5804 = vadd.f32 %v5611, %v5696
        %v5805 = vadd.f32 %v5612, %v5699
        %v5806 = vadd.f32 %v5613, %v5704
        %v5807 = vadd.f32 %v5614, %v5707
        %v5808 = vadd.f32 %v5615, %v5712
        %v5809 = vadd.f32 %v5616, %v5715
        %v5810 = vadd.f32 %v5617, %v5720
        %v5811 = vadd.f32 %v5618, %v5723
        %v5812 = vadd.f32 %v5619, %v5728
        %v5813 = vadd.f32 %v5620, %v5731
        %v5814 = vadd.f32 %v5621, %v5736
        %v5815 = vadd.f32 %v5622, %v5739
        %v5816 = vadd.f32 %v5623, %v5744
        %v5817 = vadd.f32 %v5624, %v5747
        %v5818 = vadd.f32 %v5625, %v5752
        %v5819 = vadd.f32 %v5626, %v5755
        %v5820 = vadd.f32 %v5627, %v5760
        %v5821 = vadd.f32 %v5628, %v5763
        %v5822 = vadd.f32 %v5629, %v5768
        %v5823 = vadd.f32 %v5630, %v5771
        %v5824 = vadd.f32 %v5631, %v5776
        %v5825 = vadd.f32 %v5632, %v5779
        %v5826 = vadd.f32 %v5633, %v5784
        %v5827 = vadd.f32 %v5634, %v5787
        %v5828 = vadd.f32 %v5635, %v5792
        %v5829 = vadd.f32 %v5636, %v5795
        %v5831 = vshrl.u32 %v471, 16
        %v5833 = vshll.u32 %v471, 16
        %v5835 = vrot.slane %v5833, 1
        %v5836 = vor.u32 %v5831, %v5835
        %v5838 = vshll.u32 %v472, 16
        %v5840 = vrot.slane %v5838, 1
        %v5841 = vsel %vm1708, %v5836, %v5840
        %v5844 = vshrl.u32 %v615, 16
        %v5846 = vshll.u32 %v615, 16
        %v5848 = vrot.slane %v5846, 1
        %v5849 = vor.u32 %v5844, %v5848
        %v5851 = vshll.u32 %v616, 16
        %v5853 = vrot.slane %v5851, 1
        %v5854 = vsel %vm1708, %v5849, %v5853
        %5856 = vmatprep.subr.bf16.mxu0 0
        %5857 = vmatpush1.bf16.msra.mxu0 %v824
        %5858 = vmatprep.subr.bf16.mxu0 0
        %5859 = vmatpush1.bf16.msra.mxu0 %v823
        %5860 = vmatprep.subr.bf16.mxu0 0
        %5861 = vmatpush1.bf16.msra.mxu0 %v822
        %5862 = vmatprep.subr.bf16.mxu0 0
        %5863 = vmatpush1.bf16.msra.mxu0 %v821
        %5864 = vmatprep.subr.bf16.mxu0 0
        %5865 = vmatpush1.bf16.msra.mxu0 %v820
        %5866 = vmatprep.subr.bf16.mxu0 0
        %5867 = vmatpush1.bf16.msra.mxu0 %v819
        %5868 = vmatprep.subr.bf16.mxu0 0
        %5869 = vmatpush1.bf16.msra.mxu0 %v818
        %5870 = vmatprep.subr.bf16.mxu0 0
        %5871 = vmatpush1.bf16.msra.mxu0 %v817
        %5872 = vmatprep.subr.bf16.mxu0 0
        %5873 = vmatpush2.bf16.msra.mxu0 0
        %5874 = vmatprep.subr.bf16.mxu0 0
        %5875 = vmatpush2.bf16.msra.mxu0 0
        %5876 = vmatprep.subr.bf16.mxu0 0
        %5877 = vmatpush2.bf16.msra.mxu0 0
        %5878 = vmatprep.subr.bf16.mxu0 0
        %5879 = vmatpush2.bf16.msra.mxu0 0
        %5880 = vmatprep.subr.bf16.mxu0 0
        %5881 = vmatpush2.bf16.msra.mxu0 0
        %5882 = vmatprep.subr.bf16.mxu0 0
        %5883 = vmatpush2.bf16.msra.mxu0 0
        %5884 = vmatprep.subr.bf16.mxu0 0
        %5885 = vmatpush2.bf16.msra.mxu0 0
        %5886 = vmatprep.subr.bf16.mxu0 0
        %5887 = vmatpush2.bf16.msra.mxu0 0
        %5888 = vmatprep.mubr.bf16.mxu0 0
        %5889 = vmatmul.mubr.bf16.gmra.mxu0 %v1744
        %v5890 = vpop.f32.mrf.mxu0
        %v5891 = vadd.f32 0.0, %v5890
        %v5892 = vpop.f32.mrf.mxu0
        %v5893 = vpop.f32.mrf.mxu0
        %v5894 = vadd.f32 0.0, %v5893
        %v5895 = vpop.f32.mrf.mxu0
        %5896 = vmatprep.mubr.bf16.mxu0 0
        %5897 = vmatmul.mubr.bf16.gmra.mxu0 %v1756
        %v5898 = vpop.f32.mrf.mxu0
        %v5899 = vadd.f32 0.0, %v5898
        %v5900 = vpop.f32.mrf.mxu0
        %v5901 = vpop.f32.mrf.mxu0
        %v5902 = vadd.f32 0.0, %v5901
        %v5903 = vpop.f32.mrf.mxu0
        %5904 = vmatprep.mubr.bf16.mxu0 0
        %5905 = vmatmul.mubr.bf16.gmra.mxu0 %v1768
        %v5906 = vpop.f32.mrf.mxu0
        %v5907 = vadd.f32 0.0, %v5906
        %v5908 = vpop.f32.mrf.mxu0
        %v5909 = vpop.f32.mrf.mxu0
        %v5910 = vadd.f32 0.0, %v5909
        %v5911 = vpop.f32.mrf.mxu0
        %5912 = vmatprep.mubr.bf16.mxu0 0
        %5913 = vmatmul.mubr.bf16.gmra.mxu0 %v1780
        %v5914 = vpop.f32.mrf.mxu0
        %v5915 = vadd.f32 0.0, %v5914
        %v5916 = vpop.f32.mrf.mxu0
        %v5917 = vpop.f32.mrf.mxu0
        %v5918 = vadd.f32 0.0, %v5917
        %v5919 = vpop.f32.mrf.mxu0
        %5920 = vmatprep.mubr.bf16.mxu0 0
        %5921 = vmatmul.mubr.bf16.gmra.mxu0 %v1792
        %v5922 = vpop.f32.mrf.mxu0
        %v5923 = vadd.f32 0.0, %v5922
        %v5924 = vpop.f32.mrf.mxu0
        %v5925 = vpop.f32.mrf.mxu0
        %v5926 = vadd.f32 0.0, %v5925
        %v5927 = vpop.f32.mrf.mxu0
        %5928 = vmatprep.mubr.bf16.mxu0 0
        %5929 = vmatmul.mubr.bf16.gmra.mxu0 %v1804
        %v5930 = vpop.f32.mrf.mxu0
        %v5931 = vadd.f32 0.0, %v5930
        %v5932 = vpop.f32.mrf.mxu0
        %v5933 = vpop.f32.mrf.mxu0
        %v5934 = vadd.f32 0.0, %v5933
        %v5935 = vpop.f32.mrf.mxu0
        %5936 = vmatprep.mubr.bf16.mxu0 0
        %5937 = vmatmul.mubr.bf16.gmra.mxu0 %v1816
        %v5938 = vpop.f32.mrf.mxu0
        %v5939 = vadd.f32 0.0, %v5938
        %v5940 = vpop.f32.mrf.mxu0
        %v5941 = vpop.f32.mrf.mxu0
        %v5942 = vadd.f32 0.0, %v5941
        %v5943 = vpop.f32.mrf.mxu0
        %5944 = vmatprep.mubr.bf16.mxu0 0
        %5945 = vmatmul.mubr.bf16.gmra.mxu0 %v1828
        %v5946 = vpop.f32.mrf.mxu0
        %v5947 = vadd.f32 0.0, %v5946
        %v5948 = vpop.f32.mrf.mxu0
        %v5949 = vpop.f32.mrf.mxu0
        %v5950 = vadd.f32 0.0, %v5949
        %v5951 = vpop.f32.mrf.mxu0
        %5952 = vmatprep.mubr.bf16.mxu0 0
        %5953 = vmatmul.mubr.bf16.gmra.mxu0 %v1840
        %v5954 = vpop.f32.mrf.mxu0
        %v5955 = vadd.f32 0.0, %v5954
        %v5956 = vpop.f32.mrf.mxu0
        %v5957 = vpop.f32.mrf.mxu0
        %v5958 = vadd.f32 0.0, %v5957
        %v5959 = vpop.f32.mrf.mxu0
        %5960 = vmatprep.mubr.bf16.mxu0 0
        %5961 = vmatmul.mubr.bf16.gmra.mxu0 %v1852
        %v5962 = vpop.f32.mrf.mxu0
        %v5963 = vadd.f32 0.0, %v5962
        %v5964 = vpop.f32.mrf.mxu0
        %v5965 = vpop.f32.mrf.mxu0
        %v5966 = vadd.f32 0.0, %v5965
        %v5967 = vpop.f32.mrf.mxu0
        %5968 = vmatprep.mubr.bf16.mxu0 0
        %5969 = vmatmul.mubr.bf16.gmra.mxu0 %v1864
        %v5970 = vpop.f32.mrf.mxu0
        %v5971 = vadd.f32 0.0, %v5970
        %v5972 = vpop.f32.mrf.mxu0
        %v5973 = vpop.f32.mrf.mxu0
        %v5974 = vadd.f32 0.0, %v5973
        %v5975 = vpop.f32.mrf.mxu0
        %5976 = vmatprep.mubr.bf16.mxu0 0
        %5977 = vmatmul.mubr.bf16.gmra.mxu0 %v1876
        %v5978 = vpop.f32.mrf.mxu0
        %v5979 = vadd.f32 0.0, %v5978
        %v5980 = vpop.f32.mrf.mxu0
        %v5981 = vpop.f32.mrf.mxu0
        %v5982 = vadd.f32 0.0, %v5981
        %v5983 = vpop.f32.mrf.mxu0
        %5984 = vmatprep.mubr.bf16.mxu0 0
        %5985 = vmatmul.mubr.bf16.gmra.mxu0 %v1888
        %v5986 = vpop.f32.mrf.mxu0
        %v5987 = vadd.f32 0.0, %v5986
        %v5988 = vpop.f32.mrf.mxu0
        %v5989 = vpop.f32.mrf.mxu0
        %v5990 = vadd.f32 0.0, %v5989
        %v5991 = vpop.f32.mrf.mxu0
        %5992 = vmatprep.mubr.bf16.mxu0 0
        %5993 = vmatmul.mubr.bf16.gmra.mxu0 %v1900
        %v5994 = vpop.f32.mrf.mxu0
        %v5995 = vadd.f32 0.0, %v5994
        %v5996 = vpop.f32.mrf.mxu0
        %v5997 = vpop.f32.mrf.mxu0
        %v5998 = vadd.f32 0.0, %v5997
        %v5999 = vpop.f32.mrf.mxu0
        %6000 = vmatprep.mubr.bf16.mxu0 0
        %6001 = vmatmul.mubr.bf16.gmra.mxu0 %v4066
        %v6002 = vpop.f32.mrf.mxu0
        %v6003 = vadd.f32 0.0, %v6002
        %v6004 = vpop.f32.mrf.mxu0
        %v6005 = vpop.f32.mrf.mxu0
        %v6006 = vadd.f32 0.0, %v6005
        %v6007 = vpop.f32.mrf.mxu0
        %6008 = vmatprep.mubr.bf16.mxu0 0
        %6009 = vmatmul.mubr.bf16.gmra.mxu0 %v5841
        %v6010 = vpop.f32.mrf.mxu0
        %v6011 = vadd.f32 0.0, %v6010
        %v6012 = vpop.f32.mrf.mxu0
        %v6013 = vpop.f32.mrf.mxu0
        %v6014 = vadd.f32 0.0, %v6013
        %v6015 = vpop.f32.mrf.mxu0
        %6016 = vdwg.mxu0
        %v6017 = vadd.f32 %v5798, %v5891
        %v6018 = vadd.f32 %v5799, %v5894
        %v6019 = vadd.f32 %v5800, %v5899
        %v6020 = vadd.f32 %v5801, %v5902
        %v6021 = vadd.f32 %v5802, %v5907
        %v6022 = vadd.f32 %v5803, %v5910
        %v6023 = vadd.f32 %v5804, %v5915
        %v6024 = vadd.f32 %v5805, %v5918
        %v6025 = vadd.f32 %v5806, %v5923
        %v6026 = vadd.f32 %v5807, %v5926
        %v6027 = vadd.f32 %v5808, %v5931
        %v6028 = vadd.f32 %v5809, %v5934
        %v6029 = vadd.f32 %v5810, %v5939
        %v6030 = vadd.f32 %v5811, %v5942
        %v6031 = vadd.f32 %v5812, %v5947
        %v6032 = vadd.f32 %v5813, %v5950
        %v6033 = vadd.f32 %v5814, %v5955
        %v6034 = vadd.f32 %v5815, %v5958
        %v6035 = vadd.f32 %v5816, %v5963
        %v6036 = vadd.f32 %v5817, %v5966
        %v6037 = vadd.f32 %v5818, %v5971
        %v6038 = vadd.f32 %v5819, %v5974
        %v6039 = vadd.f32 %v5820, %v5979
        %v6040 = vadd.f32 %v5821, %v5982
        %v6041 = vadd.f32 %v5822, %v5987
        %v6042 = vadd.f32 %v5823, %v5990
        %v6043 = vadd.f32 %v5824, %v5995
        %v6044 = vadd.f32 %v5825, %v5998
        %v6045 = vadd.f32 %v5826, %v6003
        %v6046 = vadd.f32 %v5827, %v6006
        %v6047 = vadd.f32 %v5828, %v6011
        %v6048 = vadd.f32 %v5829, %v6014
        %6049 = vmatprep.subr.bf16.mxu0 0
        %6050 = vmatpush1.bf16.msra.mxu0 %v1184
        %6051 = vmatprep.subr.bf16.mxu0 0
        %6052 = vmatpush1.bf16.msra.mxu0 %v1183
        %6053 = vmatprep.subr.bf16.mxu0 0
        %6054 = vmatpush1.bf16.msra.mxu0 %v1182
        %6055 = vmatprep.subr.bf16.mxu0 0
        %6056 = vmatpush1.bf16.msra.mxu0 %v1181
        %6057 = vmatprep.subr.bf16.mxu0 0
        %6058 = vmatpush1.bf16.msra.mxu0 %v1180
        %6059 = vmatprep.subr.bf16.mxu0 0
        %6060 = vmatpush1.bf16.msra.mxu0 %v1179
        %6061 = vmatprep.subr.bf16.mxu0 0
        %6062 = vmatpush1.bf16.msra.mxu0 %v1178
        %6063 = vmatprep.subr.bf16.mxu0 0
        %6064 = vmatpush1.bf16.msra.mxu0 %v1177
        %6065 = vmatprep.subr.bf16.mxu0 0
        %6066 = vmatpush2.bf16.msra.mxu0 0
        %6067 = vmatprep.subr.bf16.mxu0 0
        %6068 = vmatpush2.bf16.msra.mxu0 0
        %6069 = vmatprep.subr.bf16.mxu0 0
        %6070 = vmatpush2.bf16.msra.mxu0 0
        %6071 = vmatprep.subr.bf16.mxu0 0
        %6072 = vmatpush2.bf16.msra.mxu0 0
        %6073 = vmatprep.subr.bf16.mxu0 0
        %6074 = vmatpush2.bf16.msra.mxu0 0
        %6075 = vmatprep.subr.bf16.mxu0 0
        %6076 = vmatpush2.bf16.msra.mxu0 0
        %6077 = vmatprep.subr.bf16.mxu0 0
        %6078 = vmatpush2.bf16.msra.mxu0 0
        %6079 = vmatprep.subr.bf16.mxu0 0
        %6080 = vmatpush2.bf16.msra.mxu0 0
        %6081 = vmatprep.mubr.bf16.mxu0 0
        %6082 = vmatmul.mubr.bf16.gmra.mxu0 %v1744
        %v6083 = vpop.f32.mrf.mxu0
        %v6084 = vadd.f32 0.0, %v6083
        %v6085 = vpop.f32.mrf.mxu0
        %v6086 = vpop.f32.mrf.mxu0
        %v6087 = vadd.f32 0.0, %v6086
        %v6088 = vpop.f32.mrf.mxu0
        %6089 = vmatprep.mubr.bf16.mxu0 0
        %6090 = vmatmul.mubr.bf16.gmra.mxu0 %v1756
        %v6091 = vpop.f32.mrf.mxu0
        %v6092 = vadd.f32 0.0, %v6091
        %v6093 = vpop.f32.mrf.mxu0
        %v6094 = vpop.f32.mrf.mxu0
        %v6095 = vadd.f32 0.0, %v6094
        %v6096 = vpop.f32.mrf.mxu0
        %6097 = vmatprep.mubr.bf16.mxu0 0
        %6098 = vmatmul.mubr.bf16.gmra.mxu0 %v1768
        %v6099 = vpop.f32.mrf.mxu0
        %v6100 = vadd.f32 0.0, %v6099
        %v6101 = vpop.f32.mrf.mxu0
        %v6102 = vpop.f32.mrf.mxu0
        %v6103 = vadd.f32 0.0, %v6102
        %v6104 = vpop.f32.mrf.mxu0
        %6105 = vmatprep.mubr.bf16.mxu0 0
        %6106 = vmatmul.mubr.bf16.gmra.mxu0 %v1780
        %v6107 = vpop.f32.mrf.mxu0
        %v6108 = vadd.f32 0.0, %v6107
        %v6109 = vpop.f32.mrf.mxu0
        %v6110 = vpop.f32.mrf.mxu0
        %v6111 = vadd.f32 0.0, %v6110
        %v6112 = vpop.f32.mrf.mxu0
        %6113 = vmatprep.mubr.bf16.mxu0 0
        %6114 = vmatmul.mubr.bf16.gmra.mxu0 %v1792
        %v6115 = vpop.f32.mrf.mxu0
        %v6116 = vadd.f32 0.0, %v6115
        %v6117 = vpop.f32.mrf.mxu0
        %v6118 = vpop.f32.mrf.mxu0
        %v6119 = vadd.f32 0.0, %v6118
        %v6120 = vpop.f32.mrf.mxu0
        %6121 = vmatprep.mubr.bf16.mxu0 0
        %6122 = vmatmul.mubr.bf16.gmra.mxu0 %v1804
        %v6123 = vpop.f32.mrf.mxu0
        %v6124 = vadd.f32 0.0, %v6123
        %v6125 = vpop.f32.mrf.mxu0
        %v6126 = vpop.f32.mrf.mxu0
        %v6127 = vadd.f32 0.0, %v6126
        %v6128 = vpop.f32.mrf.mxu0
        %6129 = vmatprep.mubr.bf16.mxu0 0
        %6130 = vmatmul.mubr.bf16.gmra.mxu0 %v1816
        %v6131 = vpop.f32.mrf.mxu0
        %v6132 = vadd.f32 0.0, %v6131
        %v6133 = vpop.f32.mrf.mxu0
        %v6134 = vpop.f32.mrf.mxu0
        %v6135 = vadd.f32 0.0, %v6134
        %v6136 = vpop.f32.mrf.mxu0
        %6137 = vmatprep.mubr.bf16.mxu0 0
        %6138 = vmatmul.mubr.bf16.gmra.mxu0 %v1828
        %v6139 = vpop.f32.mrf.mxu0
        %v6140 = vadd.f32 0.0, %v6139
        %v6141 = vpop.f32.mrf.mxu0
        %v6142 = vpop.f32.mrf.mxu0
        %v6143 = vadd.f32 0.0, %v6142
        %v6144 = vpop.f32.mrf.mxu0
        %6145 = vmatprep.mubr.bf16.mxu0 0
        %6146 = vmatmul.mubr.bf16.gmra.mxu0 %v1840
        %v6147 = vpop.f32.mrf.mxu0
        %v6148 = vadd.f32 0.0, %v6147
        %v6149 = vpop.f32.mrf.mxu0
        %v6150 = vpop.f32.mrf.mxu0
        %v6151 = vadd.f32 0.0, %v6150
        %v6152 = vpop.f32.mrf.mxu0
        %6153 = vmatprep.mubr.bf16.mxu0 0
        %6154 = vmatmul.mubr.bf16.gmra.mxu0 %v1852
        %v6155 = vpop.f32.mrf.mxu0
        %v6156 = vadd.f32 0.0, %v6155
        %v6157 = vpop.f32.mrf.mxu0
        %v6158 = vpop.f32.mrf.mxu0
        %v6159 = vadd.f32 0.0, %v6158
        %v6160 = vpop.f32.mrf.mxu0
        %6161 = vmatprep.mubr.bf16.mxu0 0
        %6162 = vmatmul.mubr.bf16.gmra.mxu0 %v1864
        %v6163 = vpop.f32.mrf.mxu0
        %v6164 = vadd.f32 0.0, %v6163
        %v6165 = vpop.f32.mrf.mxu0
        %v6166 = vpop.f32.mrf.mxu0
        %v6167 = vadd.f32 0.0, %v6166
        %v6168 = vpop.f32.mrf.mxu0
        %6169 = vmatprep.mubr.bf16.mxu0 0
        %6170 = vmatmul.mubr.bf16.gmra.mxu0 %v1876
        %v6171 = vpop.f32.mrf.mxu0
        %v6172 = vadd.f32 0.0, %v6171
        %v6173 = vpop.f32.mrf.mxu0
        %v6174 = vpop.f32.mrf.mxu0
        %v6175 = vadd.f32 0.0, %v6174
        %v6176 = vpop.f32.mrf.mxu0
        %6177 = vmatprep.mubr.bf16.mxu0 0
        %6178 = vmatmul.mubr.bf16.gmra.mxu0 %v1888
        %v6179 = vpop.f32.mrf.mxu0
        %v6180 = vadd.f32 0.0, %v6179
        %v6181 = vpop.f32.mrf.mxu0
        %v6182 = vpop.f32.mrf.mxu0
        %v6183 = vadd.f32 0.0, %v6182
        %v6184 = vpop.f32.mrf.mxu0
        %6185 = vmatprep.mubr.bf16.mxu0 0
        %6186 = vmatmul.mubr.bf16.gmra.mxu0 %v1900
        %v6187 = vpop.f32.mrf.mxu0
        %v6188 = vadd.f32 0.0, %v6187
        %v6189 = vpop.f32.mrf.mxu0
        %v6190 = vpop.f32.mrf.mxu0
        %v6191 = vadd.f32 0.0, %v6190
        %v6192 = vpop.f32.mrf.mxu0
        %6193 = vmatprep.mubr.bf16.mxu0 0
        %6194 = vmatmul.mubr.bf16.gmra.mxu0 %v4066
        %v6195 = vpop.f32.mrf.mxu0
        %v6196 = vadd.f32 0.0, %v6195
        %v6197 = vpop.f32.mrf.mxu0
        %v6198 = vpop.f32.mrf.mxu0
        %v6199 = vadd.f32 0.0, %v6198
        %v6200 = vpop.f32.mrf.mxu0
        %6201 = vmatprep.mubr.bf16.mxu0 0
        %6202 = vmatmul.mubr.bf16.gmra.mxu0 %v5841
        %v6203 = vpop.f32.mrf.mxu0
        %v6204 = vadd.f32 0.0, %v6203
        %v6205 = vpop.f32.mrf.mxu0
        %v6206 = vpop.f32.mrf.mxu0
        %v6207 = vadd.f32 0.0, %v6206
        %v6208 = vpop.f32.mrf.mxu0
        %6209 = vdwg.mxu0
        %v6210 = vadd.f32 %v6017, %v6084
        %v6211 = vadd.f32 %v6018, %v6087
        %v6212 = vadd.f32 %v6019, %v6092
        %v6213 = vadd.f32 %v6020, %v6095
        %v6214 = vadd.f32 %v6021, %v6100
        %v6215 = vadd.f32 %v6022, %v6103
        %v6216 = vadd.f32 %v6023, %v6108
        %v6217 = vadd.f32 %v6024, %v6111
        %v6218 = vadd.f32 %v6025, %v6116
        %v6219 = vadd.f32 %v6026, %v6119
        %v6220 = vadd.f32 %v6027, %v6124
        %v6221 = vadd.f32 %v6028, %v6127
        %v6222 = vadd.f32 %v6029, %v6132
        %v6223 = vadd.f32 %v6030, %v6135
        %v6224 = vadd.f32 %v6031, %v6140
        %v6225 = vadd.f32 %v6032, %v6143
        %v6226 = vadd.f32 %v6033, %v6148
        %v6227 = vadd.f32 %v6034, %v6151
        %v6228 = vadd.f32 %v6035, %v6156
        %v6229 = vadd.f32 %v6036, %v6159
        %v6230 = vadd.f32 %v6037, %v6164
        %v6231 = vadd.f32 %v6038, %v6167
        %v6232 = vadd.f32 %v6039, %v6172
        %v6233 = vadd.f32 %v6040, %v6175
        %v6234 = vadd.f32 %v6041, %v6180
        %v6235 = vadd.f32 %v6042, %v6183
        %v6236 = vadd.f32 %v6043, %v6188
        %v6237 = vadd.f32 %v6044, %v6191
        %v6238 = vadd.f32 %v6045, %v6196
        %v6239 = vadd.f32 %v6046, %v6199
        %v6240 = vadd.f32 %v6047, %v6204
        %v6241 = vadd.f32 %v6048, %v6207
        %6242 = vmatprep.subr.bf16.mxu0 0
        %6243 = vmatpush1.bf16.msra.mxu0 %v824
        %6244 = vmatprep.subr.bf16.mxu0 0
        %6245 = vmatpush1.bf16.msra.mxu0 %v823
        %6246 = vmatprep.subr.bf16.mxu0 0
        %6247 = vmatpush1.bf16.msra.mxu0 %v822
        %6248 = vmatprep.subr.bf16.mxu0 0
        %6249 = vmatpush1.bf16.msra.mxu0 %v821
        %6250 = vmatprep.subr.bf16.mxu0 0
        %6251 = vmatpush1.bf16.msra.mxu0 %v820
        %6252 = vmatprep.subr.bf16.mxu0 0
        %6253 = vmatpush1.bf16.msra.mxu0 %v819
        %6254 = vmatprep.subr.bf16.mxu0 0
        %6255 = vmatpush1.bf16.msra.mxu0 %v818
        %6256 = vmatprep.subr.bf16.mxu0 0
        %6257 = vmatpush1.bf16.msra.mxu0 %v817
        %6258 = vmatprep.subr.bf16.mxu0 0
        %6259 = vmatpush2.bf16.msra.mxu0 0
        %6260 = vmatprep.subr.bf16.mxu0 0
        %6261 = vmatpush2.bf16.msra.mxu0 0
        %6262 = vmatprep.subr.bf16.mxu0 0
        %6263 = vmatpush2.bf16.msra.mxu0 0
        %6264 = vmatprep.subr.bf16.mxu0 0
        %6265 = vmatpush2.bf16.msra.mxu0 0
        %6266 = vmatprep.subr.bf16.mxu0 0
        %6267 = vmatpush2.bf16.msra.mxu0 0
        %6268 = vmatprep.subr.bf16.mxu0 0
        %6269 = vmatpush2.bf16.msra.mxu0 0
        %6270 = vmatprep.subr.bf16.mxu0 0
        %6271 = vmatpush2.bf16.msra.mxu0 0
        %6272 = vmatprep.subr.bf16.mxu0 0
        %6273 = vmatpush2.bf16.msra.mxu0 0
        %6274 = vmatprep.mubr.bf16.mxu0 0
        %6275 = vmatmul.mubr.bf16.gmra.mxu0 %v1952
        %v6276 = vpop.f32.mrf.mxu0
        %v6277 = vadd.f32 0.0, %v6276
        %v6278 = vpop.f32.mrf.mxu0
        %v6279 = vpop.f32.mrf.mxu0
        %v6280 = vadd.f32 0.0, %v6279
        %v6281 = vpop.f32.mrf.mxu0
        %6282 = vmatprep.mubr.bf16.mxu0 0
        %6283 = vmatmul.mubr.bf16.gmra.mxu0 %v1964
        %v6284 = vpop.f32.mrf.mxu0
        %v6285 = vadd.f32 0.0, %v6284
        %v6286 = vpop.f32.mrf.mxu0
        %v6287 = vpop.f32.mrf.mxu0
        %v6288 = vadd.f32 0.0, %v6287
        %v6289 = vpop.f32.mrf.mxu0
        %6290 = vmatprep.mubr.bf16.mxu0 0
        %6291 = vmatmul.mubr.bf16.gmra.mxu0 %v1976
        %v6292 = vpop.f32.mrf.mxu0
        %v6293 = vadd.f32 0.0, %v6292
        %v6294 = vpop.f32.mrf.mxu0
        %v6295 = vpop.f32.mrf.mxu0
        %v6296 = vadd.f32 0.0, %v6295
        %v6297 = vpop.f32.mrf.mxu0
        %6298 = vmatprep.mubr.bf16.mxu0 0
        %6299 = vmatmul.mubr.bf16.gmra.mxu0 %v1988
        %v6300 = vpop.f32.mrf.mxu0
        %v6301 = vadd.f32 0.0, %v6300
        %v6302 = vpop.f32.mrf.mxu0
        %v6303 = vpop.f32.mrf.mxu0
        %v6304 = vadd.f32 0.0, %v6303
        %v6305 = vpop.f32.mrf.mxu0
        %6306 = vmatprep.mubr.bf16.mxu0 0
        %6307 = vmatmul.mubr.bf16.gmra.mxu0 %v2000
        %v6308 = vpop.f32.mrf.mxu0
        %v6309 = vadd.f32 0.0, %v6308
        %v6310 = vpop.f32.mrf.mxu0
        %v6311 = vpop.f32.mrf.mxu0
        %v6312 = vadd.f32 0.0, %v6311
        %v6313 = vpop.f32.mrf.mxu0
        %6314 = vmatprep.mubr.bf16.mxu0 0
        %6315 = vmatmul.mubr.bf16.gmra.mxu0 %v2012
        %v6316 = vpop.f32.mrf.mxu0
        %v6317 = vadd.f32 0.0, %v6316
        %v6318 = vpop.f32.mrf.mxu0
        %v6319 = vpop.f32.mrf.mxu0
        %v6320 = vadd.f32 0.0, %v6319
        %v6321 = vpop.f32.mrf.mxu0
        %6322 = vmatprep.mubr.bf16.mxu0 0
        %6323 = vmatmul.mubr.bf16.gmra.mxu0 %v2024
        %v6324 = vpop.f32.mrf.mxu0
        %v6325 = vadd.f32 0.0, %v6324
        %v6326 = vpop.f32.mrf.mxu0
        %v6327 = vpop.f32.mrf.mxu0
        %v6328 = vadd.f32 0.0, %v6327
        %v6329 = vpop.f32.mrf.mxu0
        %6330 = vmatprep.mubr.bf16.mxu0 0
        %6331 = vmatmul.mubr.bf16.gmra.mxu0 %v2036
        %v6332 = vpop.f32.mrf.mxu0
        %v6333 = vadd.f32 0.0, %v6332
        %v6334 = vpop.f32.mrf.mxu0
        %v6335 = vpop.f32.mrf.mxu0
        %v6336 = vadd.f32 0.0, %v6335
        %v6337 = vpop.f32.mrf.mxu0
        %6338 = vmatprep.mubr.bf16.mxu0 0
        %6339 = vmatmul.mubr.bf16.gmra.mxu0 %v2048
        %v6340 = vpop.f32.mrf.mxu0
        %v6341 = vadd.f32 0.0, %v6340
        %v6342 = vpop.f32.mrf.mxu0
        %v6343 = vpop.f32.mrf.mxu0
        %v6344 = vadd.f32 0.0, %v6343
        %v6345 = vpop.f32.mrf.mxu0
        %6346 = vmatprep.mubr.bf16.mxu0 0
        %6347 = vmatmul.mubr.bf16.gmra.mxu0 %v2060
        %v6348 = vpop.f32.mrf.mxu0
        %v6349 = vadd.f32 0.0, %v6348
        %v6350 = vpop.f32.mrf.mxu0
        %v6351 = vpop.f32.mrf.mxu0
        %v6352 = vadd.f32 0.0, %v6351
        %v6353 = vpop.f32.mrf.mxu0
        %6354 = vmatprep.mubr.bf16.mxu0 0
        %6355 = vmatmul.mubr.bf16.gmra.mxu0 %v2072
        %v6356 = vpop.f32.mrf.mxu0
        %v6357 = vadd.f32 0.0, %v6356
        %v6358 = vpop.f32.mrf.mxu0
        %v6359 = vpop.f32.mrf.mxu0
        %v6360 = vadd.f32 0.0, %v6359
        %v6361 = vpop.f32.mrf.mxu0
        %6362 = vmatprep.mubr.bf16.mxu0 0
        %6363 = vmatmul.mubr.bf16.gmra.mxu0 %v2084
        %v6364 = vpop.f32.mrf.mxu0
        %v6365 = vadd.f32 0.0, %v6364
        %v6366 = vpop.f32.mrf.mxu0
        %v6367 = vpop.f32.mrf.mxu0
        %v6368 = vadd.f32 0.0, %v6367
        %v6369 = vpop.f32.mrf.mxu0
        %6370 = vmatprep.mubr.bf16.mxu0 0
        %6371 = vmatmul.mubr.bf16.gmra.mxu0 %v2096
        %v6372 = vpop.f32.mrf.mxu0
        %v6373 = vadd.f32 0.0, %v6372
        %v6374 = vpop.f32.mrf.mxu0
        %v6375 = vpop.f32.mrf.mxu0
        %v6376 = vadd.f32 0.0, %v6375
        %v6377 = vpop.f32.mrf.mxu0
        %6378 = vmatprep.mubr.bf16.mxu0 0
        %6379 = vmatmul.mubr.bf16.gmra.mxu0 %v2108
        %v6380 = vpop.f32.mrf.mxu0
        %v6381 = vadd.f32 0.0, %v6380
        %v6382 = vpop.f32.mrf.mxu0
        %v6383 = vpop.f32.mrf.mxu0
        %v6384 = vadd.f32 0.0, %v6383
        %v6385 = vpop.f32.mrf.mxu0
        %6386 = vmatprep.mubr.bf16.mxu0 0
        %6387 = vmatmul.mubr.bf16.gmra.mxu0 %v4079
        %v6388 = vpop.f32.mrf.mxu0
        %v6389 = vadd.f32 0.0, %v6388
        %v6390 = vpop.f32.mrf.mxu0
        %v6391 = vpop.f32.mrf.mxu0
        %v6392 = vadd.f32 0.0, %v6391
        %v6393 = vpop.f32.mrf.mxu0
        %6394 = vmatprep.mubr.bf16.mxu0 0
        %6395 = vmatmul.mubr.bf16.gmra.mxu0 %v5854
        %v6396 = vpop.f32.mrf.mxu0
        %v6397 = vadd.f32 0.0, %v6396
        %v6398 = vpop.f32.mrf.mxu0
        %v6399 = vpop.f32.mrf.mxu0
        %v6400 = vadd.f32 0.0, %v6399
        %v6401 = vpop.f32.mrf.mxu0
        %6402 = vdwg.mxu0
        %v6403 = vadd.f32 %v6210, %v6277
        %v6404 = vadd.f32 %v6211, %v6280
        %v6405 = vadd.f32 %v6212, %v6285
        %v6406 = vadd.f32 %v6213, %v6288
        %v6407 = vadd.f32 %v6214, %v6293
        %v6408 = vadd.f32 %v6215, %v6296
        %v6409 = vadd.f32 %v6216, %v6301
        %v6410 = vadd.f32 %v6217, %v6304
        %v6411 = vadd.f32 %v6218, %v6309
        %v6412 = vadd.f32 %v6219, %v6312
        %v6413 = vadd.f32 %v6220, %v6317
        %v6414 = vadd.f32 %v6221, %v6320
        %v6415 = vadd.f32 %v6222, %v6325
        %v6416 = vadd.f32 %v6223, %v6328
        %v6417 = vadd.f32 %v6224, %v6333
        %v6418 = vadd.f32 %v6225, %v6336
        %v6419 = vadd.f32 %v6226, %v6341
        %v6420 = vadd.f32 %v6227, %v6344
        %v6421 = vadd.f32 %v6228, %v6349
        %v6422 = vadd.f32 %v6229, %v6352
        %v6423 = vadd.f32 %v6230, %v6357
        %v6424 = vadd.f32 %v6231, %v6360
        %v6425 = vadd.f32 %v6232, %v6365
        %v6426 = vadd.f32 %v6233, %v6368
        %v6427 = vadd.f32 %v6234, %v6373
        %v6428 = vadd.f32 %v6235, %v6376
        %v6429 = vadd.f32 %v6236, %v6381
        %v6430 = vadd.f32 %v6237, %v6384
        %v6431 = vadd.f32 %v6238, %v6389
        %v6432 = vadd.f32 %v6239, %v6392
        %v6433 = vadd.f32 %v6240, %v6397
        %v6434 = vadd.f32 %v6241, %v6400
        %v6437 = vrot.slane %v471, 1
        %v6438 = vrot.slane %v472, 1
        %v6439 = vsel %vm2736, %v6437, %v6438
        %v6443 = vrot.slane %v615, 1
        %v6444 = vrot.slane %v616, 1
        %v6445 = vsel %vm2736, %v6443, %v6444
        %6447 = vmatprep.subr.bf16.mxu0 0
        %6448 = vmatpush1.bf16.msra.mxu0 %v832
        %6449 = vmatprep.subr.bf16.mxu0 0
        %6450 = vmatpush1.bf16.msra.mxu0 %v831
        %6451 = vmatprep.subr.bf16.mxu0 0
        %6452 = vmatpush1.bf16.msra.mxu0 %v830
        %6453 = vmatprep.subr.bf16.mxu0 0
        %6454 = vmatpush1.bf16.msra.mxu0 %v829
        %6455 = vmatprep.subr.bf16.mxu0 0
        %6456 = vmatpush1.bf16.msra.mxu0 %v828
        %6457 = vmatprep.subr.bf16.mxu0 0
        %6458 = vmatpush1.bf16.msra.mxu0 %v827
        %6459 = vmatprep.subr.bf16.mxu0 0
        %6460 = vmatpush1.bf16.msra.mxu0 %v826
        %6461 = vmatprep.subr.bf16.mxu0 0
        %6462 = vmatpush1.bf16.msra.mxu0 %v825
        %6463 = vmatprep.subr.bf16.mxu0 0
        %6464 = vmatpush2.bf16.msra.mxu0 0
        %6465 = vmatprep.subr.bf16.mxu0 0
        %6466 = vmatpush2.bf16.msra.mxu0 0
        %6467 = vmatprep.subr.bf16.mxu0 0
        %6468 = vmatpush2.bf16.msra.mxu0 0
        %6469 = vmatprep.subr.bf16.mxu0 0
        %6470 = vmatpush2.bf16.msra.mxu0 0
        %6471 = vmatprep.subr.bf16.mxu0 0
        %6472 = vmatpush2.bf16.msra.mxu0 0
        %6473 = vmatprep.subr.bf16.mxu0 0
        %6474 = vmatpush2.bf16.msra.mxu0 0
        %6475 = vmatprep.subr.bf16.mxu0 0
        %6476 = vmatpush2.bf16.msra.mxu0 0
        %6477 = vmatprep.subr.bf16.mxu0 0
        %6478 = vmatpush2.bf16.msra.mxu0 0
        %6479 = vmatprep.mubr.bf16.mxu0 0
        %6480 = vmatmul.mubr.bf16.gmra.mxu0 %v2745
        %v6481 = vpop.f32.mrf.mxu0
        %v6482 = vadd.f32 0.0, %v6481
        %v6483 = vpop.f32.mrf.mxu0
        %v6484 = vpop.f32.mrf.mxu0
        %v6485 = vadd.f32 0.0, %v6484
        %v6486 = vpop.f32.mrf.mxu0
        %6487 = vmatprep.mubr.bf16.mxu0 0
        %6488 = vmatmul.mubr.bf16.gmra.mxu0 %v2748
        %v6489 = vpop.f32.mrf.mxu0
        %v6490 = vadd.f32 0.0, %v6489
        %v6491 = vpop.f32.mrf.mxu0
        %v6492 = vpop.f32.mrf.mxu0
        %v6493 = vadd.f32 0.0, %v6492
        %v6494 = vpop.f32.mrf.mxu0
        %6495 = vmatprep.mubr.bf16.mxu0 0
        %6496 = vmatmul.mubr.bf16.gmra.mxu0 %v2751
        %v6497 = vpop.f32.mrf.mxu0
        %v6498 = vadd.f32 0.0, %v6497
        %v6499 = vpop.f32.mrf.mxu0
        %v6500 = vpop.f32.mrf.mxu0
        %v6501 = vadd.f32 0.0, %v6500
        %v6502 = vpop.f32.mrf.mxu0
        %6503 = vmatprep.mubr.bf16.mxu0 0
        %6504 = vmatmul.mubr.bf16.gmra.mxu0 %v2754
        %v6505 = vpop.f32.mrf.mxu0
        %v6506 = vadd.f32 0.0, %v6505
        %v6507 = vpop.f32.mrf.mxu0
        %v6508 = vpop.f32.mrf.mxu0
        %v6509 = vadd.f32 0.0, %v6508
        %v6510 = vpop.f32.mrf.mxu0
        %6511 = vmatprep.mubr.bf16.mxu0 0
        %6512 = vmatmul.mubr.bf16.gmra.mxu0 %v2757
        %v6513 = vpop.f32.mrf.mxu0
        %v6514 = vadd.f32 0.0, %v6513
        %v6515 = vpop.f32.mrf.mxu0
        %v6516 = vpop.f32.mrf.mxu0
        %v6517 = vadd.f32 0.0, %v6516
        %v6518 = vpop.f32.mrf.mxu0
        %6519 = vmatprep.mubr.bf16.mxu0 0
        %6520 = vmatmul.mubr.bf16.gmra.mxu0 %v2760
        %v6521 = vpop.f32.mrf.mxu0
        %v6522 = vadd.f32 0.0, %v6521
        %v6523 = vpop.f32.mrf.mxu0
        %v6524 = vpop.f32.mrf.mxu0
        %v6525 = vadd.f32 0.0, %v6524
        %v6526 = vpop.f32.mrf.mxu0
        %6527 = vmatprep.mubr.bf16.mxu0 0
        %6528 = vmatmul.mubr.bf16.gmra.mxu0 %v2763
        %v6529 = vpop.f32.mrf.mxu0
        %v6530 = vadd.f32 0.0, %v6529
        %v6531 = vpop.f32.mrf.mxu0
        %v6532 = vpop.f32.mrf.mxu0
        %v6533 = vadd.f32 0.0, %v6532
        %v6534 = vpop.f32.mrf.mxu0
        %6535 = vmatprep.mubr.bf16.mxu0 0
        %6536 = vmatmul.mubr.bf16.gmra.mxu0 %v2766
        %v6537 = vpop.f32.mrf.mxu0
        %v6538 = vadd.f32 0.0, %v6537
        %v6539 = vpop.f32.mrf.mxu0
        %v6540 = vpop.f32.mrf.mxu0
        %v6541 = vadd.f32 0.0, %v6540
        %v6542 = vpop.f32.mrf.mxu0
        %6543 = vmatprep.mubr.bf16.mxu0 0
        %6544 = vmatmul.mubr.bf16.gmra.mxu0 %v2769
        %v6545 = vpop.f32.mrf.mxu0
        %v6546 = vadd.f32 0.0, %v6545
        %v6547 = vpop.f32.mrf.mxu0
        %v6548 = vpop.f32.mrf.mxu0
        %v6549 = vadd.f32 0.0, %v6548
        %v6550 = vpop.f32.mrf.mxu0
        %6551 = vmatprep.mubr.bf16.mxu0 0
        %6552 = vmatmul.mubr.bf16.gmra.mxu0 %v2772
        %v6553 = vpop.f32.mrf.mxu0
        %v6554 = vadd.f32 0.0, %v6553
        %v6555 = vpop.f32.mrf.mxu0
        %v6556 = vpop.f32.mrf.mxu0
        %v6557 = vadd.f32 0.0, %v6556
        %v6558 = vpop.f32.mrf.mxu0
        %6559 = vmatprep.mubr.bf16.mxu0 0
        %6560 = vmatmul.mubr.bf16.gmra.mxu0 %v2775
        %v6561 = vpop.f32.mrf.mxu0
        %v6562 = vadd.f32 0.0, %v6561
        %v6563 = vpop.f32.mrf.mxu0
        %v6564 = vpop.f32.mrf.mxu0
        %v6565 = vadd.f32 0.0, %v6564
        %v6566 = vpop.f32.mrf.mxu0
        %6567 = vmatprep.mubr.bf16.mxu0 0
        %6568 = vmatmul.mubr.bf16.gmra.mxu0 %v2778
        %v6569 = vpop.f32.mrf.mxu0
        %v6570 = vadd.f32 0.0, %v6569
        %v6571 = vpop.f32.mrf.mxu0
        %v6572 = vpop.f32.mrf.mxu0
        %v6573 = vadd.f32 0.0, %v6572
        %v6574 = vpop.f32.mrf.mxu0
        %6575 = vmatprep.mubr.bf16.mxu0 0
        %6576 = vmatmul.mubr.bf16.gmra.mxu0 %v2781
        %v6577 = vpop.f32.mrf.mxu0
        %v6578 = vadd.f32 0.0, %v6577
        %v6579 = vpop.f32.mrf.mxu0
        %v6580 = vpop.f32.mrf.mxu0
        %v6581 = vadd.f32 0.0, %v6580
        %v6582 = vpop.f32.mrf.mxu0
        %6583 = vmatprep.mubr.bf16.mxu0 0
        %6584 = vmatmul.mubr.bf16.gmra.mxu0 %v2784
        %v6585 = vpop.f32.mrf.mxu0
        %v6586 = vadd.f32 0.0, %v6585
        %v6587 = vpop.f32.mrf.mxu0
        %v6588 = vpop.f32.mrf.mxu0
        %v6589 = vadd.f32 0.0, %v6588
        %v6590 = vpop.f32.mrf.mxu0
        %6591 = vmatprep.mubr.bf16.mxu0 0
        %6592 = vmatmul.mubr.bf16.gmra.mxu0 %v4664
        %v6593 = vpop.f32.mrf.mxu0
        %v6594 = vadd.f32 0.0, %v6593
        %v6595 = vpop.f32.mrf.mxu0
        %v6596 = vpop.f32.mrf.mxu0
        %v6597 = vadd.f32 0.0, %v6596
        %v6598 = vpop.f32.mrf.mxu0
        %6599 = vmatprep.mubr.bf16.mxu0 0
        %6600 = vmatmul.mubr.bf16.gmra.mxu0 %v6439
        %v6601 = vpop.f32.mrf.mxu0
        %v6602 = vadd.f32 0.0, %v6601
        %v6603 = vpop.f32.mrf.mxu0
        %v6604 = vpop.f32.mrf.mxu0
        %v6605 = vadd.f32 0.0, %v6604
        %v6606 = vpop.f32.mrf.mxu0
        %6607 = vdwg.mxu0
        %v6608 = vadd.f32 %v6403, %v6482
        %v6609 = vadd.f32 %v6404, %v6485
        %v6610 = vadd.f32 %v6405, %v6490
        %v6611 = vadd.f32 %v6406, %v6493
        %v6612 = vadd.f32 %v6407, %v6498
        %v6613 = vadd.f32 %v6408, %v6501
        %v6614 = vadd.f32 %v6409, %v6506
        %v6615 = vadd.f32 %v6410, %v6509
        %v6616 = vadd.f32 %v6411, %v6514
        %v6617 = vadd.f32 %v6412, %v6517
        %v6618 = vadd.f32 %v6413, %v6522
        %v6619 = vadd.f32 %v6414, %v6525
        %v6620 = vadd.f32 %v6415, %v6530
        %v6621 = vadd.f32 %v6416, %v6533
        %v6622 = vadd.f32 %v6417, %v6538
        %v6623 = vadd.f32 %v6418, %v6541
        %v6624 = vadd.f32 %v6419, %v6546
        %v6625 = vadd.f32 %v6420, %v6549
        %v6626 = vadd.f32 %v6421, %v6554
        %v6627 = vadd.f32 %v6422, %v6557
        %v6628 = vadd.f32 %v6423, %v6562
        %v6629 = vadd.f32 %v6424, %v6565
        %v6630 = vadd.f32 %v6425, %v6570
        %v6631 = vadd.f32 %v6426, %v6573
        %v6632 = vadd.f32 %v6427, %v6578
        %v6633 = vadd.f32 %v6428, %v6581
        %v6634 = vadd.f32 %v6429, %v6586
        %v6635 = vadd.f32 %v6430, %v6589
        %v6636 = vadd.f32 %v6431, %v6594
        %v6637 = vadd.f32 %v6432, %v6597
        %v6638 = vadd.f32 %v6433, %v6602
        %v6639 = vadd.f32 %v6434, %v6605
        %6640 = vmatprep.subr.bf16.mxu0 0
        %6641 = vmatpush1.bf16.msra.mxu0 %v1192
        %6642 = vmatprep.subr.bf16.mxu0 0
        %6643 = vmatpush1.bf16.msra.mxu0 %v1191
        %6644 = vmatprep.subr.bf16.mxu0 0
        %6645 = vmatpush1.bf16.msra.mxu0 %v1190
        %6646 = vmatprep.subr.bf16.mxu0 0
        %6647 = vmatpush1.bf16.msra.mxu0 %v1189
        %6648 = vmatprep.subr.bf16.mxu0 0
        %6649 = vmatpush1.bf16.msra.mxu0 %v1188
        %6650 = vmatprep.subr.bf16.mxu0 0
        %6651 = vmatpush1.bf16.msra.mxu0 %v1187
        %6652 = vmatprep.subr.bf16.mxu0 0
        %6653 = vmatpush1.bf16.msra.mxu0 %v1186
        %6654 = vmatprep.subr.bf16.mxu0 0
        %6655 = vmatpush1.bf16.msra.mxu0 %v1185
        %6656 = vmatprep.subr.bf16.mxu0 0
        %6657 = vmatpush2.bf16.msra.mxu0 0
        %6658 = vmatprep.subr.bf16.mxu0 0
        %6659 = vmatpush2.bf16.msra.mxu0 0
        %6660 = vmatprep.subr.bf16.mxu0 0
        %6661 = vmatpush2.bf16.msra.mxu0 0
        %6662 = vmatprep.subr.bf16.mxu0 0
        %6663 = vmatpush2.bf16.msra.mxu0 0
        %6664 = vmatprep.subr.bf16.mxu0 0
        %6665 = vmatpush2.bf16.msra.mxu0 0
        %6666 = vmatprep.subr.bf16.mxu0 0
        %6667 = vmatpush2.bf16.msra.mxu0 0
        %6668 = vmatprep.subr.bf16.mxu0 0
        %6669 = vmatpush2.bf16.msra.mxu0 0
        %6670 = vmatprep.subr.bf16.mxu0 0
        %6671 = vmatpush2.bf16.msra.mxu0 0
        %6672 = vmatprep.mubr.bf16.mxu0 0
        %6673 = vmatmul.mubr.bf16.gmra.mxu0 %v2745
        %v6674 = vpop.f32.mrf.mxu0
        %v6675 = vadd.f32 0.0, %v6674
        %v6676 = vpop.f32.mrf.mxu0
        %v6677 = vpop.f32.mrf.mxu0
        %v6678 = vadd.f32 0.0, %v6677
        %v6679 = vpop.f32.mrf.mxu0
        %6680 = vmatprep.mubr.bf16.mxu0 0
        %6681 = vmatmul.mubr.bf16.gmra.mxu0 %v2748
        %v6682 = vpop.f32.mrf.mxu0
        %v6683 = vadd.f32 0.0, %v6682
        %v6684 = vpop.f32.mrf.mxu0
        %v6685 = vpop.f32.mrf.mxu0
        %v6686 = vadd.f32 0.0, %v6685
        %v6687 = vpop.f32.mrf.mxu0
        %6688 = vmatprep.mubr.bf16.mxu0 0
        %6689 = vmatmul.mubr.bf16.gmra.mxu0 %v2751
        %v6690 = vpop.f32.mrf.mxu0
        %v6691 = vadd.f32 0.0, %v6690
        %v6692 = vpop.f32.mrf.mxu0
        %v6693 = vpop.f32.mrf.mxu0
        %v6694 = vadd.f32 0.0, %v6693
        %v6695 = vpop.f32.mrf.mxu0
        %6696 = vmatprep.mubr.bf16.mxu0 0
        %6697 = vmatmul.mubr.bf16.gmra.mxu0 %v2754
        %v6698 = vpop.f32.mrf.mxu0
        %v6699 = vadd.f32 0.0, %v6698
        %v6700 = vpop.f32.mrf.mxu0
        %v6701 = vpop.f32.mrf.mxu0
        %v6702 = vadd.f32 0.0, %v6701
        %v6703 = vpop.f32.mrf.mxu0
        %6704 = vmatprep.mubr.bf16.mxu0 0
        %6705 = vmatmul.mubr.bf16.gmra.mxu0 %v2757
        %v6706 = vpop.f32.mrf.mxu0
        %v6707 = vadd.f32 0.0, %v6706
        %v6708 = vpop.f32.mrf.mxu0
        %v6709 = vpop.f32.mrf.mxu0
        %v6710 = vadd.f32 0.0, %v6709
        %v6711 = vpop.f32.mrf.mxu0
        %6712 = vmatprep.mubr.bf16.mxu0 0
        %6713 = vmatmul.mubr.bf16.gmra.mxu0 %v2760
        %v6714 = vpop.f32.mrf.mxu0
        %v6715 = vadd.f32 0.0, %v6714
        %v6716 = vpop.f32.mrf.mxu0
        %v6717 = vpop.f32.mrf.mxu0
        %v6718 = vadd.f32 0.0, %v6717
        %v6719 = vpop.f32.mrf.mxu0
        %6720 = vmatprep.mubr.bf16.mxu0 0
        %6721 = vmatmul.mubr.bf16.gmra.mxu0 %v2763
        %v6722 = vpop.f32.mrf.mxu0
        %v6723 = vadd.f32 0.0, %v6722
        %v6724 = vpop.f32.mrf.mxu0
        %v6725 = vpop.f32.mrf.mxu0
        %v6726 = vadd.f32 0.0, %v6725
        %v6727 = vpop.f32.mrf.mxu0
        %6728 = vmatprep.mubr.bf16.mxu0 0
        %6729 = vmatmul.mubr.bf16.gmra.mxu0 %v2766
        %v6730 = vpop.f32.mrf.mxu0
        %v6731 = vadd.f32 0.0, %v6730
        %v6732 = vpop.f32.mrf.mxu0
        %v6733 = vpop.f32.mrf.mxu0
        %v6734 = vadd.f32 0.0, %v6733
        %v6735 = vpop.f32.mrf.mxu0
        %6736 = vmatprep.mubr.bf16.mxu0 0
        %6737 = vmatmul.mubr.bf16.gmra.mxu0 %v2769
        %v6738 = vpop.f32.mrf.mxu0
        %v6739 = vadd.f32 0.0, %v6738
        %v6740 = vpop.f32.mrf.mxu0
        %v6741 = vpop.f32.mrf.mxu0
        %v6742 = vadd.f32 0.0, %v6741
        %v6743 = vpop.f32.mrf.mxu0
        %6744 = vmatprep.mubr.bf16.mxu0 0
        %6745 = vmatmul.mubr.bf16.gmra.mxu0 %v2772
        %v6746 = vpop.f32.mrf.mxu0
        %v6747 = vadd.f32 0.0, %v6746
        %v6748 = vpop.f32.mrf.mxu0
        %v6749 = vpop.f32.mrf.mxu0
        %v6750 = vadd.f32 0.0, %v6749
        %v6751 = vpop.f32.mrf.mxu0
        %6752 = vmatprep.mubr.bf16.mxu0 0
        %6753 = vmatmul.mubr.bf16.gmra.mxu0 %v2775
        %v6754 = vpop.f32.mrf.mxu0
        %v6755 = vadd.f32 0.0, %v6754
        %v6756 = vpop.f32.mrf.mxu0
        %v6757 = vpop.f32.mrf.mxu0
        %v6758 = vadd.f32 0.0, %v6757
        %v6759 = vpop.f32.mrf.mxu0
        %6760 = vmatprep.mubr.bf16.mxu0 0
        %6761 = vmatmul.mubr.bf16.gmra.mxu0 %v2778
        %v6762 = vpop.f32.mrf.mxu0
        %v6763 = vadd.f32 0.0, %v6762
        %v6764 = vpop.f32.mrf.mxu0
        %v6765 = vpop.f32.mrf.mxu0
        %v6766 = vadd.f32 0.0, %v6765
        %v6767 = vpop.f32.mrf.mxu0
        %6768 = vmatprep.mubr.bf16.mxu0 0
        %6769 = vmatmul.mubr.bf16.gmra.mxu0 %v2781
        %v6770 = vpop.f32.mrf.mxu0
        %v6771 = vadd.f32 0.0, %v6770
        %v6772 = vpop.f32.mrf.mxu0
        %v6773 = vpop.f32.mrf.mxu0
        %v6774 = vadd.f32 0.0, %v6773
        %v6775 = vpop.f32.mrf.mxu0
        %6776 = vmatprep.mubr.bf16.mxu0 0
        %6777 = vmatmul.mubr.bf16.gmra.mxu0 %v2784
        %v6778 = vpop.f32.mrf.mxu0
        %v6779 = vadd.f32 0.0, %v6778
        %v6780 = vpop.f32.mrf.mxu0
        %v6781 = vpop.f32.mrf.mxu0
        %v6782 = vadd.f32 0.0, %v6781
        %v6783 = vpop.f32.mrf.mxu0
        %6784 = vmatprep.mubr.bf16.mxu0 0
        %6785 = vmatmul.mubr.bf16.gmra.mxu0 %v4664
        %v6786 = vpop.f32.mrf.mxu0
        %v6787 = vadd.f32 0.0, %v6786
        %v6788 = vpop.f32.mrf.mxu0
        %v6789 = vpop.f32.mrf.mxu0
        %v6790 = vadd.f32 0.0, %v6789
        %v6791 = vpop.f32.mrf.mxu0
        %6792 = vmatprep.mubr.bf16.mxu0 0
        %6793 = vmatmul.mubr.bf16.gmra.mxu0 %v6439
        %v6794 = vpop.f32.mrf.mxu0
        %v6795 = vadd.f32 0.0, %v6794
        %v6796 = vpop.f32.mrf.mxu0
        %v6797 = vpop.f32.mrf.mxu0
        %v6798 = vadd.f32 0.0, %v6797
        %v6799 = vpop.f32.mrf.mxu0
        %6800 = vdwg.mxu0
        %v6801 = vadd.f32 %v6608, %v6675
        %v6802 = vadd.f32 %v6609, %v6678
        %v6803 = vadd.f32 %v6610, %v6683
        %v6804 = vadd.f32 %v6611, %v6686
        %v6805 = vadd.f32 %v6612, %v6691
        %v6806 = vadd.f32 %v6613, %v6694
        %v6807 = vadd.f32 %v6614, %v6699
        %v6808 = vadd.f32 %v6615, %v6702
        %v6809 = vadd.f32 %v6616, %v6707
        %v6810 = vadd.f32 %v6617, %v6710
        %v6811 = vadd.f32 %v6618, %v6715
        %v6812 = vadd.f32 %v6619, %v6718
        %v6813 = vadd.f32 %v6620, %v6723
        %v6814 = vadd.f32 %v6621, %v6726
        %v6815 = vadd.f32 %v6622, %v6731
        %v6816 = vadd.f32 %v6623, %v6734
        %v6817 = vadd.f32 %v6624, %v6739
        %v6818 = vadd.f32 %v6625, %v6742
        %v6819 = vadd.f32 %v6626, %v6747
        %v6820 = vadd.f32 %v6627, %v6750
        %v6821 = vadd.f32 %v6628, %v6755
        %v6822 = vadd.f32 %v6629, %v6758
        %v6823 = vadd.f32 %v6630, %v6763
        %v6824 = vadd.f32 %v6631, %v6766
        %v6825 = vadd.f32 %v6632, %v6771
        %v6826 = vadd.f32 %v6633, %v6774
        %v6827 = vadd.f32 %v6634, %v6779
        %v6828 = vadd.f32 %v6635, %v6782
        %v6829 = vadd.f32 %v6636, %v6787
        %v6830 = vadd.f32 %v6637, %v6790
        %v6831 = vadd.f32 %v6638, %v6795
        %v6832 = vadd.f32 %v6639, %v6798
        %6833 = vmatprep.subr.bf16.mxu0 0
        %6834 = vmatpush1.bf16.msra.mxu0 %v832
        %6835 = vmatprep.subr.bf16.mxu0 0
        %6836 = vmatpush1.bf16.msra.mxu0 %v831
        %6837 = vmatprep.subr.bf16.mxu0 0
        %6838 = vmatpush1.bf16.msra.mxu0 %v830
        %6839 = vmatprep.subr.bf16.mxu0 0
        %6840 = vmatpush1.bf16.msra.mxu0 %v829
        %6841 = vmatprep.subr.bf16.mxu0 0
        %6842 = vmatpush1.bf16.msra.mxu0 %v828
        %6843 = vmatprep.subr.bf16.mxu0 0
        %6844 = vmatpush1.bf16.msra.mxu0 %v827
        %6845 = vmatprep.subr.bf16.mxu0 0
        %6846 = vmatpush1.bf16.msra.mxu0 %v826
        %6847 = vmatprep.subr.bf16.mxu0 0
        %6848 = vmatpush1.bf16.msra.mxu0 %v825
        %6849 = vmatprep.subr.bf16.mxu0 0
        %6850 = vmatpush2.bf16.msra.mxu0 0
        %6851 = vmatprep.subr.bf16.mxu0 0
        %6852 = vmatpush2.bf16.msra.mxu0 0
        %6853 = vmatprep.subr.bf16.mxu0 0
        %6854 = vmatpush2.bf16.msra.mxu0 0
        %6855 = vmatprep.subr.bf16.mxu0 0
        %6856 = vmatpush2.bf16.msra.mxu0 0
        %6857 = vmatprep.subr.bf16.mxu0 0
        %6858 = vmatpush2.bf16.msra.mxu0 0
        %6859 = vmatprep.subr.bf16.mxu0 0
        %6860 = vmatpush2.bf16.msra.mxu0 0
        %6861 = vmatprep.subr.bf16.mxu0 0
        %6862 = vmatpush2.bf16.msra.mxu0 0
        %6863 = vmatprep.subr.bf16.mxu0 0
        %6864 = vmatpush2.bf16.msra.mxu0 0
        %6865 = vmatprep.mubr.bf16.mxu0 0
        %6866 = vmatmul.mubr.bf16.gmra.mxu0 %v2841
        %v6867 = vpop.f32.mrf.mxu0
        %v6868 = vadd.f32 0.0, %v6867
        %v6869 = vpop.f32.mrf.mxu0
        %v6870 = vpop.f32.mrf.mxu0
        %v6871 = vadd.f32 0.0, %v6870
        %v6872 = vpop.f32.mrf.mxu0
        %6873 = vmatprep.mubr.bf16.mxu0 0
        %6874 = vmatmul.mubr.bf16.gmra.mxu0 %v2844
        %v6875 = vpop.f32.mrf.mxu0
        %v6876 = vadd.f32 0.0, %v6875
        %v6877 = vpop.f32.mrf.mxu0
        %v6878 = vpop.f32.mrf.mxu0
        %v6879 = vadd.f32 0.0, %v6878
        %v6880 = vpop.f32.mrf.mxu0
        %6881 = vmatprep.mubr.bf16.mxu0 0
        %6882 = vmatmul.mubr.bf16.gmra.mxu0 %v2847
        %v6883 = vpop.f32.mrf.mxu0
        %v6884 = vadd.f32 0.0, %v6883
        %v6885 = vpop.f32.mrf.mxu0
        %v6886 = vpop.f32.mrf.mxu0
        %v6887 = vadd.f32 0.0, %v6886
        %v6888 = vpop.f32.mrf.mxu0
        %6889 = vmatprep.mubr.bf16.mxu0 0
        %6890 = vmatmul.mubr.bf16.gmra.mxu0 %v2850
        %v6891 = vpop.f32.mrf.mxu0
        %v6892 = vadd.f32 0.0, %v6891
        %v6893 = vpop.f32.mrf.mxu0
        %v6894 = vpop.f32.mrf.mxu0
        %v6895 = vadd.f32 0.0, %v6894
        %v6896 = vpop.f32.mrf.mxu0
        %6897 = vmatprep.mubr.bf16.mxu0 0
        %6898 = vmatmul.mubr.bf16.gmra.mxu0 %v2853
        %v6899 = vpop.f32.mrf.mxu0
        %v6900 = vadd.f32 0.0, %v6899
        %v6901 = vpop.f32.mrf.mxu0
        %v6902 = vpop.f32.mrf.mxu0
        %v6903 = vadd.f32 0.0, %v6902
        %v6904 = vpop.f32.mrf.mxu0
        %6905 = vmatprep.mubr.bf16.mxu0 0
        %6906 = vmatmul.mubr.bf16.gmra.mxu0 %v2856
        %v6907 = vpop.f32.mrf.mxu0
        %v6908 = vadd.f32 0.0, %v6907
        %v6909 = vpop.f32.mrf.mxu0
        %v6910 = vpop.f32.mrf.mxu0
        %v6911 = vadd.f32 0.0, %v6910
        %v6912 = vpop.f32.mrf.mxu0
        %6913 = vmatprep.mubr.bf16.mxu0 0
        %6914 = vmatmul.mubr.bf16.gmra.mxu0 %v2859
        %v6915 = vpop.f32.mrf.mxu0
        %v6916 = vadd.f32 0.0, %v6915
        %v6917 = vpop.f32.mrf.mxu0
        %v6918 = vpop.f32.mrf.mxu0
        %v6919 = vadd.f32 0.0, %v6918
        %v6920 = vpop.f32.mrf.mxu0
        %6921 = vmatprep.mubr.bf16.mxu0 0
        %6922 = vmatmul.mubr.bf16.gmra.mxu0 %v2862
        %v6923 = vpop.f32.mrf.mxu0
        %v6924 = vadd.f32 0.0, %v6923
        %v6925 = vpop.f32.mrf.mxu0
        %v6926 = vpop.f32.mrf.mxu0
        %v6927 = vadd.f32 0.0, %v6926
        %v6928 = vpop.f32.mrf.mxu0
        %6929 = vmatprep.mubr.bf16.mxu0 0
        %6930 = vmatmul.mubr.bf16.gmra.mxu0 %v2865
        %v6931 = vpop.f32.mrf.mxu0
        %v6932 = vadd.f32 0.0, %v6931
        %v6933 = vpop.f32.mrf.mxu0
        %v6934 = vpop.f32.mrf.mxu0
        %v6935 = vadd.f32 0.0, %v6934
        %v6936 = vpop.f32.mrf.mxu0
        %6937 = vmatprep.mubr.bf16.mxu0 0
        %6938 = vmatmul.mubr.bf16.gmra.mxu0 %v2868
        %v6939 = vpop.f32.mrf.mxu0
        %v6940 = vadd.f32 0.0, %v6939
        %v6941 = vpop.f32.mrf.mxu0
        %v6942 = vpop.f32.mrf.mxu0
        %v6943 = vadd.f32 0.0, %v6942
        %v6944 = vpop.f32.mrf.mxu0
        %6945 = vmatprep.mubr.bf16.mxu0 0
        %6946 = vmatmul.mubr.bf16.gmra.mxu0 %v2871
        %v6947 = vpop.f32.mrf.mxu0
        %v6948 = vadd.f32 0.0, %v6947
        %v6949 = vpop.f32.mrf.mxu0
        %v6950 = vpop.f32.mrf.mxu0
        %v6951 = vadd.f32 0.0, %v6950
        %v6952 = vpop.f32.mrf.mxu0
        %6953 = vmatprep.mubr.bf16.mxu0 0
        %6954 = vmatmul.mubr.bf16.gmra.mxu0 %v2874
        %v6955 = vpop.f32.mrf.mxu0
        %v6956 = vadd.f32 0.0, %v6955
        %v6957 = vpop.f32.mrf.mxu0
        %v6958 = vpop.f32.mrf.mxu0
        %v6959 = vadd.f32 0.0, %v6958
        %v6960 = vpop.f32.mrf.mxu0
        %6961 = vmatprep.mubr.bf16.mxu0 0
        %6962 = vmatmul.mubr.bf16.gmra.mxu0 %v2877
        %v6963 = vpop.f32.mrf.mxu0
        %v6964 = vadd.f32 0.0, %v6963
        %v6965 = vpop.f32.mrf.mxu0
        %v6966 = vpop.f32.mrf.mxu0
        %v6967 = vadd.f32 0.0, %v6966
        %v6968 = vpop.f32.mrf.mxu0
        %6969 = vmatprep.mubr.bf16.mxu0 0
        %6970 = vmatmul.mubr.bf16.gmra.mxu0 %v2880
        %v6971 = vpop.f32.mrf.mxu0
        %v6972 = vadd.f32 0.0, %v6971
        %v6973 = vpop.f32.mrf.mxu0
        %v6974 = vpop.f32.mrf.mxu0
        %v6975 = vadd.f32 0.0, %v6974
        %v6976 = vpop.f32.mrf.mxu0
        %6977 = vmatprep.mubr.bf16.mxu0 0
        %6978 = vmatmul.mubr.bf16.gmra.mxu0 %v4670
        %v6979 = vpop.f32.mrf.mxu0
        %v6980 = vadd.f32 0.0, %v6979
        %v6981 = vpop.f32.mrf.mxu0
        %v6982 = vpop.f32.mrf.mxu0
        %v6983 = vadd.f32 0.0, %v6982
        %v6984 = vpop.f32.mrf.mxu0
        %6985 = vmatprep.mubr.bf16.mxu0 0
        %6986 = vmatmul.mubr.bf16.gmra.mxu0 %v6445
        %v6987 = vpop.f32.mrf.mxu0
        %v6988 = vadd.f32 0.0, %v6987
        %v6989 = vpop.f32.mrf.mxu0
        %v6990 = vpop.f32.mrf.mxu0
        %v6991 = vadd.f32 0.0, %v6990
        %v6992 = vpop.f32.mrf.mxu0
        %6993 = vdwg.mxu0
        %v6994 = vadd.f32 %v6801, %v6868
        %v6995 = vadd.f32 %v6802, %v6871
        %v6996 = vadd.f32 %v6803, %v6876
        %v6997 = vadd.f32 %v6804, %v6879
        %v6998 = vadd.f32 %v6805, %v6884
        %v6999 = vadd.f32 %v6806, %v6887
        %v7000 = vadd.f32 %v6807, %v6892
        %v7001 = vadd.f32 %v6808, %v6895
        %v7002 = vadd.f32 %v6809, %v6900
        %v7003 = vadd.f32 %v6810, %v6903
        %v7004 = vadd.f32 %v6811, %v6908
        %v7005 = vadd.f32 %v6812, %v6911
        %v7006 = vadd.f32 %v6813, %v6916
        %v7007 = vadd.f32 %v6814, %v6919
        %v7008 = vadd.f32 %v6815, %v6924
        %v7009 = vadd.f32 %v6816, %v6927
        %v7010 = vadd.f32 %v6817, %v6932
        %v7011 = vadd.f32 %v6818, %v6935
        %v7012 = vadd.f32 %v6819, %v6940
        %v7013 = vadd.f32 %v6820, %v6943
        %v7014 = vadd.f32 %v6821, %v6948
        %v7015 = vadd.f32 %v6822, %v6951
        %v7016 = vadd.f32 %v6823, %v6956
        %v7017 = vadd.f32 %v6824, %v6959
        %v7018 = vadd.f32 %v6825, %v6964
        %v7019 = vadd.f32 %v6826, %v6967
        %v7020 = vadd.f32 %v6827, %v6972
        %v7021 = vadd.f32 %v6828, %v6975
        %v7022 = vadd.f32 %v6829, %v6980
        %v7023 = vadd.f32 %v6830, %v6983
        %v7024 = vadd.f32 %v6831, %v6988
        %v7025 = vadd.f32 %v6832, %v6991
        %v7026 = vadd.f32 %v6994, %v6995
        %v7027 = vadd.f32 %v7026, %v6996
        %v7028 = vadd.f32 %v7027, %v6997
        %v7029 = vadd.f32 %v7028, %v6998
        %v7030 = vadd.f32 %v7029, %v6999
        %v7031 = vadd.f32 %v7030, %v7000
        %v7032 = vadd.f32 %v7031, %v7001
        %v7033 = vadd.f32 %v7032, %v7002
        %v7034 = vadd.f32 %v7033, %v7003
        %v7035 = vadd.f32 %v7034, %v7004
        %v7036 = vadd.f32 %v7035, %v7005
        %v7037 = vadd.f32 %v7036, %v7006
        %v7038 = vadd.f32 %v7037, %v7007
        %v7039 = vadd.f32 %v7038, %v7008
        %v7040 = vadd.f32 %v7039, %v7009
        %v7041 = vadd.f32 %v7040, %v7010
        %v7042 = vadd.f32 %v7041, %v7011
        %v7043 = vadd.f32 %v7042, %v7012
        %v7044 = vadd.f32 %v7043, %v7013
        %v7045 = vadd.f32 %v7044, %v7014
        %v7046 = vadd.f32 %v7045, %v7015
        %v7047 = vadd.f32 %v7046, %v7016
        %v7048 = vadd.f32 %v7047, %v7017
        %v7049 = vadd.f32 %v7048, %v7018
        %v7050 = vadd.f32 %v7049, %v7019
        %v7051 = vadd.f32 %v7050, %v7020
        %v7052 = vadd.f32 %v7051, %v7021
        %v7053 = vadd.f32 %v7052, %v7022
        %v7054 = vadd.f32 %v7053, %v7023
        %v7055 = vadd.f32 %v7054, %v7024
        %v7056 = vadd.f32 %v7055, %v7025
        %v7057 = vrot.slane %v7056, 4
        %v7058 = vadd.f32 %v7056, %v7057
        %v7059 = vrot.slane %v7058, 2
        %v7060 = vadd.f32 %v7058, %v7059
        %v7061 = vrot.slane %v7060, 1
        %v7062 = vadd.f32 %v7060, %v7061
        %v7063 = vrcp.pop 256.0
        %v7064 = vmul.f32 %v7062, %v7063
        %v7065 = vsub.f32 %v6994, %v7064
        %v7066 = vsub.f32 %v6995, %v7064
        %v7067 = vsub.f32 %v6996, %v7064
        %v7068 = vsub.f32 %v6997, %v7064
        %v7069 = vsub.f32 %v6998, %v7064
        %v7070 = vsub.f32 %v6999, %v7064
        %v7071 = vsub.f32 %v7000, %v7064
        %v7072 = vsub.f32 %v7001, %v7064
        %v7073 = vsub.f32 %v7002, %v7064
        %v7074 = vsub.f32 %v7003, %v7064
        %v7075 = vsub.f32 %v7004, %v7064
        %v7076 = vsub.f32 %v7005, %v7064
        %v7077 = vsub.f32 %v7006, %v7064
        %v7078 = vsub.f32 %v7007, %v7064
        %v7079 = vsub.f32 %v7008, %v7064
        %v7080 = vsub.f32 %v7009, %v7064
        %v7081 = vsub.f32 %v7010, %v7064
        %v7082 = vsub.f32 %v7011, %v7064
        %v7083 = vsub.f32 %v7012, %v7064
        %v7084 = vsub.f32 %v7013, %v7064
        %v7085 = vsub.f32 %v7014, %v7064
        %v7086 = vsub.f32 %v7015, %v7064
        %v7087 = vsub.f32 %v7016, %v7064
        %v7088 = vsub.f32 %v7017, %v7064
        %v7089 = vsub.f32 %v7018, %v7064
        %v7090 = vsub.f32 %v7019, %v7064
        %v7091 = vsub.f32 %v7020, %v7064
        %v7092 = vsub.f32 %v7021, %v7064
        %v7093 = vsub.f32 %v7022, %v7064
        %v7094 = vsub.f32 %v7023, %v7064
        %v7095 = vsub.f32 %v7024, %v7064
        %v7096 = vsub.f32 %v7025, %v7064
        %v7097 = vmul.f32 %v7065, %v7065
        %v7098 = vmul.f32 %v7066, %v7066
        %v7099 = vmul.f32 %v7067, %v7067
        %v7100 = vmul.f32 %v7068, %v7068
        %v7101 = vmul.f32 %v7069, %v7069
        %v7102 = vmul.f32 %v7070, %v7070
        %v7103 = vmul.f32 %v7071, %v7071
        %v7104 = vmul.f32 %v7072, %v7072
        %v7105 = vmul.f32 %v7073, %v7073
        %v7106 = vmul.f32 %v7074, %v7074
        %v7107 = vmul.f32 %v7075, %v7075
        %v7108 = vmul.f32 %v7076, %v7076
        %v7109 = vmul.f32 %v7077, %v7077
        %v7110 = vmul.f32 %v7078, %v7078
        %v7111 = vmul.f32 %v7079, %v7079
        %v7112 = vmul.f32 %v7080, %v7080
        %v7113 = vmul.f32 %v7081, %v7081
        %v7114 = vmul.f32 %v7082, %v7082
        %v7115 = vmul.f32 %v7083, %v7083
        %v7116 = vmul.f32 %v7084, %v7084
        %v7117 = vmul.f32 %v7085, %v7085
        %v7118 = vmul.f32 %v7086, %v7086
        %v7119 = vmul.f32 %v7087, %v7087
        %v7120 = vmul.f32 %v7088, %v7088
        %v7121 = vmul.f32 %v7089, %v7089
        %v7122 = vmul.f32 %v7090, %v7090
        %v7123 = vmul.f32 %v7091, %v7091
        %v7124 = vmul.f32 %v7092, %v7092
        %v7125 = vmul.f32 %v7093, %v7093
        %v7126 = vmul.f32 %v7094, %v7094
        %v7127 = vmul.f32 %v7095, %v7095
        %v7128 = vmul.f32 %v7096, %v7096
        %v7129 = vadd.f32 %v7097, %v7098
        %v7130 = vadd.f32 %v7129, %v7099
        %v7131 = vadd.f32 %v7130, %v7100
        %v7132 = vadd.f32 %v7131, %v7101
        %v7133 = vadd.f32 %v7132, %v7102
        %v7134 = vadd.f32 %v7133, %v7103
        %v7135 = vadd.f32 %v7134, %v7104
        %v7136 = vadd.f32 %v7135, %v7105
        %v7137 = vadd.f32 %v7136, %v7106
        %v7138 = vadd.f32 %v7137, %v7107
        %v7139 = vadd.f32 %v7138, %v7108
        %v7140 = vadd.f32 %v7139, %v7109
        %v7141 = vadd.f32 %v7140, %v7110
        %v7142 = vadd.f32 %v7141, %v7111
        %v7143 = vadd.f32 %v7142, %v7112
        %v7144 = vadd.f32 %v7143, %v7113
        %v7145 = vadd.f32 %v7144, %v7114
        %v7146 = vadd.f32 %v7145, %v7115
        %v7147 = vadd.f32 %v7146, %v7116
        %v7148 = vadd.f32 %v7147, %v7117
        %v7149 = vadd.f32 %v7148, %v7118
        %v7150 = vadd.f32 %v7149, %v7119
        %v7151 = vadd.f32 %v7150, %v7120
        %v7152 = vadd.f32 %v7151, %v7121
        %v7153 = vadd.f32 %v7152, %v7122
        %v7154 = vadd.f32 %v7153, %v7123
        %v7155 = vadd.f32 %v7154, %v7124
        %v7156 = vadd.f32 %v7155, %v7125
        %v7157 = vadd.f32 %v7156, %v7126
        %v7158 = vadd.f32 %v7157, %v7127
        %v7159 = vadd.f32 %v7158, %v7128
        %v7160 = vrot.slane %v7159, 4
        %v7161 = vadd.f32 %v7159, %v7160
        %v7162 = vrot.slane %v7161, 2
        %v7163 = vadd.f32 %v7161, %v7162
        %v7164 = vrot.slane %v7163, 1
        %v7165 = vadd.f32 %v7163, %v7164
        %v7166 = vmul.f32 %v7165, %v7063
        %v7167 = vadd.f32 %v7166, 1e-05
        %v7168 = vrsqrt.pop %v7167
        %v7169 = vmul.f32 %v7065, %v7168
        %v7170 = vmul.f32 %v7066, %v7168
        %v7171 = vmul.f32 %v7067, %v7168
        %v7172 = vmul.f32 %v7068, %v7168
        %v7173 = vmul.f32 %v7069, %v7168
        %v7174 = vmul.f32 %v7070, %v7168
        %v7175 = vmul.f32 %v7071, %v7168
        %v7176 = vmul.f32 %v7072, %v7168
        %v7177 = vmul.f32 %v7073, %v7168
        %v7178 = vmul.f32 %v7074, %v7168
        %v7179 = vmul.f32 %v7075, %v7168
        %v7180 = vmul.f32 %v7076, %v7168
        %v7181 = vmul.f32 %v7077, %v7168
        %v7182 = vmul.f32 %v7078, %v7168
        %v7183 = vmul.f32 %v7079, %v7168
        %v7184 = vmul.f32 %v7080, %v7168
        %v7185 = vmul.f32 %v7081, %v7168
        %v7186 = vmul.f32 %v7082, %v7168
        %v7187 = vmul.f32 %v7083, %v7168
        %v7188 = vmul.f32 %v7084, %v7168
        %v7189 = vmul.f32 %v7085, %v7168
        %v7190 = vmul.f32 %v7086, %v7168
        %v7191 = vmul.f32 %v7087, %v7168
        %v7192 = vmul.f32 %v7088, %v7168
        %v7193 = vmul.f32 %v7089, %v7168
        %v7194 = vmul.f32 %v7090, %v7168
        %v7195 = vmul.f32 %v7091, %v7168
        %v7196 = vmul.f32 %v7092, %v7168
        %v7197 = vmul.f32 %v7093, %v7168
        %v7198 = vmul.f32 %v7094, %v7168
        %v7199 = vmul.f32 %v7095, %v7168
        %v7200 = vmul.f32 %v7096, %v7168
        %v7201 = vld [vmem:[%s2] sm:$0x1]
        %v7203 = vlaneseq
        %v7204 = vshrl.u32 %v7203, 7
        %v7205 = vsub.s32 0, %v7204
        %v7206 = vrot.slane %v7201, %v7205
        %v7208 = vmul.f32 %v7169, %v7206
        %v7209 = vmul.f32 %v7170, %v7206
        %v7210 = vmul.f32 %v7171, %v7206
        %v7211 = vmul.f32 %v7172, %v7206
        %v7212 = vmul.f32 %v7173, %v7206
        %v7213 = vmul.f32 %v7174, %v7206
        %v7214 = vmul.f32 %v7175, %v7206
        %v7215 = vmul.f32 %v7176, %v7206
        %v7216 = vmul.f32 %v7177, %v7206
        %v7217 = vmul.f32 %v7178, %v7206
        %v7218 = vmul.f32 %v7179, %v7206
        %v7219 = vmul.f32 %v7180, %v7206
        %v7220 = vmul.f32 %v7181, %v7206
        %v7221 = vmul.f32 %v7182, %v7206
        %v7222 = vmul.f32 %v7183, %v7206
        %v7223 = vmul.f32 %v7184, %v7206
        %v7224 = vmul.f32 %v7185, %v7206
        %v7225 = vmul.f32 %v7186, %v7206
        %v7226 = vmul.f32 %v7187, %v7206
        %v7227 = vmul.f32 %v7188, %v7206
        %v7228 = vmul.f32 %v7189, %v7206
        %v7229 = vmul.f32 %v7190, %v7206
        %v7230 = vmul.f32 %v7191, %v7206
        %v7231 = vmul.f32 %v7192, %v7206
        %v7232 = vmul.f32 %v7193, %v7206
        %v7233 = vmul.f32 %v7194, %v7206
        %v7234 = vmul.f32 %v7195, %v7206
        %v7235 = vmul.f32 %v7196, %v7206
        %v7236 = vmul.f32 %v7197, %v7206
        %v7237 = vmul.f32 %v7198, %v7206
        %v7238 = vmul.f32 %v7199, %v7206
        %v7239 = vmul.f32 %v7200, %v7206
        %v7240 = vld [vmem:[%s3] sm:$0x1]
        %v7242 = vlaneseq
        %v7243 = vshrl.u32 %v7242, 7
        %v7244 = vsub.s32 0, %v7243
        %v7245 = vrot.slane %v7240, %v7244
        %v7247 = vadd.f32 %v7208, %v7245
        %v7248 = vadd.f32 %v7209, %v7245
        %v7249 = vadd.f32 %v7210, %v7245
        %v7250 = vadd.f32 %v7211, %v7245
        %v7251 = vadd.f32 %v7212, %v7245
        %v7252 = vadd.f32 %v7213, %v7245
        %v7253 = vadd.f32 %v7214, %v7245
        %v7254 = vadd.f32 %v7215, %v7245
        %v7255 = vadd.f32 %v7216, %v7245
        %v7256 = vadd.f32 %v7217, %v7245
        %v7257 = vadd.f32 %v7218, %v7245
        %v7258 = vadd.f32 %v7219, %v7245
        %v7259 = vadd.f32 %v7220, %v7245
        %v7260 = vadd.f32 %v7221, %v7245
        %v7261 = vadd.f32 %v7222, %v7245
        %v7262 = vadd.f32 %v7223, %v7245
        %v7263 = vadd.f32 %v7224, %v7245
        %v7264 = vadd.f32 %v7225, %v7245
        %v7265 = vadd.f32 %v7226, %v7245
        %v7266 = vadd.f32 %v7227, %v7245
        %v7267 = vadd.f32 %v7228, %v7245
        %v7268 = vadd.f32 %v7229, %v7245
        %v7269 = vadd.f32 %v7230, %v7245
        %v7270 = vadd.f32 %v7231, %v7245
        %v7271 = vadd.f32 %v7232, %v7245
        %v7272 = vadd.f32 %v7233, %v7245
        %v7273 = vadd.f32 %v7234, %v7245
        %v7274 = vadd.f32 %v7235, %v7245
        %v7275 = vadd.f32 %v7236, %v7245
        %v7276 = vadd.f32 %v7237, %v7245
        %v7277 = vadd.f32 %v7238, %v7245
        %v7278 = vadd.f32 %v7239, %v7245
        %v7279 = vsub.f32 0.0, %v7247
        %v7280 = vsub.f32 0.0, %v7248
        %v7281 = vsub.f32 0.0, %v7249
        %v7282 = vsub.f32 0.0, %v7250
        %v7283 = vsub.f32 0.0, %v7251
        %v7284 = vsub.f32 0.0, %v7252
        %v7285 = vsub.f32 0.0, %v7253
        %v7286 = vsub.f32 0.0, %v7254
        %v7287 = vsub.f32 0.0, %v7255
        %v7288 = vsub.f32 0.0, %v7256
        %v7289 = vsub.f32 0.0, %v7257
        %v7290 = vsub.f32 0.0, %v7258
        %v7291 = vsub.f32 0.0, %v7259
        %v7292 = vsub.f32 0.0, %v7260
        %v7293 = vsub.f32 0.0, %v7261
        %v7294 = vsub.f32 0.0, %v7262
        %v7295 = vsub.f32 0.0, %v7263
        %v7296 = vsub.f32 0.0, %v7264
        %v7297 = vsub.f32 0.0, %v7265
        %v7298 = vsub.f32 0.0, %v7266
        %v7299 = vsub.f32 0.0, %v7267
        %v7300 = vsub.f32 0.0, %v7268
        %v7301 = vsub.f32 0.0, %v7269
        %v7302 = vsub.f32 0.0, %v7270
        %v7303 = vsub.f32 0.0, %v7271
        %v7304 = vsub.f32 0.0, %v7272
        %v7305 = vsub.f32 0.0, %v7273
        %v7306 = vsub.f32 0.0, %v7274
        %v7307 = vsub.f32 0.0, %v7275
        %v7308 = vsub.f32 0.0, %v7276
        %v7309 = vsub.f32 0.0, %v7277
        %v7310 = vsub.f32 0.0, %v7278
        %v7311 = vmul.f32 %v7279, 1.442695
        %v7312 = vpow.pop %v7311
        %v7313 = vmul.f32 %v7280, 1.442695
        %v7314 = vpow.pop %v7313
        %v7315 = vmul.f32 %v7281, 1.442695
        %v7316 = vpow.pop %v7315
        %v7317 = vmul.f32 %v7282, 1.442695
        %v7318 = vpow.pop %v7317
        %v7319 = vmul.f32 %v7283, 1.442695
        %v7320 = vpow.pop %v7319
        %v7321 = vmul.f32 %v7284, 1.442695
        %v7322 = vpow.pop %v7321
        %v7323 = vmul.f32 %v7285, 1.442695
        %v7324 = vpow.pop %v7323
        %v7325 = vmul.f32 %v7286, 1.442695
        %v7326 = vpow.pop %v7325
        %v7327 = vmul.f32 %v7287, 1.442695
        %v7328 = vpow.pop %v7327
        %v7329 = vmul.f32 %v7288, 1.442695
        %v7330 = vpow.pop %v7329
        %v7331 = vmul.f32 %v7289, 1.442695
        %v7332 = vpow.pop %v7331
        %v7333 = vmul.f32 %v7290, 1.442695
        %v7334 = vpow.pop %v7333
        %v7335 = vmul.f32 %v7291, 1.442695
        %v7336 = vpow.pop %v7335
        %v7337 = vmul.f32 %v7292, 1.442695
        %v7338 = vpow.pop %v7337
        %v7339 = vmul.f32 %v7293, 1.442695
        %v7340 = vpow.pop %v7339
        %v7341 = vmul.f32 %v7294, 1.442695
        %v7342 = vpow.pop %v7341
        %v7343 = vmul.f32 %v7295, 1.442695
        %v7344 = vpow.pop %v7343
        %v7345 = vmul.f32 %v7296, 1.442695
        %v7346 = vpow.pop %v7345
        %v7347 = vmul.f32 %v7297, 1.442695
        %v7348 = vpow.pop %v7347
        %v7349 = vmul.f32 %v7298, 1.442695
        %v7350 = vpow.pop %v7349
        %v7351 = vmul.f32 %v7299, 1.442695
        %v7352 = vpow.pop %v7351
        %v7353 = vmul.f32 %v7300, 1.442695
        %v7354 = vpow.pop %v7353
        %v7355 = vmul.f32 %v7301, 1.442695
        %v7356 = vpow.pop %v7355
        %v7357 = vmul.f32 %v7302, 1.442695
        %v7358 = vpow.pop %v7357
        %v7359 = vmul.f32 %v7303, 1.442695
        %v7360 = vpow.pop %v7359
        %v7361 = vmul.f32 %v7304, 1.442695
        %v7362 = vpow.pop %v7361
        %v7363 = vmul.f32 %v7305, 1.442695
        %v7364 = vpow.pop %v7363
        %v7365 = vmul.f32 %v7306, 1.442695
        %v7366 = vpow.pop %v7365
        %v7367 = vmul.f32 %v7307, 1.442695
        %v7368 = vpow.pop %v7367
        %v7369 = vmul.f32 %v7308, 1.442695
        %v7370 = vpow.pop %v7369
        %v7371 = vmul.f32 %v7309, 1.442695
        %v7372 = vpow.pop %v7371
        %v7373 = vmul.f32 %v7310, 1.442695
        %v7374 = vpow.pop %v7373
        %v7375 = vadd.f32 %v7312, 1.0
        %v7376 = vadd.f32 %v7314, 1.0
        %v7377 = vadd.f32 %v7316, 1.0
        %v7378 = vadd.f32 %v7318, 1.0
        %v7379 = vadd.f32 %v7320, 1.0
        %v7380 = vadd.f32 %v7322, 1.0
        %v7381 = vadd.f32 %v7324, 1.0
        %v7382 = vadd.f32 %v7326, 1.0
        %v7383 = vadd.f32 %v7328, 1.0
        %v7384 = vadd.f32 %v7330, 1.0
        %v7385 = vadd.f32 %v7332, 1.0
        %v7386 = vadd.f32 %v7334, 1.0
        %v7387 = vadd.f32 %v7336, 1.0
        %v7388 = vadd.f32 %v7338, 1.0
        %v7389 = vadd.f32 %v7340, 1.0
        %v7390 = vadd.f32 %v7342, 1.0
        %v7391 = vadd.f32 %v7344, 1.0
        %v7392 = vadd.f32 %v7346, 1.0
        %v7393 = vadd.f32 %v7348, 1.0
        %v7394 = vadd.f32 %v7350, 1.0
        %v7395 = vadd.f32 %v7352, 1.0
        %v7396 = vadd.f32 %v7354, 1.0
        %v7397 = vadd.f32 %v7356, 1.0
        %v7398 = vadd.f32 %v7358, 1.0
        %v7399 = vadd.f32 %v7360, 1.0
        %v7400 = vadd.f32 %v7362, 1.0
        %v7401 = vadd.f32 %v7364, 1.0
        %v7402 = vadd.f32 %v7366, 1.0
        %v7403 = vadd.f32 %v7368, 1.0
        %v7404 = vadd.f32 %v7370, 1.0
        %v7405 = vadd.f32 %v7372, 1.0
        %v7406 = vadd.f32 %v7374, 1.0
        %v7407 = vrcp.pop %v7375
        %v7408 = vrcp.pop %v7376
        %v7409 = vrcp.pop %v7377
        %v7410 = vrcp.pop %v7378
        %v7411 = vrcp.pop %v7379
        %v7412 = vrcp.pop %v7380
        %v7413 = vrcp.pop %v7381
        %v7414 = vrcp.pop %v7382
        %v7415 = vrcp.pop %v7383
        %v7416 = vrcp.pop %v7384
        %v7417 = vrcp.pop %v7385
        %v7418 = vrcp.pop %v7386
        %v7419 = vrcp.pop %v7387
        %v7420 = vrcp.pop %v7388
        %v7421 = vrcp.pop %v7389
        %v7422 = vrcp.pop %v7390
        %v7423 = vrcp.pop %v7391
        %v7424 = vrcp.pop %v7392
        %v7425 = vrcp.pop %v7393
        %v7426 = vrcp.pop %v7394
        %v7427 = vrcp.pop %v7395
        %v7428 = vrcp.pop %v7396
        %v7429 = vrcp.pop %v7397
        %v7430 = vrcp.pop %v7398
        %v7431 = vrcp.pop %v7399
        %v7432 = vrcp.pop %v7400
        %v7433 = vrcp.pop %v7401
        %v7434 = vrcp.pop %v7402
        %v7435 = vrcp.pop %v7403
        %v7436 = vrcp.pop %v7404
        %v7437 = vrcp.pop %v7405
        %v7438 = vrcp.pop %v7406
        %v7439 = vmul.f32 %v7407, 12.0
        %v7440 = vmul.f32 %v7408, 12.0
        %v7441 = vmul.f32 %v7409, 12.0
        %v7442 = vmul.f32 %v7410, 12.0
        %v7443 = vmul.f32 %v7411, 12.0
        %v7444 = vmul.f32 %v7412, 12.0
        %v7445 = vmul.f32 %v7413, 12.0
        %v7446 = vmul.f32 %v7414, 12.0
        %v7447 = vmul.f32 %v7415, 12.0
        %v7448 = vmul.f32 %v7416, 12.0
        %v7449 = vmul.f32 %v7417, 12.0
        %v7450 = vmul.f32 %v7418, 12.0
        %v7451 = vmul.f32 %v7419, 12.0
        %v7452 = vmul.f32 %v7420, 12.0
        %v7453 = vmul.f32 %v7421, 12.0
        %v7454 = vmul.f32 %v7422, 12.0
        %v7455 = vmul.f32 %v7423, 12.0
        %v7456 = vmul.f32 %v7424, 12.0
        %v7457 = vmul.f32 %v7425, 12.0
        %v7458 = vmul.f32 %v7426, 12.0
        %v7459 = vmul.f32 %v7427, 12.0
        %v7460 = vmul.f32 %v7428, 12.0
        %v7461 = vmul.f32 %v7429, 12.0
        %v7462 = vmul.f32 %v7430, 12.0
        %v7463 = vmul.f32 %v7431, 12.0
        %v7464 = vmul.f32 %v7432, 12.0
        %v7465 = vmul.f32 %v7433, 12.0
        %v7466 = vmul.f32 %v7434, 12.0
        %v7467 = vmul.f32 %v7435, 12.0
        %v7468 = vmul.f32 %v7436, 12.0
        %v7469 = vmul.f32 %v7437, 12.0
        %v7470 = vmul.f32 %v7438, 12.0
        %v7471 = vmul.f32 %v7439, 1.442695
        %v7472 = vpow.pop %v7471
        %v7473 = vmul.f32 %v7440, 1.442695
        %v7474 = vpow.pop %v7473
        %v7475 = vmul.f32 %v7441, 1.442695
        %v7476 = vpow.pop %v7475
        %v7477 = vmul.f32 %v7442, 1.442695
        %v7478 = vpow.pop %v7477
        %v7479 = vmul.f32 %v7443, 1.442695
        %v7480 = vpow.pop %v7479
        %v7481 = vmul.f32 %v7444, 1.442695
        %v7482 = vpow.pop %v7481
        %v7483 = vmul.f32 %v7445, 1.442695
        %v7484 = vpow.pop %v7483
        %v7485 = vmul.f32 %v7446, 1.442695
        %v7486 = vpow.pop %v7485
        %v7487 = vmul.f32 %v7447, 1.442695
        %v7488 = vpow.pop %v7487
        %v7489 = vmul.f32 %v7448, 1.442695
        %v7490 = vpow.pop %v7489
        %v7491 = vmul.f32 %v7449, 1.442695
        %v7492 = vpow.pop %v7491
        %v7493 = vmul.f32 %v7450, 1.442695
        %v7494 = vpow.pop %v7493
        %v7495 = vmul.f32 %v7451, 1.442695
        %v7496 = vpow.pop %v7495
        %v7497 = vmul.f32 %v7452, 1.442695
        %v7498 = vpow.pop %v7497
        %v7499 = vmul.f32 %v7453, 1.442695
        %v7500 = vpow.pop %v7499
        %v7501 = vmul.f32 %v7454, 1.442695
        %v7502 = vpow.pop %v7501
        %v7503 = vmul.f32 %v7455, 1.442695
        %v7504 = vpow.pop %v7503
        %v7505 = vmul.f32 %v7456, 1.442695
        %v7506 = vpow.pop %v7505
        %v7507 = vmul.f32 %v7457, 1.442695
        %v7508 = vpow.pop %v7507
        %v7509 = vmul.f32 %v7458, 1.442695
        %v7510 = vpow.pop %v7509
        %v7511 = vmul.f32 %v7459, 1.442695
        %v7512 = vpow.pop %v7511
        %v7513 = vmul.f32 %v7460, 1.442695
        %v7514 = vpow.pop %v7513
        %v7515 = vmul.f32 %v7461, 1.442695
        %v7516 = vpow.pop %v7515
        %v7517 = vmul.f32 %v7462, 1.442695
        %v7518 = vpow.pop %v7517
        %v7519 = vmul.f32 %v7463, 1.442695
        %v7520 = vpow.pop %v7519
        %v7521 = vmul.f32 %v7464, 1.442695
        %v7522 = vpow.pop %v7521
        %v7523 = vmul.f32 %v7465, 1.442695
        %v7524 = vpow.pop %v7523
        %v7525 = vmul.f32 %v7466, 1.442695
        %v7526 = vpow.pop %v7525
        %v7527 = vmul.f32 %v7467, 1.442695
        %v7528 = vpow.pop %v7527
        %v7529 = vmul.f32 %v7468, 1.442695
        %v7530 = vpow.pop %v7529
        %v7531 = vmul.f32 %v7469, 1.442695
        %v7532 = vpow.pop %v7531
        %v7533 = vmul.f32 %v7470, 1.442695
        %v7534 = vpow.pop %v7533
        %s7535 = scalar_lea.vmem [#allocation3], 24
        %7536 = vst [vmem:[%s7535 + $0x1] sm:$0xff] %v7472
        %7537 = vst [vmem:[%s7535 + $0x9] sm:$0xff] %v7474
        %7538 = vst [vmem:[%s7535 + $0x19] sm:$0xff] %v7476
        %7539 = vst [vmem:[%s7535 + $0x21] sm:$0xff] %v7478
        %7540 = vst [vmem:[%s7535 + $0x31] sm:$0xff] %v7480
        %7541 = vst [vmem:[%s7535 + $0x39] sm:$0xff] %v7482
        %7542 = vst [vmem:[%s7535 + $0x49] sm:$0xff] %v7484
        %7543 = vst [vmem:[%s7535 + $0x51] sm:$0xff] %v7486
        %7544 = vst [vmem:[%s7535 + $0x61] sm:$0xff] %v7488
        %7545 = vst [vmem:[%s7535 + $0x69] sm:$0xff] %v7490
        %7546 = vst [vmem:[%s7535 + $0x79] sm:$0xff] %v7492
        %7547 = vst [vmem:[%s7535 + $0x81] sm:$0xff] %v7494
        %7548 = vst [vmem:[%s7535 + $0x91] sm:$0xff] %v7496
        %7549 = vst [vmem:[%s7535 + $0x99] sm:$0xff] %v7498
        %7550 = vst [vmem:[%s7535 + $0xa9] sm:$0xff] %v7500
        %7551 = vst [vmem:[%s7535 + $0xb1] sm:$0xff] %v7502
        %7552 = vst [vmem:[%s7535 + $0xc1] sm:$0xff] %v7504
        %7553 = vst [vmem:[%s7535 + $0xc9] sm:$0xff] %v7506
        %7554 = vst [vmem:[%s7535 + $0xd9] sm:$0xff] %v7508
        %7555 = vst [vmem:[%s7535 + $0xe1] sm:$0xff] %v7510
        %7556 = vst [vmem:[%s7535 + $0xf1] sm:$0xff] %v7512
        %7557 = vst [vmem:[%s7535 + $0xf9] sm:$0xff] %v7514
        %7558 = vst [vmem:[%s7535 + $0x109] sm:$0xff] %v7516
        %7559 = vst [vmem:[%s7535 + $0x111] sm:$0xff] %v7518
        %7560 = vst [vmem:[%s7535 + $0x121] sm:$0xff] %v7520
        %7561 = vst [vmem:[%s7535 + $0x129] sm:$0xff] %v7522
        %7562 = vst [vmem:[%s7535 + $0x139] sm:$0xff] %v7524
        %7563 = vst [vmem:[%s7535 + $0x141] sm:$0xff] %v7526
        %7564 = vst [vmem:[%s7535 + $0x151] sm:$0xff] %v7528
        %7565 = vst [vmem:[%s7535 + $0x159] sm:$0xff] %v7530
        %7566 = vst [vmem:[%s7535 + $0x169] sm:$0xff] %v7532
        %7567 = vst [vmem:[%s7535 + $0x171] sm:$0xff] %v7534
        %v7568 = vld [vmem:[%s202] sm:$0xff]
        %v7569 = vld [vmem:[%s202 + $0x8] sm:$0xff]
        %v7570 = vld [vmem:[%s202 + $0x10] sm:$0xff]
        %v7571 = vld [vmem:[%s202 + $0x18] sm:$0xff]
        %v7572 = vld [vmem:[%s202 + $0x20] sm:$0xff]
        %v7573 = vld [vmem:[%s202 + $0x28] sm:$0xff]
        %v7574 = vld [vmem:[%s202 + $0x30] sm:$0xff]
        %v7575 = vld [vmem:[%s202 + $0x38] sm:$0xff]
        %v7576 = vld [vmem:[%s202 + $0x40] sm:$0xff]
        %v7577 = vld [vmem:[%s202 + $0x48] sm:$0xff]
        %v7578 = vld [vmem:[%s202 + $0x50] sm:$0xff]
        %v7579 = vld [vmem:[%s202 + $0x58] sm:$0xff]
        %v7580 = vld [vmem:[%s202 + $0x60] sm:$0xff]
        %v7581 = vld [vmem:[%s202 + $0x68] sm:$0xff]
        %v7582 = vld [vmem:[%s202 + $0x70] sm:$0xff]
        %v7583 = vld [vmem:[%s202 + $0x78] sm:$0xff]
        %v7584 = vld [vmem:[%s202 + $0x80] sm:$0xff]
        %v7585 = vld [vmem:[%s202 + $0x88] sm:$0xff]
        %v7586 = vld [vmem:[%s202 + $0x90] sm:$0xff]
        %v7587 = vld [vmem:[%s202 + $0x98] sm:$0xff]
        %v7588 = vld [vmem:[%s202 + $0xa0] sm:$0xff]
        %v7589 = vld [vmem:[%s202 + $0xa8] sm:$0xff]
        %v7590 = vld [vmem:[%s202 + $0xb0] sm:$0xff]
        %v7591 = vld [vmem:[%s202 + $0xb8] sm:$0xff]
        %v7592 = vld [vmem:[%s202 + $0xc0] sm:$0xff]
        %v7593 = vld [vmem:[%s202 + $0xc8] sm:$0xff]
        %v7594 = vld [vmem:[%s202 + $0xd0] sm:$0xff]
        %v7595 = vld [vmem:[%s202 + $0xd8] sm:$0xff]
        %v7596 = vld [vmem:[%s202 + $0xe0] sm:$0xff]
        %v7597 = vld [vmem:[%s202 + $0xe8] sm:$0xff]
        %v7598 = vld [vmem:[%s202 + $0xf0] sm:$0xff]
        %v7599 = vld [vmem:[%s202 + $0xf8] sm:$0xff]
        %v7600 = vmul.f32 %v7568, %v7472
        %v7601 = vmul.f32 %v7569, %v7474
        %v7602 = vmul.f32 %v7570, %v7476
        %v7603 = vmul.f32 %v7571, %v7478
        %v7604 = vmul.f32 %v7572, %v7480
        %v7605 = vmul.f32 %v7573, %v7482
        %v7606 = vmul.f32 %v7574, %v7484
        %v7607 = vmul.f32 %v7575, %v7486
        %v7608 = vmul.f32 %v7576, %v7488
        %v7609 = vmul.f32 %v7577, %v7490
        %v7610 = vmul.f32 %v7578, %v7492
        %v7611 = vmul.f32 %v7579, %v7494
        %v7612 = vmul.f32 %v7580, %v7496
        %v7613 = vmul.f32 %v7581, %v7498
        %v7614 = vmul.f32 %v7582, %v7500
        %v7615 = vmul.f32 %v7583, %v7502
        %v7616 = vmul.f32 %v7584, %v7504
        %v7617 = vmul.f32 %v7585, %v7506
        %v7618 = vmul.f32 %v7586, %v7508
        %v7619 = vmul.f32 %v7587, %v7510
        %v7620 = vmul.f32 %v7588, %v7512
        %v7621 = vmul.f32 %v7589, %v7514
        %v7622 = vmul.f32 %v7590, %v7516
        %v7623 = vmul.f32 %v7591, %v7518
        %v7624 = vmul.f32 %v7592, %v7520
        %v7625 = vmul.f32 %v7593, %v7522
        %v7626 = vmul.f32 %v7594, %v7524
        %v7627 = vmul.f32 %v7595, %v7526
        %v7628 = vmul.f32 %v7596, %v7528
        %v7629 = vmul.f32 %v7597, %v7530
        %v7630 = vmul.f32 %v7598, %v7532
        %v7631 = vmul.f32 %v7599, %v7534
        %7632 = vst [vmem:[%s350 + $0x1] sm:$0xff] %v7600
        %7633 = vst [vmem:[%s350 + $0x9] sm:$0xff] %v7601
        %7634 = vst [vmem:[%s350 + $0x19] sm:$0xff] %v7602
        %7635 = vst [vmem:[%s350 + $0x21] sm:$0xff] %v7603
        %7636 = vst [vmem:[%s350 + $0x31] sm:$0xff] %v7604
        %7637 = vst [vmem:[%s350 + $0x39] sm:$0xff] %v7605
        %7638 = vst [vmem:[%s350 + $0x49] sm:$0xff] %v7606
        %7639 = vst [vmem:[%s350 + $0x51] sm:$0xff] %v7607
        %7640 = vst [vmem:[%s350 + $0x61] sm:$0xff] %v7608
        %7641 = vst [vmem:[%s350 + $0x69] sm:$0xff] %v7609
        %7642 = vst [vmem:[%s350 + $0x79] sm:$0xff] %v7610
        %7643 = vst [vmem:[%s350 + $0x81] sm:$0xff] %v7611
        %7644 = vst [vmem:[%s350 + $0x91] sm:$0xff] %v7612
        %7645 = vst [vmem:[%s350 + $0x99] sm:$0xff] %v7613
        %7646 = vst [vmem:[%s350 + $0xa9] sm:$0xff] %v7614
        %7647 = vst [vmem:[%s350 + $0xb1] sm:$0xff] %v7615
        %7648 = vst [vmem:[%s350 + $0xc1] sm:$0xff] %v7616
        %7649 = vst [vmem:[%s350 + $0xc9] sm:$0xff] %v7617
        %7650 = vst [vmem:[%s350 + $0xd9] sm:$0xff] %v7618
        %7651 = vst [vmem:[%s350 + $0xe1] sm:$0xff] %v7619
        %7652 = vst [vmem:[%s350 + $0xf1] sm:$0xff] %v7620
        %7653 = vst [vmem:[%s350 + $0xf9] sm:$0xff] %v7621
        %7654 = vst [vmem:[%s350 + $0x109] sm:$0xff] %v7622
        %7655 = vst [vmem:[%s350 + $0x111] sm:$0xff] %v7623
        %7656 = vst [vmem:[%s350 + $0x121] sm:$0xff] %v7624
        %7657 = vst [vmem:[%s350 + $0x129] sm:$0xff] %v7625
        %7658 = vst [vmem:[%s350 + $0x139] sm:$0xff] %v7626
        %7659 = vst [vmem:[%s350 + $0x141] sm:$0xff] %v7627
        %7660 = vst [vmem:[%s350 + $0x151] sm:$0xff] %v7628
        %7661 = vst [vmem:[%s350 + $0x159] sm:$0xff] %v7629
        %7662 = vst [vmem:[%s350 + $0x169] sm:$0xff] %v7630
        %7663 = vst [vmem:[%s350 + $0x171] sm:$0xff] %v7631
        %v7664 = vld [vmem:[#allocation2] ss:$2 sm:$0xff]
        %s7665 = scalar_lea.vmem [#allocation2], 24
        %v7666 = vld [vmem:[%s7665] ss:$2 sm:$0xff]
        %s7667 = scalar_lea.vmem [#allocation2], 48
        %v7668 = vld [vmem:[%s7667] ss:$2 sm:$0xff]
        %s7669 = scalar_lea.vmem [#allocation2], 72
        %v7670 = vld [vmem:[%s7669] ss:$2 sm:$0xff]
        %s7671 = scalar_lea.vmem [#allocation2], 96
        %v7672 = vld [vmem:[%s7671] ss:$2 sm:$0xff]
        %s7673 = scalar_lea.vmem [#allocation2], 120
        %v7674 = vld [vmem:[%s7673] ss:$2 sm:$0xff]
        %s7675 = scalar_lea.vmem [#allocation2], 144
        %v7676 = vld [vmem:[%s7675] ss:$2 sm:$0xff]
        %s7677 = scalar_lea.vmem [#allocation2], 168
        %v7678 = vld [vmem:[%s7677] ss:$2 sm:$0xff]
        %s7679 = scalar_lea.vmem [#allocation2], 192
        %v7680 = vld [vmem:[%s7679] ss:$2 sm:$0xff]
        %s7681 = scalar_lea.vmem [#allocation2], 216
        %v7682 = vld [vmem:[%s7681] ss:$2 sm:$0xff]
        %s7683 = scalar_lea.vmem [#allocation2], 240
        %v7684 = vld [vmem:[%s7683] ss:$2 sm:$0xff]
        %s7685 = scalar_lea.vmem [#allocation2], 264
        %v7686 = vld [vmem:[%s7685] ss:$2 sm:$0xff]
        %s7687 = scalar_lea.vmem [#allocation2], 288
        %v7688 = vld [vmem:[%s7687] ss:$2 sm:$0xff]
        %s7689 = scalar_lea.vmem [#allocation2], 312
        %v7690 = vld [vmem:[%s7689] ss:$2 sm:$0xff]
        %s7691 = scalar_lea.vmem [#allocation2], 336
        %v7692 = vld [vmem:[%s7691] ss:$2 sm:$0xff]
        %s7693 = scalar_lea.vmem [#allocation2], 360
        %v7694 = vld [vmem:[%s7693] ss:$2 sm:$0xff]
        %s7695 = scalar_lea.vmem [#allocation2], 384
        %v7696 = vld [vmem:[%s7695] ss:$2 sm:$0xff]
        %s7697 = scalar_lea.vmem [#allocation2], 408
        %v7698 = vld [vmem:[%s7697] ss:$2 sm:$0xff]
        %s7699 = scalar_lea.vmem [#allocation2], 1
        %v7700 = vld [vmem:[%s7699] ss:$2 sm:$0xff]
        %s7701 = scalar_lea.vmem [#allocation2], 25
        %v7702 = vld [vmem:[%s7701] ss:$2 sm:$0xff]
        %s7703 = scalar_lea.vmem [#allocation2], 49
        %v7704 = vld [vmem:[%s7703] ss:$2 sm:$0xff]
        %s7705 = scalar_lea.vmem [#allocation2], 73
        %v7706 = vld [vmem:[%s7705] ss:$2 sm:$0xff]
        %s7707 = scalar_lea.vmem [#allocation2], 97
        %v7708 = vld [vmem:[%s7707] ss:$2 sm:$0xff]
        %s7709 = scalar_lea.vmem [#allocation2], 121
        %v7710 = vld [vmem:[%s7709] ss:$2 sm:$0xff]
        %s7711 = scalar_lea.vmem [#allocation2], 145
        %v7712 = vld [vmem:[%s7711] ss:$2 sm:$0xff]
        %s7713 = scalar_lea.vmem [#allocation2], 169
        %v7714 = vld [vmem:[%s7713] ss:$2 sm:$0xff]
        %s7715 = scalar_lea.vmem [#allocation2], 193
        %v7716 = vld [vmem:[%s7715] ss:$2 sm:$0xff]
        %s7717 = scalar_lea.vmem [#allocation2], 217
        %v7718 = vld [vmem:[%s7717] ss:$2 sm:$0xff]
        %s7719 = scalar_lea.vmem [#allocation2], 241
        %v7720 = vld [vmem:[%s7719] ss:$2 sm:$0xff]
        %s7721 = scalar_lea.vmem [#allocation2], 265
        %v7722 = vld [vmem:[%s7721] ss:$2 sm:$0xff]
        %s7723 = scalar_lea.vmem [#allocation2], 289
        %v7724 = vld [vmem:[%s7723] ss:$2 sm:$0xff]
        %s7725 = scalar_lea.vmem [#allocation2], 313
        %v7726 = vld [vmem:[%s7725] ss:$2 sm:$0xff]
        %s7727 = scalar_lea.vmem [#allocation2], 337
        %v7728 = vld [vmem:[%s7727] ss:$2 sm:$0xff]
        %s7729 = scalar_lea.vmem [#allocation2], 361
        %v7730 = vld [vmem:[%s7729] ss:$2 sm:$0xff]
        %s7731 = scalar_lea.vmem [#allocation2], 385
        %v7732 = vld [vmem:[%s7731] ss:$2 sm:$0xff]
        %s7733 = scalar_lea.vmem [#allocation2], 409
        %v7734 = vld [vmem:[%s7733] ss:$2 sm:$0xff]
        %v7735 = vadd.f32 %v7664, %v7700
        %v7736 = vadd.f32 %v7666, %v7702
        %v7737 = vadd.f32 %v7668, %v7704
        %v7738 = vadd.f32 %v7670, %v7706
        %v7739 = vadd.f32 %v7672, %v7708
        %v7740 = vadd.f32 %v7674, %v7710
        %v7741 = vadd.f32 %v7676, %v7712
        %v7742 = vadd.f32 %v7678, %v7714
        %v7743 = vadd.f32 %v7680, %v7716
        %v7744 = vadd.f32 %v7682, %v7718
        %v7745 = vadd.f32 %v7684, %v7720
        %v7746 = vadd.f32 %v7686, %v7722
        %v7747 = vadd.f32 %v7688, %v7724
        %v7748 = vadd.f32 %v7690, %v7726
        %v7749 = vadd.f32 %v7692, %v7728
        %v7750 = vadd.f32 %v7694, %v7730
        %v7751 = vadd.f32 %v7696, %v7732
        %v7752 = vadd.f32 %v7698, %v7734
        %s7753 = scalar_lea.vmem [#allocation2], 2
        %v7754 = vld [vmem:[%s7753] ss:$2 sm:$0xff]
        %s7755 = scalar_lea.vmem [#allocation2], 26
        %v7756 = vld [vmem:[%s7755] ss:$2 sm:$0xff]
        %s7757 = scalar_lea.vmem [#allocation2], 50
        %v7758 = vld [vmem:[%s7757] ss:$2 sm:$0xff]
        %s7759 = scalar_lea.vmem [#allocation2], 74
        %v7760 = vld [vmem:[%s7759] ss:$2 sm:$0xff]
        %s7761 = scalar_lea.vmem [#allocation2], 98
        %v7762 = vld [vmem:[%s7761] ss:$2 sm:$0xff]
        %s7763 = scalar_lea.vmem [#allocation2], 122
        %v7764 = vld [vmem:[%s7763] ss:$2 sm:$0xff]
        %s7765 = scalar_lea.vmem [#allocation2], 146
        %v7766 = vld [vmem:[%s7765] ss:$2 sm:$0xff]
        %s7767 = scalar_lea.vmem [#allocation2], 170
        %v7768 = vld [vmem:[%s7767] ss:$2 sm:$0xff]
        %s7769 = scalar_lea.vmem [#allocation2], 194
        %v7770 = vld [vmem:[%s7769] ss:$2 sm:$0xff]
        %s7771 = scalar_lea.vmem [#allocation2], 218
        %v7772 = vld [vmem:[%s7771] ss:$2 sm:$0xff]
        %s7773 = scalar_lea.vmem [#allocation2], 242
        %v7774 = vld [vmem:[%s7773] ss:$2 sm:$0xff]
        %s7775 = scalar_lea.vmem [#allocation2], 266
        %v7776 = vld [vmem:[%s7775] ss:$2 sm:$0xff]
        %s7777 = scalar_lea.vmem [#allocation2], 290
        %v7778 = vld [vmem:[%s7777] ss:$2 sm:$0xff]
        %s7779 = scalar_lea.vmem [#allocation2], 314
        %v7780 = vld [vmem:[%s7779] ss:$2 sm:$0xff]
        %s7781 = scalar_lea.vmem [#allocation2], 338
        %v7782 = vld [vmem:[%s7781] ss:$2 sm:$0xff]
        %s7783 = scalar_lea.vmem [#allocation2], 362
        %v7784 = vld [vmem:[%s7783] ss:$2 sm:$0xff]
        %s7785 = scalar_lea.vmem [#allocation2], 386
        %v7786 = vld [vmem:[%s7785] ss:$2 sm:$0xff]
        %s7787 = scalar_lea.vmem [#allocation2], 410
        %v7788 = vld [vmem:[%s7787] ss:$2 sm:$0xff]
        %v7789 = vadd.f32 %v7735, %v7754
        %v7790 = vadd.f32 %v7736, %v7756
        %v7791 = vadd.f32 %v7737, %v7758
        %v7792 = vadd.f32 %v7738, %v7760
        %v7793 = vadd.f32 %v7739, %v7762
        %v7794 = vadd.f32 %v7740, %v7764
        %v7795 = vadd.f32 %v7741, %v7766
        %v7796 = vadd.f32 %v7742, %v7768
        %v7797 = vadd.f32 %v7743, %v7770
        %v7798 = vadd.f32 %v7744, %v7772
        %v7799 = vadd.f32 %v7745, %v7774
        %v7800 = vadd.f32 %v7746, %v7776
        %v7801 = vadd.f32 %v7747, %v7778
        %v7802 = vadd.f32 %v7748, %v7780
        %v7803 = vadd.f32 %v7749, %v7782
        %v7804 = vadd.f32 %v7750, %v7784
        %v7805 = vadd.f32 %v7751, %v7786
        %v7806 = vadd.f32 %v7752, %v7788
        %7807 = vst [vmem:[#allocation4] sm:$0xff] %v7789
        %7808 = vst [vmem:[#allocation4 + $0x8] sm:$0xff] %v7790
        %7809 = vst [vmem:[#allocation4 + $0x10] sm:$0xff] %v7791
        %7810 = vst [vmem:[#allocation4 + $0x18] sm:$0xff] %v7792
        %7811 = vst [vmem:[#allocation4 + $0x20] sm:$0xff] %v7793
        %7812 = vst [vmem:[#allocation4 + $0x28] sm:$0xff] %v7794
        %7813 = vst [vmem:[#allocation4 + $0x30] sm:$0xff] %v7795
        %7814 = vst [vmem:[#allocation4 + $0x38] sm:$0xff] %v7796
        %7815 = vst [vmem:[#allocation4 + $0x40] sm:$0xff] %v7797
        %7816 = vst [vmem:[#allocation4 + $0x48] sm:$0xff] %v7798
        %7817 = vst [vmem:[#allocation4 + $0x50] sm:$0xff] %v7799
        %7818 = vst [vmem:[#allocation4 + $0x58] sm:$0xff] %v7800
        %7819 = vst [vmem:[#allocation4 + $0x60] sm:$0xff] %v7801
        %7820 = vst [vmem:[#allocation4 + $0x68] sm:$0xff] %v7802
        %7821 = vst [vmem:[#allocation4 + $0x70] sm:$0xff] %v7803
        %7822 = vst [vmem:[#allocation4 + $0x78] sm:$0xff] %v7804
        %7823 = vst [vmem:[#allocation4 + $0x80] sm:$0xff] %v7805
        %7824 = vst [vmem:[#allocation4 + $0x88] sm:$0xff] %v7806
        %v7825 = vld [vmem:[#allocation4] sm:$0xff]
        %v7826 = vld [vmem:[#allocation4 + $0x10] sm:$0xff]
        %v7827 = vld [vmem:[#allocation4 + $0x20] sm:$0xff]
        %v7828 = vld [vmem:[#allocation4 + $0x30] sm:$0xff]
        %v7829 = vld [vmem:[#allocation4 + $0x40] sm:$0xff]
        %v7830 = vld [vmem:[#allocation4 + $0x50] sm:$0xff]
        %v7831 = vld [vmem:[#allocation4 + $0x60] sm:$0xff]
        %v7832 = vld [vmem:[#allocation4 + $0x70] sm:$0xff]
        %s7833 = scalar_lea.vmem [#allocation4], 8
        %v7834 = vld [vmem:[%s7833] sm:$0xff]
        %v7835 = vld [vmem:[%s7833 + $0x10] sm:$0xff]
        %v7836 = vld [vmem:[%s7833 + $0x20] sm:$0xff]
        %v7837 = vld [vmem:[%s7833 + $0x30] sm:$0xff]
        %v7838 = vld [vmem:[%s7833 + $0x40] sm:$0xff]
        %v7839 = vld [vmem:[%s7833 + $0x50] sm:$0xff]
        %v7840 = vld [vmem:[%s7833 + $0x60] sm:$0xff]
        %v7841 = vld [vmem:[%s7833 + $0x70] sm:$0xff]
        %v7842 = vadd.f32 %v7825, %v7834
        %v7843 = vadd.f32 %v7826, %v7835
        %v7844 = vadd.f32 %v7827, %v7836
        %v7845 = vadd.f32 %v7828, %v7837
        %v7846 = vadd.f32 %v7829, %v7838
        %v7847 = vadd.f32 %v7830, %v7839
        %v7848 = vadd.f32 %v7831, %v7840
        %v7849 = vadd.f32 %v7832, %v7841
        %s7850 = scalar_lea.vmem [#allocation4], 16
        %v7851 = vld [vmem:[%s7850] sm:$0xff]
        %v7852 = vld [vmem:[%s7850 + $0x10] sm:$0xff]
        %v7853 = vld [vmem:[%s7850 + $0x20] sm:$0xff]
        %v7854 = vld [vmem:[%s7850 + $0x30] sm:$0xff]
        %v7855 = vld [vmem:[%s7850 + $0x40] sm:$0xff]
        %v7856 = vld [vmem:[%s7850 + $0x50] sm:$0xff]
        %v7857 = vld [vmem:[%s7850 + $0x60] sm:$0xff]
        %v7858 = vld [vmem:[%s7850 + $0x70] sm:$0xff]
        %v7859 = vadd.f32 %v7842, %v7851
        %v7860 = vadd.f32 %v7843, %v7852
        %v7861 = vadd.f32 %v7844, %v7853
        %v7862 = vadd.f32 %v7845, %v7854
        %v7863 = vadd.f32 %v7846, %v7855
        %v7864 = vadd.f32 %v7847, %v7856
        %v7865 = vadd.f32 %v7848, %v7857
        %v7866 = vadd.f32 %v7849, %v7858
        %v7867 = vld [vmem:[#allocation3] ss:$2 sm:$0xff]
        %s7868 = scalar_lea.vmem [#allocation3], 24
        %v7869 = vld [vmem:[%s7868] ss:$2 sm:$0xff]
        %s7870 = scalar_lea.vmem [#allocation3], 48
        %v7871 = vld [vmem:[%s7870] ss:$2 sm:$0xff]
        %s7872 = scalar_lea.vmem [#allocation3], 72
        %v7873 = vld [vmem:[%s7872] ss:$2 sm:$0xff]
        %s7874 = scalar_lea.vmem [#allocation3], 96
        %v7875 = vld [vmem:[%s7874] ss:$2 sm:$0xff]
        %s7876 = scalar_lea.vmem [#allocation3], 120
        %v7877 = vld [vmem:[%s7876] ss:$2 sm:$0xff]
        %s7878 = scalar_lea.vmem [#allocation3], 144
        %v7879 = vld [vmem:[%s7878] ss:$2 sm:$0xff]
        %s7880 = scalar_lea.vmem [#allocation3], 168
        %v7881 = vld [vmem:[%s7880] ss:$2 sm:$0xff]
        %s7882 = scalar_lea.vmem [#allocation3], 192
        %v7883 = vld [vmem:[%s7882] ss:$2 sm:$0xff]
        %s7884 = scalar_lea.vmem [#allocation3], 216
        %v7885 = vld [vmem:[%s7884] ss:$2 sm:$0xff]
        %s7886 = scalar_lea.vmem [#allocation3], 240
        %v7887 = vld [vmem:[%s7886] ss:$2 sm:$0xff]
        %s7888 = scalar_lea.vmem [#allocation3], 264
        %v7889 = vld [vmem:[%s7888] ss:$2 sm:$0xff]
        %s7890 = scalar_lea.vmem [#allocation3], 288
        %v7891 = vld [vmem:[%s7890] ss:$2 sm:$0xff]
        %s7892 = scalar_lea.vmem [#allocation3], 312
        %v7893 = vld [vmem:[%s7892] ss:$2 sm:$0xff]
        %s7894 = scalar_lea.vmem [#allocation3], 336
        %v7895 = vld [vmem:[%s7894] ss:$2 sm:$0xff]
        %s7896 = scalar_lea.vmem [#allocation3], 360
        %v7897 = vld [vmem:[%s7896] ss:$2 sm:$0xff]
        %s7898 = scalar_lea.vmem [#allocation3], 384
        %v7899 = vld [vmem:[%s7898] ss:$2 sm:$0xff]
        %s7900 = scalar_lea.vmem [#allocation3], 408
        %v7901 = vld [vmem:[%s7900] ss:$2 sm:$0xff]
        %s7902 = scalar_lea.vmem [#allocation3], 1
        %v7903 = vld [vmem:[%s7902] ss:$2 sm:$0xff]
        %s7904 = scalar_lea.vmem [#allocation3], 25
        %v7905 = vld [vmem:[%s7904] ss:$2 sm:$0xff]
        %s7906 = scalar_lea.vmem [#allocation3], 49
        %v7907 = vld [vmem:[%s7906] ss:$2 sm:$0xff]
        %s7908 = scalar_lea.vmem [#allocation3], 73
        %v7909 = vld [vmem:[%s7908] ss:$2 sm:$0xff]
        %s7910 = scalar_lea.vmem [#allocation3], 97
        %v7911 = vld [vmem:[%s7910] ss:$2 sm:$0xff]
        %s7912 = scalar_lea.vmem [#allocation3], 121
        %v7913 = vld [vmem:[%s7912] ss:$2 sm:$0xff]
        %s7914 = scalar_lea.vmem [#allocation3], 145
        %v7915 = vld [vmem:[%s7914] ss:$2 sm:$0xff]
        %s7916 = scalar_lea.vmem [#allocation3], 169
        %v7917 = vld [vmem:[%s7916] ss:$2 sm:$0xff]
        %s7918 = scalar_lea.vmem [#allocation3], 193
        %v7919 = vld [vmem:[%s7918] ss:$2 sm:$0xff]
        %s7920 = scalar_lea.vmem [#allocation3], 217
        %v7921 = vld [vmem:[%s7920] ss:$2 sm:$0xff]
        %s7922 = scalar_lea.vmem [#allocation3], 241
        %v7923 = vld [vmem:[%s7922] ss:$2 sm:$0xff]
        %s7924 = scalar_lea.vmem [#allocation3], 265
        %v7925 = vld [vmem:[%s7924] ss:$2 sm:$0xff]
        %s7926 = scalar_lea.vmem [#allocation3], 289
        %v7927 = vld [vmem:[%s7926] ss:$2 sm:$0xff]
        %s7928 = scalar_lea.vmem [#allocation3], 313
        %v7929 = vld [vmem:[%s7928] ss:$2 sm:$0xff]
        %s7930 = scalar_lea.vmem [#allocation3], 337
        %v7931 = vld [vmem:[%s7930] ss:$2 sm:$0xff]
        %s7932 = scalar_lea.vmem [#allocation3], 361
        %v7933 = vld [vmem:[%s7932] ss:$2 sm:$0xff]
        %s7934 = scalar_lea.vmem [#allocation3], 385
        %v7935 = vld [vmem:[%s7934] ss:$2 sm:$0xff]
        %s7936 = scalar_lea.vmem [#allocation3], 409
        %v7937 = vld [vmem:[%s7936] ss:$2 sm:$0xff]
        %v7938 = vadd.f32 %v7867, %v7903
        %v7939 = vadd.f32 %v7869, %v7905
        %v7940 = vadd.f32 %v7871, %v7907
        %v7941 = vadd.f32 %v7873, %v7909
        %v7942 = vadd.f32 %v7875, %v7911
        %v7943 = vadd.f32 %v7877, %v7913
        %v7944 = vadd.f32 %v7879, %v7915
        %v7945 = vadd.f32 %v7881, %v7917
        %v7946 = vadd.f32 %v7883, %v7919
        %v7947 = vadd.f32 %v7885, %v7921
        %v7948 = vadd.f32 %v7887, %v7923
        %v7949 = vadd.f32 %v7889, %v7925
        %v7950 = vadd.f32 %v7891, %v7927
        %v7951 = vadd.f32 %v7893, %v7929
        %v7952 = vadd.f32 %v7895, %v7931
        %v7953 = vadd.f32 %v7897, %v7933
        %v7954 = vadd.f32 %v7899, %v7935
        %v7955 = vadd.f32 %v7901, %v7937
        %s7956 = scalar_lea.vmem [#allocation3], 2
        %v7957 = vld [vmem:[%s7956] ss:$2 sm:$0xff]
        %s7958 = scalar_lea.vmem [#allocation3], 26
        %v7959 = vld [vmem:[%s7958] ss:$2 sm:$0xff]
        %s7960 = scalar_lea.vmem [#allocation3], 50
        %v7961 = vld [vmem:[%s7960] ss:$2 sm:$0xff]
        %s7962 = scalar_lea.vmem [#allocation3], 74
        %v7963 = vld [vmem:[%s7962] ss:$2 sm:$0xff]
        %s7964 = scalar_lea.vmem [#allocation3], 98
        %v7965 = vld [vmem:[%s7964] ss:$2 sm:$0xff]
        %s7966 = scalar_lea.vmem [#allocation3], 122
        %v7967 = vld [vmem:[%s7966] ss:$2 sm:$0xff]
        %s7968 = scalar_lea.vmem [#allocation3], 146
        %v7969 = vld [vmem:[%s7968] ss:$2 sm:$0xff]
        %s7970 = scalar_lea.vmem [#allocation3], 170
        %v7971 = vld [vmem:[%s7970] ss:$2 sm:$0xff]
        %s7972 = scalar_lea.vmem [#allocation3], 194
        %v7973 = vld [vmem:[%s7972] ss:$2 sm:$0xff]
        %s7974 = scalar_lea.vmem [#allocation3], 218
        %v7975 = vld [vmem:[%s7974] ss:$2 sm:$0xff]
        %s7976 = scalar_lea.vmem [#allocation3], 242
        %v7977 = vld [vmem:[%s7976] ss:$2 sm:$0xff]
        %s7978 = scalar_lea.vmem [#allocation3], 266
        %v7979 = vld [vmem:[%s7978] ss:$2 sm:$0xff]
        %s7980 = scalar_lea.vmem [#allocation3], 290
        %v7981 = vld [vmem:[%s7980] ss:$2 sm:$0xff]
        %s7982 = scalar_lea.vmem [#allocation3], 314
        %v7983 = vld [vmem:[%s7982] ss:$2 sm:$0xff]
        %s7984 = scalar_lea.vmem [#allocation3], 338
        %v7985 = vld [vmem:[%s7984] ss:$2 sm:$0xff]
        %s7986 = scalar_lea.vmem [#allocation3], 362
        %v7987 = vld [vmem:[%s7986] ss:$2 sm:$0xff]
        %s7988 = scalar_lea.vmem [#allocation3], 386
        %v7989 = vld [vmem:[%s7988] ss:$2 sm:$0xff]
        %s7990 = scalar_lea.vmem [#allocation3], 410
        %v7991 = vld [vmem:[%s7990] ss:$2 sm:$0xff]
        %v7992 = vadd.f32 %v7938, %v7957
        %v7993 = vadd.f32 %v7939, %v7959
        %v7994 = vadd.f32 %v7940, %v7961
        %v7995 = vadd.f32 %v7941, %v7963
        %v7996 = vadd.f32 %v7942, %v7965
        %v7997 = vadd.f32 %v7943, %v7967
        %v7998 = vadd.f32 %v7944, %v7969
        %v7999 = vadd.f32 %v7945, %v7971
        %v8000 = vadd.f32 %v7946, %v7973
        %v8001 = vadd.f32 %v7947, %v7975
        %v8002 = vadd.f32 %v7948, %v7977
        %v8003 = vadd.f32 %v7949, %v7979
        %v8004 = vadd.f32 %v7950, %v7981
        %v8005 = vadd.f32 %v7951, %v7983
        %v8006 = vadd.f32 %v7952, %v7985
        %v8007 = vadd.f32 %v7953, %v7987
        %v8008 = vadd.f32 %v7954, %v7989
        %v8009 = vadd.f32 %v7955, %v7991
        %8010 = vst [vmem:[#allocation4] sm:$0xff] %v7992
        %8011 = vst [vmem:[#allocation4 + $0x8] sm:$0xff] %v7993
        %8012 = vst [vmem:[#allocation4 + $0x10] sm:$0xff] %v7994
        %8013 = vst [vmem:[#allocation4 + $0x18] sm:$0xff] %v7995
        %8014 = vst [vmem:[#allocation4 + $0x20] sm:$0xff] %v7996
        %8015 = vst [vmem:[#allocation4 + $0x28] sm:$0xff] %v7997
        %8016 = vst [vmem:[#allocation4 + $0x30] sm:$0xff] %v7998
        %8017 = vst [vmem:[#allocation4 + $0x38] sm:$0xff] %v7999
        %8018 = vst [vmem:[#allocation4 + $0x40] sm:$0xff] %v8000
        %8019 = vst [vmem:[#allocation4 + $0x48] sm:$0xff] %v8001
        %8020 = vst [vmem:[#allocation4 + $0x50] sm:$0xff] %v8002
        %8021 = vst [vmem:[#allocation4 + $0x58] sm:$0xff] %v8003
        %8022 = vst [vmem:[#allocation4 + $0x60] sm:$0xff] %v8004
        %8023 = vst [vmem:[#allocation4 + $0x68] sm:$0xff] %v8005
        %8024 = vst [vmem:[#allocation4 + $0x70] sm:$0xff] %v8006
        %8025 = vst [vmem:[#allocation4 + $0x78] sm:$0xff] %v8007
        %8026 = vst [vmem:[#allocation4 + $0x80] sm:$0xff] %v8008
        %8027 = vst [vmem:[#allocation4 + $0x88] sm:$0xff] %v8009
        %v8028 = vld [vmem:[#allocation4] sm:$0xff]
        %v8029 = vld [vmem:[#allocation4 + $0x10] sm:$0xff]
        %v8030 = vld [vmem:[#allocation4 + $0x20] sm:$0xff]
        %v8031 = vld [vmem:[#allocation4 + $0x30] sm:$0xff]
        %v8032 = vld [vmem:[#allocation4 + $0x40] sm:$0xff]
        %v8033 = vld [vmem:[#allocation4 + $0x50] sm:$0xff]
        %v8034 = vld [vmem:[#allocation4 + $0x60] sm:$0xff]
        %v8035 = vld [vmem:[#allocation4 + $0x70] sm:$0xff]
        %v8036 = vld [vmem:[%s7833] sm:$0xff]
        %v8037 = vld [vmem:[%s7833 + $0x10] sm:$0xff]
        %v8038 = vld [vmem:[%s7833 + $0x20] sm:$0xff]
        %v8039 = vld [vmem:[%s7833 + $0x30] sm:$0xff]
        %v8040 = vld [vmem:[%s7833 + $0x40] sm:$0xff]
        %v8041 = vld [vmem:[%s7833 + $0x50] sm:$0xff]
        %v8042 = vld [vmem:[%s7833 + $0x60] sm:$0xff]
        %v8043 = vld [vmem:[%s7833 + $0x70] sm:$0xff]
        %v8044 = vadd.f32 %v8028, %v8036
        %v8045 = vadd.f32 %v8029, %v8037
        %v8046 = vadd.f32 %v8030, %v8038
        %v8047 = vadd.f32 %v8031, %v8039
        %v8048 = vadd.f32 %v8032, %v8040
        %v8049 = vadd.f32 %v8033, %v8041
        %v8050 = vadd.f32 %v8034, %v8042
        %v8051 = vadd.f32 %v8035, %v8043
        %v8052 = vld [vmem:[%s7850] sm:$0xff]
        %v8053 = vld [vmem:[%s7850 + $0x10] sm:$0xff]
        %v8054 = vld [vmem:[%s7850 + $0x20] sm:$0xff]
        %v8055 = vld [vmem:[%s7850 + $0x30] sm:$0xff]
        %v8056 = vld [vmem:[%s7850 + $0x40] sm:$0xff]
        %v8057 = vld [vmem:[%s7850 + $0x50] sm:$0xff]
        %v8058 = vld [vmem:[%s7850 + $0x60] sm:$0xff]
        %v8059 = vld [vmem:[%s7850 + $0x70] sm:$0xff]
        %v8060 = vadd.f32 %v8044, %v8052
        %v8061 = vadd.f32 %v8045, %v8053
        %v8062 = vadd.f32 %v8046, %v8054
        %v8063 = vadd.f32 %v8047, %v8055
        %v8064 = vadd.f32 %v8048, %v8056
        %v8065 = vadd.f32 %v8049, %v8057
        %v8066 = vadd.f32 %v8050, %v8058
        %v8067 = vadd.f32 %v8051, %v8059
        %v8068 = vrcp.pop %v8060
        %v8069 = vrcp.pop %v8061
        %v8070 = vrcp.pop %v8062
        %v8071 = vrcp.pop %v8063
        %v8072 = vrcp.pop %v8064
        %v8073 = vrcp.pop %v8065
        %v8074 = vrcp.pop %v8066
        %v8075 = vrcp.pop %v8067
        %v8076 = vmul.f32 %v7859, %v8068
        %v8077 = vmul.f32 %v7860, %v8069
        %v8078 = vmul.f32 %v7861, %v8070
        %v8079 = vmul.f32 %v7862, %v8071
        %v8080 = vmul.f32 %v7863, %v8072
        %v8081 = vmul.f32 %v7864, %v8073
        %v8082 = vmul.f32 %v7865, %v8074
        %v8083 = vmul.f32 %v7866, %v8075
        %8084 = vst [vmem:[%s230] sm:$0xff] %v8076
        %8085 = vst [vmem:[%s230 + $0x8] sm:$0xff] %v8077
        %8086 = vst [vmem:[%s230 + $0x10] sm:$0xff] %v8078
        %8087 = vst [vmem:[%s230 + $0x18] sm:$0xff] %v8079
        %8088 = vst [vmem:[%s230 + $0x20] sm:$0xff] %v8080
        %8089 = vst [vmem:[%s230 + $0x28] sm:$0xff] %v8081
        %8090 = vst [vmem:[%s230 + $0x30] sm:$0xff] %v8082
        %8091 = vst [vmem:[%s230 + $0x38] sm:$0xff] %v8083
        %s8092 = sand.u32 %s119, 1
        %s8093 = scalar_lea.sflag [#allocation7], %s8092
        %s8094 = sand.u32 %s119, 1
        %s8095 = smul.addr %s8094, 64
        %s8096 = scalar_lea.vmem [#allocation10], %s8095
        // Predicated region
        $region45: #{tpu_custom_call.1} parent=35 // pred_check
          %p8097 = pneg %p129
        $region46: #{tpu_custom_call.1} parent=35 // pred_check_branch
          %8099 = sbr.rel (%p8097) target = $region48
        $region47: #{tpu_custom_call.1} parent=35 // pred_region
          %s8101 = ssub.s32 1024, 1024
          %8102 = vsyncadd %s8093, %s8101
          %s8103 = smul.addr %s22, 8
          %s8104 = smul.addr %s8103, 128
          %s8105 = scalar_lea.hbm %s4, %s8104
          %s8106 = sshll.u32 %s8096, 4
          %s8107 = int_to_ptr.vmem [resolvable:$true] %s8106
          %8112 = dma.vmem_to_hbm [thread:$0]  %s8107, 1024, %s8105, %s8093, 128, 128, 8
        $region48: #{tpu_custom_call.1} parent=35 // pred_fallthru
          _
      $region36: #{tpu_custom_call.1} parent=5 // pred_fallthru
        _
      %p8113 = scmp.le.s32.totalorder 2, %s17
      // Predicated region
      $region49: #{tpu_custom_call.1} parent=5 // pred_check
        %p8114 = pneg %p8113
      $region50: #{tpu_custom_call.1} parent=5 // pred_check_branch
        %8116 = sbr.rel (%p8114) target = $region52
      $region51: #{tpu_custom_call.1} parent=5 // pred_region
        %s8117 = ssub.s32 %s17, 2
        // Predicated region
        $region53: #{tpu_custom_call.1} parent=51 // pred_check
          %p8118 = pneg %p135
        $region54: #{tpu_custom_call.1} parent=51 // pred_check_branch
          %8120 = sbr.rel (%p8118) target = $region56
        $region55: #{tpu_custom_call.1} parent=51 // pred_region
          %s8121 = sand.u32 %s120, 1
          %s8122 = scalar_lea.sflag [#allocation7], %s8121
          %s8123 = sand.u32 %s120, 1
          %s8124 = smul.addr %s8123, 64
          %s8125 = scalar_lea.vmem [#allocation10], %s8124
          %8126 = dma.done %s8122, 1024
        $region56: #{tpu_custom_call.1} parent=51 // pred_fallthru
          _
      $region52: #{tpu_custom_call.1} parent=5 // pred_fallthru
        _
    $region6: #{tpu_custom_call.1} parent=1 // loop_footer
      %s21 = sadd.s32 1, %s17
    $region7: #{tpu_custom_call.1} parent=1 // loop_footer_branch
      %16 = sbr.rel target = $region3
    $region8: #{tpu_custom_call.1} parent=1 // loop_exit
      _
    %8127 = vsyncpa [#allocation6], 1
    %s8128 = scalar_lea.sflag [#allocation6], 1
    %8129 = vsyncpa %s8128, 1
    %8130 = vsyncpa [#allocation9], 1
    %8131 = vsyncpa [#allocation7], 1
    %s8132 = scalar_lea.sflag [#allocation7], 1
    %8133 = vsyncpa %s8132, 1

</llo_original>
